<compile_context>
chip_gen: v6e
topology: v6e:2x2x1
jax: 0.10.0
libtpu: 0.0.40
codegen_flags: <defaults>
</compile_context>

<pallas_src>
import functools

import jax
import jax.numpy as jnp
from jax import lax
from jax.experimental import pallas as pl
from jax.experimental.pallas import tpu as pltpu


# ----------------------------- parameters -----------------------------------

SAMPLE_RATE = 16000
N_FFT = 64
HOP = 32                       # = N_FFT // 2 (frame f = chunk f ++ chunk f+1)
N_MELS = 16
N_FREQ = N_FFT // 2 + 1        # 33
N_SPEC = 2 * N_FREQ            # 66 (re | im stacked)
N_SPEC_PAD = 72                # padded to a multiple of 8 sublanes
HALO = 8                       # halo chunks fetched per tile (min sublane block)

_PRECISION = lax.Precision.HIGHEST


def _round_up(x, m):
    return ((x + m - 1) // m) * m


def _hz_to_mel(f):
    return 2595.0 * jnp.log10(1.0 + f / 700.0)


def _mel_to_hz(m):
    return 700.0 * (10.0 ** (m / 2595.0) - 1.0)


def make_mel_filterbank(n_freq, n_mels, sample_rate):
    """HTK mel filterbank, (n_freq, n_mels), same construction as torchaudio."""
    all_freqs = jnp.linspace(0.0, sample_rate / 2.0, n_freq)
    m_min = _hz_to_mel(jnp.asarray(0.0))
    m_max = _hz_to_mel(jnp.asarray(sample_rate / 2.0))
    m_pts = jnp.linspace(m_min, m_max, n_mels + 2)
    f_pts = _mel_to_hz(m_pts)
    f_diff = f_pts[1:] - f_pts[:-1]                      # (n_mels + 1,)
    slopes = f_pts[None, :] - all_freqs[:, None]         # (n_freq, n_mels + 2)
    down = -slopes[:, :-2] / f_diff[:-1]                 # (n_freq, n_mels)
    up = slopes[:, 2:] / f_diff[1:]                      # (n_freq, n_mels)
    fb = jnp.maximum(0.0, jnp.minimum(down, up))
    return fb.astype(jnp.float32)


def make_hann_window(n_fft):
    """Periodic Hann window (torch.hann_window default), shape (n_fft,)."""
    n = jnp.arange(n_fft, dtype=jnp.float32)
    return 0.5 * (1.0 - jnp.cos(2.0 * jnp.pi * n / n_fft))


def make_fused_mats():
    """Fused constants for the chunked, frames-on-lanes compute.

    dft_a : (N_SPEC_PAD, HOP)  windowed [cos ; -sin] rows hitting the left chunk
    dft_b : (N_SPEC_PAD, HOP)  windowed [cos ; -sin] rows hitting the right chunk
    mel2  : (N_MELS, N_SPEC_PAD) = [mel.T | mel.T] padded (power = re^2 + im^2)
    """
    n = jnp.arange(N_FFT, dtype=jnp.float32)[None, :]
    k = jnp.arange(N_FREQ, dtype=jnp.float32)[:, None]
    ang = 2.0 * jnp.pi * k * n / N_FFT
    w = make_hann_window(N_FFT)[None, :]
    dftw = jnp.concatenate([jnp.cos(ang) * w, -jnp.sin(ang) * w], axis=0)  # (66, 64)
    dftw = jnp.pad(dftw, ((0, N_SPEC_PAD - N_SPEC), (0, 0)))               # (72, 64)
    dft_a = dftw[:, :HOP]                                                  # (72, 32)
    dft_b = dftw[:, HOP:]                                                  # (72, 32)
    mel_t = make_mel_filterbank(N_FREQ, N_MELS, SAMPLE_RATE).T             # (16, 33)
    mel2 = jnp.concatenate([mel_t, mel_t], axis=1)                         # (16, 66)
    mel2 = jnp.pad(mel2, ((0, 0), (0, N_SPEC_PAD - N_SPEC)))               # (16, 72)
    return (dft_a.astype(jnp.float32), dft_b.astype(jnp.float32),
            mel2.astype(jnp.float32))


# ------------------------------ kernel ---------------------------------------

def melspec_kernel(cmain_ref, chalo_ref, dfta_ref, dftb_ref, mel2_ref, out_ref):
    # cmain_ref: (tile, HOP)       chunk c = waveform[c*HOP:(c+1)*HOP]
    # chalo_ref: (HALO, HOP)       first HALO chunks past this tile (right halo)
    # dfta_ref : (N_SPEC_PAD, HOP) windowed DFT rows for the left chunk
    # dftb_ref : (N_SPEC_PAD, HOP) windowed DFT rows for the right chunk
    # mel2_ref : (N_MELS, N_SPEC_PAD)
    # out_ref  : (N_MELS, tile)    lane-dense output block
    c_left = cmain_ref[...]                                      # (tile, HOP)
    tile = c_left.shape[0]
    c_ext = jnp.concatenate([c_left, chalo_ref[...]], axis=0)    # (tile+HALO, HOP)
    c_right = lax.slice_in_dim(c_ext, 1, tile + 1, axis=0)       # (tile, HOP)

    # spec[:, f] = dftw @ frame_f = A @ chunk_f + B @ chunk_{f+1}
    # (contraction on the minor dim of both operands — the q @ k.T pattern)
    dn = (((1,), (1,)), ((), ()))
    spec = lax.dot_general(dfta_ref[...], c_left, dn,
                           precision=_PRECISION,
                           preferred_element_type=jnp.float32)   # (72, tile)
    spec = spec + lax.dot_general(dftb_ref[...], c_right, dn,
                                  precision=_PRECISION,
                                  preferred_element_type=jnp.float32)
    # TODO(synk): on v5e an inner 128-lane fori_loop(unroll=True) could keep the
    # (72, tile) `spec` intermediate in vregs between the two dots; only keep it
    # after a bundle dump confirms vst slot_util drops.
    out_ref[...] = jnp.dot(mel2_ref[...], spec * spec,
                           precision=_PRECISION,
                           preferred_element_type=jnp.float32)   # (16, tile)


# ------------------------------ wrapper ---------------------------------------

def _choose_tile(n_frames, cap):
    """Pick a frame-tile (multiple of 128) balancing padded work vs step count."""
    cap = max(128, (int(cap) // 128) * 128)
    best = None
    t = 128
    while t <= cap:
        n_pad = _round_up(n_frames, t)
        steps = n_pad // t
        cost = n_pad + 256 * steps        # padded frames + per-grid-step overhead
        if best is None or cost < best[2] or (cost == best[2] and t > best[0]):
            best = (t, n_pad, cost)
        t += 128
    return best[0], best[1]


@functools.partial(jax.jit, static_argnames=("tile_cap",))
def mel_spectrogram(x, *, tile_cap=2048):
    """x: (B, T) float32 waveform -> (B, N_MELS, n_frames) float32."""
    B, T = x.shape
    if T < N_FFT:
        raise ValueError("waveform shorter than one frame")
    n_frames = 1 + (T - N_FFT) // HOP
    tile, n_pad = _choose_tile(n_frames, tile_cap)
    n_tiles = n_pad // tile

    # No frame gather / transpose / framed-array pad: the waveform is held in
    # HBM exactly once as non-overlapping HOP-sized chunks; only the raw
    # waveform gets a tiny zero pad so every (padded) frame's chunks exist.
    n_chunks = n_pad + HALO
    x = jnp.pad(x.astype(jnp.float32), ((0, 0), (0, n_chunks * HOP - T)))
    chunks = x.reshape(B, n_chunks, HOP)          # free, contiguous reshape

    dft_a, dft_b, mel2 = make_fused_mats()
    halo_blocks = tile // HALO

    flops = B * n_pad * (2 * 2 * N_SPEC_PAD * HOP + 2 * N_SPEC_PAD
                         + 2 * N_MELS * N_SPEC_PAD)
    bytes_accessed = 4 * (B * n_chunks * HOP + B * n_pad * N_MELS
                          + 2 * N_SPEC_PAD * HOP + N_MELS * N_SPEC_PAD)

    out = pl.pallas_call(
        melspec_kernel,
        out_shape=jax.ShapeDtypeStruct((B, N_MELS, n_pad), jnp.float32),
        grid_spec=pltpu.PrefetchScalarGridSpec(
            num_scalar_prefetch=0,
            grid=(B, n_tiles),
            in_specs=[
                # main chunk block: chunks [i*tile, (i+1)*tile)
                pl.BlockSpec((None, tile, HOP), lambda b, i: (b, i, 0)),
                # right-halo block: chunks [(i+1)*tile, (i+1)*tile + HALO)
                pl.BlockSpec((None, HALO, HOP),
                             lambda b, i: (b, (i + 1) * halo_blocks, 0)),
                pl.BlockSpec((N_SPEC_PAD, HOP), lambda b, i: (0, 0)),
                pl.BlockSpec((N_SPEC_PAD, HOP), lambda b, i: (0, 0)),
                pl.BlockSpec((N_MELS, N_SPEC_PAD), lambda b, i: (0, 0)),
            ],
            out_specs=pl.BlockSpec((None, N_MELS, tile), lambda b, i: (b, 0, i)),
        ),
        compiler_params=pltpu.CompilerParams(
            dimension_semantics=("parallel", "parallel")),
        cost_estimate=pl.CostEstimate(
            flops=flops, transcendentals=0, bytes_accessed=bytes_accessed),
    )(chunks, chunks, dft_a, dft_b, mel2)

    return out[:, :, :n_frames]


# ----------------------- pure-JAX reference (validation) ---------------------

def mel_spectrogram_ref(x):
    B, T = x.shape
    n_frames = 1 + (T - N_FFT) // HOP
    idx = jnp.arange(n_frames)[:, None] * HOP + jnp.arange(N_FFT)[None, :]
    frames = x[:, idx].astype(jnp.float32)                       # (B, nf, 64)
    f = frames * make_hann_window(N_FFT)[None, None, :]
    n = jnp.arange(N_FFT, dtype=jnp.float32)[:, None]
    k = jnp.arange(N_FREQ, dtype=jnp.float32)[None, :]
    ang = 2.0 * jnp.pi * n * k / N_FFT
    re = jnp.einsum("btn,nk->btk", f, jnp.cos(ang), precision=_PRECISION)
    im = jnp.einsum("btn,nk->btk", f, -jnp.sin(ang), precision=_PRECISION)
    power = re * re + im * im                                    # (B, nf, 33)
    mel = jnp.einsum("btk,km->btm", power,
                     make_mel_filterbank(N_FREQ, N_MELS, SAMPLE_RATE),
                     precision=_PRECISION)
    return mel.transpose(0, 2, 1)                                # (B, 16, nf)


if __name__ == "__main__":
    key = jax.random.PRNGKey(0)
    B = 2
    n_frames = 300                       # exercises padding + multi-step grid
    T = N_FFT + HOP * (n_frames - 1)     # 9632 samples (~0.6 s @ 16 kHz)
    x = jax.random.normal(key, (B, T), dtype=jnp.float32)

    y = mel_spectrogram(x)
    jax.block_until_ready(y)

    y_ref = mel_spectrogram_ref(x)
    assert y.shape == (B, N_MELS, n_frames), y.shape
    assert jnp.allclose(y, y_ref, rtol=1e-3, atol=1e-3), (
        "mismatch vs reference, max abs err = %f"
        % float(jnp.max(jnp.abs(y - y_ref))))

    print("KERNEL_OK")
</pallas_src>

<mosaic_0001>
module attributes {stable_mosaic.version = 11 : i64} {
  func.func @melspec_kernel(%arg0: i32, %arg1: i32, %arg2: memref<1x384x32xf32, #tpu.memory_space<vmem>>, %arg3: memref<1x8x32xf32, #tpu.memory_space<vmem>>, %arg4: memref<72x32xf32, #tpu.memory_space<vmem>>, %arg5: memref<72x32xf32, #tpu.memory_space<vmem>>, %arg6: memref<16x72xf32, #tpu.memory_space<vmem>>, %arg7: memref<1x16x384xf32, #tpu.memory_space<vmem>>) attributes {dimension_semantics = [#tpu.dimension_semantics<parallel>, #tpu.dimension_semantics<parallel>], iteration_bounds = array<i64: 2, 1>, scalar_prefetch = 0 : i64, scratch_operands = 0 : i64, tpu.core_type = #tpu.core_type<tc>, window_params = [{transform_indices = @transform_0, window_bounds = array<i64: 1, 384, 32>}, {transform_indices = @transform_1, window_bounds = array<i64: 1, 8, 32>}, {pipeline_mode = #tpu.pipeline_mode<synchronous>, transform_indices = @transform_2, window_bounds = array<i64: 72, 32>}, {pipeline_mode = #tpu.pipeline_mode<synchronous>, transform_indices = @transform_3, window_bounds = array<i64: 72, 32>}, {pipeline_mode = #tpu.pipeline_mode<synchronous>, transform_indices = @transform_4, window_bounds = array<i64: 16, 72>}, {transform_indices = @transform_5, window_bounds = array<i64: 1, 16, 384>}]} {
    %c0 = arith.constant 0 : index
    %c0_0 = arith.constant 0 : index
    %c0_1 = arith.constant 0 : index
    %0 = vector.load %arg2[%c0, %c0_0, %c0_1] : memref<1x384x32xf32, #tpu.memory_space<vmem>>, vector<1x384x32xf32>
    %1 = vector.shape_cast %0 : vector<1x384x32xf32> to vector<384x32xf32>
    %c0_2 = arith.constant 0 : index
    %c0_3 = arith.constant 0 : index
    %c0_4 = arith.constant 0 : index
    %2 = vector.load %arg3[%c0_2, %c0_3, %c0_4] : memref<1x8x32xf32, #tpu.memory_space<vmem>>, vector<1x8x32xf32>
    %3 = vector.shape_cast %2 : vector<1x8x32xf32> to vector<8x32xf32>
    %4 = tpu.concatenate %1, %3 in 0 : vector<384x32xf32>, vector<8x32xf32> -> vector<392x32xf32>
    %5 = vector.extract_strided_slice %4 {offsets = [1, 0], sizes = [384, 32], strides = [1, 1]} : vector<392x32xf32> to vector<384x32xf32>
    %c0_5 = arith.constant 0 : index
    %c0_6 = arith.constant 0 : index
    %6 = vector.load %arg4[%c0_5, %c0_6] : memref<72x32xf32, #tpu.memory_space<vmem>>, vector<72x32xf32>
    %cst = arith.constant dense<0.000000e+00> : vector<72x384xf32>
    %7 = tpu.matmul %6, %1, %cst {dimension_numbers = #tpu.dot_dimension_numbers<[1], [1], [0], [0], [0, 0, 1, 0], [], []>, precision = #tpu.contract_precision<fp32>} : vector<72x32xf32>, vector<384x32xf32>, vector<72x384xf32> -> vector<72x384xf32>
    %c0_7 = arith.constant 0 : index
    %c0_8 = arith.constant 0 : index
    %8 = vector.load %arg5[%c0_7, %c0_8] : memref<72x32xf32, #tpu.memory_space<vmem>>, vector<72x32xf32>
    %cst_9 = arith.constant dense<0.000000e+00> : vector<72x384xf32>
    %9 = tpu.matmul %8, %5, %cst_9 {dimension_numbers = #tpu.dot_dimension_numbers<[1], [1], [0], [0], [0, 0, 1, 0], [], []>, precision = #tpu.contract_precision<fp32>} : vector<72x32xf32>, vector<384x32xf32>, vector<72x384xf32> -> vector<72x384xf32>
    %10 = arith.addf %7, %9 : vector<72x384xf32>
    %c0_10 = arith.constant 0 : index
    %c0_11 = arith.constant 0 : index
    %11 = vector.load %arg6[%c0_10, %c0_11] : memref<16x72xf32, #tpu.memory_space<vmem>>, vector<16x72xf32>
    %12 = arith.mulf %10, %10 : vector<72x384xf32>
    %cst_12 = arith.constant dense<0.000000e+00> : vector<16x384xf32>
    %13 = tpu.matmul %11, %12, %cst_12 {dimension_numbers = #tpu.dot_dimension_numbers<[1], [0], [0], [1], [0, 0, 1, 1], [], []>, precision = #tpu.contract_precision<fp32>} : vector<16x72xf32>, vector<72x384xf32>, vector<16x384xf32> -> vector<16x384xf32>
    %c0_13 = arith.constant 0 : index
    %c0_14 = arith.constant 0 : index
    %c0_15 = arith.constant 0 : index
    %14 = vector.load %arg7[%c0_13, %c0_14, %c0_15] : memref<1x16x384xf32, #tpu.memory_space<vmem>>, vector<1x16x384xf32>
    %15 = vector.shape_cast %14 : vector<1x16x384xf32> to vector<16x384xf32>
    %16 = vector.shape_cast %13 : vector<16x384xf32> to vector<1x16x384xf32>
    tpu.vector_store %arg7[%c0_13, %c0_14, %c0_15], %16 {strides = array<i32>} : memref<1x16x384xf32, #tpu.memory_space<vmem>>, vector<1x16x384xf32>,
    return
  }
  func.func @transform_0(%arg0: i32, %arg1: i32) -> (i32, i32, i32) {
    %c0_i32 = arith.constant 0 : i32
    %c0_i32_0 = arith.constant 0 : i32
    return %arg0, %arg1, %c0_i32 : i32, i32, i32
  }
  func.func @transform_1(%arg0: i32, %arg1: i32) -> (i32, i32, i32) {
    %c1_i32 = arith.constant 1 : i32
    %0 = arith.addi %arg1, %c1_i32 : i32
    %c48_i32 = arith.constant 48 : i32
    %1 = arith.muli %0, %c48_i32 : i32
    %c0_i32 = arith.constant 0 : i32
    %c0_i32_0 = arith.constant 0 : i32
    return %arg0, %1, %c0_i32 : i32, i32, i32
  }
  func.func @transform_2(%arg0: i32, %arg1: i32) -> (i32, i32) {
    %c0_i32 = arith.constant 0 : i32
    %c0_i32_0 = arith.constant 0 : i32
    %c0_i32_1 = arith.constant 0 : i32
    return %c0_i32, %c0_i32_0 : i32, i32
  }
  func.func @transform_3(%arg0: i32, %arg1: i32) -> (i32, i32) {
    %c0_i32 = arith.constant 0 : i32
    %c0_i32_0 = arith.constant 0 : i32
    %c0_i32_1 = arith.constant 0 : i32
    return %c0_i32, %c0_i32_0 : i32, i32
  }
  func.func @transform_4(%arg0: i32, %arg1: i32) -> (i32, i32) {
    %c0_i32 = arith.constant 0 : i32
    %c0_i32_0 = arith.constant 0 : i32
    %c0_i32_1 = arith.constant 0 : i32
    return %c0_i32, %c0_i32_0 : i32, i32
  }
  func.func @transform_5(%arg0: i32, %arg1: i32) -> (i32, i32, i32) {
    %c0_i32 = arith.constant 0 : i32
    %c0_i32_0 = arith.constant 0 : i32
    return %arg0, %c0_i32, %arg1 : i32, i32, i32
  }
}

</mosaic_0001>

<llo_original>
// kernel: mel_spectrogram.1
$region0: #{mel_spectrogram.1}
  #allocation0 [shape = 'u32[]', space=smem, size = 0x4, offset = 0x4, fixed_abs, tag = 'smem constant byte address 0x4 - core index']
  #allocation1 [shape = 'u32[144,128]{1,0:T(1,128)}', space=vmem, size = 0x12000, scoped, tag = 'internal scratch']
  %s0 = inlined_call_operand.vmem [shape: f32[2,392,32], index: 0, kind: input, shape index: {}, may-alias: {0,1}]
  %s1 = inlined_call_operand.vmem [shape: f32[2,392,32], index: 1, kind: input, shape index: {}, may-alias: {0,1}]
  %s2 = inlined_call_operand.vmem [shape: f32[72,32], index: 2, kind: input, shape index: {}]
  %s3 = inlined_call_operand.vmem [shape: f32[72,32], index: 3, kind: input, shape index: {}]
  %s4 = inlined_call_operand.vmem [shape: f32[16,72], index: 4, kind: input, shape index: {}]
  %s5 = inlined_call_operand.hbm [shape: f32[2,16,384], index: 5, kind: output, shape index: {}]
  %s6 = sld [smem:[#allocation0]]
  $region53: #{mel_spectrogram.1} parent=0
    _
  %s8 = ssub.s32 1, %s6
  %s9 = scalar_select 0, %s8, %s6
  $region1: #{mel_spectrogram.1} parent=0
    #allocation2 [shape = 'u8[49152]{0}', space=vmem, size = 0xc000, scoped, tag = 'output window, operand 0']
    #allocation3 [shape = 's32[2]{0}', space=sflag, size = 0x8, scoped, tag = 'scoped memory for mel_spectrogram.1']
    %10 = vsyncpa [#allocation3], 0
    %s11 = scalar_lea.sflag [#allocation3], 1
    %12 = vsyncpa %s11, 0
    loop: start=0, step=1, limit=4
    $region2: #{mel_spectrogram.1} parent=1 // loop_pre_header
      _
    $region3: #{mel_spectrogram.1} parent=1 // loop_header
      %s14 = sphi 0, %s18
      %p15 = scmp.ge.s32.totalorder %s14, 4
      %s21 = sphi 0, %s33
      %s22 = sphi 0, %s29
      %s23 = sphi 0, %s21
      %s24 = sphi 0, %s22
      %s25 = sphi 0, %s23
      %s26 = sphi 0, %s24
      %s38 = sphi 0, %s40
      %s41 = sphi 0, %s38
      %s42 = sphi 0, %s41
      %s58 = sphi 0, %s42
      %s70 = sphi 0, %s72
      %s73 = sphi 0, %s70
      %s74 = sphi 0, %s73
      %s90 = sphi 0, %s74
      %s94 = sphi 0, %s94
      %s96 = sphi 0, %s94
      %s97 = sphi 0, %s96
      %s111 = sphi 0, %s97
      %s115 = sphi 0, %s115
      %s117 = sphi 0, %s115
      %s118 = sphi 0, %s117
      %s132 = sphi 0, %s118
      %s136 = sphi 0, %s136
      %s138 = sphi 0, %s136
      %s139 = sphi 0, %s138
      %s153 = sphi 0, %s139
      %s161 = sphi 0, %s163
      %s164 = sphi 0, %s161
      %s165 = sphi 0, %s164
      %s181 = sphi 0, %s165
    $region4: #{mel_spectrogram.1} parent=1 // loop_header_branch
      %17 = sbr.rel (%p15) target = $region8
    $region5: #{mel_spectrogram.1} parent=1 // loop_body
      %s19 = ssub.s32 %s14, 1
      %s20 = ssub.s32 %s14, 2
      %s27 = sadd.s32 1, %s22
      %p28 = scmp.ge.s32.totalorder %s27, 1
      %s29 = scalar_select %p28, 0, %s27
      %s30 = sadd.s32 1, %s21
      %s31 = scalar_select %p28, %s30, %s21
      %p32 = scmp.ge.s32.totalorder %s31, 2
      %s33 = scalar_select %p32, 0, %s31
      %s34 = ssub.s32 %s21, %s33
      %s35 = ssub.s32 %s22, %s29
      %s36 = sor.u32 %s34, %s35
      %p37 = scmp.eq.s32.totalorder %s36, 0
      %s39 = sadd.s32 %s38, 1
      %s40 = scalar_select %p37, %s38, %s39
      %p43 = pneg %p37
      %p44 = scmp.eq.s32.totalorder %s14, 1
      %p45 = por %p43, %p44
      %p46 = scmp.ne.s32.totalorder %s38, %s41
      %p47 = scmp.eq.s32.totalorder %s14, 0
      %p48 = por %p46, %p47
      %p49 = scmp.ne.s32.totalorder %s38, %s41
      %p50 = scmp.eq.s32.totalorder %s19, 1
      %p51 = por %p49, %p50
      %p52 = scmp.ne.s32.totalorder %s41, %s42
      %p53 = scmp.eq.s32.totalorder %s19, 0
      %p54 = por %p52, %p53
      %p55 = scmp.ne.s32.totalorder %s41, %s42
      %p56 = scmp.eq.s32.totalorder %s20, 1
      %p57 = por %p55, %p56
      %p59 = scmp.ne.s32.totalorder %s42, %s58
      %p60 = scmp.eq.s32.totalorder %s20, 0
      %p61 = por %p59, %p60
      %s62 = sadd.s32 %s22, 1
      %s63 = smul.u32 %s62, 48
      %s64 = sadd.s32 %s29, 1
      %s65 = smul.u32 %s64, 48
      %s66 = ssub.s32 %s21, %s33
      %s67 = ssub.s32 %s63, %s65
      %s68 = sor.u32 %s66, %s67
      %p69 = scmp.eq.s32.totalorder %s68, 0
      %s71 = sadd.s32 %s70, 1
      %s72 = scalar_select %p69, %s70, %s71
      %p75 = pneg %p69
      %p76 = scmp.eq.s32.totalorder %s14, 1
      %p77 = por %p75, %p76
      %p78 = scmp.ne.s32.totalorder %s70, %s73
      %p79 = scmp.eq.s32.totalorder %s14, 0
      %p80 = por %p78, %p79
      %p81 = scmp.ne.s32.totalorder %s70, %s73
      %p82 = scmp.eq.s32.totalorder %s19, 1
      %p83 = por %p81, %p82
      %p84 = scmp.ne.s32.totalorder %s73, %s74
      %p85 = scmp.eq.s32.totalorder %s19, 0
      %p86 = por %p84, %p85
      %p87 = scmp.ne.s32.totalorder %s73, %s74
      %p88 = scmp.eq.s32.totalorder %s20, 1
      %p89 = por %p87, %p88
      %p91 = scmp.ne.s32.totalorder %s74, %s90
      %p92 = scmp.eq.s32.totalorder %s20, 0
      %p93 = por %p91, %p92
      %s95 = sadd.s32 %s94, 1
      %p98 = scmp.eq.s32.totalorder %s14, 1
      %p99 = scmp.ne.s32.totalorder %s94, %s96
      %p100 = scmp.eq.s32.totalorder %s14, 0
      %p101 = por %p99, %p100
      %p102 = scmp.ne.s32.totalorder %s94, %s96
      %p103 = scmp.eq.s32.totalorder %s19, 1
      %p104 = por %p102, %p103
      %p105 = scmp.ne.s32.totalorder %s96, %s97
      %p106 = scmp.eq.s32.totalorder %s19, 0
      %p107 = por %p105, %p106
      %p108 = scmp.ne.s32.totalorder %s96, %s97
      %p109 = scmp.eq.s32.totalorder %s20, 1
      %p110 = por %p108, %p109
      %p112 = scmp.ne.s32.totalorder %s97, %s111
      %p113 = scmp.eq.s32.totalorder %s20, 0
      %p114 = por %p112, %p113
      %s116 = sadd.s32 %s115, 1
      %p119 = scmp.eq.s32.totalorder %s14, 1
      %p120 = scmp.ne.s32.totalorder %s115, %s117
      %p121 = scmp.eq.s32.totalorder %s14, 0
      %p122 = por %p120, %p121
      %p123 = scmp.ne.s32.totalorder %s115, %s117
      %p124 = scmp.eq.s32.totalorder %s19, 1
      %p125 = por %p123, %p124
      %p126 = scmp.ne.s32.totalorder %s117, %s118
      %p127 = scmp.eq.s32.totalorder %s19, 0
      %p128 = por %p126, %p127
      %p129 = scmp.ne.s32.totalorder %s117, %s118
      %p130 = scmp.eq.s32.totalorder %s20, 1
      %p131 = por %p129, %p130
      %p133 = scmp.ne.s32.totalorder %s118, %s132
      %p134 = scmp.eq.s32.totalorder %s20, 0
      %p135 = por %p133, %p134
      %s137 = sadd.s32 %s136, 1
      %p140 = scmp.eq.s32.totalorder %s14, 1
      %p141 = scmp.ne.s32.totalorder %s136, %s138
      %p142 = scmp.eq.s32.totalorder %s14, 0
      %p143 = por %p141, %p142
      %p144 = scmp.ne.s32.totalorder %s136, %s138
      %p145 = scmp.eq.s32.totalorder %s19, 1
      %p146 = por %p144, %p145
      %p147 = scmp.ne.s32.totalorder %s138, %s139
      %p148 = scmp.eq.s32.totalorder %s19, 0
      %p149 = por %p147, %p148
      %p150 = scmp.ne.s32.totalorder %s138, %s139
      %p151 = scmp.eq.s32.totalorder %s20, 1
      %p152 = por %p150, %p151
      %p154 = scmp.ne.s32.totalorder %s139, %s153
      %p155 = scmp.eq.s32.totalorder %s20, 0
      %p156 = por %p154, %p155
      %s157 = ssub.s32 %s21, %s33
      %s158 = ssub.s32 %s22, %s29
      %s159 = sor.u32 %s157, %s158
      %p160 = scmp.eq.s32.totalorder %s159, 0
      %s162 = sadd.s32 %s161, 1
      %s163 = scalar_select %p160, %s161, %s162
      %p166 = pneg %p160
      %p167 = scmp.eq.s32.totalorder %s14, 1
      %p168 = por %p166, %p167
      %p169 = scmp.ne.s32.totalorder %s161, %s164
      %p170 = scmp.eq.s32.totalorder %s14, 0
      %p171 = por %p169, %p170
      %p172 = scmp.ne.s32.totalorder %s161, %s164
      %p173 = scmp.eq.s32.totalorder %s19, 1
      %p174 = por %p172, %p173
      %p175 = scmp.ne.s32.totalorder %s164, %s165
      %p176 = scmp.eq.s32.totalorder %s19, 0
      %p177 = por %p175, %p176
      %p178 = scmp.ne.s32.totalorder %s164, %s165
      %p179 = scmp.eq.s32.totalorder %s20, 1
      %p180 = por %p178, %p179
      %p182 = scmp.ne.s32.totalorder %s165, %s181
      %p183 = scmp.eq.s32.totalorder %s20, 0
      %p184 = por %p182, %p183
      %p185 = scmp.le.s32.totalorder 1, %s14
      %p186 = scmp.lt.s32.totalorder %s14, 3
      %p187 = pnand %p185, %p186
      %p188 = pneg %p187
      // Predicated region
      $region9: #{mel_spectrogram.1} parent=5 // pred_check
        _
      $region10: #{mel_spectrogram.1} parent=5 // pred_check_branch
        %190 = sbr.rel (%p187) target = $region12
      $region11: #{mel_spectrogram.1} parent=5 // pred_region
        %s191 = ssub.s32 %s14, 1
        // Predicated region
        $region13: #{mel_spectrogram.1} parent=11 // pred_check
          %p192 = pneg %p107
        $region14: #{mel_spectrogram.1} parent=11 // pred_check_branch
          %194 = sbr.rel (%p192) target = $region16
        $region15: #{mel_spectrogram.1} parent=11 // pred_region
          _
        $region16: #{mel_spectrogram.1} parent=11 // pred_fallthru
          _
        // Predicated region
        $region17: #{mel_spectrogram.1} parent=11 // pred_check
          %p195 = pneg %p128
        $region18: #{mel_spectrogram.1} parent=11 // pred_check_branch
          %197 = sbr.rel (%p195) target = $region20
        $region19: #{mel_spectrogram.1} parent=11 // pred_region
          _
        $region20: #{mel_spectrogram.1} parent=11 // pred_fallthru
          _
        // Predicated region
        $region21: #{mel_spectrogram.1} parent=11 // pred_check
          %p198 = pneg %p149
        $region22: #{mel_spectrogram.1} parent=11 // pred_check_branch
          %200 = sbr.rel (%p198) target = $region24
        $region23: #{mel_spectrogram.1} parent=11 // pred_region
          _
        $region24: #{mel_spectrogram.1} parent=11 // pred_fallthru
          _
      $region12: #{mel_spectrogram.1} parent=5 // pred_fallthru
        _
      %p201 = scmp.lt.s32.totalorder %s14, 2
      // Predicated region
      $region25: #{mel_spectrogram.1} parent=5 // pred_check
        %p202 = pneg %p201
      $region26: #{mel_spectrogram.1} parent=5 // pred_check_branch
        %204 = sbr.rel (%p202) target = $region28
      $region27: #{mel_spectrogram.1} parent=5 // pred_region
        // Predicated region
        $region29: #{mel_spectrogram.1} parent=27 // pred_check
          %p205 = pneg %p48
        $region30: #{mel_spectrogram.1} parent=27 // pred_check_branch
          %207 = sbr.rel (%p205) target = $region32
        $region31: #{mel_spectrogram.1} parent=27 // pred_region
          %s208 = smul.u32 48, %s22
          %s209 = ssub.s32 49, %s208
          %p210 = scmp.lt.s32.totalorder %s209, 48
          %s211 = scalar_select %p210, %s209, 48
          %s212 = smul.u32 128, %s211
          %p213 = scmp.lt.s32.totalorder %s21, 1
          %s214 = scalar_select %p213, %s21, 1
          %p215 = scmp.lt.s32.totalorder %s208, 48
          %s216 = scalar_select %p215, %s208, 48
          %s217 = smul.addr %s214, 49
          %s218 = sadd.s32 %s216, %s217
          %s219 = smul.addr %s218, 8
          %s220 = scalar_lea.vmem %s0, %s219
          %s221 = smul.u32 48, %s22
          %s222 = ssub.s32 49, %s221
          %p223 = scmp.lt.s32.totalorder %s222, 48
          %s224 = scalar_select %p223, %s222, 48
          %s225 = smul.u32 128, %s224
        $region32: #{mel_spectrogram.1} parent=27 // pred_fallthru
          _
        // Predicated region
        $region33: #{mel_spectrogram.1} parent=27 // pred_check
          %p226 = pneg %p80
        $region34: #{mel_spectrogram.1} parent=27 // pred_check_branch
          %228 = sbr.rel (%p226) target = $region36
        $region35: #{mel_spectrogram.1} parent=27 // pred_region
          %s229 = sadd.s32 %s22, 1
          %s230 = smul.u32 %s229, 48
          %p231 = scmp.lt.s32.totalorder %s21, 1
          %s232 = scalar_select %p231, %s21, 1
          %p233 = scmp.lt.s32.totalorder %s230, 48
          %s234 = scalar_select %p233, %s230, 48
          %s235 = smul.addr %s232, 49
          %s236 = sadd.s32 %s234, %s235
          %s237 = smul.addr %s236, 8
          %s238 = scalar_lea.vmem %s1, %s237
          %s239 = sadd.s32 %s22, 1
          %s240 = smul.u32 %s239, 48
        $region36: #{mel_spectrogram.1} parent=27 // pred_fallthru
          _
      $region28: #{mel_spectrogram.1} parent=5 // pred_fallthru
        _
      %p241 = scmp.le.s32.totalorder 1, %s14
      %p242 = scmp.lt.s32.totalorder %s14, 3
      %p243 = pnand %p241, %p242
      %p244 = pneg %p243
      // Predicated region
      $region37: #{mel_spectrogram.1} parent=5 // pred_check
        _
      $region38: #{mel_spectrogram.1} parent=5 // pred_check_branch
        %246 = sbr.rel (%p243) target = $region40
      $region39: #{mel_spectrogram.1} parent=5 // pred_region
        %s247 = ssub.s32 %s14, 1
        %s248 = smul.u32 48, %s24
        %s249 = ssub.s32 49, %s248
        %p250 = scmp.lt.s32.totalorder %s249, 48
        %s251 = scalar_select %p250, %s249, 48
        %s252 = smul.u32 128, %s251
        %p253 = scmp.lt.s32.totalorder %s23, 1
        %s254 = scalar_select %p253, %s23, 1
        %p255 = scmp.lt.s32.totalorder %s248, 48
        %s256 = scalar_select %p255, %s248, 48
        %s257 = smul.addr %s254, 49
        %s258 = sadd.s32 %s256, %s257
        %s259 = smul.addr %s258, 8
        %s260 = scalar_lea.vmem %s0, %s259
        %p261 = pneg %p54
        %p262 = pneg %p51
        %s263 = sadd.s32 %s24, 1
        %s264 = smul.u32 %s263, 48
        %p265 = scmp.lt.s32.totalorder %s23, 1
        %s266 = scalar_select %p265, %s23, 1
        %p267 = scmp.lt.s32.totalorder %s264, 48
        %s268 = scalar_select %p267, %s264, 48
        %s269 = smul.addr %s266, 49
        %s270 = sadd.s32 %s268, %s269
        %s271 = smul.addr %s270, 8
        %s272 = scalar_lea.vmem %s1, %s271
        %p273 = pneg %p86
        %p274 = pneg %p83
        %p275 = pneg %p107
        %p276 = pneg %p104
        %p277 = pneg %p128
        %p278 = pneg %p125
        %p279 = pneg %p149
        %p280 = pneg %p146
        %p281 = pneg %p177
        %p282 = pneg %p174
        %s283 = sand.u32 %s164, 1
        %s284 = scalar_lea.sflag [#allocation3], %s283
        %s285 = sand.u32 %s164, 1
        %s286 = smul.addr %s285, 48
        %s287 = scalar_lea.vmem [#allocation2], %s286
        %s288 = smul.u32 48, %s24
        %s289 = ssub.s32 49, %s288
        %p290 = scmp.lt.s32.totalorder %s289, 48
        %s291 = scalar_select %p290, %s289, 48
        %s292 = smul.u32 128, %s291
        %p293 = scmp.lt.s32.totalorder %s23, 1
        %s294 = scalar_select %p293, %s23, 1
        %p295 = scmp.lt.s32.totalorder %s288, 48
        %s296 = scalar_select %p295, %s288, 48
        %s297 = smul.addr %s294, 49
        %s298 = sadd.s32 %s296, %s297
        %s299 = smul.addr %s298, 8
        %s300 = scalar_lea.vmem %s0, %s299
        %s301 = smul.u32 48, %s24
        %s302 = ssub.s32 49, %s301
        %p303 = scmp.lt.s32.totalorder %s302, 48
        %s304 = scalar_select %p303, %s302, 48
        %s305 = smul.u32 128, %s304
        %s306 = sadd.s32 %s24, 1
        %s307 = smul.u32 %s306, 48
        %p308 = scmp.lt.s32.totalorder %s23, 1
        %s309 = scalar_select %p308, %s23, 1
        %p310 = scmp.lt.s32.totalorder %s307, 48
        %s311 = scalar_select %p310, %s307, 48
        %s312 = smul.addr %s309, 49
        %s313 = sadd.s32 %s311, %s312
        %s314 = smul.addr %s313, 8
        %s315 = scalar_lea.vmem %s1, %s314
        %s316 = sadd.s32 %s24, 1
        %s317 = smul.u32 %s316, 48
        %s318 = smul.u32 3, %s24
        %v319 = vld [vmem:[%s300] sm:$0xff]
        %v320 = vld [vmem:[%s300 + $0x8] sm:$0xff]
        %v321 = vld [vmem:[%s300 + $0x10] sm:$0xff]
        %v322 = vld [vmem:[%s300 + $0x18] sm:$0xff]
        %v323 = vld [vmem:[%s300 + $0x20] sm:$0xff]
        %v324 = vld [vmem:[%s300 + $0x28] sm:$0xff]
        %v325 = vld [vmem:[%s300 + $0x30] sm:$0xff]
        %v326 = vld [vmem:[%s300 + $0x38] sm:$0xff]
        %v327 = vld [vmem:[%s300 + $0x40] sm:$0xff]
        %v328 = vld [vmem:[%s300 + $0x48] sm:$0xff]
        %v329 = vld [vmem:[%s300 + $0x50] sm:$0xff]
        %v330 = vld [vmem:[%s300 + $0x58] sm:$0xff]
        %v331 = vld [vmem:[%s300 + $0x60] sm:$0xff]
        %v332 = vld [vmem:[%s300 + $0x68] sm:$0xff]
        %v333 = vld [vmem:[%s300 + $0x70] sm:$0xff]
        %v334 = vld [vmem:[%s300 + $0x78] sm:$0xff]
        %v335 = vld [vmem:[%s300 + $0x80] sm:$0xff]
        %v336 = vld [vmem:[%s300 + $0x88] sm:$0xff]
        %v337 = vld [vmem:[%s300 + $0x90] sm:$0xff]
        %v338 = vld [vmem:[%s300 + $0x98] sm:$0xff]
        %v339 = vld [vmem:[%s300 + $0xa0] sm:$0xff]
        %v340 = vld [vmem:[%s300 + $0xa8] sm:$0xff]
        %v341 = vld [vmem:[%s300 + $0xb0] sm:$0xff]
        %v342 = vld [vmem:[%s300 + $0xb8] sm:$0xff]
        %v343 = vld [vmem:[%s300 + $0xc0] sm:$0xff]
        %v344 = vld [vmem:[%s300 + $0xc8] sm:$0xff]
        %v345 = vld [vmem:[%s300 + $0xd0] sm:$0xff]
        %v346 = vld [vmem:[%s300 + $0xd8] sm:$0xff]
        %v347 = vld [vmem:[%s300 + $0xe0] sm:$0xff]
        %v348 = vld [vmem:[%s300 + $0xe8] sm:$0xff]
        %v349 = vld [vmem:[%s300 + $0xf0] sm:$0xff]
        %v350 = vld [vmem:[%s300 + $0xf8] sm:$0xff]
        %v351 = vld [vmem:[%s300 + $0x100] sm:$0xff]
        %v352 = vld [vmem:[%s300 + $0x108] sm:$0xff]
        %v353 = vld [vmem:[%s300 + $0x110] sm:$0xff]
        %v354 = vld [vmem:[%s300 + $0x118] sm:$0xff]
        %v355 = vld [vmem:[%s300 + $0x120] sm:$0xff]
        %v356 = vld [vmem:[%s300 + $0x128] sm:$0xff]
        %v357 = vld [vmem:[%s300 + $0x130] sm:$0xff]
        %v358 = vld [vmem:[%s300 + $0x138] sm:$0xff]
        %v359 = vld [vmem:[%s300 + $0x140] sm:$0xff]
        %v360 = vld [vmem:[%s300 + $0x148] sm:$0xff]
        %v361 = vld [vmem:[%s300 + $0x150] sm:$0xff]
        %v362 = vld [vmem:[%s300 + $0x158] sm:$0xff]
        %v363 = vld [vmem:[%s300 + $0x160] sm:$0xff]
        %v364 = vld [vmem:[%s300 + $0x168] sm:$0xff]
        %v365 = vld [vmem:[%s300 + $0x170] sm:$0xff]
        %v366 = vld [vmem:[%s300 + $0x178] sm:$0xff]
        %v367 = vld [vmem:[%s315] sm:$0xff]
        %v368 = vld [vmem:[%s2] sm:$0xff]
        %v369 = vld [vmem:[%s2 + $0x8] sm:$0xff]
        %v370 = vld [vmem:[%s2 + $0x10] sm:$0xff]
        %v371 = vld [vmem:[%s2 + $0x18] sm:$0xff]
        %v372 = vld [vmem:[%s2 + $0x20] sm:$0xff]
        %v373 = vld [vmem:[%s2 + $0x28] sm:$0xff]
        %v374 = vld [vmem:[%s2 + $0x30] sm:$0xff]
        %v375 = vld [vmem:[%s2 + $0x38] sm:$0xff]
        %v376 = vld [vmem:[%s2 + $0x40] sm:$0xff]
        %v377 = vld [vmem:[%s3] sm:$0xff]
        %v378 = vld [vmem:[%s3 + $0x8] sm:$0xff]
        %v379 = vld [vmem:[%s3 + $0x10] sm:$0xff]
        %v380 = vld [vmem:[%s3 + $0x18] sm:$0xff]
        %v381 = vld [vmem:[%s3 + $0x20] sm:$0xff]
        %v382 = vld [vmem:[%s3 + $0x28] sm:$0xff]
        %v383 = vld [vmem:[%s3 + $0x30] sm:$0xff]
        %v384 = vld [vmem:[%s3 + $0x38] sm:$0xff]
        %v385 = vld [vmem:[%s3 + $0x40] sm:$0xff]
        %vm435 = vcmask 1046528
        %v436 = vrot.slane %v319, 1
        %v437 = vrot.slane %v320, 1
        %v438 = vsel %vm435, %v436, %v437
        %v439 = vrot.slane %v321, 1
        %v440 = vsel %vm435, %v437, %v439
        %v441 = vrot.slane %v322, 1
        %v442 = vsel %vm435, %v439, %v441
        %v443 = vrot.slane %v323, 1
        %v444 = vsel %vm435, %v441, %v443
        %v445 = vrot.slane %v324, 1
        %v446 = vsel %vm435, %v443, %v445
        %v447 = vrot.slane %v325, 1
        %v448 = vsel %vm435, %v445, %v447
        %v449 = vrot.slane %v326, 1
        %v450 = vsel %vm435, %v447, %v449
        %v451 = vrot.slane %v327, 1
        %v452 = vsel %vm435, %v449, %v451
        %v453 = vrot.slane %v328, 1
        %v454 = vsel %vm435, %v451, %v453
        %v455 = vrot.slane %v329, 1
        %v456 = vsel %vm435, %v453, %v455
        %v457 = vrot.slane %v330, 1
        %v458 = vsel %vm435, %v455, %v457
        %v459 = vrot.slane %v331, 1
        %v460 = vsel %vm435, %v457, %v459
        %v461 = vrot.slane %v332, 1
        %v462 = vsel %vm435, %v459, %v461
        %v463 = vrot.slane %v333, 1
        %v464 = vsel %vm435, %v461, %v463
        %v465 = vrot.slane %v334, 1
        %v466 = vsel %vm435, %v463, %v465
        %v467 = vrot.slane %v335, 1
        %v468 = vsel %vm435, %v465, %v467
        %v469 = vrot.slane %v336, 1
        %v470 = vsel %vm435, %v467, %v469
        %v471 = vrot.slane %v337, 1
        %v472 = vsel %vm435, %v469, %v471
        %v473 = vrot.slane %v338, 1
        %v474 = vsel %vm435, %v471, %v473
        %v475 = vrot.slane %v339, 1
        %v476 = vsel %vm435, %v473, %v475
        %v477 = vrot.slane %v340, 1
        %v478 = vsel %vm435, %v475, %v477
        %v479 = vrot.slane %v341, 1
        %v480 = vsel %vm435, %v477, %v479
        %v481 = vrot.slane %v342, 1
        %v482 = vsel %vm435, %v479, %v481
        %v483 = vrot.slane %v343, 1
        %v484 = vsel %vm435, %v481, %v483
        %v485 = vrot.slane %v344, 1
        %v486 = vsel %vm435, %v483, %v485
        %v487 = vrot.slane %v345, 1
        %v488 = vsel %vm435, %v485, %v487
        %v489 = vrot.slane %v346, 1
        %v490 = vsel %vm435, %v487, %v489
        %v491 = vrot.slane %v347, 1
        %v492 = vsel %vm435, %v489, %v491
        %v493 = vrot.slane %v348, 1
        %v494 = vsel %vm435, %v491, %v493
        %v495 = vrot.slane %v349, 1
        %v496 = vsel %vm435, %v493, %v495
        %v497 = vrot.slane %v350, 1
        %v498 = vsel %vm435, %v495, %v497
        %v499 = vrot.slane %v351, 1
        %v500 = vsel %vm435, %v497, %v499
        %v501 = vrot.slane %v352, 1
        %v502 = vsel %vm435, %v499, %v501
        %v503 = vrot.slane %v353, 1
        %v504 = vsel %vm435, %v501, %v503
        %v505 = vrot.slane %v354, 1
        %v506 = vsel %vm435, %v503, %v505
        %v507 = vrot.slane %v355, 1
        %v508 = vsel %vm435, %v505, %v507
        %v509 = vrot.slane %v356, 1
        %v510 = vsel %vm435, %v507, %v509
        %v511 = vrot.slane %v357, 1
        %v512 = vsel %vm435, %v509, %v511
        %v513 = vrot.slane %v358, 1
        %v514 = vsel %vm435, %v511, %v513
        %v515 = vrot.slane %v359, 1
        %v516 = vsel %vm435, %v513, %v515
        %v517 = vrot.slane %v360, 1
        %v518 = vsel %vm435, %v515, %v517
        %v519 = vrot.slane %v361, 1
        %v520 = vsel %vm435, %v517, %v519
        %v521 = vrot.slane %v362, 1
        %v522 = vsel %vm435, %v519, %v521
        %v523 = vrot.slane %v363, 1
        %v524 = vsel %vm435, %v521, %v523
        %v525 = vrot.slane %v364, 1
        %v526 = vsel %vm435, %v523, %v525
        %v527 = vrot.slane %v365, 1
        %v528 = vsel %vm435, %v525, %v527
        %v529 = vrot.slane %v366, 1
        %v530 = vsel %vm435, %v527, %v529
        %v531 = vrot.slane %v367, 1
        %v532 = vsel %vm435, %v529, %v531
        %vm533 = vcmask 261120
        %v535 = vsel %vm533, %v377, 0
        %v538 = vsel %vm533, %v378, 0
        %v541 = vsel %vm533, %v379, 0
        %v544 = vsel %vm533, %v380, 0
        %v547 = vsel %vm533, %v381, 0
        %v550 = vsel %vm533, %v382, 0
        %v553 = vsel %vm533, %v383, 0
        %v556 = vsel %vm533, %v384, 0
        %v559 = vsel %vm533, %v385, 0
        %v561 = vsel %vm533, %v438, 0
        %v563 = vsel %vm533, %v440, 0
        %v565 = vsel %vm533, %v442, 0
        %v567 = vsel %vm533, %v444, 0
        %v569 = vsel %vm533, %v446, 0
        %v571 = vsel %vm533, %v448, 0
        %v573 = vsel %vm533, %v450, 0
        %v575 = vsel %vm533, %v452, 0
        %v577 = vsel %vm533, %v454, 0
        %v579 = vsel %vm533, %v456, 0
        %v581 = vsel %vm533, %v458, 0
        %v583 = vsel %vm533, %v460, 0
        %v585 = vsel %vm533, %v462, 0
        %v587 = vsel %vm533, %v464, 0
        %v589 = vsel %vm533, %v466, 0
        %v591 = vsel %vm533, %v468, 0
        %v593 = vsel %vm533, %v470, 0
        %v595 = vsel %vm533, %v472, 0
        %v597 = vsel %vm533, %v474, 0
        %v599 = vsel %vm533, %v476, 0
        %v601 = vsel %vm533, %v478, 0
        %v603 = vsel %vm533, %v480, 0
        %v605 = vsel %vm533, %v482, 0
        %v607 = vsel %vm533, %v484, 0
        %v609 = vsel %vm533, %v486, 0
        %v611 = vsel %vm533, %v488, 0
        %v613 = vsel %vm533, %v490, 0
        %v615 = vsel %vm533, %v492, 0
        %v617 = vsel %vm533, %v494, 0
        %v619 = vsel %vm533, %v496, 0
        %v621 = vsel %vm533, %v498, 0
        %v623 = vsel %vm533, %v500, 0
        %v625 = vsel %vm533, %v502, 0
        %v627 = vsel %vm533, %v504, 0
        %v629 = vsel %vm533, %v506, 0
        %v631 = vsel %vm533, %v508, 0
        %v633 = vsel %vm533, %v510, 0
        %v635 = vsel %vm533, %v512, 0
        %v637 = vsel %vm533, %v514, 0
        %v639 = vsel %vm533, %v516, 0
        %v641 = vsel %vm533, %v518, 0
        %v643 = vsel %vm533, %v520, 0
        %v645 = vsel %vm533, %v522, 0
        %v647 = vsel %vm533, %v524, 0
        %v649 = vsel %vm533, %v526, 0
        %v651 = vsel %vm533, %v528, 0
        %v653 = vsel %vm533, %v530, 0
        %v655 = vsel %vm533, %v532, 0
        %657 = vmatprep.subr.mxu0 0.0
        %v658 = vand.u32 %v591, 4294901760
        %659 = vmatpush1.xpose.msra.mxu0 %v658
        %660 = vmatprep.subr.mxu0 0.0
        %v661 = vand.u32 %v589, 4294901760
        %662 = vmatpush1.xpose.msra.mxu0 %v661
        %663 = vmatprep.subr.mxu0 0.0
        %v664 = vand.u32 %v587, 4294901760
        %665 = vmatpush1.xpose.msra.mxu0 %v664
        %666 = vmatprep.subr.mxu0 0.0
        %v667 = vand.u32 %v585, 4294901760
        %668 = vmatpush1.xpose.msra.mxu0 %v667
        %669 = vmatprep.subr.mxu0 0.0
        %v670 = vand.u32 %v583, 4294901760
        %671 = vmatpush1.xpose.msra.mxu0 %v670
        %672 = vmatprep.subr.mxu0 0.0
        %v673 = vand.u32 %v581, 4294901760
        %674 = vmatpush1.xpose.msra.mxu0 %v673
        %675 = vmatprep.subr.mxu0 0.0
        %v676 = vand.u32 %v579, 4294901760
        %677 = vmatpush1.xpose.msra.mxu0 %v676
        %678 = vmatprep.subr.mxu0 0.0
        %v679 = vand.u32 %v577, 4294901760
        %680 = vmatpush1.xpose.msra.mxu0 %v679
        %681 = vmatprep.subr.mxu0 0.0
        %v682 = vand.u32 %v575, 4294901760
        %683 = vmatpush1.xpose.msra.mxu0 %v682
        %684 = vmatprep.subr.mxu0 0.0
        %v685 = vand.u32 %v573, 4294901760
        %686 = vmatpush1.xpose.msra.mxu0 %v685
        %687 = vmatprep.subr.mxu0 0.0
        %v688 = vand.u32 %v571, 4294901760
        %689 = vmatpush1.xpose.msra.mxu0 %v688
        %690 = vmatprep.subr.mxu0 0.0
        %v691 = vand.u32 %v569, 4294901760
        %692 = vmatpush1.xpose.msra.mxu0 %v691
        %693 = vmatprep.subr.mxu0 0.0
        %v694 = vand.u32 %v567, 4294901760
        %695 = vmatpush1.xpose.msra.mxu0 %v694
        %696 = vmatprep.subr.mxu0 0.0
        %v697 = vand.u32 %v565, 4294901760
        %698 = vmatpush1.xpose.msra.mxu0 %v697
        %699 = vmatprep.subr.mxu0 0.0
        %v700 = vand.u32 %v563, 4294901760
        %701 = vmatpush1.xpose.msra.mxu0 %v700
        %702 = vmatprep.subr.mxu0 0.0
        %v703 = vand.u32 %v561, 4294901760
        %704 = vmatpush1.xpose.msra.mxu0 %v703
        %705 = vmatprep.subr.mxu0 0.0
        %v706 = vand.u32 %v623, 4294901760
        %707 = vmatpush2.xpose.msra.mxu0 %v706
        %708 = vmatprep.subr.mxu0 0.0
        %v709 = vand.u32 %v621, 4294901760
        %710 = vmatpush2.xpose.msra.mxu0 %v709
        %711 = vmatprep.subr.mxu0 0.0
        %v712 = vand.u32 %v619, 4294901760
        %713 = vmatpush2.xpose.msra.mxu0 %v712
        %714 = vmatprep.subr.mxu0 0.0
        %v715 = vand.u32 %v617, 4294901760
        %716 = vmatpush2.xpose.msra.mxu0 %v715
        %717 = vmatprep.subr.mxu0 0.0
        %v718 = vand.u32 %v615, 4294901760
        %719 = vmatpush2.xpose.msra.mxu0 %v718
        %720 = vmatprep.subr.mxu0 0.0
        %v721 = vand.u32 %v613, 4294901760
        %722 = vmatpush2.xpose.msra.mxu0 %v721
        %723 = vmatprep.subr.mxu0 0.0
        %v724 = vand.u32 %v611, 4294901760
        %725 = vmatpush2.xpose.msra.mxu0 %v724
        %726 = vmatprep.subr.mxu0 0.0
        %v727 = vand.u32 %v609, 4294901760
        %728 = vmatpush2.xpose.msra.mxu0 %v727
        %729 = vmatprep.subr.mxu0 0.0
        %v730 = vand.u32 %v607, 4294901760
        %731 = vmatpush2.xpose.msra.mxu0 %v730
        %732 = vmatprep.subr.mxu0 0.0
        %v733 = vand.u32 %v605, 4294901760
        %734 = vmatpush2.xpose.msra.mxu0 %v733
        %735 = vmatprep.subr.mxu0 0.0
        %v736 = vand.u32 %v603, 4294901760
        %737 = vmatpush2.xpose.msra.mxu0 %v736
        %738 = vmatprep.subr.mxu0 0.0
        %v739 = vand.u32 %v601, 4294901760
        %740 = vmatpush2.xpose.msra.mxu0 %v739
        %741 = vmatprep.subr.mxu0 0.0
        %v742 = vand.u32 %v599, 4294901760
        %743 = vmatpush2.xpose.msra.mxu0 %v742
        %744 = vmatprep.subr.mxu0 0.0
        %v745 = vand.u32 %v597, 4294901760
        %746 = vmatpush2.xpose.msra.mxu0 %v745
        %747 = vmatprep.subr.mxu0 0.0
        %v748 = vand.u32 %v595, 4294901760
        %749 = vmatpush2.xpose.msra.mxu0 %v748
        %750 = vmatprep.subr.mxu0 0.0
        %v751 = vand.u32 %v593, 4294901760
        %752 = vmatpush2.xpose.msra.mxu0 %v751
        %753 = vmatprep.mubr.f32.mxu0 0.0
        %v754 = vand.u32 %v535, 4294901760
        %v755 = vsub.f32 %v535, %v754
        %v756 = vand.u32 %v755, 4294901760
        %v757 = vsub.f32 %v755, %v756
        %v758 = vand.u32 %v757, 4294901760
        %759 = vmatmul.mubr.f32.gmra.mxu0 %v758
        %v760 = vpop.f32.mrf.mxu0
        %v761 = vadd.f32 0.0, %v760
        %v762 = vpop.f32.mrf.mxu0
        %v763 = vadd.f32 0.0, %v762
        %764 = vmatprep.mubr.f32.mxu0 0.0
        %v765 = vand.u32 %v538, 4294901760
        %v766 = vsub.f32 %v538, %v765
        %v767 = vand.u32 %v766, 4294901760
        %v768 = vsub.f32 %v766, %v767
        %v769 = vand.u32 %v768, 4294901760
        %770 = vmatmul.mubr.f32.gmra.mxu0 %v769
        %v771 = vpop.f32.mrf.mxu0
        %v772 = vadd.f32 0.0, %v771
        %v773 = vpop.f32.mrf.mxu0
        %v774 = vadd.f32 0.0, %v773
        %775 = vmatprep.mubr.f32.mxu0 0.0
        %v776 = vand.u32 %v541, 4294901760
        %v777 = vsub.f32 %v541, %v776
        %v778 = vand.u32 %v777, 4294901760
        %v779 = vsub.f32 %v777, %v778
        %v780 = vand.u32 %v779, 4294901760
        %781 = vmatmul.mubr.f32.gmra.mxu0 %v780
        %v782 = vpop.f32.mrf.mxu0
        %v783 = vadd.f32 0.0, %v782
        %v784 = vpop.f32.mrf.mxu0
        %v785 = vadd.f32 0.0, %v784
        %786 = vmatprep.mubr.f32.mxu0 0.0
        %v787 = vand.u32 %v544, 4294901760
        %v788 = vsub.f32 %v544, %v787
        %v789 = vand.u32 %v788, 4294901760
        %v790 = vsub.f32 %v788, %v789
        %v791 = vand.u32 %v790, 4294901760
        %792 = vmatmul.mubr.f32.gmra.mxu0 %v791
        %v793 = vpop.f32.mrf.mxu0
        %v794 = vadd.f32 0.0, %v793
        %v795 = vpop.f32.mrf.mxu0
        %v796 = vadd.f32 0.0, %v795
        %797 = vmatprep.mubr.f32.mxu0 0.0
        %v798 = vand.u32 %v547, 4294901760
        %v799 = vsub.f32 %v547, %v798
        %v800 = vand.u32 %v799, 4294901760
        %v801 = vsub.f32 %v799, %v800
        %v802 = vand.u32 %v801, 4294901760
        %803 = vmatmul.mubr.f32.gmra.mxu0 %v802
        %v804 = vpop.f32.mrf.mxu0
        %v805 = vadd.f32 0.0, %v804
        %v806 = vpop.f32.mrf.mxu0
        %v807 = vadd.f32 0.0, %v806
        %808 = vmatprep.mubr.f32.mxu0 0.0
        %v809 = vand.u32 %v550, 4294901760
        %v810 = vsub.f32 %v550, %v809
        %v811 = vand.u32 %v810, 4294901760
        %v812 = vsub.f32 %v810, %v811
        %v813 = vand.u32 %v812, 4294901760
        %814 = vmatmul.mubr.f32.gmra.mxu0 %v813
        %v815 = vpop.f32.mrf.mxu0
        %v816 = vadd.f32 0.0, %v815
        %v817 = vpop.f32.mrf.mxu0
        %v818 = vadd.f32 0.0, %v817
        %819 = vmatprep.mubr.f32.mxu0 0.0
        %v820 = vand.u32 %v553, 4294901760
        %v821 = vsub.f32 %v553, %v820
        %v822 = vand.u32 %v821, 4294901760
        %v823 = vsub.f32 %v821, %v822
        %v824 = vand.u32 %v823, 4294901760
        %825 = vmatmul.mubr.f32.gmra.mxu0 %v824
        %v826 = vpop.f32.mrf.mxu0
        %v827 = vadd.f32 0.0, %v826
        %v828 = vpop.f32.mrf.mxu0
        %v829 = vadd.f32 0.0, %v828
        %830 = vmatprep.mubr.f32.mxu0 0.0
        %v831 = vand.u32 %v556, 4294901760
        %v832 = vsub.f32 %v556, %v831
        %v833 = vand.u32 %v832, 4294901760
        %v834 = vsub.f32 %v832, %v833
        %v835 = vand.u32 %v834, 4294901760
        %836 = vmatmul.mubr.f32.gmra.mxu0 %v835
        %v837 = vpop.f32.mrf.mxu0
        %v838 = vadd.f32 0.0, %v837
        %v839 = vpop.f32.mrf.mxu0
        %v840 = vadd.f32 0.0, %v839
        %841 = vmatprep.mubr.f32.mxu0 0.0
        %v842 = vand.u32 %v559, 4294901760
        %v843 = vsub.f32 %v559, %v842
        %v844 = vand.u32 %v843, 4294901760
        %v845 = vsub.f32 %v843, %v844
        %v846 = vand.u32 %v845, 4294901760
        %847 = vmatmul.mubr.f32.gmra.mxu0 %v846
        %v848 = vpop.f32.mrf.mxu0
        %v849 = vadd.f32 0.0, %v848
        %v850 = vpop.f32.mrf.mxu0
        %v851 = vadd.f32 0.0, %v850
        %852 = vdwg.mxu0
        %853 = vmatprep.subr.mxu0 0.0
        %v854 = vand.u32 %v591, 4294901760
        %v855 = vsub.f32 %v591, %v854
        %v856 = vand.u32 %v855, 4294901760
        %v857 = vsub.f32 %v855, %v856
        %v858 = vand.u32 %v857, 4294901760
        %859 = vmatpush1.xpose.msra.mxu0 %v858
        %860 = vmatprep.subr.mxu0 0.0
        %v861 = vand.u32 %v589, 4294901760
        %v862 = vsub.f32 %v589, %v861
        %v863 = vand.u32 %v862, 4294901760
        %v864 = vsub.f32 %v862, %v863
        %v865 = vand.u32 %v864, 4294901760
        %866 = vmatpush1.xpose.msra.mxu0 %v865
        %867 = vmatprep.subr.mxu0 0.0
        %v868 = vand.u32 %v587, 4294901760
        %v869 = vsub.f32 %v587, %v868
        %v870 = vand.u32 %v869, 4294901760
        %v871 = vsub.f32 %v869, %v870
        %v872 = vand.u32 %v871, 4294901760
        %873 = vmatpush1.xpose.msra.mxu0 %v872
        %874 = vmatprep.subr.mxu0 0.0
        %v875 = vand.u32 %v585, 4294901760
        %v876 = vsub.f32 %v585, %v875
        %v877 = vand.u32 %v876, 4294901760
        %v878 = vsub.f32 %v876, %v877
        %v879 = vand.u32 %v878, 4294901760
        %880 = vmatpush1.xpose.msra.mxu0 %v879
        %881 = vmatprep.subr.mxu0 0.0
        %v882 = vand.u32 %v583, 4294901760
        %v883 = vsub.f32 %v583, %v882
        %v884 = vand.u32 %v883, 4294901760
        %v885 = vsub.f32 %v883, %v884
        %v886 = vand.u32 %v885, 4294901760
        %887 = vmatpush1.xpose.msra.mxu0 %v886
        %888 = vmatprep.subr.mxu0 0.0
        %v889 = vand.u32 %v581, 4294901760
        %v890 = vsub.f32 %v581, %v889
        %v891 = vand.u32 %v890, 4294901760
        %v892 = vsub.f32 %v890, %v891
        %v893 = vand.u32 %v892, 4294901760
        %894 = vmatpush1.xpose.msra.mxu0 %v893
        %895 = vmatprep.subr.mxu0 0.0
        %v896 = vand.u32 %v579, 4294901760
        %v897 = vsub.f32 %v579, %v896
        %v898 = vand.u32 %v897, 4294901760
        %v899 = vsub.f32 %v897, %v898
        %v900 = vand.u32 %v899, 4294901760
        %901 = vmatpush1.xpose.msra.mxu0 %v900
        %902 = vmatprep.subr.mxu0 0.0
        %v903 = vand.u32 %v577, 4294901760
        %v904 = vsub.f32 %v577, %v903
        %v905 = vand.u32 %v904, 4294901760
        %v906 = vsub.f32 %v904, %v905
        %v907 = vand.u32 %v906, 4294901760
        %908 = vmatpush1.xpose.msra.mxu0 %v907
        %909 = vmatprep.subr.mxu0 0.0
        %v910 = vand.u32 %v575, 4294901760
        %v911 = vsub.f32 %v575, %v910
        %v912 = vand.u32 %v911, 4294901760
        %v913 = vsub.f32 %v911, %v912
        %v914 = vand.u32 %v913, 4294901760
        %915 = vmatpush1.xpose.msra.mxu0 %v914
        %916 = vmatprep.subr.mxu0 0.0
        %v917 = vand.u32 %v573, 4294901760
        %v918 = vsub.f32 %v573, %v917
        %v919 = vand.u32 %v918, 4294901760
        %v920 = vsub.f32 %v918, %v919
        %v921 = vand.u32 %v920, 4294901760
        %922 = vmatpush1.xpose.msra.mxu0 %v921
        %923 = vmatprep.subr.mxu0 0.0
        %v924 = vand.u32 %v571, 4294901760
        %v925 = vsub.f32 %v571, %v924
        %v926 = vand.u32 %v925, 4294901760
        %v927 = vsub.f32 %v925, %v926
        %v928 = vand.u32 %v927, 4294901760
        %929 = vmatpush1.xpose.msra.mxu0 %v928
        %930 = vmatprep.subr.mxu0 0.0
        %v931 = vand.u32 %v569, 4294901760
        %v932 = vsub.f32 %v569, %v931
        %v933 = vand.u32 %v932, 4294901760
        %v934 = vsub.f32 %v932, %v933
        %v935 = vand.u32 %v934, 4294901760
        %936 = vmatpush1.xpose.msra.mxu0 %v935
        %937 = vmatprep.subr.mxu0 0.0
        %v938 = vand.u32 %v567, 4294901760
        %v939 = vsub.f32 %v567, %v938
        %v940 = vand.u32 %v939, 4294901760
        %v941 = vsub.f32 %v939, %v940
        %v942 = vand.u32 %v941, 4294901760
        %943 = vmatpush1.xpose.msra.mxu0 %v942
        %944 = vmatprep.subr.mxu0 0.0
        %v945 = vand.u32 %v565, 4294901760
        %v946 = vsub.f32 %v565, %v945
        %v947 = vand.u32 %v946, 4294901760
        %v948 = vsub.f32 %v946, %v947
        %v949 = vand.u32 %v948, 4294901760
        %950 = vmatpush1.xpose.msra.mxu0 %v949
        %951 = vmatprep.subr.mxu0 0.0
        %v952 = vand.u32 %v563, 4294901760
        %v953 = vsub.f32 %v563, %v952
        %v954 = vand.u32 %v953, 4294901760
        %v955 = vsub.f32 %v953, %v954
        %v956 = vand.u32 %v955, 4294901760
        %957 = vmatpush1.xpose.msra.mxu0 %v956
        %958 = vmatprep.subr.mxu0 0.0
        %v959 = vand.u32 %v561, 4294901760
        %v960 = vsub.f32 %v561, %v959
        %v961 = vand.u32 %v960, 4294901760
        %v962 = vsub.f32 %v960, %v961
        %v963 = vand.u32 %v962, 4294901760
        %964 = vmatpush1.xpose.msra.mxu0 %v963
        %965 = vmatprep.subr.mxu0 0.0
        %v966 = vand.u32 %v623, 4294901760
        %v967 = vsub.f32 %v623, %v966
        %v968 = vand.u32 %v967, 4294901760
        %v969 = vsub.f32 %v967, %v968
        %v970 = vand.u32 %v969, 4294901760
        %971 = vmatpush2.xpose.msra.mxu0 %v970
        %972 = vmatprep.subr.mxu0 0.0
        %v973 = vand.u32 %v621, 4294901760
        %v974 = vsub.f32 %v621, %v973
        %v975 = vand.u32 %v974, 4294901760
        %v976 = vsub.f32 %v974, %v975
        %v977 = vand.u32 %v976, 4294901760
        %978 = vmatpush2.xpose.msra.mxu0 %v977
        %979 = vmatprep.subr.mxu0 0.0
        %v980 = vand.u32 %v619, 4294901760
        %v981 = vsub.f32 %v619, %v980
        %v982 = vand.u32 %v981, 4294901760
        %v983 = vsub.f32 %v981, %v982
        %v984 = vand.u32 %v983, 4294901760
        %985 = vmatpush2.xpose.msra.mxu0 %v984
        %986 = vmatprep.subr.mxu0 0.0
        %v987 = vand.u32 %v617, 4294901760
        %v988 = vsub.f32 %v617, %v987
        %v989 = vand.u32 %v988, 4294901760
        %v990 = vsub.f32 %v988, %v989
        %v991 = vand.u32 %v990, 4294901760
        %992 = vmatpush2.xpose.msra.mxu0 %v991
        %993 = vmatprep.subr.mxu0 0.0
        %v994 = vand.u32 %v615, 4294901760
        %v995 = vsub.f32 %v615, %v994
        %v996 = vand.u32 %v995, 4294901760
        %v997 = vsub.f32 %v995, %v996
        %v998 = vand.u32 %v997, 4294901760
        %999 = vmatpush2.xpose.msra.mxu0 %v998
        %1000 = vmatprep.subr.mxu0 0.0
        %v1001 = vand.u32 %v613, 4294901760
        %v1002 = vsub.f32 %v613, %v1001
        %v1003 = vand.u32 %v1002, 4294901760
        %v1004 = vsub.f32 %v1002, %v1003
        %v1005 = vand.u32 %v1004, 4294901760
        %1006 = vmatpush2.xpose.msra.mxu0 %v1005
        %1007 = vmatprep.subr.mxu0 0.0
        %v1008 = vand.u32 %v611, 4294901760
        %v1009 = vsub.f32 %v611, %v1008
        %v1010 = vand.u32 %v1009, 4294901760
        %v1011 = vsub.f32 %v1009, %v1010
        %v1012 = vand.u32 %v1011, 4294901760
        %1013 = vmatpush2.xpose.msra.mxu0 %v1012
        %1014 = vmatprep.subr.mxu0 0.0
        %v1015 = vand.u32 %v609, 4294901760
        %v1016 = vsub.f32 %v609, %v1015
        %v1017 = vand.u32 %v1016, 4294901760
        %v1018 = vsub.f32 %v1016, %v1017
        %v1019 = vand.u32 %v1018, 4294901760
        %1020 = vmatpush2.xpose.msra.mxu0 %v1019
        %1021 = vmatprep.subr.mxu0 0.0
        %v1022 = vand.u32 %v607, 4294901760
        %v1023 = vsub.f32 %v607, %v1022
        %v1024 = vand.u32 %v1023, 4294901760
        %v1025 = vsub.f32 %v1023, %v1024
        %v1026 = vand.u32 %v1025, 4294901760
        %1027 = vmatpush2.xpose.msra.mxu0 %v1026
        %1028 = vmatprep.subr.mxu0 0.0
        %v1029 = vand.u32 %v605, 4294901760
        %v1030 = vsub.f32 %v605, %v1029
        %v1031 = vand.u32 %v1030, 4294901760
        %v1032 = vsub.f32 %v1030, %v1031
        %v1033 = vand.u32 %v1032, 4294901760
        %1034 = vmatpush2.xpose.msra.mxu0 %v1033
        %1035 = vmatprep.subr.mxu0 0.0
        %v1036 = vand.u32 %v603, 4294901760
        %v1037 = vsub.f32 %v603, %v1036
        %v1038 = vand.u32 %v1037, 4294901760
        %v1039 = vsub.f32 %v1037, %v1038
        %v1040 = vand.u32 %v1039, 4294901760
        %1041 = vmatpush2.xpose.msra.mxu0 %v1040
        %1042 = vmatprep.subr.mxu0 0.0
        %v1043 = vand.u32 %v601, 4294901760
        %v1044 = vsub.f32 %v601, %v1043
        %v1045 = vand.u32 %v1044, 4294901760
        %v1046 = vsub.f32 %v1044, %v1045
        %v1047 = vand.u32 %v1046, 4294901760
        %1048 = vmatpush2.xpose.msra.mxu0 %v1047
        %1049 = vmatprep.subr.mxu0 0.0
        %v1050 = vand.u32 %v599, 4294901760
        %v1051 = vsub.f32 %v599, %v1050
        %v1052 = vand.u32 %v1051, 4294901760
        %v1053 = vsub.f32 %v1051, %v1052
        %v1054 = vand.u32 %v1053, 4294901760
        %1055 = vmatpush2.xpose.msra.mxu0 %v1054
        %1056 = vmatprep.subr.mxu0 0.0
        %v1057 = vand.u32 %v597, 4294901760
        %v1058 = vsub.f32 %v597, %v1057
        %v1059 = vand.u32 %v1058, 4294901760
        %v1060 = vsub.f32 %v1058, %v1059
        %v1061 = vand.u32 %v1060, 4294901760
        %1062 = vmatpush2.xpose.msra.mxu0 %v1061
        %1063 = vmatprep.subr.mxu0 0.0
        %v1064 = vand.u32 %v595, 4294901760
        %v1065 = vsub.f32 %v595, %v1064
        %v1066 = vand.u32 %v1065, 4294901760
        %v1067 = vsub.f32 %v1065, %v1066
        %v1068 = vand.u32 %v1067, 4294901760
        %1069 = vmatpush2.xpose.msra.mxu0 %v1068
        %1070 = vmatprep.subr.mxu0 0.0
        %v1071 = vand.u32 %v593, 4294901760
        %v1072 = vsub.f32 %v593, %v1071
        %v1073 = vand.u32 %v1072, 4294901760
        %v1074 = vsub.f32 %v1072, %v1073
        %v1075 = vand.u32 %v1074, 4294901760
        %1076 = vmatpush2.xpose.msra.mxu0 %v1075
        %1077 = vmatprep.mubr.f32.mxu0 0.0
        %v1078 = vand.u32 %v535, 4294901760
        %1079 = vmatmul.mubr.f32.gmra.mxu0 %v1078
        %v1080 = vpop.f32.mrf.mxu0
        %v1081 = vadd.f32 %v761, %v1080
        %v1082 = vpop.f32.mrf.mxu0
        %v1083 = vadd.f32 %v763, %v1082
        %1084 = vmatprep.mubr.f32.mxu0 0.0
        %v1085 = vand.u32 %v538, 4294901760
        %1086 = vmatmul.mubr.f32.gmra.mxu0 %v1085
        %v1087 = vpop.f32.mrf.mxu0
        %v1088 = vadd.f32 %v772, %v1087
        %v1089 = vpop.f32.mrf.mxu0
        %v1090 = vadd.f32 %v774, %v1089
        %1091 = vmatprep.mubr.f32.mxu0 0.0
        %v1092 = vand.u32 %v541, 4294901760
        %1093 = vmatmul.mubr.f32.gmra.mxu0 %v1092
        %v1094 = vpop.f32.mrf.mxu0
        %v1095 = vadd.f32 %v783, %v1094
        %v1096 = vpop.f32.mrf.mxu0
        %v1097 = vadd.f32 %v785, %v1096
        %1098 = vmatprep.mubr.f32.mxu0 0.0
        %v1099 = vand.u32 %v544, 4294901760
        %1100 = vmatmul.mubr.f32.gmra.mxu0 %v1099
        %v1101 = vpop.f32.mrf.mxu0
        %v1102 = vadd.f32 %v794, %v1101
        %v1103 = vpop.f32.mrf.mxu0
        %v1104 = vadd.f32 %v796, %v1103
        %1105 = vmatprep.mubr.f32.mxu0 0.0
        %v1106 = vand.u32 %v547, 4294901760
        %1107 = vmatmul.mubr.f32.gmra.mxu0 %v1106
        %v1108 = vpop.f32.mrf.mxu0
        %v1109 = vadd.f32 %v805, %v1108
        %v1110 = vpop.f32.mrf.mxu0
        %v1111 = vadd.f32 %v807, %v1110
        %1112 = vmatprep.mubr.f32.mxu0 0.0
        %v1113 = vand.u32 %v550, 4294901760
        %1114 = vmatmul.mubr.f32.gmra.mxu0 %v1113
        %v1115 = vpop.f32.mrf.mxu0
        %v1116 = vadd.f32 %v816, %v1115
        %v1117 = vpop.f32.mrf.mxu0
        %v1118 = vadd.f32 %v818, %v1117
        %1119 = vmatprep.mubr.f32.mxu0 0.0
        %v1120 = vand.u32 %v553, 4294901760
        %1121 = vmatmul.mubr.f32.gmra.mxu0 %v1120
        %v1122 = vpop.f32.mrf.mxu0
        %v1123 = vadd.f32 %v827, %v1122
        %v1124 = vpop.f32.mrf.mxu0
        %v1125 = vadd.f32 %v829, %v1124
        %1126 = vmatprep.mubr.f32.mxu0 0.0
        %v1127 = vand.u32 %v556, 4294901760
        %1128 = vmatmul.mubr.f32.gmra.mxu0 %v1127
        %v1129 = vpop.f32.mrf.mxu0
        %v1130 = vadd.f32 %v838, %v1129
        %v1131 = vpop.f32.mrf.mxu0
        %v1132 = vadd.f32 %v840, %v1131
        %1133 = vmatprep.mubr.f32.mxu0 0.0
        %v1134 = vand.u32 %v559, 4294901760
        %1135 = vmatmul.mubr.f32.gmra.mxu0 %v1134
        %v1136 = vpop.f32.mrf.mxu0
        %v1137 = vadd.f32 %v849, %v1136
        %v1138 = vpop.f32.mrf.mxu0
        %v1139 = vadd.f32 %v851, %v1138
        %1140 = vdwg.mxu0
        %1141 = vmatprep.subr.mxu0 0.0
        %v1142 = vand.u32 %v591, 4294901760
        %v1143 = vsub.f32 %v591, %v1142
        %1144 = vmatpush1.xpose.msra.mxu0 %v1143
        %1145 = vmatprep.subr.mxu0 0.0
        %v1146 = vand.u32 %v589, 4294901760
        %v1147 = vsub.f32 %v589, %v1146
        %1148 = vmatpush1.xpose.msra.mxu0 %v1147
        %1149 = vmatprep.subr.mxu0 0.0
        %v1150 = vand.u32 %v587, 4294901760
        %v1151 = vsub.f32 %v587, %v1150
        %1152 = vmatpush1.xpose.msra.mxu0 %v1151
        %1153 = vmatprep.subr.mxu0 0.0
        %v1154 = vand.u32 %v585, 4294901760
        %v1155 = vsub.f32 %v585, %v1154
        %1156 = vmatpush1.xpose.msra.mxu0 %v1155
        %1157 = vmatprep.subr.mxu0 0.0
        %v1158 = vand.u32 %v583, 4294901760
        %v1159 = vsub.f32 %v583, %v1158
        %1160 = vmatpush1.xpose.msra.mxu0 %v1159
        %1161 = vmatprep.subr.mxu0 0.0
        %v1162 = vand.u32 %v581, 4294901760
        %v1163 = vsub.f32 %v581, %v1162
        %1164 = vmatpush1.xpose.msra.mxu0 %v1163
        %1165 = vmatprep.subr.mxu0 0.0
        %v1166 = vand.u32 %v579, 4294901760
        %v1167 = vsub.f32 %v579, %v1166
        %1168 = vmatpush1.xpose.msra.mxu0 %v1167
        %1169 = vmatprep.subr.mxu0 0.0
        %v1170 = vand.u32 %v577, 4294901760
        %v1171 = vsub.f32 %v577, %v1170
        %1172 = vmatpush1.xpose.msra.mxu0 %v1171
        %1173 = vmatprep.subr.mxu0 0.0
        %v1174 = vand.u32 %v575, 4294901760
        %v1175 = vsub.f32 %v575, %v1174
        %1176 = vmatpush1.xpose.msra.mxu0 %v1175
        %1177 = vmatprep.subr.mxu0 0.0
        %v1178 = vand.u32 %v573, 4294901760
        %v1179 = vsub.f32 %v573, %v1178
        %1180 = vmatpush1.xpose.msra.mxu0 %v1179
        %1181 = vmatprep.subr.mxu0 0.0
        %v1182 = vand.u32 %v571, 4294901760
        %v1183 = vsub.f32 %v571, %v1182
        %1184 = vmatpush1.xpose.msra.mxu0 %v1183
        %1185 = vmatprep.subr.mxu0 0.0
        %v1186 = vand.u32 %v569, 4294901760
        %v1187 = vsub.f32 %v569, %v1186
        %1188 = vmatpush1.xpose.msra.mxu0 %v1187
        %1189 = vmatprep.subr.mxu0 0.0
        %v1190 = vand.u32 %v567, 4294901760
        %v1191 = vsub.f32 %v567, %v1190
        %1192 = vmatpush1.xpose.msra.mxu0 %v1191
        %1193 = vmatprep.subr.mxu0 0.0
        %v1194 = vand.u32 %v565, 4294901760
        %v1195 = vsub.f32 %v565, %v1194
        %1196 = vmatpush1.xpose.msra.mxu0 %v1195
        %1197 = vmatprep.subr.mxu0 0.0
        %v1198 = vand.u32 %v563, 4294901760
        %v1199 = vsub.f32 %v563, %v1198
        %1200 = vmatpush1.xpose.msra.mxu0 %v1199
        %1201 = vmatprep.subr.mxu0 0.0
        %v1202 = vand.u32 %v561, 4294901760
        %v1203 = vsub.f32 %v561, %v1202
        %1204 = vmatpush1.xpose.msra.mxu0 %v1203
        %1205 = vmatprep.subr.mxu0 0.0
        %v1206 = vand.u32 %v623, 4294901760
        %v1207 = vsub.f32 %v623, %v1206
        %1208 = vmatpush2.xpose.msra.mxu0 %v1207
        %1209 = vmatprep.subr.mxu0 0.0
        %v1210 = vand.u32 %v621, 4294901760
        %v1211 = vsub.f32 %v621, %v1210
        %1212 = vmatpush2.xpose.msra.mxu0 %v1211
        %1213 = vmatprep.subr.mxu0 0.0
        %v1214 = vand.u32 %v619, 4294901760
        %v1215 = vsub.f32 %v619, %v1214
        %1216 = vmatpush2.xpose.msra.mxu0 %v1215
        %1217 = vmatprep.subr.mxu0 0.0
        %v1218 = vand.u32 %v617, 4294901760
        %v1219 = vsub.f32 %v617, %v1218
        %1220 = vmatpush2.xpose.msra.mxu0 %v1219
        %1221 = vmatprep.subr.mxu0 0.0
        %v1222 = vand.u32 %v615, 4294901760
        %v1223 = vsub.f32 %v615, %v1222
        %1224 = vmatpush2.xpose.msra.mxu0 %v1223
        %1225 = vmatprep.subr.mxu0 0.0
        %v1226 = vand.u32 %v613, 4294901760
        %v1227 = vsub.f32 %v613, %v1226
        %1228 = vmatpush2.xpose.msra.mxu0 %v1227
        %1229 = vmatprep.subr.mxu0 0.0
        %v1230 = vand.u32 %v611, 4294901760
        %v1231 = vsub.f32 %v611, %v1230
        %1232 = vmatpush2.xpose.msra.mxu0 %v1231
        %1233 = vmatprep.subr.mxu0 0.0
        %v1234 = vand.u32 %v609, 4294901760
        %v1235 = vsub.f32 %v609, %v1234
        %1236 = vmatpush2.xpose.msra.mxu0 %v1235
        %1237 = vmatprep.subr.mxu0 0.0
        %v1238 = vand.u32 %v607, 4294901760
        %v1239 = vsub.f32 %v607, %v1238
        %1240 = vmatpush2.xpose.msra.mxu0 %v1239
        %1241 = vmatprep.subr.mxu0 0.0
        %v1242 = vand.u32 %v605, 4294901760
        %v1243 = vsub.f32 %v605, %v1242
        %1244 = vmatpush2.xpose.msra.mxu0 %v1243
        %1245 = vmatprep.subr.mxu0 0.0
        %v1246 = vand.u32 %v603, 4294901760
        %v1247 = vsub.f32 %v603, %v1246
        %1248 = vmatpush2.xpose.msra.mxu0 %v1247
        %1249 = vmatprep.subr.mxu0 0.0
        %v1250 = vand.u32 %v601, 4294901760
        %v1251 = vsub.f32 %v601, %v1250
        %1252 = vmatpush2.xpose.msra.mxu0 %v1251
        %1253 = vmatprep.subr.mxu0 0.0
        %v1254 = vand.u32 %v599, 4294901760
        %v1255 = vsub.f32 %v599, %v1254
        %1256 = vmatpush2.xpose.msra.mxu0 %v1255
        %1257 = vmatprep.subr.mxu0 0.0
        %v1258 = vand.u32 %v597, 4294901760
        %v1259 = vsub.f32 %v597, %v1258
        %1260 = vmatpush2.xpose.msra.mxu0 %v1259
        %1261 = vmatprep.subr.mxu0 0.0
        %v1262 = vand.u32 %v595, 4294901760
        %v1263 = vsub.f32 %v595, %v1262
        %1264 = vmatpush2.xpose.msra.mxu0 %v1263
        %1265 = vmatprep.subr.mxu0 0.0
        %v1266 = vand.u32 %v593, 4294901760
        %v1267 = vsub.f32 %v593, %v1266
        %1268 = vmatpush2.xpose.msra.mxu0 %v1267
        %1269 = vmatprep.mubr.f32.mxu0 0.0
        %v1270 = vand.u32 %v535, 4294901760
        %v1271 = vsub.f32 %v535, %v1270
        %1272 = vmatmul.mubr.f32.gmra.mxu0 %v1271
        %v1273 = vpop.f32.mrf.mxu0
        %v1274 = vadd.f32 %v1081, %v1273
        %v1275 = vpop.f32.mrf.mxu0
        %v1276 = vadd.f32 %v1083, %v1275
        %1277 = vmatprep.mubr.f32.mxu0 0.0
        %v1278 = vand.u32 %v538, 4294901760
        %v1279 = vsub.f32 %v538, %v1278
        %1280 = vmatmul.mubr.f32.gmra.mxu0 %v1279
        %v1281 = vpop.f32.mrf.mxu0
        %v1282 = vadd.f32 %v1088, %v1281
        %v1283 = vpop.f32.mrf.mxu0
        %v1284 = vadd.f32 %v1090, %v1283
        %1285 = vmatprep.mubr.f32.mxu0 0.0
        %v1286 = vand.u32 %v541, 4294901760
        %v1287 = vsub.f32 %v541, %v1286
        %1288 = vmatmul.mubr.f32.gmra.mxu0 %v1287
        %v1289 = vpop.f32.mrf.mxu0
        %v1290 = vadd.f32 %v1095, %v1289
        %v1291 = vpop.f32.mrf.mxu0
        %v1292 = vadd.f32 %v1097, %v1291
        %1293 = vmatprep.mubr.f32.mxu0 0.0
        %v1294 = vand.u32 %v544, 4294901760
        %v1295 = vsub.f32 %v544, %v1294
        %1296 = vmatmul.mubr.f32.gmra.mxu0 %v1295
        %v1297 = vpop.f32.mrf.mxu0
        %v1298 = vadd.f32 %v1102, %v1297
        %v1299 = vpop.f32.mrf.mxu0
        %v1300 = vadd.f32 %v1104, %v1299
        %1301 = vmatprep.mubr.f32.mxu0 0.0
        %v1302 = vand.u32 %v547, 4294901760
        %v1303 = vsub.f32 %v547, %v1302
        %1304 = vmatmul.mubr.f32.gmra.mxu0 %v1303
        %v1305 = vpop.f32.mrf.mxu0
        %v1306 = vadd.f32 %v1109, %v1305
        %v1307 = vpop.f32.mrf.mxu0
        %v1308 = vadd.f32 %v1111, %v1307
        %1309 = vmatprep.mubr.f32.mxu0 0.0
        %v1310 = vand.u32 %v550, 4294901760
        %v1311 = vsub.f32 %v550, %v1310
        %1312 = vmatmul.mubr.f32.gmra.mxu0 %v1311
        %v1313 = vpop.f32.mrf.mxu0
        %v1314 = vadd.f32 %v1116, %v1313
        %v1315 = vpop.f32.mrf.mxu0
        %v1316 = vadd.f32 %v1118, %v1315
        %1317 = vmatprep.mubr.f32.mxu0 0.0
        %v1318 = vand.u32 %v553, 4294901760
        %v1319 = vsub.f32 %v553, %v1318
        %1320 = vmatmul.mubr.f32.gmra.mxu0 %v1319
        %v1321 = vpop.f32.mrf.mxu0
        %v1322 = vadd.f32 %v1123, %v1321
        %v1323 = vpop.f32.mrf.mxu0
        %v1324 = vadd.f32 %v1125, %v1323
        %1325 = vmatprep.mubr.f32.mxu0 0.0
        %v1326 = vand.u32 %v556, 4294901760
        %v1327 = vsub.f32 %v556, %v1326
        %1328 = vmatmul.mubr.f32.gmra.mxu0 %v1327
        %v1329 = vpop.f32.mrf.mxu0
        %v1330 = vadd.f32 %v1130, %v1329
        %v1331 = vpop.f32.mrf.mxu0
        %v1332 = vadd.f32 %v1132, %v1331
        %1333 = vmatprep.mubr.f32.mxu0 0.0
        %v1334 = vand.u32 %v559, 4294901760
        %v1335 = vsub.f32 %v559, %v1334
        %1336 = vmatmul.mubr.f32.gmra.mxu0 %v1335
        %v1337 = vpop.f32.mrf.mxu0
        %v1338 = vadd.f32 %v1137, %v1337
        %v1339 = vpop.f32.mrf.mxu0
        %v1340 = vadd.f32 %v1139, %v1339
        %1341 = vdwg.mxu0
        %1342 = vmatprep.subr.mxu0 0.0
        %v1343 = vand.u32 %v591, 4294901760
        %1344 = vmatpush1.xpose.msra.mxu0 %v1343
        %1345 = vmatprep.subr.mxu0 0.0
        %v1346 = vand.u32 %v589, 4294901760
        %1347 = vmatpush1.xpose.msra.mxu0 %v1346
        %1348 = vmatprep.subr.mxu0 0.0
        %v1349 = vand.u32 %v587, 4294901760
        %1350 = vmatpush1.xpose.msra.mxu0 %v1349
        %1351 = vmatprep.subr.mxu0 0.0
        %v1352 = vand.u32 %v585, 4294901760
        %1353 = vmatpush1.xpose.msra.mxu0 %v1352
        %1354 = vmatprep.subr.mxu0 0.0
        %v1355 = vand.u32 %v583, 4294901760
        %1356 = vmatpush1.xpose.msra.mxu0 %v1355
        %1357 = vmatprep.subr.mxu0 0.0
        %v1358 = vand.u32 %v581, 4294901760
        %1359 = vmatpush1.xpose.msra.mxu0 %v1358
        %1360 = vmatprep.subr.mxu0 0.0
        %v1361 = vand.u32 %v579, 4294901760
        %1362 = vmatpush1.xpose.msra.mxu0 %v1361
        %1363 = vmatprep.subr.mxu0 0.0
        %v1364 = vand.u32 %v577, 4294901760
        %1365 = vmatpush1.xpose.msra.mxu0 %v1364
        %1366 = vmatprep.subr.mxu0 0.0
        %v1367 = vand.u32 %v575, 4294901760
        %1368 = vmatpush1.xpose.msra.mxu0 %v1367
        %1369 = vmatprep.subr.mxu0 0.0
        %v1370 = vand.u32 %v573, 4294901760
        %1371 = vmatpush1.xpose.msra.mxu0 %v1370
        %1372 = vmatprep.subr.mxu0 0.0
        %v1373 = vand.u32 %v571, 4294901760
        %1374 = vmatpush1.xpose.msra.mxu0 %v1373
        %1375 = vmatprep.subr.mxu0 0.0
        %v1376 = vand.u32 %v569, 4294901760
        %1377 = vmatpush1.xpose.msra.mxu0 %v1376
        %1378 = vmatprep.subr.mxu0 0.0
        %v1379 = vand.u32 %v567, 4294901760
        %1380 = vmatpush1.xpose.msra.mxu0 %v1379
        %1381 = vmatprep.subr.mxu0 0.0
        %v1382 = vand.u32 %v565, 4294901760
        %1383 = vmatpush1.xpose.msra.mxu0 %v1382
        %1384 = vmatprep.subr.mxu0 0.0
        %v1385 = vand.u32 %v563, 4294901760
        %1386 = vmatpush1.xpose.msra.mxu0 %v1385
        %1387 = vmatprep.subr.mxu0 0.0
        %v1388 = vand.u32 %v561, 4294901760
        %1389 = vmatpush1.xpose.msra.mxu0 %v1388
        %1390 = vmatprep.subr.mxu0 0.0
        %v1391 = vand.u32 %v623, 4294901760
        %1392 = vmatpush2.xpose.msra.mxu0 %v1391
        %1393 = vmatprep.subr.mxu0 0.0
        %v1394 = vand.u32 %v621, 4294901760
        %1395 = vmatpush2.xpose.msra.mxu0 %v1394
        %1396 = vmatprep.subr.mxu0 0.0
        %v1397 = vand.u32 %v619, 4294901760
        %1398 = vmatpush2.xpose.msra.mxu0 %v1397
        %1399 = vmatprep.subr.mxu0 0.0
        %v1400 = vand.u32 %v617, 4294901760
        %1401 = vmatpush2.xpose.msra.mxu0 %v1400
        %1402 = vmatprep.subr.mxu0 0.0
        %v1403 = vand.u32 %v615, 4294901760
        %1404 = vmatpush2.xpose.msra.mxu0 %v1403
        %1405 = vmatprep.subr.mxu0 0.0
        %v1406 = vand.u32 %v613, 4294901760
        %1407 = vmatpush2.xpose.msra.mxu0 %v1406
        %1408 = vmatprep.subr.mxu0 0.0
        %v1409 = vand.u32 %v611, 4294901760
        %1410 = vmatpush2.xpose.msra.mxu0 %v1409
        %1411 = vmatprep.subr.mxu0 0.0
        %v1412 = vand.u32 %v609, 4294901760
        %1413 = vmatpush2.xpose.msra.mxu0 %v1412
        %1414 = vmatprep.subr.mxu0 0.0
        %v1415 = vand.u32 %v607, 4294901760
        %1416 = vmatpush2.xpose.msra.mxu0 %v1415
        %1417 = vmatprep.subr.mxu0 0.0
        %v1418 = vand.u32 %v605, 4294901760
        %1419 = vmatpush2.xpose.msra.mxu0 %v1418
        %1420 = vmatprep.subr.mxu0 0.0
        %v1421 = vand.u32 %v603, 4294901760
        %1422 = vmatpush2.xpose.msra.mxu0 %v1421
        %1423 = vmatprep.subr.mxu0 0.0
        %v1424 = vand.u32 %v601, 4294901760
        %1425 = vmatpush2.xpose.msra.mxu0 %v1424
        %1426 = vmatprep.subr.mxu0 0.0
        %v1427 = vand.u32 %v599, 4294901760
        %1428 = vmatpush2.xpose.msra.mxu0 %v1427
        %1429 = vmatprep.subr.mxu0 0.0
        %v1430 = vand.u32 %v597, 4294901760
        %1431 = vmatpush2.xpose.msra.mxu0 %v1430
        %1432 = vmatprep.subr.mxu0 0.0
        %v1433 = vand.u32 %v595, 4294901760
        %1434 = vmatpush2.xpose.msra.mxu0 %v1433
        %1435 = vmatprep.subr.mxu0 0.0
        %v1436 = vand.u32 %v593, 4294901760
        %1437 = vmatpush2.xpose.msra.mxu0 %v1436
        %1438 = vmatprep.mubr.f32.mxu0 0.0
        %v1439 = vand.u32 %v535, 4294901760
        %v1440 = vsub.f32 %v535, %v1439
        %v1441 = vand.u32 %v1440, 4294901760
        %1442 = vmatmul.mubr.f32.gmra.mxu0 %v1441
        %v1443 = vpop.f32.mrf.mxu0
        %v1444 = vadd.f32 %v1274, %v1443
        %v1445 = vpop.f32.mrf.mxu0
        %v1446 = vadd.f32 %v1276, %v1445
        %1447 = vmatprep.mubr.f32.mxu0 0.0
        %v1448 = vand.u32 %v538, 4294901760
        %v1449 = vsub.f32 %v538, %v1448
        %v1450 = vand.u32 %v1449, 4294901760
        %1451 = vmatmul.mubr.f32.gmra.mxu0 %v1450
        %v1452 = vpop.f32.mrf.mxu0
        %v1453 = vadd.f32 %v1282, %v1452
        %v1454 = vpop.f32.mrf.mxu0
        %v1455 = vadd.f32 %v1284, %v1454
        %1456 = vmatprep.mubr.f32.mxu0 0.0
        %v1457 = vand.u32 %v541, 4294901760
        %v1458 = vsub.f32 %v541, %v1457
        %v1459 = vand.u32 %v1458, 4294901760
        %1460 = vmatmul.mubr.f32.gmra.mxu0 %v1459
        %v1461 = vpop.f32.mrf.mxu0
        %v1462 = vadd.f32 %v1290, %v1461
        %v1463 = vpop.f32.mrf.mxu0
        %v1464 = vadd.f32 %v1292, %v1463
        %1465 = vmatprep.mubr.f32.mxu0 0.0
        %v1466 = vand.u32 %v544, 4294901760
        %v1467 = vsub.f32 %v544, %v1466
        %v1468 = vand.u32 %v1467, 4294901760
        %1469 = vmatmul.mubr.f32.gmra.mxu0 %v1468
        %v1470 = vpop.f32.mrf.mxu0
        %v1471 = vadd.f32 %v1298, %v1470
        %v1472 = vpop.f32.mrf.mxu0
        %v1473 = vadd.f32 %v1300, %v1472
        %1474 = vmatprep.mubr.f32.mxu0 0.0
        %v1475 = vand.u32 %v547, 4294901760
        %v1476 = vsub.f32 %v547, %v1475
        %v1477 = vand.u32 %v1476, 4294901760
        %1478 = vmatmul.mubr.f32.gmra.mxu0 %v1477
        %v1479 = vpop.f32.mrf.mxu0
        %v1480 = vadd.f32 %v1306, %v1479
        %v1481 = vpop.f32.mrf.mxu0
        %v1482 = vadd.f32 %v1308, %v1481
        %1483 = vmatprep.mubr.f32.mxu0 0.0
        %v1484 = vand.u32 %v550, 4294901760
        %v1485 = vsub.f32 %v550, %v1484
        %v1486 = vand.u32 %v1485, 4294901760
        %1487 = vmatmul.mubr.f32.gmra.mxu0 %v1486
        %v1488 = vpop.f32.mrf.mxu0
        %v1489 = vadd.f32 %v1314, %v1488
        %v1490 = vpop.f32.mrf.mxu0
        %v1491 = vadd.f32 %v1316, %v1490
        %1492 = vmatprep.mubr.f32.mxu0 0.0
        %v1493 = vand.u32 %v553, 4294901760
        %v1494 = vsub.f32 %v553, %v1493
        %v1495 = vand.u32 %v1494, 4294901760
        %1496 = vmatmul.mubr.f32.gmra.mxu0 %v1495
        %v1497 = vpop.f32.mrf.mxu0
        %v1498 = vadd.f32 %v1322, %v1497
        %v1499 = vpop.f32.mrf.mxu0
        %v1500 = vadd.f32 %v1324, %v1499
        %1501 = vmatprep.mubr.f32.mxu0 0.0
        %v1502 = vand.u32 %v556, 4294901760
        %v1503 = vsub.f32 %v556, %v1502
        %v1504 = vand.u32 %v1503, 4294901760
        %1505 = vmatmul.mubr.f32.gmra.mxu0 %v1504
        %v1506 = vpop.f32.mrf.mxu0
        %v1507 = vadd.f32 %v1330, %v1506
        %v1508 = vpop.f32.mrf.mxu0
        %v1509 = vadd.f32 %v1332, %v1508
        %1510 = vmatprep.mubr.f32.mxu0 0.0
        %v1511 = vand.u32 %v559, 4294901760
        %v1512 = vsub.f32 %v559, %v1511
        %v1513 = vand.u32 %v1512, 4294901760
        %1514 = vmatmul.mubr.f32.gmra.mxu0 %v1513
        %v1515 = vpop.f32.mrf.mxu0
        %v1516 = vadd.f32 %v1338, %v1515
        %v1517 = vpop.f32.mrf.mxu0
        %v1518 = vadd.f32 %v1340, %v1517
        %1519 = vdwg.mxu0
        %1520 = vmatprep.subr.mxu0 0.0
        %v1521 = vand.u32 %v591, 4294901760
        %v1522 = vsub.f32 %v591, %v1521
        %v1523 = vand.u32 %v1522, 4294901760
        %1524 = vmatpush1.xpose.msra.mxu0 %v1523
        %1525 = vmatprep.subr.mxu0 0.0
        %v1526 = vand.u32 %v589, 4294901760
        %v1527 = vsub.f32 %v589, %v1526
        %v1528 = vand.u32 %v1527, 4294901760
        %1529 = vmatpush1.xpose.msra.mxu0 %v1528
        %1530 = vmatprep.subr.mxu0 0.0
        %v1531 = vand.u32 %v587, 4294901760
        %v1532 = vsub.f32 %v587, %v1531
        %v1533 = vand.u32 %v1532, 4294901760
        %1534 = vmatpush1.xpose.msra.mxu0 %v1533
        %1535 = vmatprep.subr.mxu0 0.0
        %v1536 = vand.u32 %v585, 4294901760
        %v1537 = vsub.f32 %v585, %v1536
        %v1538 = vand.u32 %v1537, 4294901760
        %1539 = vmatpush1.xpose.msra.mxu0 %v1538
        %1540 = vmatprep.subr.mxu0 0.0
        %v1541 = vand.u32 %v583, 4294901760
        %v1542 = vsub.f32 %v583, %v1541
        %v1543 = vand.u32 %v1542, 4294901760
        %1544 = vmatpush1.xpose.msra.mxu0 %v1543
        %1545 = vmatprep.subr.mxu0 0.0
        %v1546 = vand.u32 %v581, 4294901760
        %v1547 = vsub.f32 %v581, %v1546
        %v1548 = vand.u32 %v1547, 4294901760
        %1549 = vmatpush1.xpose.msra.mxu0 %v1548
        %1550 = vmatprep.subr.mxu0 0.0
        %v1551 = vand.u32 %v579, 4294901760
        %v1552 = vsub.f32 %v579, %v1551
        %v1553 = vand.u32 %v1552, 4294901760
        %1554 = vmatpush1.xpose.msra.mxu0 %v1553
        %1555 = vmatprep.subr.mxu0 0.0
        %v1556 = vand.u32 %v577, 4294901760
        %v1557 = vsub.f32 %v577, %v1556
        %v1558 = vand.u32 %v1557, 4294901760
        %1559 = vmatpush1.xpose.msra.mxu0 %v1558
        %1560 = vmatprep.subr.mxu0 0.0
        %v1561 = vand.u32 %v575, 4294901760
        %v1562 = vsub.f32 %v575, %v1561
        %v1563 = vand.u32 %v1562, 4294901760
        %1564 = vmatpush1.xpose.msra.mxu0 %v1563
        %1565 = vmatprep.subr.mxu0 0.0
        %v1566 = vand.u32 %v573, 4294901760
        %v1567 = vsub.f32 %v573, %v1566
        %v1568 = vand.u32 %v1567, 4294901760
        %1569 = vmatpush1.xpose.msra.mxu0 %v1568
        %1570 = vmatprep.subr.mxu0 0.0
        %v1571 = vand.u32 %v571, 4294901760
        %v1572 = vsub.f32 %v571, %v1571
        %v1573 = vand.u32 %v1572, 4294901760
        %1574 = vmatpush1.xpose.msra.mxu0 %v1573
        %1575 = vmatprep.subr.mxu0 0.0
        %v1576 = vand.u32 %v569, 4294901760
        %v1577 = vsub.f32 %v569, %v1576
        %v1578 = vand.u32 %v1577, 4294901760
        %1579 = vmatpush1.xpose.msra.mxu0 %v1578
        %1580 = vmatprep.subr.mxu0 0.0
        %v1581 = vand.u32 %v567, 4294901760
        %v1582 = vsub.f32 %v567, %v1581
        %v1583 = vand.u32 %v1582, 4294901760
        %1584 = vmatpush1.xpose.msra.mxu0 %v1583
        %1585 = vmatprep.subr.mxu0 0.0
        %v1586 = vand.u32 %v565, 4294901760
        %v1587 = vsub.f32 %v565, %v1586
        %v1588 = vand.u32 %v1587, 4294901760
        %1589 = vmatpush1.xpose.msra.mxu0 %v1588
        %1590 = vmatprep.subr.mxu0 0.0
        %v1591 = vand.u32 %v563, 4294901760
        %v1592 = vsub.f32 %v563, %v1591
        %v1593 = vand.u32 %v1592, 4294901760
        %1594 = vmatpush1.xpose.msra.mxu0 %v1593
        %1595 = vmatprep.subr.mxu0 0.0
        %v1596 = vand.u32 %v561, 4294901760
        %v1597 = vsub.f32 %v561, %v1596
        %v1598 = vand.u32 %v1597, 4294901760
        %1599 = vmatpush1.xpose.msra.mxu0 %v1598
        %1600 = vmatprep.subr.mxu0 0.0
        %v1601 = vand.u32 %v623, 4294901760
        %v1602 = vsub.f32 %v623, %v1601
        %v1603 = vand.u32 %v1602, 4294901760
        %1604 = vmatpush2.xpose.msra.mxu0 %v1603
        %1605 = vmatprep.subr.mxu0 0.0
        %v1606 = vand.u32 %v621, 4294901760
        %v1607 = vsub.f32 %v621, %v1606
        %v1608 = vand.u32 %v1607, 4294901760
        %1609 = vmatpush2.xpose.msra.mxu0 %v1608
        %1610 = vmatprep.subr.mxu0 0.0
        %v1611 = vand.u32 %v619, 4294901760
        %v1612 = vsub.f32 %v619, %v1611
        %v1613 = vand.u32 %v1612, 4294901760
        %1614 = vmatpush2.xpose.msra.mxu0 %v1613
        %1615 = vmatprep.subr.mxu0 0.0
        %v1616 = vand.u32 %v617, 4294901760
        %v1617 = vsub.f32 %v617, %v1616
        %v1618 = vand.u32 %v1617, 4294901760
        %1619 = vmatpush2.xpose.msra.mxu0 %v1618
        %1620 = vmatprep.subr.mxu0 0.0
        %v1621 = vand.u32 %v615, 4294901760
        %v1622 = vsub.f32 %v615, %v1621
        %v1623 = vand.u32 %v1622, 4294901760
        %1624 = vmatpush2.xpose.msra.mxu0 %v1623
        %1625 = vmatprep.subr.mxu0 0.0
        %v1626 = vand.u32 %v613, 4294901760
        %v1627 = vsub.f32 %v613, %v1626
        %v1628 = vand.u32 %v1627, 4294901760
        %1629 = vmatpush2.xpose.msra.mxu0 %v1628
        %1630 = vmatprep.subr.mxu0 0.0
        %v1631 = vand.u32 %v611, 4294901760
        %v1632 = vsub.f32 %v611, %v1631
        %v1633 = vand.u32 %v1632, 4294901760
        %1634 = vmatpush2.xpose.msra.mxu0 %v1633
        %1635 = vmatprep.subr.mxu0 0.0
        %v1636 = vand.u32 %v609, 4294901760
        %v1637 = vsub.f32 %v609, %v1636
        %v1638 = vand.u32 %v1637, 4294901760
        %1639 = vmatpush2.xpose.msra.mxu0 %v1638
        %1640 = vmatprep.subr.mxu0 0.0
        %v1641 = vand.u32 %v607, 4294901760
        %v1642 = vsub.f32 %v607, %v1641
        %v1643 = vand.u32 %v1642, 4294901760
        %1644 = vmatpush2.xpose.msra.mxu0 %v1643
        %1645 = vmatprep.subr.mxu0 0.0
        %v1646 = vand.u32 %v605, 4294901760
        %v1647 = vsub.f32 %v605, %v1646
        %v1648 = vand.u32 %v1647, 4294901760
        %1649 = vmatpush2.xpose.msra.mxu0 %v1648
        %1650 = vmatprep.subr.mxu0 0.0
        %v1651 = vand.u32 %v603, 4294901760
        %v1652 = vsub.f32 %v603, %v1651
        %v1653 = vand.u32 %v1652, 4294901760
        %1654 = vmatpush2.xpose.msra.mxu0 %v1653
        %1655 = vmatprep.subr.mxu0 0.0
        %v1656 = vand.u32 %v601, 4294901760
        %v1657 = vsub.f32 %v601, %v1656
        %v1658 = vand.u32 %v1657, 4294901760
        %1659 = vmatpush2.xpose.msra.mxu0 %v1658
        %1660 = vmatprep.subr.mxu0 0.0
        %v1661 = vand.u32 %v599, 4294901760
        %v1662 = vsub.f32 %v599, %v1661
        %v1663 = vand.u32 %v1662, 4294901760
        %1664 = vmatpush2.xpose.msra.mxu0 %v1663
        %1665 = vmatprep.subr.mxu0 0.0
        %v1666 = vand.u32 %v597, 4294901760
        %v1667 = vsub.f32 %v597, %v1666
        %v1668 = vand.u32 %v1667, 4294901760
        %1669 = vmatpush2.xpose.msra.mxu0 %v1668
        %1670 = vmatprep.subr.mxu0 0.0
        %v1671 = vand.u32 %v595, 4294901760
        %v1672 = vsub.f32 %v595, %v1671
        %v1673 = vand.u32 %v1672, 4294901760
        %1674 = vmatpush2.xpose.msra.mxu0 %v1673
        %1675 = vmatprep.subr.mxu0 0.0
        %v1676 = vand.u32 %v593, 4294901760
        %v1677 = vsub.f32 %v593, %v1676
        %v1678 = vand.u32 %v1677, 4294901760
        %1679 = vmatpush2.xpose.msra.mxu0 %v1678
        %1680 = vmatprep.mubr.f32.mxu0 0.0
        %v1681 = vand.u32 %v535, 4294901760
        %1682 = vmatmul.mubr.f32.gmra.mxu0 %v1681
        %v1683 = vpop.f32.mrf.mxu0
        %v1684 = vadd.f32 %v1444, %v1683
        %v1685 = vpop.f32.mrf.mxu0
        %v1686 = vadd.f32 %v1446, %v1685
        %1687 = vmatprep.mubr.f32.mxu0 0.0
        %v1688 = vand.u32 %v538, 4294901760
        %1689 = vmatmul.mubr.f32.gmra.mxu0 %v1688
        %v1690 = vpop.f32.mrf.mxu0
        %v1691 = vadd.f32 %v1453, %v1690
        %v1692 = vpop.f32.mrf.mxu0
        %v1693 = vadd.f32 %v1455, %v1692
        %1694 = vmatprep.mubr.f32.mxu0 0.0
        %v1695 = vand.u32 %v541, 4294901760
        %1696 = vmatmul.mubr.f32.gmra.mxu0 %v1695
        %v1697 = vpop.f32.mrf.mxu0
        %v1698 = vadd.f32 %v1462, %v1697
        %v1699 = vpop.f32.mrf.mxu0
        %v1700 = vadd.f32 %v1464, %v1699
        %1701 = vmatprep.mubr.f32.mxu0 0.0
        %v1702 = vand.u32 %v544, 4294901760
        %1703 = vmatmul.mubr.f32.gmra.mxu0 %v1702
        %v1704 = vpop.f32.mrf.mxu0
        %v1705 = vadd.f32 %v1471, %v1704
        %v1706 = vpop.f32.mrf.mxu0
        %v1707 = vadd.f32 %v1473, %v1706
        %1708 = vmatprep.mubr.f32.mxu0 0.0
        %v1709 = vand.u32 %v547, 4294901760
        %1710 = vmatmul.mubr.f32.gmra.mxu0 %v1709
        %v1711 = vpop.f32.mrf.mxu0
        %v1712 = vadd.f32 %v1480, %v1711
        %v1713 = vpop.f32.mrf.mxu0
        %v1714 = vadd.f32 %v1482, %v1713
        %1715 = vmatprep.mubr.f32.mxu0 0.0
        %v1716 = vand.u32 %v550, 4294901760
        %1717 = vmatmul.mubr.f32.gmra.mxu0 %v1716
        %v1718 = vpop.f32.mrf.mxu0
        %v1719 = vadd.f32 %v1489, %v1718
        %v1720 = vpop.f32.mrf.mxu0
        %v1721 = vadd.f32 %v1491, %v1720
        %1722 = vmatprep.mubr.f32.mxu0 0.0
        %v1723 = vand.u32 %v553, 4294901760
        %1724 = vmatmul.mubr.f32.gmra.mxu0 %v1723
        %v1725 = vpop.f32.mrf.mxu0
        %v1726 = vadd.f32 %v1498, %v1725
        %v1727 = vpop.f32.mrf.mxu0
        %v1728 = vadd.f32 %v1500, %v1727
        %1729 = vmatprep.mubr.f32.mxu0 0.0
        %v1730 = vand.u32 %v556, 4294901760
        %1731 = vmatmul.mubr.f32.gmra.mxu0 %v1730
        %v1732 = vpop.f32.mrf.mxu0
        %v1733 = vadd.f32 %v1507, %v1732
        %v1734 = vpop.f32.mrf.mxu0
        %v1735 = vadd.f32 %v1509, %v1734
        %1736 = vmatprep.mubr.f32.mxu0 0.0
        %v1737 = vand.u32 %v559, 4294901760
        %1738 = vmatmul.mubr.f32.gmra.mxu0 %v1737
        %v1739 = vpop.f32.mrf.mxu0
        %v1740 = vadd.f32 %v1516, %v1739
        %v1741 = vpop.f32.mrf.mxu0
        %v1742 = vadd.f32 %v1518, %v1741
        %1743 = vdwg.mxu0
        %1744 = vmatprep.subr.mxu0 0.0
        %v1745 = vand.u32 %v591, 4294901760
        %1746 = vmatpush1.xpose.msra.mxu0 %v1745
        %1747 = vmatprep.subr.mxu0 0.0
        %v1748 = vand.u32 %v589, 4294901760
        %1749 = vmatpush1.xpose.msra.mxu0 %v1748
        %1750 = vmatprep.subr.mxu0 0.0
        %v1751 = vand.u32 %v587, 4294901760
        %1752 = vmatpush1.xpose.msra.mxu0 %v1751
        %1753 = vmatprep.subr.mxu0 0.0
        %v1754 = vand.u32 %v585, 4294901760
        %1755 = vmatpush1.xpose.msra.mxu0 %v1754
        %1756 = vmatprep.subr.mxu0 0.0
        %v1757 = vand.u32 %v583, 4294901760
        %1758 = vmatpush1.xpose.msra.mxu0 %v1757
        %1759 = vmatprep.subr.mxu0 0.0
        %v1760 = vand.u32 %v581, 4294901760
        %1761 = vmatpush1.xpose.msra.mxu0 %v1760
        %1762 = vmatprep.subr.mxu0 0.0
        %v1763 = vand.u32 %v579, 4294901760
        %1764 = vmatpush1.xpose.msra.mxu0 %v1763
        %1765 = vmatprep.subr.mxu0 0.0
        %v1766 = vand.u32 %v577, 4294901760
        %1767 = vmatpush1.xpose.msra.mxu0 %v1766
        %1768 = vmatprep.subr.mxu0 0.0
        %v1769 = vand.u32 %v575, 4294901760
        %1770 = vmatpush1.xpose.msra.mxu0 %v1769
        %1771 = vmatprep.subr.mxu0 0.0
        %v1772 = vand.u32 %v573, 4294901760
        %1773 = vmatpush1.xpose.msra.mxu0 %v1772
        %1774 = vmatprep.subr.mxu0 0.0
        %v1775 = vand.u32 %v571, 4294901760
        %1776 = vmatpush1.xpose.msra.mxu0 %v1775
        %1777 = vmatprep.subr.mxu0 0.0
        %v1778 = vand.u32 %v569, 4294901760
        %1779 = vmatpush1.xpose.msra.mxu0 %v1778
        %1780 = vmatprep.subr.mxu0 0.0
        %v1781 = vand.u32 %v567, 4294901760
        %1782 = vmatpush1.xpose.msra.mxu0 %v1781
        %1783 = vmatprep.subr.mxu0 0.0
        %v1784 = vand.u32 %v565, 4294901760
        %1785 = vmatpush1.xpose.msra.mxu0 %v1784
        %1786 = vmatprep.subr.mxu0 0.0
        %v1787 = vand.u32 %v563, 4294901760
        %1788 = vmatpush1.xpose.msra.mxu0 %v1787
        %1789 = vmatprep.subr.mxu0 0.0
        %v1790 = vand.u32 %v561, 4294901760
        %1791 = vmatpush1.xpose.msra.mxu0 %v1790
        %1792 = vmatprep.subr.mxu0 0.0
        %v1793 = vand.u32 %v623, 4294901760
        %1794 = vmatpush2.xpose.msra.mxu0 %v1793
        %1795 = vmatprep.subr.mxu0 0.0
        %v1796 = vand.u32 %v621, 4294901760
        %1797 = vmatpush2.xpose.msra.mxu0 %v1796
        %1798 = vmatprep.subr.mxu0 0.0
        %v1799 = vand.u32 %v619, 4294901760
        %1800 = vmatpush2.xpose.msra.mxu0 %v1799
        %1801 = vmatprep.subr.mxu0 0.0
        %v1802 = vand.u32 %v617, 4294901760
        %1803 = vmatpush2.xpose.msra.mxu0 %v1802
        %1804 = vmatprep.subr.mxu0 0.0
        %v1805 = vand.u32 %v615, 4294901760
        %1806 = vmatpush2.xpose.msra.mxu0 %v1805
        %1807 = vmatprep.subr.mxu0 0.0
        %v1808 = vand.u32 %v613, 4294901760
        %1809 = vmatpush2.xpose.msra.mxu0 %v1808
        %1810 = vmatprep.subr.mxu0 0.0
        %v1811 = vand.u32 %v611, 4294901760
        %1812 = vmatpush2.xpose.msra.mxu0 %v1811
        %1813 = vmatprep.subr.mxu0 0.0
        %v1814 = vand.u32 %v609, 4294901760
        %1815 = vmatpush2.xpose.msra.mxu0 %v1814
        %1816 = vmatprep.subr.mxu0 0.0
        %v1817 = vand.u32 %v607, 4294901760
        %1818 = vmatpush2.xpose.msra.mxu0 %v1817
        %1819 = vmatprep.subr.mxu0 0.0
        %v1820 = vand.u32 %v605, 4294901760
        %1821 = vmatpush2.xpose.msra.mxu0 %v1820
        %1822 = vmatprep.subr.mxu0 0.0
        %v1823 = vand.u32 %v603, 4294901760
        %1824 = vmatpush2.xpose.msra.mxu0 %v1823
        %1825 = vmatprep.subr.mxu0 0.0
        %v1826 = vand.u32 %v601, 4294901760
        %1827 = vmatpush2.xpose.msra.mxu0 %v1826
        %1828 = vmatprep.subr.mxu0 0.0
        %v1829 = vand.u32 %v599, 4294901760
        %1830 = vmatpush2.xpose.msra.mxu0 %v1829
        %1831 = vmatprep.subr.mxu0 0.0
        %v1832 = vand.u32 %v597, 4294901760
        %1833 = vmatpush2.xpose.msra.mxu0 %v1832
        %1834 = vmatprep.subr.mxu0 0.0
        %v1835 = vand.u32 %v595, 4294901760
        %1836 = vmatpush2.xpose.msra.mxu0 %v1835
        %1837 = vmatprep.subr.mxu0 0.0
        %v1838 = vand.u32 %v593, 4294901760
        %1839 = vmatpush2.xpose.msra.mxu0 %v1838
        %1840 = vmatprep.mubr.f32.mxu0 0.0
        %v1841 = vand.u32 %v535, 4294901760
        %1842 = vmatmul.mubr.f32.gmra.mxu0 %v1841
        %v1843 = vpop.f32.mrf.mxu0
        %v1844 = vadd.f32 %v1684, %v1843
        %v1845 = vpop.f32.mrf.mxu0
        %v1846 = vadd.f32 %v1686, %v1845
        %1847 = vmatprep.mubr.f32.mxu0 0.0
        %v1848 = vand.u32 %v538, 4294901760
        %1849 = vmatmul.mubr.f32.gmra.mxu0 %v1848
        %v1850 = vpop.f32.mrf.mxu0
        %v1851 = vadd.f32 %v1691, %v1850
        %v1852 = vpop.f32.mrf.mxu0
        %v1853 = vadd.f32 %v1693, %v1852
        %1854 = vmatprep.mubr.f32.mxu0 0.0
        %v1855 = vand.u32 %v541, 4294901760
        %1856 = vmatmul.mubr.f32.gmra.mxu0 %v1855
        %v1857 = vpop.f32.mrf.mxu0
        %v1858 = vadd.f32 %v1698, %v1857
        %v1859 = vpop.f32.mrf.mxu0
        %v1860 = vadd.f32 %v1700, %v1859
        %1861 = vmatprep.mubr.f32.mxu0 0.0
        %v1862 = vand.u32 %v544, 4294901760
        %1863 = vmatmul.mubr.f32.gmra.mxu0 %v1862
        %v1864 = vpop.f32.mrf.mxu0
        %v1865 = vadd.f32 %v1705, %v1864
        %v1866 = vpop.f32.mrf.mxu0
        %v1867 = vadd.f32 %v1707, %v1866
        %1868 = vmatprep.mubr.f32.mxu0 0.0
        %v1869 = vand.u32 %v547, 4294901760
        %1870 = vmatmul.mubr.f32.gmra.mxu0 %v1869
        %v1871 = vpop.f32.mrf.mxu0
        %v1872 = vadd.f32 %v1712, %v1871
        %v1873 = vpop.f32.mrf.mxu0
        %v1874 = vadd.f32 %v1714, %v1873
        %1875 = vmatprep.mubr.f32.mxu0 0.0
        %v1876 = vand.u32 %v550, 4294901760
        %1877 = vmatmul.mubr.f32.gmra.mxu0 %v1876
        %v1878 = vpop.f32.mrf.mxu0
        %v1879 = vadd.f32 %v1719, %v1878
        %v1880 = vpop.f32.mrf.mxu0
        %v1881 = vadd.f32 %v1721, %v1880
        %1882 = vmatprep.mubr.f32.mxu0 0.0
        %v1883 = vand.u32 %v553, 4294901760
        %1884 = vmatmul.mubr.f32.gmra.mxu0 %v1883
        %v1885 = vpop.f32.mrf.mxu0
        %v1886 = vadd.f32 %v1726, %v1885
        %v1887 = vpop.f32.mrf.mxu0
        %v1888 = vadd.f32 %v1728, %v1887
        %1889 = vmatprep.mubr.f32.mxu0 0.0
        %v1890 = vand.u32 %v556, 4294901760
        %1891 = vmatmul.mubr.f32.gmra.mxu0 %v1890
        %v1892 = vpop.f32.mrf.mxu0
        %v1893 = vadd.f32 %v1733, %v1892
        %v1894 = vpop.f32.mrf.mxu0
        %v1895 = vadd.f32 %v1735, %v1894
        %1896 = vmatprep.mubr.f32.mxu0 0.0
        %v1897 = vand.u32 %v559, 4294901760
        %1898 = vmatmul.mubr.f32.gmra.mxu0 %v1897
        %v1899 = vpop.f32.mrf.mxu0
        %v1900 = vadd.f32 %v1740, %v1899
        %v1901 = vpop.f32.mrf.mxu0
        %v1902 = vadd.f32 %v1742, %v1901
        %1903 = vdwg.mxu0
        %1904 = vmatprep.subr.mxu0 0.0
        %v1905 = vand.u32 %v655, 4294901760
        %1906 = vmatpush1.xpose.msra.mxu0 %v1905
        %1907 = vmatprep.subr.mxu0 0.0
        %v1908 = vand.u32 %v653, 4294901760
        %1909 = vmatpush1.xpose.msra.mxu0 %v1908
        %1910 = vmatprep.subr.mxu0 0.0
        %v1911 = vand.u32 %v651, 4294901760
        %1912 = vmatpush1.xpose.msra.mxu0 %v1911
        %1913 = vmatprep.subr.mxu0 0.0
        %v1914 = vand.u32 %v649, 4294901760
        %1915 = vmatpush1.xpose.msra.mxu0 %v1914
        %1916 = vmatprep.subr.mxu0 0.0
        %v1917 = vand.u32 %v647, 4294901760
        %1918 = vmatpush1.xpose.msra.mxu0 %v1917
        %1919 = vmatprep.subr.mxu0 0.0
        %v1920 = vand.u32 %v645, 4294901760
        %1921 = vmatpush1.xpose.msra.mxu0 %v1920
        %1922 = vmatprep.subr.mxu0 0.0
        %v1923 = vand.u32 %v643, 4294901760
        %1924 = vmatpush1.xpose.msra.mxu0 %v1923
        %1925 = vmatprep.subr.mxu0 0.0
        %v1926 = vand.u32 %v641, 4294901760
        %1927 = vmatpush1.xpose.msra.mxu0 %v1926
        %1928 = vmatprep.subr.mxu0 0.0
        %v1929 = vand.u32 %v639, 4294901760
        %1930 = vmatpush1.xpose.msra.mxu0 %v1929
        %1931 = vmatprep.subr.mxu0 0.0
        %v1932 = vand.u32 %v637, 4294901760
        %1933 = vmatpush1.xpose.msra.mxu0 %v1932
        %1934 = vmatprep.subr.mxu0 0.0
        %v1935 = vand.u32 %v635, 4294901760
        %1936 = vmatpush1.xpose.msra.mxu0 %v1935
        %1937 = vmatprep.subr.mxu0 0.0
        %v1938 = vand.u32 %v633, 4294901760
        %1939 = vmatpush1.xpose.msra.mxu0 %v1938
        %1940 = vmatprep.subr.mxu0 0.0
        %v1941 = vand.u32 %v631, 4294901760
        %1942 = vmatpush1.xpose.msra.mxu0 %v1941
        %1943 = vmatprep.subr.mxu0 0.0
        %v1944 = vand.u32 %v629, 4294901760
        %1945 = vmatpush1.xpose.msra.mxu0 %v1944
        %1946 = vmatprep.subr.mxu0 0.0
        %v1947 = vand.u32 %v627, 4294901760
        %1948 = vmatpush1.xpose.msra.mxu0 %v1947
        %1949 = vmatprep.subr.mxu0 0.0
        %v1950 = vand.u32 %v625, 4294901760
        %1951 = vmatpush1.xpose.msra.mxu0 %v1950
        %1952 = vmatprep.subr.mxu0 0.0
        %1953 = vmatpush2.xpose.msra.mxu0 0.0
        %1954 = vmatprep.subr.mxu0 0.0
        %1955 = vmatpush2.xpose.msra.mxu0 0.0
        %1956 = vmatprep.subr.mxu0 0.0
        %1957 = vmatpush2.xpose.msra.mxu0 0.0
        %1958 = vmatprep.subr.mxu0 0.0
        %1959 = vmatpush2.xpose.msra.mxu0 0.0
        %1960 = vmatprep.subr.mxu0 0.0
        %1961 = vmatpush2.xpose.msra.mxu0 0.0
        %1962 = vmatprep.subr.mxu0 0.0
        %1963 = vmatpush2.xpose.msra.mxu0 0.0
        %1964 = vmatprep.subr.mxu0 0.0
        %1965 = vmatpush2.xpose.msra.mxu0 0.0
        %1966 = vmatprep.subr.mxu0 0.0
        %1967 = vmatpush2.xpose.msra.mxu0 0.0
        %1968 = vmatprep.subr.mxu0 0.0
        %1969 = vmatpush2.xpose.msra.mxu0 0.0
        %1970 = vmatprep.subr.mxu0 0.0
        %1971 = vmatpush2.xpose.msra.mxu0 0.0
        %1972 = vmatprep.subr.mxu0 0.0
        %1973 = vmatpush2.xpose.msra.mxu0 0.0
        %1974 = vmatprep.subr.mxu0 0.0
        %1975 = vmatpush2.xpose.msra.mxu0 0.0
        %1976 = vmatprep.subr.mxu0 0.0
        %1977 = vmatpush2.xpose.msra.mxu0 0.0
        %1978 = vmatprep.subr.mxu0 0.0
        %1979 = vmatpush2.xpose.msra.mxu0 0.0
        %1980 = vmatprep.subr.mxu0 0.0
        %1981 = vmatpush2.xpose.msra.mxu0 0.0
        %1982 = vmatprep.subr.mxu0 0.0
        %1983 = vmatpush2.xpose.msra.mxu0 0.0
        %1984 = vmatprep.mubr.f32.mxu0 0.0
        %v1985 = vand.u32 %v535, 4294901760
        %v1986 = vsub.f32 %v535, %v1985
        %v1987 = vand.u32 %v1986, 4294901760
        %v1988 = vsub.f32 %v1986, %v1987
        %v1989 = vand.u32 %v1988, 4294901760
        %1990 = vmatmul.mubr.f32.gmra.mxu0 %v1989
        %v1991 = vpop.f32.mrf.mxu0
        %v1992 = vadd.f32 0.0, %v1991
        %v1993 = vpop.f32.mrf.mxu0
        %1994 = vmatprep.mubr.f32.mxu0 0.0
        %v1995 = vand.u32 %v538, 4294901760
        %v1996 = vsub.f32 %v538, %v1995
        %v1997 = vand.u32 %v1996, 4294901760
        %v1998 = vsub.f32 %v1996, %v1997
        %v1999 = vand.u32 %v1998, 4294901760
        %2000 = vmatmul.mubr.f32.gmra.mxu0 %v1999
        %v2001 = vpop.f32.mrf.mxu0
        %v2002 = vadd.f32 0.0, %v2001
        %v2003 = vpop.f32.mrf.mxu0
        %2004 = vmatprep.mubr.f32.mxu0 0.0
        %v2005 = vand.u32 %v541, 4294901760
        %v2006 = vsub.f32 %v541, %v2005
        %v2007 = vand.u32 %v2006, 4294901760
        %v2008 = vsub.f32 %v2006, %v2007
        %v2009 = vand.u32 %v2008, 4294901760
        %2010 = vmatmul.mubr.f32.gmra.mxu0 %v2009
        %v2011 = vpop.f32.mrf.mxu0
        %v2012 = vadd.f32 0.0, %v2011
        %v2013 = vpop.f32.mrf.mxu0
        %2014 = vmatprep.mubr.f32.mxu0 0.0
        %v2015 = vand.u32 %v544, 4294901760
        %v2016 = vsub.f32 %v544, %v2015
        %v2017 = vand.u32 %v2016, 4294901760
        %v2018 = vsub.f32 %v2016, %v2017
        %v2019 = vand.u32 %v2018, 4294901760
        %2020 = vmatmul.mubr.f32.gmra.mxu0 %v2019
        %v2021 = vpop.f32.mrf.mxu0
        %v2022 = vadd.f32 0.0, %v2021
        %v2023 = vpop.f32.mrf.mxu0
        %2024 = vmatprep.mubr.f32.mxu0 0.0
        %v2025 = vand.u32 %v547, 4294901760
        %v2026 = vsub.f32 %v547, %v2025
        %v2027 = vand.u32 %v2026, 4294901760
        %v2028 = vsub.f32 %v2026, %v2027
        %v2029 = vand.u32 %v2028, 4294901760
        %2030 = vmatmul.mubr.f32.gmra.mxu0 %v2029
        %v2031 = vpop.f32.mrf.mxu0
        %v2032 = vadd.f32 0.0, %v2031
        %v2033 = vpop.f32.mrf.mxu0
        %2034 = vmatprep.mubr.f32.mxu0 0.0
        %v2035 = vand.u32 %v550, 4294901760
        %v2036 = vsub.f32 %v550, %v2035
        %v2037 = vand.u32 %v2036, 4294901760
        %v2038 = vsub.f32 %v2036, %v2037
        %v2039 = vand.u32 %v2038, 4294901760
        %2040 = vmatmul.mubr.f32.gmra.mxu0 %v2039
        %v2041 = vpop.f32.mrf.mxu0
        %v2042 = vadd.f32 0.0, %v2041
        %v2043 = vpop.f32.mrf.mxu0
        %2044 = vmatprep.mubr.f32.mxu0 0.0
        %v2045 = vand.u32 %v553, 4294901760
        %v2046 = vsub.f32 %v553, %v2045
        %v2047 = vand.u32 %v2046, 4294901760
        %v2048 = vsub.f32 %v2046, %v2047
        %v2049 = vand.u32 %v2048, 4294901760
        %2050 = vmatmul.mubr.f32.gmra.mxu0 %v2049
        %v2051 = vpop.f32.mrf.mxu0
        %v2052 = vadd.f32 0.0, %v2051
        %v2053 = vpop.f32.mrf.mxu0
        %2054 = vmatprep.mubr.f32.mxu0 0.0
        %v2055 = vand.u32 %v556, 4294901760
        %v2056 = vsub.f32 %v556, %v2055
        %v2057 = vand.u32 %v2056, 4294901760
        %v2058 = vsub.f32 %v2056, %v2057
        %v2059 = vand.u32 %v2058, 4294901760
        %2060 = vmatmul.mubr.f32.gmra.mxu0 %v2059
        %v2061 = vpop.f32.mrf.mxu0
        %v2062 = vadd.f32 0.0, %v2061
        %v2063 = vpop.f32.mrf.mxu0
        %2064 = vmatprep.mubr.f32.mxu0 0.0
        %v2065 = vand.u32 %v559, 4294901760
        %v2066 = vsub.f32 %v559, %v2065
        %v2067 = vand.u32 %v2066, 4294901760
        %v2068 = vsub.f32 %v2066, %v2067
        %v2069 = vand.u32 %v2068, 4294901760
        %2070 = vmatmul.mubr.f32.gmra.mxu0 %v2069
        %v2071 = vpop.f32.mrf.mxu0
        %v2072 = vadd.f32 0.0, %v2071
        %v2073 = vpop.f32.mrf.mxu0
        %2074 = vdwg.mxu0
        %2075 = vmatprep.subr.mxu0 0.0
        %v2076 = vand.u32 %v655, 4294901760
        %v2077 = vsub.f32 %v655, %v2076
        %v2078 = vand.u32 %v2077, 4294901760
        %v2079 = vsub.f32 %v2077, %v2078
        %v2080 = vand.u32 %v2079, 4294901760
        %2081 = vmatpush1.xpose.msra.mxu0 %v2080
        %2082 = vmatprep.subr.mxu0 0.0
        %v2083 = vand.u32 %v653, 4294901760
        %v2084 = vsub.f32 %v653, %v2083
        %v2085 = vand.u32 %v2084, 4294901760
        %v2086 = vsub.f32 %v2084, %v2085
        %v2087 = vand.u32 %v2086, 4294901760
        %2088 = vmatpush1.xpose.msra.mxu0 %v2087
        %2089 = vmatprep.subr.mxu0 0.0
        %v2090 = vand.u32 %v651, 4294901760
        %v2091 = vsub.f32 %v651, %v2090
        %v2092 = vand.u32 %v2091, 4294901760
        %v2093 = vsub.f32 %v2091, %v2092
        %v2094 = vand.u32 %v2093, 4294901760
        %2095 = vmatpush1.xpose.msra.mxu0 %v2094
        %2096 = vmatprep.subr.mxu0 0.0
        %v2097 = vand.u32 %v649, 4294901760
        %v2098 = vsub.f32 %v649, %v2097
        %v2099 = vand.u32 %v2098, 4294901760
        %v2100 = vsub.f32 %v2098, %v2099
        %v2101 = vand.u32 %v2100, 4294901760
        %2102 = vmatpush1.xpose.msra.mxu0 %v2101
        %2103 = vmatprep.subr.mxu0 0.0
        %v2104 = vand.u32 %v647, 4294901760
        %v2105 = vsub.f32 %v647, %v2104
        %v2106 = vand.u32 %v2105, 4294901760
        %v2107 = vsub.f32 %v2105, %v2106
        %v2108 = vand.u32 %v2107, 4294901760
        %2109 = vmatpush1.xpose.msra.mxu0 %v2108
        %2110 = vmatprep.subr.mxu0 0.0
        %v2111 = vand.u32 %v645, 4294901760
        %v2112 = vsub.f32 %v645, %v2111
        %v2113 = vand.u32 %v2112, 4294901760
        %v2114 = vsub.f32 %v2112, %v2113
        %v2115 = vand.u32 %v2114, 4294901760
        %2116 = vmatpush1.xpose.msra.mxu0 %v2115
        %2117 = vmatprep.subr.mxu0 0.0
        %v2118 = vand.u32 %v643, 4294901760
        %v2119 = vsub.f32 %v643, %v2118
        %v2120 = vand.u32 %v2119, 4294901760
        %v2121 = vsub.f32 %v2119, %v2120
        %v2122 = vand.u32 %v2121, 4294901760
        %2123 = vmatpush1.xpose.msra.mxu0 %v2122
        %2124 = vmatprep.subr.mxu0 0.0
        %v2125 = vand.u32 %v641, 4294901760
        %v2126 = vsub.f32 %v641, %v2125
        %v2127 = vand.u32 %v2126, 4294901760
        %v2128 = vsub.f32 %v2126, %v2127
        %v2129 = vand.u32 %v2128, 4294901760
        %2130 = vmatpush1.xpose.msra.mxu0 %v2129
        %2131 = vmatprep.subr.mxu0 0.0
        %v2132 = vand.u32 %v639, 4294901760
        %v2133 = vsub.f32 %v639, %v2132
        %v2134 = vand.u32 %v2133, 4294901760
        %v2135 = vsub.f32 %v2133, %v2134
        %v2136 = vand.u32 %v2135, 4294901760
        %2137 = vmatpush1.xpose.msra.mxu0 %v2136
        %2138 = vmatprep.subr.mxu0 0.0
        %v2139 = vand.u32 %v637, 4294901760
        %v2140 = vsub.f32 %v637, %v2139
        %v2141 = vand.u32 %v2140, 4294901760
        %v2142 = vsub.f32 %v2140, %v2141
        %v2143 = vand.u32 %v2142, 4294901760
        %2144 = vmatpush1.xpose.msra.mxu0 %v2143
        %2145 = vmatprep.subr.mxu0 0.0
        %v2146 = vand.u32 %v635, 4294901760
        %v2147 = vsub.f32 %v635, %v2146
        %v2148 = vand.u32 %v2147, 4294901760
        %v2149 = vsub.f32 %v2147, %v2148
        %v2150 = vand.u32 %v2149, 4294901760
        %2151 = vmatpush1.xpose.msra.mxu0 %v2150
        %2152 = vmatprep.subr.mxu0 0.0
        %v2153 = vand.u32 %v633, 4294901760
        %v2154 = vsub.f32 %v633, %v2153
        %v2155 = vand.u32 %v2154, 4294901760
        %v2156 = vsub.f32 %v2154, %v2155
        %v2157 = vand.u32 %v2156, 4294901760
        %2158 = vmatpush1.xpose.msra.mxu0 %v2157
        %2159 = vmatprep.subr.mxu0 0.0
        %v2160 = vand.u32 %v631, 4294901760
        %v2161 = vsub.f32 %v631, %v2160
        %v2162 = vand.u32 %v2161, 4294901760
        %v2163 = vsub.f32 %v2161, %v2162
        %v2164 = vand.u32 %v2163, 4294901760
        %2165 = vmatpush1.xpose.msra.mxu0 %v2164
        %2166 = vmatprep.subr.mxu0 0.0
        %v2167 = vand.u32 %v629, 4294901760
        %v2168 = vsub.f32 %v629, %v2167
        %v2169 = vand.u32 %v2168, 4294901760
        %v2170 = vsub.f32 %v2168, %v2169
        %v2171 = vand.u32 %v2170, 4294901760
        %2172 = vmatpush1.xpose.msra.mxu0 %v2171
        %2173 = vmatprep.subr.mxu0 0.0
        %v2174 = vand.u32 %v627, 4294901760
        %v2175 = vsub.f32 %v627, %v2174
        %v2176 = vand.u32 %v2175, 4294901760
        %v2177 = vsub.f32 %v2175, %v2176
        %v2178 = vand.u32 %v2177, 4294901760
        %2179 = vmatpush1.xpose.msra.mxu0 %v2178
        %2180 = vmatprep.subr.mxu0 0.0
        %v2181 = vand.u32 %v625, 4294901760
        %v2182 = vsub.f32 %v625, %v2181
        %v2183 = vand.u32 %v2182, 4294901760
        %v2184 = vsub.f32 %v2182, %v2183
        %v2185 = vand.u32 %v2184, 4294901760
        %2186 = vmatpush1.xpose.msra.mxu0 %v2185
        %2187 = vmatprep.subr.mxu0 0.0
        %2188 = vmatpush2.xpose.msra.mxu0 0.0
        %2189 = vmatprep.subr.mxu0 0.0
        %2190 = vmatpush2.xpose.msra.mxu0 0.0
        %2191 = vmatprep.subr.mxu0 0.0
        %2192 = vmatpush2.xpose.msra.mxu0 0.0
        %2193 = vmatprep.subr.mxu0 0.0
        %2194 = vmatpush2.xpose.msra.mxu0 0.0
        %2195 = vmatprep.subr.mxu0 0.0
        %2196 = vmatpush2.xpose.msra.mxu0 0.0
        %2197 = vmatprep.subr.mxu0 0.0
        %2198 = vmatpush2.xpose.msra.mxu0 0.0
        %2199 = vmatprep.subr.mxu0 0.0
        %2200 = vmatpush2.xpose.msra.mxu0 0.0
        %2201 = vmatprep.subr.mxu0 0.0
        %2202 = vmatpush2.xpose.msra.mxu0 0.0
        %2203 = vmatprep.subr.mxu0 0.0
        %2204 = vmatpush2.xpose.msra.mxu0 0.0
        %2205 = vmatprep.subr.mxu0 0.0
        %2206 = vmatpush2.xpose.msra.mxu0 0.0
        %2207 = vmatprep.subr.mxu0 0.0
        %2208 = vmatpush2.xpose.msra.mxu0 0.0
        %2209 = vmatprep.subr.mxu0 0.0
        %2210 = vmatpush2.xpose.msra.mxu0 0.0
        %2211 = vmatprep.subr.mxu0 0.0
        %2212 = vmatpush2.xpose.msra.mxu0 0.0
        %2213 = vmatprep.subr.mxu0 0.0
        %2214 = vmatpush2.xpose.msra.mxu0 0.0
        %2215 = vmatprep.subr.mxu0 0.0
        %2216 = vmatpush2.xpose.msra.mxu0 0.0
        %2217 = vmatprep.subr.mxu0 0.0
        %2218 = vmatpush2.xpose.msra.mxu0 0.0
        %2219 = vmatprep.mubr.f32.mxu0 0.0
        %v2220 = vand.u32 %v535, 4294901760
        %2221 = vmatmul.mubr.f32.gmra.mxu0 %v2220
        %v2222 = vpop.f32.mrf.mxu0
        %v2223 = vadd.f32 %v1992, %v2222
        %v2224 = vpop.f32.mrf.mxu0
        %2225 = vmatprep.mubr.f32.mxu0 0.0
        %v2226 = vand.u32 %v538, 4294901760
        %2227 = vmatmul.mubr.f32.gmra.mxu0 %v2226
        %v2228 = vpop.f32.mrf.mxu0
        %v2229 = vadd.f32 %v2002, %v2228
        %v2230 = vpop.f32.mrf.mxu0
        %2231 = vmatprep.mubr.f32.mxu0 0.0
        %v2232 = vand.u32 %v541, 4294901760
        %2233 = vmatmul.mubr.f32.gmra.mxu0 %v2232
        %v2234 = vpop.f32.mrf.mxu0
        %v2235 = vadd.f32 %v2012, %v2234
        %v2236 = vpop.f32.mrf.mxu0
        %2237 = vmatprep.mubr.f32.mxu0 0.0
        %v2238 = vand.u32 %v544, 4294901760
        %2239 = vmatmul.mubr.f32.gmra.mxu0 %v2238
        %v2240 = vpop.f32.mrf.mxu0
        %v2241 = vadd.f32 %v2022, %v2240
        %v2242 = vpop.f32.mrf.mxu0
        %2243 = vmatprep.mubr.f32.mxu0 0.0
        %v2244 = vand.u32 %v547, 4294901760
        %2245 = vmatmul.mubr.f32.gmra.mxu0 %v2244
        %v2246 = vpop.f32.mrf.mxu0
        %v2247 = vadd.f32 %v2032, %v2246
        %v2248 = vpop.f32.mrf.mxu0
        %2249 = vmatprep.mubr.f32.mxu0 0.0
        %v2250 = vand.u32 %v550, 4294901760
        %2251 = vmatmul.mubr.f32.gmra.mxu0 %v2250
        %v2252 = vpop.f32.mrf.mxu0
        %v2253 = vadd.f32 %v2042, %v2252
        %v2254 = vpop.f32.mrf.mxu0
        %2255 = vmatprep.mubr.f32.mxu0 0.0
        %v2256 = vand.u32 %v553, 4294901760
        %2257 = vmatmul.mubr.f32.gmra.mxu0 %v2256
        %v2258 = vpop.f32.mrf.mxu0
        %v2259 = vadd.f32 %v2052, %v2258
        %v2260 = vpop.f32.mrf.mxu0
        %2261 = vmatprep.mubr.f32.mxu0 0.0
        %v2262 = vand.u32 %v556, 4294901760
        %2263 = vmatmul.mubr.f32.gmra.mxu0 %v2262
        %v2264 = vpop.f32.mrf.mxu0
        %v2265 = vadd.f32 %v2062, %v2264
        %v2266 = vpop.f32.mrf.mxu0
        %2267 = vmatprep.mubr.f32.mxu0 0.0
        %v2268 = vand.u32 %v559, 4294901760
        %2269 = vmatmul.mubr.f32.gmra.mxu0 %v2268
        %v2270 = vpop.f32.mrf.mxu0
        %v2271 = vadd.f32 %v2072, %v2270
        %v2272 = vpop.f32.mrf.mxu0
        %2273 = vdwg.mxu0
        %2274 = vmatprep.subr.mxu0 0.0
        %v2275 = vand.u32 %v655, 4294901760
        %v2276 = vsub.f32 %v655, %v2275
        %2277 = vmatpush1.xpose.msra.mxu0 %v2276
        %2278 = vmatprep.subr.mxu0 0.0
        %v2279 = vand.u32 %v653, 4294901760
        %v2280 = vsub.f32 %v653, %v2279
        %2281 = vmatpush1.xpose.msra.mxu0 %v2280
        %2282 = vmatprep.subr.mxu0 0.0
        %v2283 = vand.u32 %v651, 4294901760
        %v2284 = vsub.f32 %v651, %v2283
        %2285 = vmatpush1.xpose.msra.mxu0 %v2284
        %2286 = vmatprep.subr.mxu0 0.0
        %v2287 = vand.u32 %v649, 4294901760
        %v2288 = vsub.f32 %v649, %v2287
        %2289 = vmatpush1.xpose.msra.mxu0 %v2288
        %2290 = vmatprep.subr.mxu0 0.0
        %v2291 = vand.u32 %v647, 4294901760
        %v2292 = vsub.f32 %v647, %v2291
        %2293 = vmatpush1.xpose.msra.mxu0 %v2292
        %2294 = vmatprep.subr.mxu0 0.0
        %v2295 = vand.u32 %v645, 4294901760
        %v2296 = vsub.f32 %v645, %v2295
        %2297 = vmatpush1.xpose.msra.mxu0 %v2296
        %2298 = vmatprep.subr.mxu0 0.0
        %v2299 = vand.u32 %v643, 4294901760
        %v2300 = vsub.f32 %v643, %v2299
        %2301 = vmatpush1.xpose.msra.mxu0 %v2300
        %2302 = vmatprep.subr.mxu0 0.0
        %v2303 = vand.u32 %v641, 4294901760
        %v2304 = vsub.f32 %v641, %v2303
        %2305 = vmatpush1.xpose.msra.mxu0 %v2304
        %2306 = vmatprep.subr.mxu0 0.0
        %v2307 = vand.u32 %v639, 4294901760
        %v2308 = vsub.f32 %v639, %v2307
        %2309 = vmatpush1.xpose.msra.mxu0 %v2308
        %2310 = vmatprep.subr.mxu0 0.0
        %v2311 = vand.u32 %v637, 4294901760
        %v2312 = vsub.f32 %v637, %v2311
        %2313 = vmatpush1.xpose.msra.mxu0 %v2312
        %2314 = vmatprep.subr.mxu0 0.0
        %v2315 = vand.u32 %v635, 4294901760
        %v2316 = vsub.f32 %v635, %v2315
        %2317 = vmatpush1.xpose.msra.mxu0 %v2316
        %2318 = vmatprep.subr.mxu0 0.0
        %v2319 = vand.u32 %v633, 4294901760
        %v2320 = vsub.f32 %v633, %v2319
        %2321 = vmatpush1.xpose.msra.mxu0 %v2320
        %2322 = vmatprep.subr.mxu0 0.0
        %v2323 = vand.u32 %v631, 4294901760
        %v2324 = vsub.f32 %v631, %v2323
        %2325 = vmatpush1.xpose.msra.mxu0 %v2324
        %2326 = vmatprep.subr.mxu0 0.0
        %v2327 = vand.u32 %v629, 4294901760
        %v2328 = vsub.f32 %v629, %v2327
        %2329 = vmatpush1.xpose.msra.mxu0 %v2328
        %2330 = vmatprep.subr.mxu0 0.0
        %v2331 = vand.u32 %v627, 4294901760
        %v2332 = vsub.f32 %v627, %v2331
        %2333 = vmatpush1.xpose.msra.mxu0 %v2332
        %2334 = vmatprep.subr.mxu0 0.0
        %v2335 = vand.u32 %v625, 4294901760
        %v2336 = vsub.f32 %v625, %v2335
        %2337 = vmatpush1.xpose.msra.mxu0 %v2336
        %2338 = vmatprep.subr.mxu0 0.0
        %2339 = vmatpush2.xpose.msra.mxu0 0.0
        %2340 = vmatprep.subr.mxu0 0.0
        %2341 = vmatpush2.xpose.msra.mxu0 0.0
        %2342 = vmatprep.subr.mxu0 0.0
        %2343 = vmatpush2.xpose.msra.mxu0 0.0
        %2344 = vmatprep.subr.mxu0 0.0
        %2345 = vmatpush2.xpose.msra.mxu0 0.0
        %2346 = vmatprep.subr.mxu0 0.0
        %2347 = vmatpush2.xpose.msra.mxu0 0.0
        %2348 = vmatprep.subr.mxu0 0.0
        %2349 = vmatpush2.xpose.msra.mxu0 0.0
        %2350 = vmatprep.subr.mxu0 0.0
        %2351 = vmatpush2.xpose.msra.mxu0 0.0
        %2352 = vmatprep.subr.mxu0 0.0
        %2353 = vmatpush2.xpose.msra.mxu0 0.0
        %2354 = vmatprep.subr.mxu0 0.0
        %2355 = vmatpush2.xpose.msra.mxu0 0.0
        %2356 = vmatprep.subr.mxu0 0.0
        %2357 = vmatpush2.xpose.msra.mxu0 0.0
        %2358 = vmatprep.subr.mxu0 0.0
        %2359 = vmatpush2.xpose.msra.mxu0 0.0
        %2360 = vmatprep.subr.mxu0 0.0
        %2361 = vmatpush2.xpose.msra.mxu0 0.0
        %2362 = vmatprep.subr.mxu0 0.0
        %2363 = vmatpush2.xpose.msra.mxu0 0.0
        %2364 = vmatprep.subr.mxu0 0.0
        %2365 = vmatpush2.xpose.msra.mxu0 0.0
        %2366 = vmatprep.subr.mxu0 0.0
        %2367 = vmatpush2.xpose.msra.mxu0 0.0
        %2368 = vmatprep.subr.mxu0 0.0
        %2369 = vmatpush2.xpose.msra.mxu0 0.0
        %2370 = vmatprep.mubr.f32.mxu0 0.0
        %v2371 = vand.u32 %v535, 4294901760
        %v2372 = vsub.f32 %v535, %v2371
        %2373 = vmatmul.mubr.f32.gmra.mxu0 %v2372
        %v2374 = vpop.f32.mrf.mxu0
        %v2375 = vadd.f32 %v2223, %v2374
        %v2376 = vpop.f32.mrf.mxu0
        %2377 = vmatprep.mubr.f32.mxu0 0.0
        %v2378 = vand.u32 %v538, 4294901760
        %v2379 = vsub.f32 %v538, %v2378
        %2380 = vmatmul.mubr.f32.gmra.mxu0 %v2379
        %v2381 = vpop.f32.mrf.mxu0
        %v2382 = vadd.f32 %v2229, %v2381
        %v2383 = vpop.f32.mrf.mxu0
        %2384 = vmatprep.mubr.f32.mxu0 0.0
        %v2385 = vand.u32 %v541, 4294901760
        %v2386 = vsub.f32 %v541, %v2385
        %2387 = vmatmul.mubr.f32.gmra.mxu0 %v2386
        %v2388 = vpop.f32.mrf.mxu0
        %v2389 = vadd.f32 %v2235, %v2388
        %v2390 = vpop.f32.mrf.mxu0
        %2391 = vmatprep.mubr.f32.mxu0 0.0
        %v2392 = vand.u32 %v544, 4294901760
        %v2393 = vsub.f32 %v544, %v2392
        %2394 = vmatmul.mubr.f32.gmra.mxu0 %v2393
        %v2395 = vpop.f32.mrf.mxu0
        %v2396 = vadd.f32 %v2241, %v2395
        %v2397 = vpop.f32.mrf.mxu0
        %2398 = vmatprep.mubr.f32.mxu0 0.0
        %v2399 = vand.u32 %v547, 4294901760
        %v2400 = vsub.f32 %v547, %v2399
        %2401 = vmatmul.mubr.f32.gmra.mxu0 %v2400
        %v2402 = vpop.f32.mrf.mxu0
        %v2403 = vadd.f32 %v2247, %v2402
        %v2404 = vpop.f32.mrf.mxu0
        %2405 = vmatprep.mubr.f32.mxu0 0.0
        %v2406 = vand.u32 %v550, 4294901760
        %v2407 = vsub.f32 %v550, %v2406
        %2408 = vmatmul.mubr.f32.gmra.mxu0 %v2407
        %v2409 = vpop.f32.mrf.mxu0
        %v2410 = vadd.f32 %v2253, %v2409
        %v2411 = vpop.f32.mrf.mxu0
        %2412 = vmatprep.mubr.f32.mxu0 0.0
        %v2413 = vand.u32 %v553, 4294901760
        %v2414 = vsub.f32 %v553, %v2413
        %2415 = vmatmul.mubr.f32.gmra.mxu0 %v2414
        %v2416 = vpop.f32.mrf.mxu0
        %v2417 = vadd.f32 %v2259, %v2416
        %v2418 = vpop.f32.mrf.mxu0
        %2419 = vmatprep.mubr.f32.mxu0 0.0
        %v2420 = vand.u32 %v556, 4294901760
        %v2421 = vsub.f32 %v556, %v2420
        %2422 = vmatmul.mubr.f32.gmra.mxu0 %v2421
        %v2423 = vpop.f32.mrf.mxu0
        %v2424 = vadd.f32 %v2265, %v2423
        %v2425 = vpop.f32.mrf.mxu0
        %2426 = vmatprep.mubr.f32.mxu0 0.0
        %v2427 = vand.u32 %v559, 4294901760
        %v2428 = vsub.f32 %v559, %v2427
        %2429 = vmatmul.mubr.f32.gmra.mxu0 %v2428
        %v2430 = vpop.f32.mrf.mxu0
        %v2431 = vadd.f32 %v2271, %v2430
        %v2432 = vpop.f32.mrf.mxu0
        %2433 = vdwg.mxu0
        %2434 = vmatprep.subr.mxu0 0.0
        %v2435 = vand.u32 %v655, 4294901760
        %2436 = vmatpush1.xpose.msra.mxu0 %v2435
        %2437 = vmatprep.subr.mxu0 0.0
        %v2438 = vand.u32 %v653, 4294901760
        %2439 = vmatpush1.xpose.msra.mxu0 %v2438
        %2440 = vmatprep.subr.mxu0 0.0
        %v2441 = vand.u32 %v651, 4294901760
        %2442 = vmatpush1.xpose.msra.mxu0 %v2441
        %2443 = vmatprep.subr.mxu0 0.0
        %v2444 = vand.u32 %v649, 4294901760
        %2445 = vmatpush1.xpose.msra.mxu0 %v2444
        %2446 = vmatprep.subr.mxu0 0.0
        %v2447 = vand.u32 %v647, 4294901760
        %2448 = vmatpush1.xpose.msra.mxu0 %v2447
        %2449 = vmatprep.subr.mxu0 0.0
        %v2450 = vand.u32 %v645, 4294901760
        %2451 = vmatpush1.xpose.msra.mxu0 %v2450
        %2452 = vmatprep.subr.mxu0 0.0
        %v2453 = vand.u32 %v643, 4294901760
        %2454 = vmatpush1.xpose.msra.mxu0 %v2453
        %2455 = vmatprep.subr.mxu0 0.0
        %v2456 = vand.u32 %v641, 4294901760
        %2457 = vmatpush1.xpose.msra.mxu0 %v2456
        %2458 = vmatprep.subr.mxu0 0.0
        %v2459 = vand.u32 %v639, 4294901760
        %2460 = vmatpush1.xpose.msra.mxu0 %v2459
        %2461 = vmatprep.subr.mxu0 0.0
        %v2462 = vand.u32 %v637, 4294901760
        %2463 = vmatpush1.xpose.msra.mxu0 %v2462
        %2464 = vmatprep.subr.mxu0 0.0
        %v2465 = vand.u32 %v635, 4294901760
        %2466 = vmatpush1.xpose.msra.mxu0 %v2465
        %2467 = vmatprep.subr.mxu0 0.0
        %v2468 = vand.u32 %v633, 4294901760
        %2469 = vmatpush1.xpose.msra.mxu0 %v2468
        %2470 = vmatprep.subr.mxu0 0.0
        %v2471 = vand.u32 %v631, 4294901760
        %2472 = vmatpush1.xpose.msra.mxu0 %v2471
        %2473 = vmatprep.subr.mxu0 0.0
        %v2474 = vand.u32 %v629, 4294901760
        %2475 = vmatpush1.xpose.msra.mxu0 %v2474
        %2476 = vmatprep.subr.mxu0 0.0
        %v2477 = vand.u32 %v627, 4294901760
        %2478 = vmatpush1.xpose.msra.mxu0 %v2477
        %2479 = vmatprep.subr.mxu0 0.0
        %v2480 = vand.u32 %v625, 4294901760
        %2481 = vmatpush1.xpose.msra.mxu0 %v2480
        %2482 = vmatprep.subr.mxu0 0.0
        %2483 = vmatpush2.xpose.msra.mxu0 0.0
        %2484 = vmatprep.subr.mxu0 0.0
        %2485 = vmatpush2.xpose.msra.mxu0 0.0
        %2486 = vmatprep.subr.mxu0 0.0
        %2487 = vmatpush2.xpose.msra.mxu0 0.0
        %2488 = vmatprep.subr.mxu0 0.0
        %2489 = vmatpush2.xpose.msra.mxu0 0.0
        %2490 = vmatprep.subr.mxu0 0.0
        %2491 = vmatpush2.xpose.msra.mxu0 0.0
        %2492 = vmatprep.subr.mxu0 0.0
        %2493 = vmatpush2.xpose.msra.mxu0 0.0
        %2494 = vmatprep.subr.mxu0 0.0
        %2495 = vmatpush2.xpose.msra.mxu0 0.0
        %2496 = vmatprep.subr.mxu0 0.0
        %2497 = vmatpush2.xpose.msra.mxu0 0.0
        %2498 = vmatprep.subr.mxu0 0.0
        %2499 = vmatpush2.xpose.msra.mxu0 0.0
        %2500 = vmatprep.subr.mxu0 0.0
        %2501 = vmatpush2.xpose.msra.mxu0 0.0
        %2502 = vmatprep.subr.mxu0 0.0
        %2503 = vmatpush2.xpose.msra.mxu0 0.0
        %2504 = vmatprep.subr.mxu0 0.0
        %2505 = vmatpush2.xpose.msra.mxu0 0.0
        %2506 = vmatprep.subr.mxu0 0.0
        %2507 = vmatpush2.xpose.msra.mxu0 0.0
        %2508 = vmatprep.subr.mxu0 0.0
        %2509 = vmatpush2.xpose.msra.mxu0 0.0
        %2510 = vmatprep.subr.mxu0 0.0
        %2511 = vmatpush2.xpose.msra.mxu0 0.0
        %2512 = vmatprep.subr.mxu0 0.0
        %2513 = vmatpush2.xpose.msra.mxu0 0.0
        %2514 = vmatprep.mubr.f32.mxu0 0.0
        %v2515 = vand.u32 %v535, 4294901760
        %v2516 = vsub.f32 %v535, %v2515
        %v2517 = vand.u32 %v2516, 4294901760
        %2518 = vmatmul.mubr.f32.gmra.mxu0 %v2517
        %v2519 = vpop.f32.mrf.mxu0
        %v2520 = vadd.f32 %v2375, %v2519
        %v2521 = vpop.f32.mrf.mxu0
        %2522 = vmatprep.mubr.f32.mxu0 0.0
        %v2523 = vand.u32 %v538, 4294901760
        %v2524 = vsub.f32 %v538, %v2523
        %v2525 = vand.u32 %v2524, 4294901760
        %2526 = vmatmul.mubr.f32.gmra.mxu0 %v2525
        %v2527 = vpop.f32.mrf.mxu0
        %v2528 = vadd.f32 %v2382, %v2527
        %v2529 = vpop.f32.mrf.mxu0
        %2530 = vmatprep.mubr.f32.mxu0 0.0
        %v2531 = vand.u32 %v541, 4294901760
        %v2532 = vsub.f32 %v541, %v2531
        %v2533 = vand.u32 %v2532, 4294901760
        %2534 = vmatmul.mubr.f32.gmra.mxu0 %v2533
        %v2535 = vpop.f32.mrf.mxu0
        %v2536 = vadd.f32 %v2389, %v2535
        %v2537 = vpop.f32.mrf.mxu0
        %2538 = vmatprep.mubr.f32.mxu0 0.0
        %v2539 = vand.u32 %v544, 4294901760
        %v2540 = vsub.f32 %v544, %v2539
        %v2541 = vand.u32 %v2540, 4294901760
        %2542 = vmatmul.mubr.f32.gmra.mxu0 %v2541
        %v2543 = vpop.f32.mrf.mxu0
        %v2544 = vadd.f32 %v2396, %v2543
        %v2545 = vpop.f32.mrf.mxu0
        %2546 = vmatprep.mubr.f32.mxu0 0.0
        %v2547 = vand.u32 %v547, 4294901760
        %v2548 = vsub.f32 %v547, %v2547
        %v2549 = vand.u32 %v2548, 4294901760
        %2550 = vmatmul.mubr.f32.gmra.mxu0 %v2549
        %v2551 = vpop.f32.mrf.mxu0
        %v2552 = vadd.f32 %v2403, %v2551
        %v2553 = vpop.f32.mrf.mxu0
        %2554 = vmatprep.mubr.f32.mxu0 0.0
        %v2555 = vand.u32 %v550, 4294901760
        %v2556 = vsub.f32 %v550, %v2555
        %v2557 = vand.u32 %v2556, 4294901760
        %2558 = vmatmul.mubr.f32.gmra.mxu0 %v2557
        %v2559 = vpop.f32.mrf.mxu0
        %v2560 = vadd.f32 %v2410, %v2559
        %v2561 = vpop.f32.mrf.mxu0
        %2562 = vmatprep.mubr.f32.mxu0 0.0
        %v2563 = vand.u32 %v553, 4294901760
        %v2564 = vsub.f32 %v553, %v2563
        %v2565 = vand.u32 %v2564, 4294901760
        %2566 = vmatmul.mubr.f32.gmra.mxu0 %v2565
        %v2567 = vpop.f32.mrf.mxu0
        %v2568 = vadd.f32 %v2417, %v2567
        %v2569 = vpop.f32.mrf.mxu0
        %2570 = vmatprep.mubr.f32.mxu0 0.0
        %v2571 = vand.u32 %v556, 4294901760
        %v2572 = vsub.f32 %v556, %v2571
        %v2573 = vand.u32 %v2572, 4294901760
        %2574 = vmatmul.mubr.f32.gmra.mxu0 %v2573
        %v2575 = vpop.f32.mrf.mxu0
        %v2576 = vadd.f32 %v2424, %v2575
        %v2577 = vpop.f32.mrf.mxu0
        %2578 = vmatprep.mubr.f32.mxu0 0.0
        %v2579 = vand.u32 %v559, 4294901760
        %v2580 = vsub.f32 %v559, %v2579
        %v2581 = vand.u32 %v2580, 4294901760
        %2582 = vmatmul.mubr.f32.gmra.mxu0 %v2581
        %v2583 = vpop.f32.mrf.mxu0
        %v2584 = vadd.f32 %v2431, %v2583
        %v2585 = vpop.f32.mrf.mxu0
        %2586 = vdwg.mxu0
        %2587 = vmatprep.subr.mxu0 0.0
        %v2588 = vand.u32 %v655, 4294901760
        %v2589 = vsub.f32 %v655, %v2588
        %v2590 = vand.u32 %v2589, 4294901760
        %2591 = vmatpush1.xpose.msra.mxu0 %v2590
        %2592 = vmatprep.subr.mxu0 0.0
        %v2593 = vand.u32 %v653, 4294901760
        %v2594 = vsub.f32 %v653, %v2593
        %v2595 = vand.u32 %v2594, 4294901760
        %2596 = vmatpush1.xpose.msra.mxu0 %v2595
        %2597 = vmatprep.subr.mxu0 0.0
        %v2598 = vand.u32 %v651, 4294901760
        %v2599 = vsub.f32 %v651, %v2598
        %v2600 = vand.u32 %v2599, 4294901760
        %2601 = vmatpush1.xpose.msra.mxu0 %v2600
        %2602 = vmatprep.subr.mxu0 0.0
        %v2603 = vand.u32 %v649, 4294901760
        %v2604 = vsub.f32 %v649, %v2603
        %v2605 = vand.u32 %v2604, 4294901760
        %2606 = vmatpush1.xpose.msra.mxu0 %v2605
        %2607 = vmatprep.subr.mxu0 0.0
        %v2608 = vand.u32 %v647, 4294901760
        %v2609 = vsub.f32 %v647, %v2608
        %v2610 = vand.u32 %v2609, 4294901760
        %2611 = vmatpush1.xpose.msra.mxu0 %v2610
        %2612 = vmatprep.subr.mxu0 0.0
        %v2613 = vand.u32 %v645, 4294901760
        %v2614 = vsub.f32 %v645, %v2613
        %v2615 = vand.u32 %v2614, 4294901760
        %2616 = vmatpush1.xpose.msra.mxu0 %v2615
        %2617 = vmatprep.subr.mxu0 0.0
        %v2618 = vand.u32 %v643, 4294901760
        %v2619 = vsub.f32 %v643, %v2618
        %v2620 = vand.u32 %v2619, 4294901760
        %2621 = vmatpush1.xpose.msra.mxu0 %v2620
        %2622 = vmatprep.subr.mxu0 0.0
        %v2623 = vand.u32 %v641, 4294901760
        %v2624 = vsub.f32 %v641, %v2623
        %v2625 = vand.u32 %v2624, 4294901760
        %2626 = vmatpush1.xpose.msra.mxu0 %v2625
        %2627 = vmatprep.subr.mxu0 0.0
        %v2628 = vand.u32 %v639, 4294901760
        %v2629 = vsub.f32 %v639, %v2628
        %v2630 = vand.u32 %v2629, 4294901760
        %2631 = vmatpush1.xpose.msra.mxu0 %v2630
        %2632 = vmatprep.subr.mxu0 0.0
        %v2633 = vand.u32 %v637, 4294901760
        %v2634 = vsub.f32 %v637, %v2633
        %v2635 = vand.u32 %v2634, 4294901760
        %2636 = vmatpush1.xpose.msra.mxu0 %v2635
        %2637 = vmatprep.subr.mxu0 0.0
        %v2638 = vand.u32 %v635, 4294901760
        %v2639 = vsub.f32 %v635, %v2638
        %v2640 = vand.u32 %v2639, 4294901760
        %2641 = vmatpush1.xpose.msra.mxu0 %v2640
        %2642 = vmatprep.subr.mxu0 0.0
        %v2643 = vand.u32 %v633, 4294901760
        %v2644 = vsub.f32 %v633, %v2643
        %v2645 = vand.u32 %v2644, 4294901760
        %2646 = vmatpush1.xpose.msra.mxu0 %v2645
        %2647 = vmatprep.subr.mxu0 0.0
        %v2648 = vand.u32 %v631, 4294901760
        %v2649 = vsub.f32 %v631, %v2648
        %v2650 = vand.u32 %v2649, 4294901760
        %2651 = vmatpush1.xpose.msra.mxu0 %v2650
        %2652 = vmatprep.subr.mxu0 0.0
        %v2653 = vand.u32 %v629, 4294901760
        %v2654 = vsub.f32 %v629, %v2653
        %v2655 = vand.u32 %v2654, 4294901760
        %2656 = vmatpush1.xpose.msra.mxu0 %v2655
        %2657 = vmatprep.subr.mxu0 0.0
        %v2658 = vand.u32 %v627, 4294901760
        %v2659 = vsub.f32 %v627, %v2658
        %v2660 = vand.u32 %v2659, 4294901760
        %2661 = vmatpush1.xpose.msra.mxu0 %v2660
        %2662 = vmatprep.subr.mxu0 0.0
        %v2663 = vand.u32 %v625, 4294901760
        %v2664 = vsub.f32 %v625, %v2663
        %v2665 = vand.u32 %v2664, 4294901760
        %2666 = vmatpush1.xpose.msra.mxu0 %v2665
        %2667 = vmatprep.subr.mxu0 0.0
        %2668 = vmatpush2.xpose.msra.mxu0 0.0
        %2669 = vmatprep.subr.mxu0 0.0
        %2670 = vmatpush2.xpose.msra.mxu0 0.0
        %2671 = vmatprep.subr.mxu0 0.0
        %2672 = vmatpush2.xpose.msra.mxu0 0.0
        %2673 = vmatprep.subr.mxu0 0.0
        %2674 = vmatpush2.xpose.msra.mxu0 0.0
        %2675 = vmatprep.subr.mxu0 0.0
        %2676 = vmatpush2.xpose.msra.mxu0 0.0
        %2677 = vmatprep.subr.mxu0 0.0
        %2678 = vmatpush2.xpose.msra.mxu0 0.0
        %2679 = vmatprep.subr.mxu0 0.0
        %2680 = vmatpush2.xpose.msra.mxu0 0.0
        %2681 = vmatprep.subr.mxu0 0.0
        %2682 = vmatpush2.xpose.msra.mxu0 0.0
        %2683 = vmatprep.subr.mxu0 0.0
        %2684 = vmatpush2.xpose.msra.mxu0 0.0
        %2685 = vmatprep.subr.mxu0 0.0
        %2686 = vmatpush2.xpose.msra.mxu0 0.0
        %2687 = vmatprep.subr.mxu0 0.0
        %2688 = vmatpush2.xpose.msra.mxu0 0.0
        %2689 = vmatprep.subr.mxu0 0.0
        %2690 = vmatpush2.xpose.msra.mxu0 0.0
        %2691 = vmatprep.subr.mxu0 0.0
        %2692 = vmatpush2.xpose.msra.mxu0 0.0
        %2693 = vmatprep.subr.mxu0 0.0
        %2694 = vmatpush2.xpose.msra.mxu0 0.0
        %2695 = vmatprep.subr.mxu0 0.0
        %2696 = vmatpush2.xpose.msra.mxu0 0.0
        %2697 = vmatprep.subr.mxu0 0.0
        %2698 = vmatpush2.xpose.msra.mxu0 0.0
        %2699 = vmatprep.mubr.f32.mxu0 0.0
        %v2700 = vand.u32 %v535, 4294901760
        %2701 = vmatmul.mubr.f32.gmra.mxu0 %v2700
        %v2702 = vpop.f32.mrf.mxu0
        %v2703 = vadd.f32 %v2520, %v2702
        %v2704 = vpop.f32.mrf.mxu0
        %2705 = vmatprep.mubr.f32.mxu0 0.0
        %v2706 = vand.u32 %v538, 4294901760
        %2707 = vmatmul.mubr.f32.gmra.mxu0 %v2706
        %v2708 = vpop.f32.mrf.mxu0
        %v2709 = vadd.f32 %v2528, %v2708
        %v2710 = vpop.f32.mrf.mxu0
        %2711 = vmatprep.mubr.f32.mxu0 0.0
        %v2712 = vand.u32 %v541, 4294901760
        %2713 = vmatmul.mubr.f32.gmra.mxu0 %v2712
        %v2714 = vpop.f32.mrf.mxu0
        %v2715 = vadd.f32 %v2536, %v2714
        %v2716 = vpop.f32.mrf.mxu0
        %2717 = vmatprep.mubr.f32.mxu0 0.0
        %v2718 = vand.u32 %v544, 4294901760
        %2719 = vmatmul.mubr.f32.gmra.mxu0 %v2718
        %v2720 = vpop.f32.mrf.mxu0
        %v2721 = vadd.f32 %v2544, %v2720
        %v2722 = vpop.f32.mrf.mxu0
        %2723 = vmatprep.mubr.f32.mxu0 0.0
        %v2724 = vand.u32 %v547, 4294901760
        %2725 = vmatmul.mubr.f32.gmra.mxu0 %v2724
        %v2726 = vpop.f32.mrf.mxu0
        %v2727 = vadd.f32 %v2552, %v2726
        %v2728 = vpop.f32.mrf.mxu0
        %2729 = vmatprep.mubr.f32.mxu0 0.0
        %v2730 = vand.u32 %v550, 4294901760
        %2731 = vmatmul.mubr.f32.gmra.mxu0 %v2730
        %v2732 = vpop.f32.mrf.mxu0
        %v2733 = vadd.f32 %v2560, %v2732
        %v2734 = vpop.f32.mrf.mxu0
        %2735 = vmatprep.mubr.f32.mxu0 0.0
        %v2736 = vand.u32 %v553, 4294901760
        %2737 = vmatmul.mubr.f32.gmra.mxu0 %v2736
        %v2738 = vpop.f32.mrf.mxu0
        %v2739 = vadd.f32 %v2568, %v2738
        %v2740 = vpop.f32.mrf.mxu0
        %2741 = vmatprep.mubr.f32.mxu0 0.0
        %v2742 = vand.u32 %v556, 4294901760
        %2743 = vmatmul.mubr.f32.gmra.mxu0 %v2742
        %v2744 = vpop.f32.mrf.mxu0
        %v2745 = vadd.f32 %v2576, %v2744
        %v2746 = vpop.f32.mrf.mxu0
        %2747 = vmatprep.mubr.f32.mxu0 0.0
        %v2748 = vand.u32 %v559, 4294901760
        %2749 = vmatmul.mubr.f32.gmra.mxu0 %v2748
        %v2750 = vpop.f32.mrf.mxu0
        %v2751 = vadd.f32 %v2584, %v2750
        %v2752 = vpop.f32.mrf.mxu0
        %2753 = vdwg.mxu0
        %2754 = vmatprep.subr.mxu0 0.0
        %v2755 = vand.u32 %v655, 4294901760
        %2756 = vmatpush1.xpose.msra.mxu0 %v2755
        %2757 = vmatprep.subr.mxu0 0.0
        %v2758 = vand.u32 %v653, 4294901760
        %2759 = vmatpush1.xpose.msra.mxu0 %v2758
        %2760 = vmatprep.subr.mxu0 0.0
        %v2761 = vand.u32 %v651, 4294901760
        %2762 = vmatpush1.xpose.msra.mxu0 %v2761
        %2763 = vmatprep.subr.mxu0 0.0
        %v2764 = vand.u32 %v649, 4294901760
        %2765 = vmatpush1.xpose.msra.mxu0 %v2764
        %2766 = vmatprep.subr.mxu0 0.0
        %v2767 = vand.u32 %v647, 4294901760
        %2768 = vmatpush1.xpose.msra.mxu0 %v2767
        %2769 = vmatprep.subr.mxu0 0.0
        %v2770 = vand.u32 %v645, 4294901760
        %2771 = vmatpush1.xpose.msra.mxu0 %v2770
        %2772 = vmatprep.subr.mxu0 0.0
        %v2773 = vand.u32 %v643, 4294901760
        %2774 = vmatpush1.xpose.msra.mxu0 %v2773
        %2775 = vmatprep.subr.mxu0 0.0
        %v2776 = vand.u32 %v641, 4294901760
        %2777 = vmatpush1.xpose.msra.mxu0 %v2776
        %2778 = vmatprep.subr.mxu0 0.0
        %v2779 = vand.u32 %v639, 4294901760
        %2780 = vmatpush1.xpose.msra.mxu0 %v2779
        %2781 = vmatprep.subr.mxu0 0.0
        %v2782 = vand.u32 %v637, 4294901760
        %2783 = vmatpush1.xpose.msra.mxu0 %v2782
        %2784 = vmatprep.subr.mxu0 0.0
        %v2785 = vand.u32 %v635, 4294901760
        %2786 = vmatpush1.xpose.msra.mxu0 %v2785
        %2787 = vmatprep.subr.mxu0 0.0
        %v2788 = vand.u32 %v633, 4294901760
        %2789 = vmatpush1.xpose.msra.mxu0 %v2788
        %2790 = vmatprep.subr.mxu0 0.0
        %v2791 = vand.u32 %v631, 4294901760
        %2792 = vmatpush1.xpose.msra.mxu0 %v2791
        %2793 = vmatprep.subr.mxu0 0.0
        %v2794 = vand.u32 %v629, 4294901760
        %2795 = vmatpush1.xpose.msra.mxu0 %v2794
        %2796 = vmatprep.subr.mxu0 0.0
        %v2797 = vand.u32 %v627, 4294901760
        %2798 = vmatpush1.xpose.msra.mxu0 %v2797
        %2799 = vmatprep.subr.mxu0 0.0
        %v2800 = vand.u32 %v625, 4294901760
        %2801 = vmatpush1.xpose.msra.mxu0 %v2800
        %2802 = vmatprep.subr.mxu0 0.0
        %2803 = vmatpush2.xpose.msra.mxu0 0.0
        %2804 = vmatprep.subr.mxu0 0.0
        %2805 = vmatpush2.xpose.msra.mxu0 0.0
        %2806 = vmatprep.subr.mxu0 0.0
        %2807 = vmatpush2.xpose.msra.mxu0 0.0
        %2808 = vmatprep.subr.mxu0 0.0
        %2809 = vmatpush2.xpose.msra.mxu0 0.0
        %2810 = vmatprep.subr.mxu0 0.0
        %2811 = vmatpush2.xpose.msra.mxu0 0.0
        %2812 = vmatprep.subr.mxu0 0.0
        %2813 = vmatpush2.xpose.msra.mxu0 0.0
        %2814 = vmatprep.subr.mxu0 0.0
        %2815 = vmatpush2.xpose.msra.mxu0 0.0
        %2816 = vmatprep.subr.mxu0 0.0
        %2817 = vmatpush2.xpose.msra.mxu0 0.0
        %2818 = vmatprep.subr.mxu0 0.0
        %2819 = vmatpush2.xpose.msra.mxu0 0.0
        %2820 = vmatprep.subr.mxu0 0.0
        %2821 = vmatpush2.xpose.msra.mxu0 0.0
        %2822 = vmatprep.subr.mxu0 0.0
        %2823 = vmatpush2.xpose.msra.mxu0 0.0
        %2824 = vmatprep.subr.mxu0 0.0
        %2825 = vmatpush2.xpose.msra.mxu0 0.0
        %2826 = vmatprep.subr.mxu0 0.0
        %2827 = vmatpush2.xpose.msra.mxu0 0.0
        %2828 = vmatprep.subr.mxu0 0.0
        %2829 = vmatpush2.xpose.msra.mxu0 0.0
        %2830 = vmatprep.subr.mxu0 0.0
        %2831 = vmatpush2.xpose.msra.mxu0 0.0
        %2832 = vmatprep.subr.mxu0 0.0
        %2833 = vmatpush2.xpose.msra.mxu0 0.0
        %2834 = vmatprep.mubr.f32.mxu0 0.0
        %v2835 = vand.u32 %v535, 4294901760
        %2836 = vmatmul.mubr.f32.gmra.mxu0 %v2835
        %v2837 = vpop.f32.mrf.mxu0
        %v2838 = vadd.f32 %v2703, %v2837
        %v2839 = vpop.f32.mrf.mxu0
        %2840 = vmatprep.mubr.f32.mxu0 0.0
        %v2841 = vand.u32 %v538, 4294901760
        %2842 = vmatmul.mubr.f32.gmra.mxu0 %v2841
        %v2843 = vpop.f32.mrf.mxu0
        %v2844 = vadd.f32 %v2709, %v2843
        %v2845 = vpop.f32.mrf.mxu0
        %2846 = vmatprep.mubr.f32.mxu0 0.0
        %v2847 = vand.u32 %v541, 4294901760
        %2848 = vmatmul.mubr.f32.gmra.mxu0 %v2847
        %v2849 = vpop.f32.mrf.mxu0
        %v2850 = vadd.f32 %v2715, %v2849
        %v2851 = vpop.f32.mrf.mxu0
        %2852 = vmatprep.mubr.f32.mxu0 0.0
        %v2853 = vand.u32 %v544, 4294901760
        %2854 = vmatmul.mubr.f32.gmra.mxu0 %v2853
        %v2855 = vpop.f32.mrf.mxu0
        %v2856 = vadd.f32 %v2721, %v2855
        %v2857 = vpop.f32.mrf.mxu0
        %2858 = vmatprep.mubr.f32.mxu0 0.0
        %v2859 = vand.u32 %v547, 4294901760
        %2860 = vmatmul.mubr.f32.gmra.mxu0 %v2859
        %v2861 = vpop.f32.mrf.mxu0
        %v2862 = vadd.f32 %v2727, %v2861
        %v2863 = vpop.f32.mrf.mxu0
        %2864 = vmatprep.mubr.f32.mxu0 0.0
        %v2865 = vand.u32 %v550, 4294901760
        %2866 = vmatmul.mubr.f32.gmra.mxu0 %v2865
        %v2867 = vpop.f32.mrf.mxu0
        %v2868 = vadd.f32 %v2733, %v2867
        %v2869 = vpop.f32.mrf.mxu0
        %2870 = vmatprep.mubr.f32.mxu0 0.0
        %v2871 = vand.u32 %v553, 4294901760
        %2872 = vmatmul.mubr.f32.gmra.mxu0 %v2871
        %v2873 = vpop.f32.mrf.mxu0
        %v2874 = vadd.f32 %v2739, %v2873
        %v2875 = vpop.f32.mrf.mxu0
        %2876 = vmatprep.mubr.f32.mxu0 0.0
        %v2877 = vand.u32 %v556, 4294901760
        %2878 = vmatmul.mubr.f32.gmra.mxu0 %v2877
        %v2879 = vpop.f32.mrf.mxu0
        %v2880 = vadd.f32 %v2745, %v2879
        %v2881 = vpop.f32.mrf.mxu0
        %2882 = vmatprep.mubr.f32.mxu0 0.0
        %v2883 = vand.u32 %v559, 4294901760
        %2884 = vmatmul.mubr.f32.gmra.mxu0 %v2883
        %v2885 = vpop.f32.mrf.mxu0
        %v2886 = vadd.f32 %v2751, %v2885
        %v2887 = vpop.f32.mrf.mxu0
        %2888 = vdwg.mxu0
        %v2890 = vsel %vm533, %v368, 0
        %v2893 = vsel %vm533, %v369, 0
        %v2896 = vsel %vm533, %v370, 0
        %v2899 = vsel %vm533, %v371, 0
        %v2902 = vsel %vm533, %v372, 0
        %v2905 = vsel %vm533, %v373, 0
        %v2908 = vsel %vm533, %v374, 0
        %v2911 = vsel %vm533, %v375, 0
        %v2914 = vsel %vm533, %v376, 0
        %v2916 = vsel %vm533, %v319, 0
        %v2918 = vsel %vm533, %v320, 0
        %v2920 = vsel %vm533, %v321, 0
        %v2922 = vsel %vm533, %v322, 0
        %v2924 = vsel %vm533, %v323, 0
        %v2926 = vsel %vm533, %v324, 0
        %v2928 = vsel %vm533, %v325, 0
        %v2930 = vsel %vm533, %v326, 0
        %v2932 = vsel %vm533, %v327, 0
        %v2934 = vsel %vm533, %v328, 0
        %v2936 = vsel %vm533, %v329, 0
        %v2938 = vsel %vm533, %v330, 0
        %v2940 = vsel %vm533, %v331, 0
        %v2942 = vsel %vm533, %v332, 0
        %v2944 = vsel %vm533, %v333, 0
        %v2946 = vsel %vm533, %v334, 0
        %v2948 = vsel %vm533, %v335, 0
        %v2950 = vsel %vm533, %v336, 0
        %v2952 = vsel %vm533, %v337, 0
        %v2954 = vsel %vm533, %v338, 0
        %v2956 = vsel %vm533, %v339, 0
        %v2958 = vsel %vm533, %v340, 0
        %v2960 = vsel %vm533, %v341, 0
        %v2962 = vsel %vm533, %v342, 0
        %v2964 = vsel %vm533, %v343, 0
        %v2966 = vsel %vm533, %v344, 0
        %v2968 = vsel %vm533, %v345, 0
        %v2970 = vsel %vm533, %v346, 0
        %v2972 = vsel %vm533, %v347, 0
        %v2974 = vsel %vm533, %v348, 0
        %v2976 = vsel %vm533, %v349, 0
        %v2978 = vsel %vm533, %v350, 0
        %v2980 = vsel %vm533, %v351, 0
        %v2982 = vsel %vm533, %v352, 0
        %v2984 = vsel %vm533, %v353, 0
        %v2986 = vsel %vm533, %v354, 0
        %v2988 = vsel %vm533, %v355, 0
        %v2990 = vsel %vm533, %v356, 0
        %v2992 = vsel %vm533, %v357, 0
        %v2994 = vsel %vm533, %v358, 0
        %v2996 = vsel %vm533, %v359, 0
        %v2998 = vsel %vm533, %v360, 0
        %v3000 = vsel %vm533, %v361, 0
        %v3002 = vsel %vm533, %v362, 0
        %v3004 = vsel %vm533, %v363, 0
        %v3006 = vsel %vm533, %v364, 0
        %v3008 = vsel %vm533, %v365, 0
        %v3010 = vsel %vm533, %v366, 0
        %3012 = vmatprep.subr.mxu0 0.0
        %v3013 = vand.u32 %v2946, 4294901760
        %3014 = vmatpush1.xpose.msra.mxu0 %v3013
        %3015 = vmatprep.subr.mxu0 0.0
        %v3016 = vand.u32 %v2944, 4294901760
        %3017 = vmatpush1.xpose.msra.mxu0 %v3016
        %3018 = vmatprep.subr.mxu0 0.0
        %v3019 = vand.u32 %v2942, 4294901760
        %3020 = vmatpush1.xpose.msra.mxu0 %v3019
        %3021 = vmatprep.subr.mxu0 0.0
        %v3022 = vand.u32 %v2940, 4294901760
        %3023 = vmatpush1.xpose.msra.mxu0 %v3022
        %3024 = vmatprep.subr.mxu0 0.0
        %v3025 = vand.u32 %v2938, 4294901760
        %3026 = vmatpush1.xpose.msra.mxu0 %v3025
        %3027 = vmatprep.subr.mxu0 0.0
        %v3028 = vand.u32 %v2936, 4294901760
        %3029 = vmatpush1.xpose.msra.mxu0 %v3028
        %3030 = vmatprep.subr.mxu0 0.0
        %v3031 = vand.u32 %v2934, 4294901760
        %3032 = vmatpush1.xpose.msra.mxu0 %v3031
        %3033 = vmatprep.subr.mxu0 0.0
        %v3034 = vand.u32 %v2932, 4294901760
        %3035 = vmatpush1.xpose.msra.mxu0 %v3034
        %3036 = vmatprep.subr.mxu0 0.0
        %v3037 = vand.u32 %v2930, 4294901760
        %3038 = vmatpush1.xpose.msra.mxu0 %v3037
        %3039 = vmatprep.subr.mxu0 0.0
        %v3040 = vand.u32 %v2928, 4294901760
        %3041 = vmatpush1.xpose.msra.mxu0 %v3040
        %3042 = vmatprep.subr.mxu0 0.0
        %v3043 = vand.u32 %v2926, 4294901760
        %3044 = vmatpush1.xpose.msra.mxu0 %v3043
        %3045 = vmatprep.subr.mxu0 0.0
        %v3046 = vand.u32 %v2924, 4294901760
        %3047 = vmatpush1.xpose.msra.mxu0 %v3046
        %3048 = vmatprep.subr.mxu0 0.0
        %v3049 = vand.u32 %v2922, 4294901760
        %3050 = vmatpush1.xpose.msra.mxu0 %v3049
        %3051 = vmatprep.subr.mxu0 0.0
        %v3052 = vand.u32 %v2920, 4294901760
        %3053 = vmatpush1.xpose.msra.mxu0 %v3052
        %3054 = vmatprep.subr.mxu0 0.0
        %v3055 = vand.u32 %v2918, 4294901760
        %3056 = vmatpush1.xpose.msra.mxu0 %v3055
        %3057 = vmatprep.subr.mxu0 0.0
        %v3058 = vand.u32 %v2916, 4294901760
        %3059 = vmatpush1.xpose.msra.mxu0 %v3058
        %3060 = vmatprep.subr.mxu0 0.0
        %v3061 = vand.u32 %v2978, 4294901760
        %3062 = vmatpush2.xpose.msra.mxu0 %v3061
        %3063 = vmatprep.subr.mxu0 0.0
        %v3064 = vand.u32 %v2976, 4294901760
        %3065 = vmatpush2.xpose.msra.mxu0 %v3064
        %3066 = vmatprep.subr.mxu0 0.0
        %v3067 = vand.u32 %v2974, 4294901760
        %3068 = vmatpush2.xpose.msra.mxu0 %v3067
        %3069 = vmatprep.subr.mxu0 0.0
        %v3070 = vand.u32 %v2972, 4294901760
        %3071 = vmatpush2.xpose.msra.mxu0 %v3070
        %3072 = vmatprep.subr.mxu0 0.0
        %v3073 = vand.u32 %v2970, 4294901760
        %3074 = vmatpush2.xpose.msra.mxu0 %v3073
        %3075 = vmatprep.subr.mxu0 0.0
        %v3076 = vand.u32 %v2968, 4294901760
        %3077 = vmatpush2.xpose.msra.mxu0 %v3076
        %3078 = vmatprep.subr.mxu0 0.0
        %v3079 = vand.u32 %v2966, 4294901760
        %3080 = vmatpush2.xpose.msra.mxu0 %v3079
        %3081 = vmatprep.subr.mxu0 0.0
        %v3082 = vand.u32 %v2964, 4294901760
        %3083 = vmatpush2.xpose.msra.mxu0 %v3082
        %3084 = vmatprep.subr.mxu0 0.0
        %v3085 = vand.u32 %v2962, 4294901760
        %3086 = vmatpush2.xpose.msra.mxu0 %v3085
        %3087 = vmatprep.subr.mxu0 0.0
        %v3088 = vand.u32 %v2960, 4294901760
        %3089 = vmatpush2.xpose.msra.mxu0 %v3088
        %3090 = vmatprep.subr.mxu0 0.0
        %v3091 = vand.u32 %v2958, 4294901760
        %3092 = vmatpush2.xpose.msra.mxu0 %v3091
        %3093 = vmatprep.subr.mxu0 0.0
        %v3094 = vand.u32 %v2956, 4294901760
        %3095 = vmatpush2.xpose.msra.mxu0 %v3094
        %3096 = vmatprep.subr.mxu0 0.0
        %v3097 = vand.u32 %v2954, 4294901760
        %3098 = vmatpush2.xpose.msra.mxu0 %v3097
        %3099 = vmatprep.subr.mxu0 0.0
        %v3100 = vand.u32 %v2952, 4294901760
        %3101 = vmatpush2.xpose.msra.mxu0 %v3100
        %3102 = vmatprep.subr.mxu0 0.0
        %v3103 = vand.u32 %v2950, 4294901760
        %3104 = vmatpush2.xpose.msra.mxu0 %v3103
        %3105 = vmatprep.subr.mxu0 0.0
        %v3106 = vand.u32 %v2948, 4294901760
        %3107 = vmatpush2.xpose.msra.mxu0 %v3106
        %3108 = vmatprep.mubr.f32.mxu0 0.0
        %v3109 = vand.u32 %v2890, 4294901760
        %v3110 = vsub.f32 %v2890, %v3109
        %v3111 = vand.u32 %v3110, 4294901760
        %v3112 = vsub.f32 %v3110, %v3111
        %v3113 = vand.u32 %v3112, 4294901760
        %3114 = vmatmul.mubr.f32.gmra.mxu0 %v3113
        %v3115 = vpop.f32.mrf.mxu0
        %v3116 = vadd.f32 %v1844, %v3115
        %v3117 = vpop.f32.mrf.mxu0
        %v3118 = vadd.f32 %v1846, %v3117
        %3119 = vmatprep.mubr.f32.mxu0 0.0
        %v3120 = vand.u32 %v2893, 4294901760
        %v3121 = vsub.f32 %v2893, %v3120
        %v3122 = vand.u32 %v3121, 4294901760
        %v3123 = vsub.f32 %v3121, %v3122
        %v3124 = vand.u32 %v3123, 4294901760
        %3125 = vmatmul.mubr.f32.gmra.mxu0 %v3124
        %v3126 = vpop.f32.mrf.mxu0
        %v3127 = vadd.f32 %v1851, %v3126
        %v3128 = vpop.f32.mrf.mxu0
        %v3129 = vadd.f32 %v1853, %v3128
        %3130 = vmatprep.mubr.f32.mxu0 0.0
        %v3131 = vand.u32 %v2896, 4294901760
        %v3132 = vsub.f32 %v2896, %v3131
        %v3133 = vand.u32 %v3132, 4294901760
        %v3134 = vsub.f32 %v3132, %v3133
        %v3135 = vand.u32 %v3134, 4294901760
        %3136 = vmatmul.mubr.f32.gmra.mxu0 %v3135
        %v3137 = vpop.f32.mrf.mxu0
        %v3138 = vadd.f32 %v1858, %v3137
        %v3139 = vpop.f32.mrf.mxu0
        %v3140 = vadd.f32 %v1860, %v3139
        %3141 = vmatprep.mubr.f32.mxu0 0.0
        %v3142 = vand.u32 %v2899, 4294901760
        %v3143 = vsub.f32 %v2899, %v3142
        %v3144 = vand.u32 %v3143, 4294901760
        %v3145 = vsub.f32 %v3143, %v3144
        %v3146 = vand.u32 %v3145, 4294901760
        %3147 = vmatmul.mubr.f32.gmra.mxu0 %v3146
        %v3148 = vpop.f32.mrf.mxu0
        %v3149 = vadd.f32 %v1865, %v3148
        %v3150 = vpop.f32.mrf.mxu0
        %v3151 = vadd.f32 %v1867, %v3150
        %3152 = vmatprep.mubr.f32.mxu0 0.0
        %v3153 = vand.u32 %v2902, 4294901760
        %v3154 = vsub.f32 %v2902, %v3153
        %v3155 = vand.u32 %v3154, 4294901760
        %v3156 = vsub.f32 %v3154, %v3155
        %v3157 = vand.u32 %v3156, 4294901760
        %3158 = vmatmul.mubr.f32.gmra.mxu0 %v3157
        %v3159 = vpop.f32.mrf.mxu0
        %v3160 = vadd.f32 %v1872, %v3159
        %v3161 = vpop.f32.mrf.mxu0
        %v3162 = vadd.f32 %v1874, %v3161
        %3163 = vmatprep.mubr.f32.mxu0 0.0
        %v3164 = vand.u32 %v2905, 4294901760
        %v3165 = vsub.f32 %v2905, %v3164
        %v3166 = vand.u32 %v3165, 4294901760
        %v3167 = vsub.f32 %v3165, %v3166
        %v3168 = vand.u32 %v3167, 4294901760
        %3169 = vmatmul.mubr.f32.gmra.mxu0 %v3168
        %v3170 = vpop.f32.mrf.mxu0
        %v3171 = vadd.f32 %v1879, %v3170
        %v3172 = vpop.f32.mrf.mxu0
        %v3173 = vadd.f32 %v1881, %v3172
        %3174 = vmatprep.mubr.f32.mxu0 0.0
        %v3175 = vand.u32 %v2908, 4294901760
        %v3176 = vsub.f32 %v2908, %v3175
        %v3177 = vand.u32 %v3176, 4294901760
        %v3178 = vsub.f32 %v3176, %v3177
        %v3179 = vand.u32 %v3178, 4294901760
        %3180 = vmatmul.mubr.f32.gmra.mxu0 %v3179
        %v3181 = vpop.f32.mrf.mxu0
        %v3182 = vadd.f32 %v1886, %v3181
        %v3183 = vpop.f32.mrf.mxu0
        %v3184 = vadd.f32 %v1888, %v3183
        %3185 = vmatprep.mubr.f32.mxu0 0.0
        %v3186 = vand.u32 %v2911, 4294901760
        %v3187 = vsub.f32 %v2911, %v3186
        %v3188 = vand.u32 %v3187, 4294901760
        %v3189 = vsub.f32 %v3187, %v3188
        %v3190 = vand.u32 %v3189, 4294901760
        %3191 = vmatmul.mubr.f32.gmra.mxu0 %v3190
        %v3192 = vpop.f32.mrf.mxu0
        %v3193 = vadd.f32 %v1893, %v3192
        %v3194 = vpop.f32.mrf.mxu0
        %v3195 = vadd.f32 %v1895, %v3194
        %3196 = vmatprep.mubr.f32.mxu0 0.0
        %v3197 = vand.u32 %v2914, 4294901760
        %v3198 = vsub.f32 %v2914, %v3197
        %v3199 = vand.u32 %v3198, 4294901760
        %v3200 = vsub.f32 %v3198, %v3199
        %v3201 = vand.u32 %v3200, 4294901760
        %3202 = vmatmul.mubr.f32.gmra.mxu0 %v3201
        %v3203 = vpop.f32.mrf.mxu0
        %v3204 = vadd.f32 %v1900, %v3203
        %v3205 = vpop.f32.mrf.mxu0
        %v3206 = vadd.f32 %v1902, %v3205
        %3207 = vdwg.mxu0
        %3208 = vmatprep.subr.mxu0 0.0
        %v3209 = vand.u32 %v2946, 4294901760
        %v3210 = vsub.f32 %v2946, %v3209
        %v3211 = vand.u32 %v3210, 4294901760
        %v3212 = vsub.f32 %v3210, %v3211
        %v3213 = vand.u32 %v3212, 4294901760
        %3214 = vmatpush1.xpose.msra.mxu0 %v3213
        %3215 = vmatprep.subr.mxu0 0.0
        %v3216 = vand.u32 %v2944, 4294901760
        %v3217 = vsub.f32 %v2944, %v3216
        %v3218 = vand.u32 %v3217, 4294901760
        %v3219 = vsub.f32 %v3217, %v3218
        %v3220 = vand.u32 %v3219, 4294901760
        %3221 = vmatpush1.xpose.msra.mxu0 %v3220
        %3222 = vmatprep.subr.mxu0 0.0
        %v3223 = vand.u32 %v2942, 4294901760
        %v3224 = vsub.f32 %v2942, %v3223
        %v3225 = vand.u32 %v3224, 4294901760
        %v3226 = vsub.f32 %v3224, %v3225
        %v3227 = vand.u32 %v3226, 4294901760
        %3228 = vmatpush1.xpose.msra.mxu0 %v3227
        %3229 = vmatprep.subr.mxu0 0.0
        %v3230 = vand.u32 %v2940, 4294901760
        %v3231 = vsub.f32 %v2940, %v3230
        %v3232 = vand.u32 %v3231, 4294901760
        %v3233 = vsub.f32 %v3231, %v3232
        %v3234 = vand.u32 %v3233, 4294901760
        %3235 = vmatpush1.xpose.msra.mxu0 %v3234
        %3236 = vmatprep.subr.mxu0 0.0
        %v3237 = vand.u32 %v2938, 4294901760
        %v3238 = vsub.f32 %v2938, %v3237
        %v3239 = vand.u32 %v3238, 4294901760
        %v3240 = vsub.f32 %v3238, %v3239
        %v3241 = vand.u32 %v3240, 4294901760
        %3242 = vmatpush1.xpose.msra.mxu0 %v3241
        %3243 = vmatprep.subr.mxu0 0.0
        %v3244 = vand.u32 %v2936, 4294901760
        %v3245 = vsub.f32 %v2936, %v3244
        %v3246 = vand.u32 %v3245, 4294901760
        %v3247 = vsub.f32 %v3245, %v3246
        %v3248 = vand.u32 %v3247, 4294901760
        %3249 = vmatpush1.xpose.msra.mxu0 %v3248
        %3250 = vmatprep.subr.mxu0 0.0
        %v3251 = vand.u32 %v2934, 4294901760
        %v3252 = vsub.f32 %v2934, %v3251
        %v3253 = vand.u32 %v3252, 4294901760
        %v3254 = vsub.f32 %v3252, %v3253
        %v3255 = vand.u32 %v3254, 4294901760
        %3256 = vmatpush1.xpose.msra.mxu0 %v3255
        %3257 = vmatprep.subr.mxu0 0.0
        %v3258 = vand.u32 %v2932, 4294901760
        %v3259 = vsub.f32 %v2932, %v3258
        %v3260 = vand.u32 %v3259, 4294901760
        %v3261 = vsub.f32 %v3259, %v3260
        %v3262 = vand.u32 %v3261, 4294901760
        %3263 = vmatpush1.xpose.msra.mxu0 %v3262
        %3264 = vmatprep.subr.mxu0 0.0
        %v3265 = vand.u32 %v2930, 4294901760
        %v3266 = vsub.f32 %v2930, %v3265
        %v3267 = vand.u32 %v3266, 4294901760
        %v3268 = vsub.f32 %v3266, %v3267
        %v3269 = vand.u32 %v3268, 4294901760
        %3270 = vmatpush1.xpose.msra.mxu0 %v3269
        %3271 = vmatprep.subr.mxu0 0.0
        %v3272 = vand.u32 %v2928, 4294901760
        %v3273 = vsub.f32 %v2928, %v3272
        %v3274 = vand.u32 %v3273, 4294901760
        %v3275 = vsub.f32 %v3273, %v3274
        %v3276 = vand.u32 %v3275, 4294901760
        %3277 = vmatpush1.xpose.msra.mxu0 %v3276
        %3278 = vmatprep.subr.mxu0 0.0
        %v3279 = vand.u32 %v2926, 4294901760
        %v3280 = vsub.f32 %v2926, %v3279
        %v3281 = vand.u32 %v3280, 4294901760
        %v3282 = vsub.f32 %v3280, %v3281
        %v3283 = vand.u32 %v3282, 4294901760
        %3284 = vmatpush1.xpose.msra.mxu0 %v3283
        %3285 = vmatprep.subr.mxu0 0.0
        %v3286 = vand.u32 %v2924, 4294901760
        %v3287 = vsub.f32 %v2924, %v3286
        %v3288 = vand.u32 %v3287, 4294901760
        %v3289 = vsub.f32 %v3287, %v3288
        %v3290 = vand.u32 %v3289, 4294901760
        %3291 = vmatpush1.xpose.msra.mxu0 %v3290
        %3292 = vmatprep.subr.mxu0 0.0
        %v3293 = vand.u32 %v2922, 4294901760
        %v3294 = vsub.f32 %v2922, %v3293
        %v3295 = vand.u32 %v3294, 4294901760
        %v3296 = vsub.f32 %v3294, %v3295
        %v3297 = vand.u32 %v3296, 4294901760
        %3298 = vmatpush1.xpose.msra.mxu0 %v3297
        %3299 = vmatprep.subr.mxu0 0.0
        %v3300 = vand.u32 %v2920, 4294901760
        %v3301 = vsub.f32 %v2920, %v3300
        %v3302 = vand.u32 %v3301, 4294901760
        %v3303 = vsub.f32 %v3301, %v3302
        %v3304 = vand.u32 %v3303, 4294901760
        %3305 = vmatpush1.xpose.msra.mxu0 %v3304
        %3306 = vmatprep.subr.mxu0 0.0
        %v3307 = vand.u32 %v2918, 4294901760
        %v3308 = vsub.f32 %v2918, %v3307
        %v3309 = vand.u32 %v3308, 4294901760
        %v3310 = vsub.f32 %v3308, %v3309
        %v3311 = vand.u32 %v3310, 4294901760
        %3312 = vmatpush1.xpose.msra.mxu0 %v3311
        %3313 = vmatprep.subr.mxu0 0.0
        %v3314 = vand.u32 %v2916, 4294901760
        %v3315 = vsub.f32 %v2916, %v3314
        %v3316 = vand.u32 %v3315, 4294901760
        %v3317 = vsub.f32 %v3315, %v3316
        %v3318 = vand.u32 %v3317, 4294901760
        %3319 = vmatpush1.xpose.msra.mxu0 %v3318
        %3320 = vmatprep.subr.mxu0 0.0
        %v3321 = vand.u32 %v2978, 4294901760
        %v3322 = vsub.f32 %v2978, %v3321
        %v3323 = vand.u32 %v3322, 4294901760
        %v3324 = vsub.f32 %v3322, %v3323
        %v3325 = vand.u32 %v3324, 4294901760
        %3326 = vmatpush2.xpose.msra.mxu0 %v3325
        %3327 = vmatprep.subr.mxu0 0.0
        %v3328 = vand.u32 %v2976, 4294901760
        %v3329 = vsub.f32 %v2976, %v3328
        %v3330 = vand.u32 %v3329, 4294901760
        %v3331 = vsub.f32 %v3329, %v3330
        %v3332 = vand.u32 %v3331, 4294901760
        %3333 = vmatpush2.xpose.msra.mxu0 %v3332
        %3334 = vmatprep.subr.mxu0 0.0
        %v3335 = vand.u32 %v2974, 4294901760
        %v3336 = vsub.f32 %v2974, %v3335
        %v3337 = vand.u32 %v3336, 4294901760
        %v3338 = vsub.f32 %v3336, %v3337
        %v3339 = vand.u32 %v3338, 4294901760
        %3340 = vmatpush2.xpose.msra.mxu0 %v3339
        %3341 = vmatprep.subr.mxu0 0.0
        %v3342 = vand.u32 %v2972, 4294901760
        %v3343 = vsub.f32 %v2972, %v3342
        %v3344 = vand.u32 %v3343, 4294901760
        %v3345 = vsub.f32 %v3343, %v3344
        %v3346 = vand.u32 %v3345, 4294901760
        %3347 = vmatpush2.xpose.msra.mxu0 %v3346
        %3348 = vmatprep.subr.mxu0 0.0
        %v3349 = vand.u32 %v2970, 4294901760
        %v3350 = vsub.f32 %v2970, %v3349
        %v3351 = vand.u32 %v3350, 4294901760
        %v3352 = vsub.f32 %v3350, %v3351
        %v3353 = vand.u32 %v3352, 4294901760
        %3354 = vmatpush2.xpose.msra.mxu0 %v3353
        %3355 = vmatprep.subr.mxu0 0.0
        %v3356 = vand.u32 %v2968, 4294901760
        %v3357 = vsub.f32 %v2968, %v3356
        %v3358 = vand.u32 %v3357, 4294901760
        %v3359 = vsub.f32 %v3357, %v3358
        %v3360 = vand.u32 %v3359, 4294901760
        %3361 = vmatpush2.xpose.msra.mxu0 %v3360
        %3362 = vmatprep.subr.mxu0 0.0
        %v3363 = vand.u32 %v2966, 4294901760
        %v3364 = vsub.f32 %v2966, %v3363
        %v3365 = vand.u32 %v3364, 4294901760
        %v3366 = vsub.f32 %v3364, %v3365
        %v3367 = vand.u32 %v3366, 4294901760
        %3368 = vmatpush2.xpose.msra.mxu0 %v3367
        %3369 = vmatprep.subr.mxu0 0.0
        %v3370 = vand.u32 %v2964, 4294901760
        %v3371 = vsub.f32 %v2964, %v3370
        %v3372 = vand.u32 %v3371, 4294901760
        %v3373 = vsub.f32 %v3371, %v3372
        %v3374 = vand.u32 %v3373, 4294901760
        %3375 = vmatpush2.xpose.msra.mxu0 %v3374
        %3376 = vmatprep.subr.mxu0 0.0
        %v3377 = vand.u32 %v2962, 4294901760
        %v3378 = vsub.f32 %v2962, %v3377
        %v3379 = vand.u32 %v3378, 4294901760
        %v3380 = vsub.f32 %v3378, %v3379
        %v3381 = vand.u32 %v3380, 4294901760
        %3382 = vmatpush2.xpose.msra.mxu0 %v3381
        %3383 = vmatprep.subr.mxu0 0.0
        %v3384 = vand.u32 %v2960, 4294901760
        %v3385 = vsub.f32 %v2960, %v3384
        %v3386 = vand.u32 %v3385, 4294901760
        %v3387 = vsub.f32 %v3385, %v3386
        %v3388 = vand.u32 %v3387, 4294901760
        %3389 = vmatpush2.xpose.msra.mxu0 %v3388
        %3390 = vmatprep.subr.mxu0 0.0
        %v3391 = vand.u32 %v2958, 4294901760
        %v3392 = vsub.f32 %v2958, %v3391
        %v3393 = vand.u32 %v3392, 4294901760
        %v3394 = vsub.f32 %v3392, %v3393
        %v3395 = vand.u32 %v3394, 4294901760
        %3396 = vmatpush2.xpose.msra.mxu0 %v3395
        %3397 = vmatprep.subr.mxu0 0.0
        %v3398 = vand.u32 %v2956, 4294901760
        %v3399 = vsub.f32 %v2956, %v3398
        %v3400 = vand.u32 %v3399, 4294901760
        %v3401 = vsub.f32 %v3399, %v3400
        %v3402 = vand.u32 %v3401, 4294901760
        %3403 = vmatpush2.xpose.msra.mxu0 %v3402
        %3404 = vmatprep.subr.mxu0 0.0
        %v3405 = vand.u32 %v2954, 4294901760
        %v3406 = vsub.f32 %v2954, %v3405
        %v3407 = vand.u32 %v3406, 4294901760
        %v3408 = vsub.f32 %v3406, %v3407
        %v3409 = vand.u32 %v3408, 4294901760
        %3410 = vmatpush2.xpose.msra.mxu0 %v3409
        %3411 = vmatprep.subr.mxu0 0.0
        %v3412 = vand.u32 %v2952, 4294901760
        %v3413 = vsub.f32 %v2952, %v3412
        %v3414 = vand.u32 %v3413, 4294901760
        %v3415 = vsub.f32 %v3413, %v3414
        %v3416 = vand.u32 %v3415, 4294901760
        %3417 = vmatpush2.xpose.msra.mxu0 %v3416
        %3418 = vmatprep.subr.mxu0 0.0
        %v3419 = vand.u32 %v2950, 4294901760
        %v3420 = vsub.f32 %v2950, %v3419
        %v3421 = vand.u32 %v3420, 4294901760
        %v3422 = vsub.f32 %v3420, %v3421
        %v3423 = vand.u32 %v3422, 4294901760
        %3424 = vmatpush2.xpose.msra.mxu0 %v3423
        %3425 = vmatprep.subr.mxu0 0.0
        %v3426 = vand.u32 %v2948, 4294901760
        %v3427 = vsub.f32 %v2948, %v3426
        %v3428 = vand.u32 %v3427, 4294901760
        %v3429 = vsub.f32 %v3427, %v3428
        %v3430 = vand.u32 %v3429, 4294901760
        %3431 = vmatpush2.xpose.msra.mxu0 %v3430
        %3432 = vmatprep.mubr.f32.mxu0 0.0
        %v3433 = vand.u32 %v2890, 4294901760
        %3434 = vmatmul.mubr.f32.gmra.mxu0 %v3433
        %v3435 = vpop.f32.mrf.mxu0
        %v3436 = vadd.f32 %v3116, %v3435
        %v3437 = vpop.f32.mrf.mxu0
        %v3438 = vadd.f32 %v3118, %v3437
        %3439 = vmatprep.mubr.f32.mxu0 0.0
        %v3440 = vand.u32 %v2893, 4294901760
        %3441 = vmatmul.mubr.f32.gmra.mxu0 %v3440
        %v3442 = vpop.f32.mrf.mxu0
        %v3443 = vadd.f32 %v3127, %v3442
        %v3444 = vpop.f32.mrf.mxu0
        %v3445 = vadd.f32 %v3129, %v3444
        %3446 = vmatprep.mubr.f32.mxu0 0.0
        %v3447 = vand.u32 %v2896, 4294901760
        %3448 = vmatmul.mubr.f32.gmra.mxu0 %v3447
        %v3449 = vpop.f32.mrf.mxu0
        %v3450 = vadd.f32 %v3138, %v3449
        %v3451 = vpop.f32.mrf.mxu0
        %v3452 = vadd.f32 %v3140, %v3451
        %3453 = vmatprep.mubr.f32.mxu0 0.0
        %v3454 = vand.u32 %v2899, 4294901760
        %3455 = vmatmul.mubr.f32.gmra.mxu0 %v3454
        %v3456 = vpop.f32.mrf.mxu0
        %v3457 = vadd.f32 %v3149, %v3456
        %v3458 = vpop.f32.mrf.mxu0
        %v3459 = vadd.f32 %v3151, %v3458
        %3460 = vmatprep.mubr.f32.mxu0 0.0
        %v3461 = vand.u32 %v2902, 4294901760
        %3462 = vmatmul.mubr.f32.gmra.mxu0 %v3461
        %v3463 = vpop.f32.mrf.mxu0
        %v3464 = vadd.f32 %v3160, %v3463
        %v3465 = vpop.f32.mrf.mxu0
        %v3466 = vadd.f32 %v3162, %v3465
        %3467 = vmatprep.mubr.f32.mxu0 0.0
        %v3468 = vand.u32 %v2905, 4294901760
        %3469 = vmatmul.mubr.f32.gmra.mxu0 %v3468
        %v3470 = vpop.f32.mrf.mxu0
        %v3471 = vadd.f32 %v3171, %v3470
        %v3472 = vpop.f32.mrf.mxu0
        %v3473 = vadd.f32 %v3173, %v3472
        %3474 = vmatprep.mubr.f32.mxu0 0.0
        %v3475 = vand.u32 %v2908, 4294901760
        %3476 = vmatmul.mubr.f32.gmra.mxu0 %v3475
        %v3477 = vpop.f32.mrf.mxu0
        %v3478 = vadd.f32 %v3182, %v3477
        %v3479 = vpop.f32.mrf.mxu0
        %v3480 = vadd.f32 %v3184, %v3479
        %3481 = vmatprep.mubr.f32.mxu0 0.0
        %v3482 = vand.u32 %v2911, 4294901760
        %3483 = vmatmul.mubr.f32.gmra.mxu0 %v3482
        %v3484 = vpop.f32.mrf.mxu0
        %v3485 = vadd.f32 %v3193, %v3484
        %v3486 = vpop.f32.mrf.mxu0
        %v3487 = vadd.f32 %v3195, %v3486
        %3488 = vmatprep.mubr.f32.mxu0 0.0
        %v3489 = vand.u32 %v2914, 4294901760
        %3490 = vmatmul.mubr.f32.gmra.mxu0 %v3489
        %v3491 = vpop.f32.mrf.mxu0
        %v3492 = vadd.f32 %v3204, %v3491
        %v3493 = vpop.f32.mrf.mxu0
        %v3494 = vadd.f32 %v3206, %v3493
        %3495 = vdwg.mxu0
        %3496 = vmatprep.subr.mxu0 0.0
        %v3497 = vand.u32 %v2946, 4294901760
        %v3498 = vsub.f32 %v2946, %v3497
        %3499 = vmatpush1.xpose.msra.mxu0 %v3498
        %3500 = vmatprep.subr.mxu0 0.0
        %v3501 = vand.u32 %v2944, 4294901760
        %v3502 = vsub.f32 %v2944, %v3501
        %3503 = vmatpush1.xpose.msra.mxu0 %v3502
        %3504 = vmatprep.subr.mxu0 0.0
        %v3505 = vand.u32 %v2942, 4294901760
        %v3506 = vsub.f32 %v2942, %v3505
        %3507 = vmatpush1.xpose.msra.mxu0 %v3506
        %3508 = vmatprep.subr.mxu0 0.0
        %v3509 = vand.u32 %v2940, 4294901760
        %v3510 = vsub.f32 %v2940, %v3509
        %3511 = vmatpush1.xpose.msra.mxu0 %v3510
        %3512 = vmatprep.subr.mxu0 0.0
        %v3513 = vand.u32 %v2938, 4294901760
        %v3514 = vsub.f32 %v2938, %v3513
        %3515 = vmatpush1.xpose.msra.mxu0 %v3514
        %3516 = vmatprep.subr.mxu0 0.0
        %v3517 = vand.u32 %v2936, 4294901760
        %v3518 = vsub.f32 %v2936, %v3517
        %3519 = vmatpush1.xpose.msra.mxu0 %v3518
        %3520 = vmatprep.subr.mxu0 0.0
        %v3521 = vand.u32 %v2934, 4294901760
        %v3522 = vsub.f32 %v2934, %v3521
        %3523 = vmatpush1.xpose.msra.mxu0 %v3522
        %3524 = vmatprep.subr.mxu0 0.0
        %v3525 = vand.u32 %v2932, 4294901760
        %v3526 = vsub.f32 %v2932, %v3525
        %3527 = vmatpush1.xpose.msra.mxu0 %v3526
        %3528 = vmatprep.subr.mxu0 0.0
        %v3529 = vand.u32 %v2930, 4294901760
        %v3530 = vsub.f32 %v2930, %v3529
        %3531 = vmatpush1.xpose.msra.mxu0 %v3530
        %3532 = vmatprep.subr.mxu0 0.0
        %v3533 = vand.u32 %v2928, 4294901760
        %v3534 = vsub.f32 %v2928, %v3533
        %3535 = vmatpush1.xpose.msra.mxu0 %v3534
        %3536 = vmatprep.subr.mxu0 0.0
        %v3537 = vand.u32 %v2926, 4294901760
        %v3538 = vsub.f32 %v2926, %v3537
        %3539 = vmatpush1.xpose.msra.mxu0 %v3538
        %3540 = vmatprep.subr.mxu0 0.0
        %v3541 = vand.u32 %v2924, 4294901760
        %v3542 = vsub.f32 %v2924, %v3541
        %3543 = vmatpush1.xpose.msra.mxu0 %v3542
        %3544 = vmatprep.subr.mxu0 0.0
        %v3545 = vand.u32 %v2922, 4294901760
        %v3546 = vsub.f32 %v2922, %v3545
        %3547 = vmatpush1.xpose.msra.mxu0 %v3546
        %3548 = vmatprep.subr.mxu0 0.0
        %v3549 = vand.u32 %v2920, 4294901760
        %v3550 = vsub.f32 %v2920, %v3549
        %3551 = vmatpush1.xpose.msra.mxu0 %v3550
        %3552 = vmatprep.subr.mxu0 0.0
        %v3553 = vand.u32 %v2918, 4294901760
        %v3554 = vsub.f32 %v2918, %v3553
        %3555 = vmatpush1.xpose.msra.mxu0 %v3554
        %3556 = vmatprep.subr.mxu0 0.0
        %v3557 = vand.u32 %v2916, 4294901760
        %v3558 = vsub.f32 %v2916, %v3557
        %3559 = vmatpush1.xpose.msra.mxu0 %v3558
        %3560 = vmatprep.subr.mxu0 0.0
        %v3561 = vand.u32 %v2978, 4294901760
        %v3562 = vsub.f32 %v2978, %v3561
        %3563 = vmatpush2.xpose.msra.mxu0 %v3562
        %3564 = vmatprep.subr.mxu0 0.0
        %v3565 = vand.u32 %v2976, 4294901760
        %v3566 = vsub.f32 %v2976, %v3565
        %3567 = vmatpush2.xpose.msra.mxu0 %v3566
        %3568 = vmatprep.subr.mxu0 0.0
        %v3569 = vand.u32 %v2974, 4294901760
        %v3570 = vsub.f32 %v2974, %v3569
        %3571 = vmatpush2.xpose.msra.mxu0 %v3570
        %3572 = vmatprep.subr.mxu0 0.0
        %v3573 = vand.u32 %v2972, 4294901760
        %v3574 = vsub.f32 %v2972, %v3573
        %3575 = vmatpush2.xpose.msra.mxu0 %v3574
        %3576 = vmatprep.subr.mxu0 0.0
        %v3577 = vand.u32 %v2970, 4294901760
        %v3578 = vsub.f32 %v2970, %v3577
        %3579 = vmatpush2.xpose.msra.mxu0 %v3578
        %3580 = vmatprep.subr.mxu0 0.0
        %v3581 = vand.u32 %v2968, 4294901760
        %v3582 = vsub.f32 %v2968, %v3581
        %3583 = vmatpush2.xpose.msra.mxu0 %v3582
        %3584 = vmatprep.subr.mxu0 0.0
        %v3585 = vand.u32 %v2966, 4294901760
        %v3586 = vsub.f32 %v2966, %v3585
        %3587 = vmatpush2.xpose.msra.mxu0 %v3586
        %3588 = vmatprep.subr.mxu0 0.0
        %v3589 = vand.u32 %v2964, 4294901760
        %v3590 = vsub.f32 %v2964, %v3589
        %3591 = vmatpush2.xpose.msra.mxu0 %v3590
        %3592 = vmatprep.subr.mxu0 0.0
        %v3593 = vand.u32 %v2962, 4294901760
        %v3594 = vsub.f32 %v2962, %v3593
        %3595 = vmatpush2.xpose.msra.mxu0 %v3594
        %3596 = vmatprep.subr.mxu0 0.0
        %v3597 = vand.u32 %v2960, 4294901760
        %v3598 = vsub.f32 %v2960, %v3597
        %3599 = vmatpush2.xpose.msra.mxu0 %v3598
        %3600 = vmatprep.subr.mxu0 0.0
        %v3601 = vand.u32 %v2958, 4294901760
        %v3602 = vsub.f32 %v2958, %v3601
        %3603 = vmatpush2.xpose.msra.mxu0 %v3602
        %3604 = vmatprep.subr.mxu0 0.0
        %v3605 = vand.u32 %v2956, 4294901760
        %v3606 = vsub.f32 %v2956, %v3605
        %3607 = vmatpush2.xpose.msra.mxu0 %v3606
        %3608 = vmatprep.subr.mxu0 0.0
        %v3609 = vand.u32 %v2954, 4294901760
        %v3610 = vsub.f32 %v2954, %v3609
        %3611 = vmatpush2.xpose.msra.mxu0 %v3610
        %3612 = vmatprep.subr.mxu0 0.0
        %v3613 = vand.u32 %v2952, 4294901760
        %v3614 = vsub.f32 %v2952, %v3613
        %3615 = vmatpush2.xpose.msra.mxu0 %v3614
        %3616 = vmatprep.subr.mxu0 0.0
        %v3617 = vand.u32 %v2950, 4294901760
        %v3618 = vsub.f32 %v2950, %v3617
        %3619 = vmatpush2.xpose.msra.mxu0 %v3618
        %3620 = vmatprep.subr.mxu0 0.0
        %v3621 = vand.u32 %v2948, 4294901760
        %v3622 = vsub.f32 %v2948, %v3621
        %3623 = vmatpush2.xpose.msra.mxu0 %v3622
        %3624 = vmatprep.mubr.f32.mxu0 0.0
        %v3625 = vand.u32 %v2890, 4294901760
        %v3626 = vsub.f32 %v2890, %v3625
        %3627 = vmatmul.mubr.f32.gmra.mxu0 %v3626
        %v3628 = vpop.f32.mrf.mxu0
        %v3629 = vadd.f32 %v3436, %v3628
        %v3630 = vpop.f32.mrf.mxu0
        %v3631 = vadd.f32 %v3438, %v3630
        %3632 = vmatprep.mubr.f32.mxu0 0.0
        %v3633 = vand.u32 %v2893, 4294901760
        %v3634 = vsub.f32 %v2893, %v3633
        %3635 = vmatmul.mubr.f32.gmra.mxu0 %v3634
        %v3636 = vpop.f32.mrf.mxu0
        %v3637 = vadd.f32 %v3443, %v3636
        %v3638 = vpop.f32.mrf.mxu0
        %v3639 = vadd.f32 %v3445, %v3638
        %3640 = vmatprep.mubr.f32.mxu0 0.0
        %v3641 = vand.u32 %v2896, 4294901760
        %v3642 = vsub.f32 %v2896, %v3641
        %3643 = vmatmul.mubr.f32.gmra.mxu0 %v3642
        %v3644 = vpop.f32.mrf.mxu0
        %v3645 = vadd.f32 %v3450, %v3644
        %v3646 = vpop.f32.mrf.mxu0
        %v3647 = vadd.f32 %v3452, %v3646
        %3648 = vmatprep.mubr.f32.mxu0 0.0
        %v3649 = vand.u32 %v2899, 4294901760
        %v3650 = vsub.f32 %v2899, %v3649
        %3651 = vmatmul.mubr.f32.gmra.mxu0 %v3650
        %v3652 = vpop.f32.mrf.mxu0
        %v3653 = vadd.f32 %v3457, %v3652
        %v3654 = vpop.f32.mrf.mxu0
        %v3655 = vadd.f32 %v3459, %v3654
        %3656 = vmatprep.mubr.f32.mxu0 0.0
        %v3657 = vand.u32 %v2902, 4294901760
        %v3658 = vsub.f32 %v2902, %v3657
        %3659 = vmatmul.mubr.f32.gmra.mxu0 %v3658
        %v3660 = vpop.f32.mrf.mxu0
        %v3661 = vadd.f32 %v3464, %v3660
        %v3662 = vpop.f32.mrf.mxu0
        %v3663 = vadd.f32 %v3466, %v3662
        %3664 = vmatprep.mubr.f32.mxu0 0.0
        %v3665 = vand.u32 %v2905, 4294901760
        %v3666 = vsub.f32 %v2905, %v3665
        %3667 = vmatmul.mubr.f32.gmra.mxu0 %v3666
        %v3668 = vpop.f32.mrf.mxu0
        %v3669 = vadd.f32 %v3471, %v3668
        %v3670 = vpop.f32.mrf.mxu0
        %v3671 = vadd.f32 %v3473, %v3670
        %3672 = vmatprep.mubr.f32.mxu0 0.0
        %v3673 = vand.u32 %v2908, 4294901760
        %v3674 = vsub.f32 %v2908, %v3673
        %3675 = vmatmul.mubr.f32.gmra.mxu0 %v3674
        %v3676 = vpop.f32.mrf.mxu0
        %v3677 = vadd.f32 %v3478, %v3676
        %v3678 = vpop.f32.mrf.mxu0
        %v3679 = vadd.f32 %v3480, %v3678
        %3680 = vmatprep.mubr.f32.mxu0 0.0
        %v3681 = vand.u32 %v2911, 4294901760
        %v3682 = vsub.f32 %v2911, %v3681
        %3683 = vmatmul.mubr.f32.gmra.mxu0 %v3682
        %v3684 = vpop.f32.mrf.mxu0
        %v3685 = vadd.f32 %v3485, %v3684
        %v3686 = vpop.f32.mrf.mxu0
        %v3687 = vadd.f32 %v3487, %v3686
        %3688 = vmatprep.mubr.f32.mxu0 0.0
        %v3689 = vand.u32 %v2914, 4294901760
        %v3690 = vsub.f32 %v2914, %v3689
        %3691 = vmatmul.mubr.f32.gmra.mxu0 %v3690
        %v3692 = vpop.f32.mrf.mxu0
        %v3693 = vadd.f32 %v3492, %v3692
        %v3694 = vpop.f32.mrf.mxu0
        %v3695 = vadd.f32 %v3494, %v3694
        %3696 = vdwg.mxu0
        %3697 = vmatprep.subr.mxu0 0.0
        %v3698 = vand.u32 %v2946, 4294901760
        %3699 = vmatpush1.xpose.msra.mxu0 %v3698
        %3700 = vmatprep.subr.mxu0 0.0
        %v3701 = vand.u32 %v2944, 4294901760
        %3702 = vmatpush1.xpose.msra.mxu0 %v3701
        %3703 = vmatprep.subr.mxu0 0.0
        %v3704 = vand.u32 %v2942, 4294901760
        %3705 = vmatpush1.xpose.msra.mxu0 %v3704
        %3706 = vmatprep.subr.mxu0 0.0
        %v3707 = vand.u32 %v2940, 4294901760
        %3708 = vmatpush1.xpose.msra.mxu0 %v3707
        %3709 = vmatprep.subr.mxu0 0.0
        %v3710 = vand.u32 %v2938, 4294901760
        %3711 = vmatpush1.xpose.msra.mxu0 %v3710
        %3712 = vmatprep.subr.mxu0 0.0
        %v3713 = vand.u32 %v2936, 4294901760
        %3714 = vmatpush1.xpose.msra.mxu0 %v3713
        %3715 = vmatprep.subr.mxu0 0.0
        %v3716 = vand.u32 %v2934, 4294901760
        %3717 = vmatpush1.xpose.msra.mxu0 %v3716
        %3718 = vmatprep.subr.mxu0 0.0
        %v3719 = vand.u32 %v2932, 4294901760
        %3720 = vmatpush1.xpose.msra.mxu0 %v3719
        %3721 = vmatprep.subr.mxu0 0.0
        %v3722 = vand.u32 %v2930, 4294901760
        %3723 = vmatpush1.xpose.msra.mxu0 %v3722
        %3724 = vmatprep.subr.mxu0 0.0
        %v3725 = vand.u32 %v2928, 4294901760
        %3726 = vmatpush1.xpose.msra.mxu0 %v3725
        %3727 = vmatprep.subr.mxu0 0.0
        %v3728 = vand.u32 %v2926, 4294901760
        %3729 = vmatpush1.xpose.msra.mxu0 %v3728
        %3730 = vmatprep.subr.mxu0 0.0
        %v3731 = vand.u32 %v2924, 4294901760
        %3732 = vmatpush1.xpose.msra.mxu0 %v3731
        %3733 = vmatprep.subr.mxu0 0.0
        %v3734 = vand.u32 %v2922, 4294901760
        %3735 = vmatpush1.xpose.msra.mxu0 %v3734
        %3736 = vmatprep.subr.mxu0 0.0
        %v3737 = vand.u32 %v2920, 4294901760
        %3738 = vmatpush1.xpose.msra.mxu0 %v3737
        %3739 = vmatprep.subr.mxu0 0.0
        %v3740 = vand.u32 %v2918, 4294901760
        %3741 = vmatpush1.xpose.msra.mxu0 %v3740
        %3742 = vmatprep.subr.mxu0 0.0
        %v3743 = vand.u32 %v2916, 4294901760
        %3744 = vmatpush1.xpose.msra.mxu0 %v3743
        %3745 = vmatprep.subr.mxu0 0.0
        %v3746 = vand.u32 %v2978, 4294901760
        %3747 = vmatpush2.xpose.msra.mxu0 %v3746
        %3748 = vmatprep.subr.mxu0 0.0
        %v3749 = vand.u32 %v2976, 4294901760
        %3750 = vmatpush2.xpose.msra.mxu0 %v3749
        %3751 = vmatprep.subr.mxu0 0.0
        %v3752 = vand.u32 %v2974, 4294901760
        %3753 = vmatpush2.xpose.msra.mxu0 %v3752
        %3754 = vmatprep.subr.mxu0 0.0
        %v3755 = vand.u32 %v2972, 4294901760
        %3756 = vmatpush2.xpose.msra.mxu0 %v3755
        %3757 = vmatprep.subr.mxu0 0.0
        %v3758 = vand.u32 %v2970, 4294901760
        %3759 = vmatpush2.xpose.msra.mxu0 %v3758
        %3760 = vmatprep.subr.mxu0 0.0
        %v3761 = vand.u32 %v2968, 4294901760
        %3762 = vmatpush2.xpose.msra.mxu0 %v3761
        %3763 = vmatprep.subr.mxu0 0.0
        %v3764 = vand.u32 %v2966, 4294901760
        %3765 = vmatpush2.xpose.msra.mxu0 %v3764
        %3766 = vmatprep.subr.mxu0 0.0
        %v3767 = vand.u32 %v2964, 4294901760
        %3768 = vmatpush2.xpose.msra.mxu0 %v3767
        %3769 = vmatprep.subr.mxu0 0.0
        %v3770 = vand.u32 %v2962, 4294901760
        %3771 = vmatpush2.xpose.msra.mxu0 %v3770
        %3772 = vmatprep.subr.mxu0 0.0
        %v3773 = vand.u32 %v2960, 4294901760
        %3774 = vmatpush2.xpose.msra.mxu0 %v3773
        %3775 = vmatprep.subr.mxu0 0.0
        %v3776 = vand.u32 %v2958, 4294901760
        %3777 = vmatpush2.xpose.msra.mxu0 %v3776
        %3778 = vmatprep.subr.mxu0 0.0
        %v3779 = vand.u32 %v2956, 4294901760
        %3780 = vmatpush2.xpose.msra.mxu0 %v3779
        %3781 = vmatprep.subr.mxu0 0.0
        %v3782 = vand.u32 %v2954, 4294901760
        %3783 = vmatpush2.xpose.msra.mxu0 %v3782
        %3784 = vmatprep.subr.mxu0 0.0
        %v3785 = vand.u32 %v2952, 4294901760
        %3786 = vmatpush2.xpose.msra.mxu0 %v3785
        %3787 = vmatprep.subr.mxu0 0.0
        %v3788 = vand.u32 %v2950, 4294901760
        %3789 = vmatpush2.xpose.msra.mxu0 %v3788
        %3790 = vmatprep.subr.mxu0 0.0
        %v3791 = vand.u32 %v2948, 4294901760
        %3792 = vmatpush2.xpose.msra.mxu0 %v3791
        %3793 = vmatprep.mubr.f32.mxu0 0.0
        %v3794 = vand.u32 %v2890, 4294901760
        %v3795 = vsub.f32 %v2890, %v3794
        %v3796 = vand.u32 %v3795, 4294901760
        %3797 = vmatmul.mubr.f32.gmra.mxu0 %v3796
        %v3798 = vpop.f32.mrf.mxu0
        %v3799 = vadd.f32 %v3629, %v3798
        %v3800 = vpop.f32.mrf.mxu0
        %v3801 = vadd.f32 %v3631, %v3800
        %3802 = vmatprep.mubr.f32.mxu0 0.0
        %v3803 = vand.u32 %v2893, 4294901760
        %v3804 = vsub.f32 %v2893, %v3803
        %v3805 = vand.u32 %v3804, 4294901760
        %3806 = vmatmul.mubr.f32.gmra.mxu0 %v3805
        %v3807 = vpop.f32.mrf.mxu0
        %v3808 = vadd.f32 %v3637, %v3807
        %v3809 = vpop.f32.mrf.mxu0
        %v3810 = vadd.f32 %v3639, %v3809
        %3811 = vmatprep.mubr.f32.mxu0 0.0
        %v3812 = vand.u32 %v2896, 4294901760
        %v3813 = vsub.f32 %v2896, %v3812
        %v3814 = vand.u32 %v3813, 4294901760
        %3815 = vmatmul.mubr.f32.gmra.mxu0 %v3814
        %v3816 = vpop.f32.mrf.mxu0
        %v3817 = vadd.f32 %v3645, %v3816
        %v3818 = vpop.f32.mrf.mxu0
        %v3819 = vadd.f32 %v3647, %v3818
        %3820 = vmatprep.mubr.f32.mxu0 0.0
        %v3821 = vand.u32 %v2899, 4294901760
        %v3822 = vsub.f32 %v2899, %v3821
        %v3823 = vand.u32 %v3822, 4294901760
        %3824 = vmatmul.mubr.f32.gmra.mxu0 %v3823
        %v3825 = vpop.f32.mrf.mxu0
        %v3826 = vadd.f32 %v3653, %v3825
        %v3827 = vpop.f32.mrf.mxu0
        %v3828 = vadd.f32 %v3655, %v3827
        %3829 = vmatprep.mubr.f32.mxu0 0.0
        %v3830 = vand.u32 %v2902, 4294901760
        %v3831 = vsub.f32 %v2902, %v3830
        %v3832 = vand.u32 %v3831, 4294901760
        %3833 = vmatmul.mubr.f32.gmra.mxu0 %v3832
        %v3834 = vpop.f32.mrf.mxu0
        %v3835 = vadd.f32 %v3661, %v3834
        %v3836 = vpop.f32.mrf.mxu0
        %v3837 = vadd.f32 %v3663, %v3836
        %3838 = vmatprep.mubr.f32.mxu0 0.0
        %v3839 = vand.u32 %v2905, 4294901760
        %v3840 = vsub.f32 %v2905, %v3839
        %v3841 = vand.u32 %v3840, 4294901760
        %3842 = vmatmul.mubr.f32.gmra.mxu0 %v3841
        %v3843 = vpop.f32.mrf.mxu0
        %v3844 = vadd.f32 %v3669, %v3843
        %v3845 = vpop.f32.mrf.mxu0
        %v3846 = vadd.f32 %v3671, %v3845
        %3847 = vmatprep.mubr.f32.mxu0 0.0
        %v3848 = vand.u32 %v2908, 4294901760
        %v3849 = vsub.f32 %v2908, %v3848
        %v3850 = vand.u32 %v3849, 4294901760
        %3851 = vmatmul.mubr.f32.gmra.mxu0 %v3850
        %v3852 = vpop.f32.mrf.mxu0
        %v3853 = vadd.f32 %v3677, %v3852
        %v3854 = vpop.f32.mrf.mxu0
        %v3855 = vadd.f32 %v3679, %v3854
        %3856 = vmatprep.mubr.f32.mxu0 0.0
        %v3857 = vand.u32 %v2911, 4294901760
        %v3858 = vsub.f32 %v2911, %v3857
        %v3859 = vand.u32 %v3858, 4294901760
        %3860 = vmatmul.mubr.f32.gmra.mxu0 %v3859
        %v3861 = vpop.f32.mrf.mxu0
        %v3862 = vadd.f32 %v3685, %v3861
        %v3863 = vpop.f32.mrf.mxu0
        %v3864 = vadd.f32 %v3687, %v3863
        %3865 = vmatprep.mubr.f32.mxu0 0.0
        %v3866 = vand.u32 %v2914, 4294901760
        %v3867 = vsub.f32 %v2914, %v3866
        %v3868 = vand.u32 %v3867, 4294901760
        %3869 = vmatmul.mubr.f32.gmra.mxu0 %v3868
        %v3870 = vpop.f32.mrf.mxu0
        %v3871 = vadd.f32 %v3693, %v3870
        %v3872 = vpop.f32.mrf.mxu0
        %v3873 = vadd.f32 %v3695, %v3872
        %3874 = vdwg.mxu0
        %3875 = vmatprep.subr.mxu0 0.0
        %v3876 = vand.u32 %v2946, 4294901760
        %v3877 = vsub.f32 %v2946, %v3876
        %v3878 = vand.u32 %v3877, 4294901760
        %3879 = vmatpush1.xpose.msra.mxu0 %v3878
        %3880 = vmatprep.subr.mxu0 0.0
        %v3881 = vand.u32 %v2944, 4294901760
        %v3882 = vsub.f32 %v2944, %v3881
        %v3883 = vand.u32 %v3882, 4294901760
        %3884 = vmatpush1.xpose.msra.mxu0 %v3883
        %3885 = vmatprep.subr.mxu0 0.0
        %v3886 = vand.u32 %v2942, 4294901760
        %v3887 = vsub.f32 %v2942, %v3886
        %v3888 = vand.u32 %v3887, 4294901760
        %3889 = vmatpush1.xpose.msra.mxu0 %v3888
        %3890 = vmatprep.subr.mxu0 0.0
        %v3891 = vand.u32 %v2940, 4294901760
        %v3892 = vsub.f32 %v2940, %v3891
        %v3893 = vand.u32 %v3892, 4294901760
        %3894 = vmatpush1.xpose.msra.mxu0 %v3893
        %3895 = vmatprep.subr.mxu0 0.0
        %v3896 = vand.u32 %v2938, 4294901760
        %v3897 = vsub.f32 %v2938, %v3896
        %v3898 = vand.u32 %v3897, 4294901760
        %3899 = vmatpush1.xpose.msra.mxu0 %v3898
        %3900 = vmatprep.subr.mxu0 0.0
        %v3901 = vand.u32 %v2936, 4294901760
        %v3902 = vsub.f32 %v2936, %v3901
        %v3903 = vand.u32 %v3902, 4294901760
        %3904 = vmatpush1.xpose.msra.mxu0 %v3903
        %3905 = vmatprep.subr.mxu0 0.0
        %v3906 = vand.u32 %v2934, 4294901760
        %v3907 = vsub.f32 %v2934, %v3906
        %v3908 = vand.u32 %v3907, 4294901760
        %3909 = vmatpush1.xpose.msra.mxu0 %v3908
        %3910 = vmatprep.subr.mxu0 0.0
        %v3911 = vand.u32 %v2932, 4294901760
        %v3912 = vsub.f32 %v2932, %v3911
        %v3913 = vand.u32 %v3912, 4294901760
        %3914 = vmatpush1.xpose.msra.mxu0 %v3913
        %3915 = vmatprep.subr.mxu0 0.0
        %v3916 = vand.u32 %v2930, 4294901760
        %v3917 = vsub.f32 %v2930, %v3916
        %v3918 = vand.u32 %v3917, 4294901760
        %3919 = vmatpush1.xpose.msra.mxu0 %v3918
        %3920 = vmatprep.subr.mxu0 0.0
        %v3921 = vand.u32 %v2928, 4294901760
        %v3922 = vsub.f32 %v2928, %v3921
        %v3923 = vand.u32 %v3922, 4294901760
        %3924 = vmatpush1.xpose.msra.mxu0 %v3923
        %3925 = vmatprep.subr.mxu0 0.0
        %v3926 = vand.u32 %v2926, 4294901760
        %v3927 = vsub.f32 %v2926, %v3926
        %v3928 = vand.u32 %v3927, 4294901760
        %3929 = vmatpush1.xpose.msra.mxu0 %v3928
        %3930 = vmatprep.subr.mxu0 0.0
        %v3931 = vand.u32 %v2924, 4294901760
        %v3932 = vsub.f32 %v2924, %v3931
        %v3933 = vand.u32 %v3932, 4294901760
        %3934 = vmatpush1.xpose.msra.mxu0 %v3933
        %3935 = vmatprep.subr.mxu0 0.0
        %v3936 = vand.u32 %v2922, 4294901760
        %v3937 = vsub.f32 %v2922, %v3936
        %v3938 = vand.u32 %v3937, 4294901760
        %3939 = vmatpush1.xpose.msra.mxu0 %v3938
        %3940 = vmatprep.subr.mxu0 0.0
        %v3941 = vand.u32 %v2920, 4294901760
        %v3942 = vsub.f32 %v2920, %v3941
        %v3943 = vand.u32 %v3942, 4294901760
        %3944 = vmatpush1.xpose.msra.mxu0 %v3943
        %3945 = vmatprep.subr.mxu0 0.0
        %v3946 = vand.u32 %v2918, 4294901760
        %v3947 = vsub.f32 %v2918, %v3946
        %v3948 = vand.u32 %v3947, 4294901760
        %3949 = vmatpush1.xpose.msra.mxu0 %v3948
        %3950 = vmatprep.subr.mxu0 0.0
        %v3951 = vand.u32 %v2916, 4294901760
        %v3952 = vsub.f32 %v2916, %v3951
        %v3953 = vand.u32 %v3952, 4294901760
        %3954 = vmatpush1.xpose.msra.mxu0 %v3953
        %3955 = vmatprep.subr.mxu0 0.0
        %v3956 = vand.u32 %v2978, 4294901760
        %v3957 = vsub.f32 %v2978, %v3956
        %v3958 = vand.u32 %v3957, 4294901760
        %3959 = vmatpush2.xpose.msra.mxu0 %v3958
        %3960 = vmatprep.subr.mxu0 0.0
        %v3961 = vand.u32 %v2976, 4294901760
        %v3962 = vsub.f32 %v2976, %v3961
        %v3963 = vand.u32 %v3962, 4294901760
        %3964 = vmatpush2.xpose.msra.mxu0 %v3963
        %3965 = vmatprep.subr.mxu0 0.0
        %v3966 = vand.u32 %v2974, 4294901760
        %v3967 = vsub.f32 %v2974, %v3966
        %v3968 = vand.u32 %v3967, 4294901760
        %3969 = vmatpush2.xpose.msra.mxu0 %v3968
        %3970 = vmatprep.subr.mxu0 0.0
        %v3971 = vand.u32 %v2972, 4294901760
        %v3972 = vsub.f32 %v2972, %v3971
        %v3973 = vand.u32 %v3972, 4294901760
        %3974 = vmatpush2.xpose.msra.mxu0 %v3973
        %3975 = vmatprep.subr.mxu0 0.0
        %v3976 = vand.u32 %v2970, 4294901760
        %v3977 = vsub.f32 %v2970, %v3976
        %v3978 = vand.u32 %v3977, 4294901760
        %3979 = vmatpush2.xpose.msra.mxu0 %v3978
        %3980 = vmatprep.subr.mxu0 0.0
        %v3981 = vand.u32 %v2968, 4294901760
        %v3982 = vsub.f32 %v2968, %v3981
        %v3983 = vand.u32 %v3982, 4294901760
        %3984 = vmatpush2.xpose.msra.mxu0 %v3983
        %3985 = vmatprep.subr.mxu0 0.0
        %v3986 = vand.u32 %v2966, 4294901760
        %v3987 = vsub.f32 %v2966, %v3986
        %v3988 = vand.u32 %v3987, 4294901760
        %3989 = vmatpush2.xpose.msra.mxu0 %v3988
        %3990 = vmatprep.subr.mxu0 0.0
        %v3991 = vand.u32 %v2964, 4294901760
        %v3992 = vsub.f32 %v2964, %v3991
        %v3993 = vand.u32 %v3992, 4294901760
        %3994 = vmatpush2.xpose.msra.mxu0 %v3993
        %3995 = vmatprep.subr.mxu0 0.0
        %v3996 = vand.u32 %v2962, 4294901760
        %v3997 = vsub.f32 %v2962, %v3996
        %v3998 = vand.u32 %v3997, 4294901760
        %3999 = vmatpush2.xpose.msra.mxu0 %v3998
        %4000 = vmatprep.subr.mxu0 0.0
        %v4001 = vand.u32 %v2960, 4294901760
        %v4002 = vsub.f32 %v2960, %v4001
        %v4003 = vand.u32 %v4002, 4294901760
        %4004 = vmatpush2.xpose.msra.mxu0 %v4003
        %4005 = vmatprep.subr.mxu0 0.0
        %v4006 = vand.u32 %v2958, 4294901760
        %v4007 = vsub.f32 %v2958, %v4006
        %v4008 = vand.u32 %v4007, 4294901760
        %4009 = vmatpush2.xpose.msra.mxu0 %v4008
        %4010 = vmatprep.subr.mxu0 0.0
        %v4011 = vand.u32 %v2956, 4294901760
        %v4012 = vsub.f32 %v2956, %v4011
        %v4013 = vand.u32 %v4012, 4294901760
        %4014 = vmatpush2.xpose.msra.mxu0 %v4013
        %4015 = vmatprep.subr.mxu0 0.0
        %v4016 = vand.u32 %v2954, 4294901760
        %v4017 = vsub.f32 %v2954, %v4016
        %v4018 = vand.u32 %v4017, 4294901760
        %4019 = vmatpush2.xpose.msra.mxu0 %v4018
        %4020 = vmatprep.subr.mxu0 0.0
        %v4021 = vand.u32 %v2952, 4294901760
        %v4022 = vsub.f32 %v2952, %v4021
        %v4023 = vand.u32 %v4022, 4294901760
        %4024 = vmatpush2.xpose.msra.mxu0 %v4023
        %4025 = vmatprep.subr.mxu0 0.0
        %v4026 = vand.u32 %v2950, 4294901760
        %v4027 = vsub.f32 %v2950, %v4026
        %v4028 = vand.u32 %v4027, 4294901760
        %4029 = vmatpush2.xpose.msra.mxu0 %v4028
        %4030 = vmatprep.subr.mxu0 0.0
        %v4031 = vand.u32 %v2948, 4294901760
        %v4032 = vsub.f32 %v2948, %v4031
        %v4033 = vand.u32 %v4032, 4294901760
        %4034 = vmatpush2.xpose.msra.mxu0 %v4033
        %4035 = vmatprep.mubr.f32.mxu0 0.0
        %v4036 = vand.u32 %v2890, 4294901760
        %4037 = vmatmul.mubr.f32.gmra.mxu0 %v4036
        %v4038 = vpop.f32.mrf.mxu0
        %v4039 = vadd.f32 %v3799, %v4038
        %v4040 = vpop.f32.mrf.mxu0
        %v4041 = vadd.f32 %v3801, %v4040
        %4042 = vmatprep.mubr.f32.mxu0 0.0
        %v4043 = vand.u32 %v2893, 4294901760
        %4044 = vmatmul.mubr.f32.gmra.mxu0 %v4043
        %v4045 = vpop.f32.mrf.mxu0
        %v4046 = vadd.f32 %v3808, %v4045
        %v4047 = vpop.f32.mrf.mxu0
        %v4048 = vadd.f32 %v3810, %v4047
        %4049 = vmatprep.mubr.f32.mxu0 0.0
        %v4050 = vand.u32 %v2896, 4294901760
        %4051 = vmatmul.mubr.f32.gmra.mxu0 %v4050
        %v4052 = vpop.f32.mrf.mxu0
        %v4053 = vadd.f32 %v3817, %v4052
        %v4054 = vpop.f32.mrf.mxu0
        %v4055 = vadd.f32 %v3819, %v4054
        %4056 = vmatprep.mubr.f32.mxu0 0.0
        %v4057 = vand.u32 %v2899, 4294901760
        %4058 = vmatmul.mubr.f32.gmra.mxu0 %v4057
        %v4059 = vpop.f32.mrf.mxu0
        %v4060 = vadd.f32 %v3826, %v4059
        %v4061 = vpop.f32.mrf.mxu0
        %v4062 = vadd.f32 %v3828, %v4061
        %4063 = vmatprep.mubr.f32.mxu0 0.0
        %v4064 = vand.u32 %v2902, 4294901760
        %4065 = vmatmul.mubr.f32.gmra.mxu0 %v4064
        %v4066 = vpop.f32.mrf.mxu0
        %v4067 = vadd.f32 %v3835, %v4066
        %v4068 = vpop.f32.mrf.mxu0
        %v4069 = vadd.f32 %v3837, %v4068
        %4070 = vmatprep.mubr.f32.mxu0 0.0
        %v4071 = vand.u32 %v2905, 4294901760
        %4072 = vmatmul.mubr.f32.gmra.mxu0 %v4071
        %v4073 = vpop.f32.mrf.mxu0
        %v4074 = vadd.f32 %v3844, %v4073
        %v4075 = vpop.f32.mrf.mxu0
        %v4076 = vadd.f32 %v3846, %v4075
        %4077 = vmatprep.mubr.f32.mxu0 0.0
        %v4078 = vand.u32 %v2908, 4294901760
        %4079 = vmatmul.mubr.f32.gmra.mxu0 %v4078
        %v4080 = vpop.f32.mrf.mxu0
        %v4081 = vadd.f32 %v3853, %v4080
        %v4082 = vpop.f32.mrf.mxu0
        %v4083 = vadd.f32 %v3855, %v4082
        %4084 = vmatprep.mubr.f32.mxu0 0.0
        %v4085 = vand.u32 %v2911, 4294901760
        %4086 = vmatmul.mubr.f32.gmra.mxu0 %v4085
        %v4087 = vpop.f32.mrf.mxu0
        %v4088 = vadd.f32 %v3862, %v4087
        %v4089 = vpop.f32.mrf.mxu0
        %v4090 = vadd.f32 %v3864, %v4089
        %4091 = vmatprep.mubr.f32.mxu0 0.0
        %v4092 = vand.u32 %v2914, 4294901760
        %4093 = vmatmul.mubr.f32.gmra.mxu0 %v4092
        %v4094 = vpop.f32.mrf.mxu0
        %v4095 = vadd.f32 %v3871, %v4094
        %v4096 = vpop.f32.mrf.mxu0
        %v4097 = vadd.f32 %v3873, %v4096
        %4098 = vdwg.mxu0
        %4099 = vmatprep.subr.mxu0 0.0
        %v4100 = vand.u32 %v2946, 4294901760
        %4101 = vmatpush1.xpose.msra.mxu0 %v4100
        %4102 = vmatprep.subr.mxu0 0.0
        %v4103 = vand.u32 %v2944, 4294901760
        %4104 = vmatpush1.xpose.msra.mxu0 %v4103
        %4105 = vmatprep.subr.mxu0 0.0
        %v4106 = vand.u32 %v2942, 4294901760
        %4107 = vmatpush1.xpose.msra.mxu0 %v4106
        %4108 = vmatprep.subr.mxu0 0.0
        %v4109 = vand.u32 %v2940, 4294901760
        %4110 = vmatpush1.xpose.msra.mxu0 %v4109
        %4111 = vmatprep.subr.mxu0 0.0
        %v4112 = vand.u32 %v2938, 4294901760
        %4113 = vmatpush1.xpose.msra.mxu0 %v4112
        %4114 = vmatprep.subr.mxu0 0.0
        %v4115 = vand.u32 %v2936, 4294901760
        %4116 = vmatpush1.xpose.msra.mxu0 %v4115
        %4117 = vmatprep.subr.mxu0 0.0
        %v4118 = vand.u32 %v2934, 4294901760
        %4119 = vmatpush1.xpose.msra.mxu0 %v4118
        %4120 = vmatprep.subr.mxu0 0.0
        %v4121 = vand.u32 %v2932, 4294901760
        %4122 = vmatpush1.xpose.msra.mxu0 %v4121
        %4123 = vmatprep.subr.mxu0 0.0
        %v4124 = vand.u32 %v2930, 4294901760
        %4125 = vmatpush1.xpose.msra.mxu0 %v4124
        %4126 = vmatprep.subr.mxu0 0.0
        %v4127 = vand.u32 %v2928, 4294901760
        %4128 = vmatpush1.xpose.msra.mxu0 %v4127
        %4129 = vmatprep.subr.mxu0 0.0
        %v4130 = vand.u32 %v2926, 4294901760
        %4131 = vmatpush1.xpose.msra.mxu0 %v4130
        %4132 = vmatprep.subr.mxu0 0.0
        %v4133 = vand.u32 %v2924, 4294901760
        %4134 = vmatpush1.xpose.msra.mxu0 %v4133
        %4135 = vmatprep.subr.mxu0 0.0
        %v4136 = vand.u32 %v2922, 4294901760
        %4137 = vmatpush1.xpose.msra.mxu0 %v4136
        %4138 = vmatprep.subr.mxu0 0.0
        %v4139 = vand.u32 %v2920, 4294901760
        %4140 = vmatpush1.xpose.msra.mxu0 %v4139
        %4141 = vmatprep.subr.mxu0 0.0
        %v4142 = vand.u32 %v2918, 4294901760
        %4143 = vmatpush1.xpose.msra.mxu0 %v4142
        %4144 = vmatprep.subr.mxu0 0.0
        %v4145 = vand.u32 %v2916, 4294901760
        %4146 = vmatpush1.xpose.msra.mxu0 %v4145
        %4147 = vmatprep.subr.mxu0 0.0
        %v4148 = vand.u32 %v2978, 4294901760
        %4149 = vmatpush2.xpose.msra.mxu0 %v4148
        %4150 = vmatprep.subr.mxu0 0.0
        %v4151 = vand.u32 %v2976, 4294901760
        %4152 = vmatpush2.xpose.msra.mxu0 %v4151
        %4153 = vmatprep.subr.mxu0 0.0
        %v4154 = vand.u32 %v2974, 4294901760
        %4155 = vmatpush2.xpose.msra.mxu0 %v4154
        %4156 = vmatprep.subr.mxu0 0.0
        %v4157 = vand.u32 %v2972, 4294901760
        %4158 = vmatpush2.xpose.msra.mxu0 %v4157
        %4159 = vmatprep.subr.mxu0 0.0
        %v4160 = vand.u32 %v2970, 4294901760
        %4161 = vmatpush2.xpose.msra.mxu0 %v4160
        %4162 = vmatprep.subr.mxu0 0.0
        %v4163 = vand.u32 %v2968, 4294901760
        %4164 = vmatpush2.xpose.msra.mxu0 %v4163
        %4165 = vmatprep.subr.mxu0 0.0
        %v4166 = vand.u32 %v2966, 4294901760
        %4167 = vmatpush2.xpose.msra.mxu0 %v4166
        %4168 = vmatprep.subr.mxu0 0.0
        %v4169 = vand.u32 %v2964, 4294901760
        %4170 = vmatpush2.xpose.msra.mxu0 %v4169
        %4171 = vmatprep.subr.mxu0 0.0
        %v4172 = vand.u32 %v2962, 4294901760
        %4173 = vmatpush2.xpose.msra.mxu0 %v4172
        %4174 = vmatprep.subr.mxu0 0.0
        %v4175 = vand.u32 %v2960, 4294901760
        %4176 = vmatpush2.xpose.msra.mxu0 %v4175
        %4177 = vmatprep.subr.mxu0 0.0
        %v4178 = vand.u32 %v2958, 4294901760
        %4179 = vmatpush2.xpose.msra.mxu0 %v4178
        %4180 = vmatprep.subr.mxu0 0.0
        %v4181 = vand.u32 %v2956, 4294901760
        %4182 = vmatpush2.xpose.msra.mxu0 %v4181
        %4183 = vmatprep.subr.mxu0 0.0
        %v4184 = vand.u32 %v2954, 4294901760
        %4185 = vmatpush2.xpose.msra.mxu0 %v4184
        %4186 = vmatprep.subr.mxu0 0.0
        %v4187 = vand.u32 %v2952, 4294901760
        %4188 = vmatpush2.xpose.msra.mxu0 %v4187
        %4189 = vmatprep.subr.mxu0 0.0
        %v4190 = vand.u32 %v2950, 4294901760
        %4191 = vmatpush2.xpose.msra.mxu0 %v4190
        %4192 = vmatprep.subr.mxu0 0.0
        %v4193 = vand.u32 %v2948, 4294901760
        %4194 = vmatpush2.xpose.msra.mxu0 %v4193
        %4195 = vmatprep.mubr.f32.mxu0 0.0
        %v4196 = vand.u32 %v2890, 4294901760
        %4197 = vmatmul.mubr.f32.gmra.mxu0 %v4196
        %v4198 = vpop.f32.mrf.mxu0
        %v4199 = vadd.f32 %v4039, %v4198
        %v4200 = vpop.f32.mrf.mxu0
        %v4201 = vadd.f32 %v4041, %v4200
        %4202 = vmatprep.mubr.f32.mxu0 0.0
        %v4203 = vand.u32 %v2893, 4294901760
        %4204 = vmatmul.mubr.f32.gmra.mxu0 %v4203
        %v4205 = vpop.f32.mrf.mxu0
        %v4206 = vadd.f32 %v4046, %v4205
        %v4207 = vpop.f32.mrf.mxu0
        %v4208 = vadd.f32 %v4048, %v4207
        %4209 = vmatprep.mubr.f32.mxu0 0.0
        %v4210 = vand.u32 %v2896, 4294901760
        %4211 = vmatmul.mubr.f32.gmra.mxu0 %v4210
        %v4212 = vpop.f32.mrf.mxu0
        %v4213 = vadd.f32 %v4053, %v4212
        %v4214 = vpop.f32.mrf.mxu0
        %v4215 = vadd.f32 %v4055, %v4214
        %4216 = vmatprep.mubr.f32.mxu0 0.0
        %v4217 = vand.u32 %v2899, 4294901760
        %4218 = vmatmul.mubr.f32.gmra.mxu0 %v4217
        %v4219 = vpop.f32.mrf.mxu0
        %v4220 = vadd.f32 %v4060, %v4219
        %v4221 = vpop.f32.mrf.mxu0
        %v4222 = vadd.f32 %v4062, %v4221
        %4223 = vmatprep.mubr.f32.mxu0 0.0
        %v4224 = vand.u32 %v2902, 4294901760
        %4225 = vmatmul.mubr.f32.gmra.mxu0 %v4224
        %v4226 = vpop.f32.mrf.mxu0
        %v4227 = vadd.f32 %v4067, %v4226
        %v4228 = vpop.f32.mrf.mxu0
        %v4229 = vadd.f32 %v4069, %v4228
        %4230 = vmatprep.mubr.f32.mxu0 0.0
        %v4231 = vand.u32 %v2905, 4294901760
        %4232 = vmatmul.mubr.f32.gmra.mxu0 %v4231
        %v4233 = vpop.f32.mrf.mxu0
        %v4234 = vadd.f32 %v4074, %v4233
        %v4235 = vpop.f32.mrf.mxu0
        %v4236 = vadd.f32 %v4076, %v4235
        %4237 = vmatprep.mubr.f32.mxu0 0.0
        %v4238 = vand.u32 %v2908, 4294901760
        %4239 = vmatmul.mubr.f32.gmra.mxu0 %v4238
        %v4240 = vpop.f32.mrf.mxu0
        %v4241 = vadd.f32 %v4081, %v4240
        %v4242 = vpop.f32.mrf.mxu0
        %v4243 = vadd.f32 %v4083, %v4242
        %4244 = vmatprep.mubr.f32.mxu0 0.0
        %v4245 = vand.u32 %v2911, 4294901760
        %4246 = vmatmul.mubr.f32.gmra.mxu0 %v4245
        %v4247 = vpop.f32.mrf.mxu0
        %v4248 = vadd.f32 %v4088, %v4247
        %v4249 = vpop.f32.mrf.mxu0
        %v4250 = vadd.f32 %v4090, %v4249
        %4251 = vmatprep.mubr.f32.mxu0 0.0
        %v4252 = vand.u32 %v2914, 4294901760
        %4253 = vmatmul.mubr.f32.gmra.mxu0 %v4252
        %v4254 = vpop.f32.mrf.mxu0
        %v4255 = vadd.f32 %v4095, %v4254
        %v4256 = vpop.f32.mrf.mxu0
        %v4257 = vadd.f32 %v4097, %v4256
        %4258 = vdwg.mxu0
        %4259 = vmatprep.subr.mxu0 0.0
        %v4260 = vand.u32 %v3010, 4294901760
        %4261 = vmatpush1.xpose.msra.mxu0 %v4260
        %4262 = vmatprep.subr.mxu0 0.0
        %v4263 = vand.u32 %v3008, 4294901760
        %4264 = vmatpush1.xpose.msra.mxu0 %v4263
        %4265 = vmatprep.subr.mxu0 0.0
        %v4266 = vand.u32 %v3006, 4294901760
        %4267 = vmatpush1.xpose.msra.mxu0 %v4266
        %4268 = vmatprep.subr.mxu0 0.0
        %v4269 = vand.u32 %v3004, 4294901760
        %4270 = vmatpush1.xpose.msra.mxu0 %v4269
        %4271 = vmatprep.subr.mxu0 0.0
        %v4272 = vand.u32 %v3002, 4294901760
        %4273 = vmatpush1.xpose.msra.mxu0 %v4272
        %4274 = vmatprep.subr.mxu0 0.0
        %v4275 = vand.u32 %v3000, 4294901760
        %4276 = vmatpush1.xpose.msra.mxu0 %v4275
        %4277 = vmatprep.subr.mxu0 0.0
        %v4278 = vand.u32 %v2998, 4294901760
        %4279 = vmatpush1.xpose.msra.mxu0 %v4278
        %4280 = vmatprep.subr.mxu0 0.0
        %v4281 = vand.u32 %v2996, 4294901760
        %4282 = vmatpush1.xpose.msra.mxu0 %v4281
        %4283 = vmatprep.subr.mxu0 0.0
        %v4284 = vand.u32 %v2994, 4294901760
        %4285 = vmatpush1.xpose.msra.mxu0 %v4284
        %4286 = vmatprep.subr.mxu0 0.0
        %v4287 = vand.u32 %v2992, 4294901760
        %4288 = vmatpush1.xpose.msra.mxu0 %v4287
        %4289 = vmatprep.subr.mxu0 0.0
        %v4290 = vand.u32 %v2990, 4294901760
        %4291 = vmatpush1.xpose.msra.mxu0 %v4290
        %4292 = vmatprep.subr.mxu0 0.0
        %v4293 = vand.u32 %v2988, 4294901760
        %4294 = vmatpush1.xpose.msra.mxu0 %v4293
        %4295 = vmatprep.subr.mxu0 0.0
        %v4296 = vand.u32 %v2986, 4294901760
        %4297 = vmatpush1.xpose.msra.mxu0 %v4296
        %4298 = vmatprep.subr.mxu0 0.0
        %v4299 = vand.u32 %v2984, 4294901760
        %4300 = vmatpush1.xpose.msra.mxu0 %v4299
        %4301 = vmatprep.subr.mxu0 0.0
        %v4302 = vand.u32 %v2982, 4294901760
        %4303 = vmatpush1.xpose.msra.mxu0 %v4302
        %4304 = vmatprep.subr.mxu0 0.0
        %v4305 = vand.u32 %v2980, 4294901760
        %4306 = vmatpush1.xpose.msra.mxu0 %v4305
        %4307 = vmatprep.subr.mxu0 0.0
        %4308 = vmatpush2.xpose.msra.mxu0 0.0
        %4309 = vmatprep.subr.mxu0 0.0
        %4310 = vmatpush2.xpose.msra.mxu0 0.0
        %4311 = vmatprep.subr.mxu0 0.0
        %4312 = vmatpush2.xpose.msra.mxu0 0.0
        %4313 = vmatprep.subr.mxu0 0.0
        %4314 = vmatpush2.xpose.msra.mxu0 0.0
        %4315 = vmatprep.subr.mxu0 0.0
        %4316 = vmatpush2.xpose.msra.mxu0 0.0
        %4317 = vmatprep.subr.mxu0 0.0
        %4318 = vmatpush2.xpose.msra.mxu0 0.0
        %4319 = vmatprep.subr.mxu0 0.0
        %4320 = vmatpush2.xpose.msra.mxu0 0.0
        %4321 = vmatprep.subr.mxu0 0.0
        %4322 = vmatpush2.xpose.msra.mxu0 0.0
        %4323 = vmatprep.subr.mxu0 0.0
        %4324 = vmatpush2.xpose.msra.mxu0 0.0
        %4325 = vmatprep.subr.mxu0 0.0
        %4326 = vmatpush2.xpose.msra.mxu0 0.0
        %4327 = vmatprep.subr.mxu0 0.0
        %4328 = vmatpush2.xpose.msra.mxu0 0.0
        %4329 = vmatprep.subr.mxu0 0.0
        %4330 = vmatpush2.xpose.msra.mxu0 0.0
        %4331 = vmatprep.subr.mxu0 0.0
        %4332 = vmatpush2.xpose.msra.mxu0 0.0
        %4333 = vmatprep.subr.mxu0 0.0
        %4334 = vmatpush2.xpose.msra.mxu0 0.0
        %4335 = vmatprep.subr.mxu0 0.0
        %4336 = vmatpush2.xpose.msra.mxu0 0.0
        %4337 = vmatprep.subr.mxu0 0.0
        %4338 = vmatpush2.xpose.msra.mxu0 0.0
        %4339 = vmatprep.mubr.f32.mxu0 0.0
        %v4340 = vand.u32 %v2890, 4294901760
        %v4341 = vsub.f32 %v2890, %v4340
        %v4342 = vand.u32 %v4341, 4294901760
        %v4343 = vsub.f32 %v4341, %v4342
        %v4344 = vand.u32 %v4343, 4294901760
        %4345 = vmatmul.mubr.f32.gmra.mxu0 %v4344
        %v4346 = vpop.f32.mrf.mxu0
        %v4347 = vadd.f32 %v2838, %v4346
        %v4348 = vpop.f32.mrf.mxu0
        %4349 = vmatprep.mubr.f32.mxu0 0.0
        %v4350 = vand.u32 %v2893, 4294901760
        %v4351 = vsub.f32 %v2893, %v4350
        %v4352 = vand.u32 %v4351, 4294901760
        %v4353 = vsub.f32 %v4351, %v4352
        %v4354 = vand.u32 %v4353, 4294901760
        %4355 = vmatmul.mubr.f32.gmra.mxu0 %v4354
        %v4356 = vpop.f32.mrf.mxu0
        %v4357 = vadd.f32 %v2844, %v4356
        %v4358 = vpop.f32.mrf.mxu0
        %4359 = vmatprep.mubr.f32.mxu0 0.0
        %v4360 = vand.u32 %v2896, 4294901760
        %v4361 = vsub.f32 %v2896, %v4360
        %v4362 = vand.u32 %v4361, 4294901760
        %v4363 = vsub.f32 %v4361, %v4362
        %v4364 = vand.u32 %v4363, 4294901760
        %4365 = vmatmul.mubr.f32.gmra.mxu0 %v4364
        %v4366 = vpop.f32.mrf.mxu0
        %v4367 = vadd.f32 %v2850, %v4366
        %v4368 = vpop.f32.mrf.mxu0
        %4369 = vmatprep.mubr.f32.mxu0 0.0
        %v4370 = vand.u32 %v2899, 4294901760
        %v4371 = vsub.f32 %v2899, %v4370
        %v4372 = vand.u32 %v4371, 4294901760
        %v4373 = vsub.f32 %v4371, %v4372
        %v4374 = vand.u32 %v4373, 4294901760
        %4375 = vmatmul.mubr.f32.gmra.mxu0 %v4374
        %v4376 = vpop.f32.mrf.mxu0
        %v4377 = vadd.f32 %v2856, %v4376
        %v4378 = vpop.f32.mrf.mxu0
        %4379 = vmatprep.mubr.f32.mxu0 0.0
        %v4380 = vand.u32 %v2902, 4294901760
        %v4381 = vsub.f32 %v2902, %v4380
        %v4382 = vand.u32 %v4381, 4294901760
        %v4383 = vsub.f32 %v4381, %v4382
        %v4384 = vand.u32 %v4383, 4294901760
        %4385 = vmatmul.mubr.f32.gmra.mxu0 %v4384
        %v4386 = vpop.f32.mrf.mxu0
        %v4387 = vadd.f32 %v2862, %v4386
        %v4388 = vpop.f32.mrf.mxu0
        %4389 = vmatprep.mubr.f32.mxu0 0.0
        %v4390 = vand.u32 %v2905, 4294901760
        %v4391 = vsub.f32 %v2905, %v4390
        %v4392 = vand.u32 %v4391, 4294901760
        %v4393 = vsub.f32 %v4391, %v4392
        %v4394 = vand.u32 %v4393, 4294901760
        %4395 = vmatmul.mubr.f32.gmra.mxu0 %v4394
        %v4396 = vpop.f32.mrf.mxu0
        %v4397 = vadd.f32 %v2868, %v4396
        %v4398 = vpop.f32.mrf.mxu0
        %4399 = vmatprep.mubr.f32.mxu0 0.0
        %v4400 = vand.u32 %v2908, 4294901760
        %v4401 = vsub.f32 %v2908, %v4400
        %v4402 = vand.u32 %v4401, 4294901760
        %v4403 = vsub.f32 %v4401, %v4402
        %v4404 = vand.u32 %v4403, 4294901760
        %4405 = vmatmul.mubr.f32.gmra.mxu0 %v4404
        %v4406 = vpop.f32.mrf.mxu0
        %v4407 = vadd.f32 %v2874, %v4406
        %v4408 = vpop.f32.mrf.mxu0
        %4409 = vmatprep.mubr.f32.mxu0 0.0
        %v4410 = vand.u32 %v2911, 4294901760
        %v4411 = vsub.f32 %v2911, %v4410
        %v4412 = vand.u32 %v4411, 4294901760
        %v4413 = vsub.f32 %v4411, %v4412
        %v4414 = vand.u32 %v4413, 4294901760
        %4415 = vmatmul.mubr.f32.gmra.mxu0 %v4414
        %v4416 = vpop.f32.mrf.mxu0
        %v4417 = vadd.f32 %v2880, %v4416
        %v4418 = vpop.f32.mrf.mxu0
        %4419 = vmatprep.mubr.f32.mxu0 0.0
        %v4420 = vand.u32 %v2914, 4294901760
        %v4421 = vsub.f32 %v2914, %v4420
        %v4422 = vand.u32 %v4421, 4294901760
        %v4423 = vsub.f32 %v4421, %v4422
        %v4424 = vand.u32 %v4423, 4294901760
        %4425 = vmatmul.mubr.f32.gmra.mxu0 %v4424
        %v4426 = vpop.f32.mrf.mxu0
        %v4427 = vadd.f32 %v2886, %v4426
        %v4428 = vpop.f32.mrf.mxu0
        %4429 = vdwg.mxu0
        %4430 = vmatprep.subr.mxu0 0.0
        %v4431 = vand.u32 %v3010, 4294901760
        %v4432 = vsub.f32 %v3010, %v4431
        %v4433 = vand.u32 %v4432, 4294901760
        %v4434 = vsub.f32 %v4432, %v4433
        %v4435 = vand.u32 %v4434, 4294901760
        %4436 = vmatpush1.xpose.msra.mxu0 %v4435
        %4437 = vmatprep.subr.mxu0 0.0
        %v4438 = vand.u32 %v3008, 4294901760
        %v4439 = vsub.f32 %v3008, %v4438
        %v4440 = vand.u32 %v4439, 4294901760
        %v4441 = vsub.f32 %v4439, %v4440
        %v4442 = vand.u32 %v4441, 4294901760
        %4443 = vmatpush1.xpose.msra.mxu0 %v4442
        %4444 = vmatprep.subr.mxu0 0.0
        %v4445 = vand.u32 %v3006, 4294901760
        %v4446 = vsub.f32 %v3006, %v4445
        %v4447 = vand.u32 %v4446, 4294901760
        %v4448 = vsub.f32 %v4446, %v4447
        %v4449 = vand.u32 %v4448, 4294901760
        %4450 = vmatpush1.xpose.msra.mxu0 %v4449
        %4451 = vmatprep.subr.mxu0 0.0
        %v4452 = vand.u32 %v3004, 4294901760
        %v4453 = vsub.f32 %v3004, %v4452
        %v4454 = vand.u32 %v4453, 4294901760
        %v4455 = vsub.f32 %v4453, %v4454
        %v4456 = vand.u32 %v4455, 4294901760
        %4457 = vmatpush1.xpose.msra.mxu0 %v4456
        %4458 = vmatprep.subr.mxu0 0.0
        %v4459 = vand.u32 %v3002, 4294901760
        %v4460 = vsub.f32 %v3002, %v4459
        %v4461 = vand.u32 %v4460, 4294901760
        %v4462 = vsub.f32 %v4460, %v4461
        %v4463 = vand.u32 %v4462, 4294901760
        %4464 = vmatpush1.xpose.msra.mxu0 %v4463
        %4465 = vmatprep.subr.mxu0 0.0
        %v4466 = vand.u32 %v3000, 4294901760
        %v4467 = vsub.f32 %v3000, %v4466
        %v4468 = vand.u32 %v4467, 4294901760
        %v4469 = vsub.f32 %v4467, %v4468
        %v4470 = vand.u32 %v4469, 4294901760
        %4471 = vmatpush1.xpose.msra.mxu0 %v4470
        %4472 = vmatprep.subr.mxu0 0.0
        %v4473 = vand.u32 %v2998, 4294901760
        %v4474 = vsub.f32 %v2998, %v4473
        %v4475 = vand.u32 %v4474, 4294901760
        %v4476 = vsub.f32 %v4474, %v4475
        %v4477 = vand.u32 %v4476, 4294901760
        %4478 = vmatpush1.xpose.msra.mxu0 %v4477
        %4479 = vmatprep.subr.mxu0 0.0
        %v4480 = vand.u32 %v2996, 4294901760
        %v4481 = vsub.f32 %v2996, %v4480
        %v4482 = vand.u32 %v4481, 4294901760
        %v4483 = vsub.f32 %v4481, %v4482
        %v4484 = vand.u32 %v4483, 4294901760
        %4485 = vmatpush1.xpose.msra.mxu0 %v4484
        %4486 = vmatprep.subr.mxu0 0.0
        %v4487 = vand.u32 %v2994, 4294901760
        %v4488 = vsub.f32 %v2994, %v4487
        %v4489 = vand.u32 %v4488, 4294901760
        %v4490 = vsub.f32 %v4488, %v4489
        %v4491 = vand.u32 %v4490, 4294901760
        %4492 = vmatpush1.xpose.msra.mxu0 %v4491
        %4493 = vmatprep.subr.mxu0 0.0
        %v4494 = vand.u32 %v2992, 4294901760
        %v4495 = vsub.f32 %v2992, %v4494
        %v4496 = vand.u32 %v4495, 4294901760
        %v4497 = vsub.f32 %v4495, %v4496
        %v4498 = vand.u32 %v4497, 4294901760
        %4499 = vmatpush1.xpose.msra.mxu0 %v4498
        %4500 = vmatprep.subr.mxu0 0.0
        %v4501 = vand.u32 %v2990, 4294901760
        %v4502 = vsub.f32 %v2990, %v4501
        %v4503 = vand.u32 %v4502, 4294901760
        %v4504 = vsub.f32 %v4502, %v4503
        %v4505 = vand.u32 %v4504, 4294901760
        %4506 = vmatpush1.xpose.msra.mxu0 %v4505
        %4507 = vmatprep.subr.mxu0 0.0
        %v4508 = vand.u32 %v2988, 4294901760
        %v4509 = vsub.f32 %v2988, %v4508
        %v4510 = vand.u32 %v4509, 4294901760
        %v4511 = vsub.f32 %v4509, %v4510
        %v4512 = vand.u32 %v4511, 4294901760
        %4513 = vmatpush1.xpose.msra.mxu0 %v4512
        %4514 = vmatprep.subr.mxu0 0.0
        %v4515 = vand.u32 %v2986, 4294901760
        %v4516 = vsub.f32 %v2986, %v4515
        %v4517 = vand.u32 %v4516, 4294901760
        %v4518 = vsub.f32 %v4516, %v4517
        %v4519 = vand.u32 %v4518, 4294901760
        %4520 = vmatpush1.xpose.msra.mxu0 %v4519
        %4521 = vmatprep.subr.mxu0 0.0
        %v4522 = vand.u32 %v2984, 4294901760
        %v4523 = vsub.f32 %v2984, %v4522
        %v4524 = vand.u32 %v4523, 4294901760
        %v4525 = vsub.f32 %v4523, %v4524
        %v4526 = vand.u32 %v4525, 4294901760
        %4527 = vmatpush1.xpose.msra.mxu0 %v4526
        %4528 = vmatprep.subr.mxu0 0.0
        %v4529 = vand.u32 %v2982, 4294901760
        %v4530 = vsub.f32 %v2982, %v4529
        %v4531 = vand.u32 %v4530, 4294901760
        %v4532 = vsub.f32 %v4530, %v4531
        %v4533 = vand.u32 %v4532, 4294901760
        %4534 = vmatpush1.xpose.msra.mxu0 %v4533
        %4535 = vmatprep.subr.mxu0 0.0
        %v4536 = vand.u32 %v2980, 4294901760
        %v4537 = vsub.f32 %v2980, %v4536
        %v4538 = vand.u32 %v4537, 4294901760
        %v4539 = vsub.f32 %v4537, %v4538
        %v4540 = vand.u32 %v4539, 4294901760
        %4541 = vmatpush1.xpose.msra.mxu0 %v4540
        %4542 = vmatprep.subr.mxu0 0.0
        %4543 = vmatpush2.xpose.msra.mxu0 0.0
        %4544 = vmatprep.subr.mxu0 0.0
        %4545 = vmatpush2.xpose.msra.mxu0 0.0
        %4546 = vmatprep.subr.mxu0 0.0
        %4547 = vmatpush2.xpose.msra.mxu0 0.0
        %4548 = vmatprep.subr.mxu0 0.0
        %4549 = vmatpush2.xpose.msra.mxu0 0.0
        %4550 = vmatprep.subr.mxu0 0.0
        %4551 = vmatpush2.xpose.msra.mxu0 0.0
        %4552 = vmatprep.subr.mxu0 0.0
        %4553 = vmatpush2.xpose.msra.mxu0 0.0
        %4554 = vmatprep.subr.mxu0 0.0
        %4555 = vmatpush2.xpose.msra.mxu0 0.0
        %4556 = vmatprep.subr.mxu0 0.0
        %4557 = vmatpush2.xpose.msra.mxu0 0.0
        %4558 = vmatprep.subr.mxu0 0.0
        %4559 = vmatpush2.xpose.msra.mxu0 0.0
        %4560 = vmatprep.subr.mxu0 0.0
        %4561 = vmatpush2.xpose.msra.mxu0 0.0
        %4562 = vmatprep.subr.mxu0 0.0
        %4563 = vmatpush2.xpose.msra.mxu0 0.0
        %4564 = vmatprep.subr.mxu0 0.0
        %4565 = vmatpush2.xpose.msra.mxu0 0.0
        %4566 = vmatprep.subr.mxu0 0.0
        %4567 = vmatpush2.xpose.msra.mxu0 0.0
        %4568 = vmatprep.subr.mxu0 0.0
        %4569 = vmatpush2.xpose.msra.mxu0 0.0
        %4570 = vmatprep.subr.mxu0 0.0
        %4571 = vmatpush2.xpose.msra.mxu0 0.0
        %4572 = vmatprep.subr.mxu0 0.0
        %4573 = vmatpush2.xpose.msra.mxu0 0.0
        %4574 = vmatprep.mubr.f32.mxu0 0.0
        %v4575 = vand.u32 %v2890, 4294901760
        %4576 = vmatmul.mubr.f32.gmra.mxu0 %v4575
        %v4577 = vpop.f32.mrf.mxu0
        %v4578 = vadd.f32 %v4347, %v4577
        %v4579 = vpop.f32.mrf.mxu0
        %4580 = vmatprep.mubr.f32.mxu0 0.0
        %v4581 = vand.u32 %v2893, 4294901760
        %4582 = vmatmul.mubr.f32.gmra.mxu0 %v4581
        %v4583 = vpop.f32.mrf.mxu0
        %v4584 = vadd.f32 %v4357, %v4583
        %v4585 = vpop.f32.mrf.mxu0
        %4586 = vmatprep.mubr.f32.mxu0 0.0
        %v4587 = vand.u32 %v2896, 4294901760
        %4588 = vmatmul.mubr.f32.gmra.mxu0 %v4587
        %v4589 = vpop.f32.mrf.mxu0
        %v4590 = vadd.f32 %v4367, %v4589
        %v4591 = vpop.f32.mrf.mxu0
        %4592 = vmatprep.mubr.f32.mxu0 0.0
        %v4593 = vand.u32 %v2899, 4294901760
        %4594 = vmatmul.mubr.f32.gmra.mxu0 %v4593
        %v4595 = vpop.f32.mrf.mxu0
        %v4596 = vadd.f32 %v4377, %v4595
        %v4597 = vpop.f32.mrf.mxu0
        %4598 = vmatprep.mubr.f32.mxu0 0.0
        %v4599 = vand.u32 %v2902, 4294901760
        %4600 = vmatmul.mubr.f32.gmra.mxu0 %v4599
        %v4601 = vpop.f32.mrf.mxu0
        %v4602 = vadd.f32 %v4387, %v4601
        %v4603 = vpop.f32.mrf.mxu0
        %4604 = vmatprep.mubr.f32.mxu0 0.0
        %v4605 = vand.u32 %v2905, 4294901760
        %4606 = vmatmul.mubr.f32.gmra.mxu0 %v4605
        %v4607 = vpop.f32.mrf.mxu0
        %v4608 = vadd.f32 %v4397, %v4607
        %v4609 = vpop.f32.mrf.mxu0
        %4610 = vmatprep.mubr.f32.mxu0 0.0
        %v4611 = vand.u32 %v2908, 4294901760
        %4612 = vmatmul.mubr.f32.gmra.mxu0 %v4611
        %v4613 = vpop.f32.mrf.mxu0
        %v4614 = vadd.f32 %v4407, %v4613
        %v4615 = vpop.f32.mrf.mxu0
        %4616 = vmatprep.mubr.f32.mxu0 0.0
        %v4617 = vand.u32 %v2911, 4294901760
        %4618 = vmatmul.mubr.f32.gmra.mxu0 %v4617
        %v4619 = vpop.f32.mrf.mxu0
        %v4620 = vadd.f32 %v4417, %v4619
        %v4621 = vpop.f32.mrf.mxu0
        %4622 = vmatprep.mubr.f32.mxu0 0.0
        %v4623 = vand.u32 %v2914, 4294901760
        %4624 = vmatmul.mubr.f32.gmra.mxu0 %v4623
        %v4625 = vpop.f32.mrf.mxu0
        %v4626 = vadd.f32 %v4427, %v4625
        %v4627 = vpop.f32.mrf.mxu0
        %4628 = vdwg.mxu0
        %4629 = vmatprep.subr.mxu0 0.0
        %v4630 = vand.u32 %v3010, 4294901760
        %v4631 = vsub.f32 %v3010, %v4630
        %4632 = vmatpush1.xpose.msra.mxu0 %v4631
        %4633 = vmatprep.subr.mxu0 0.0
        %v4634 = vand.u32 %v3008, 4294901760
        %v4635 = vsub.f32 %v3008, %v4634
        %4636 = vmatpush1.xpose.msra.mxu0 %v4635
        %4637 = vmatprep.subr.mxu0 0.0
        %v4638 = vand.u32 %v3006, 4294901760
        %v4639 = vsub.f32 %v3006, %v4638
        %4640 = vmatpush1.xpose.msra.mxu0 %v4639
        %4641 = vmatprep.subr.mxu0 0.0
        %v4642 = vand.u32 %v3004, 4294901760
        %v4643 = vsub.f32 %v3004, %v4642
        %4644 = vmatpush1.xpose.msra.mxu0 %v4643
        %4645 = vmatprep.subr.mxu0 0.0
        %v4646 = vand.u32 %v3002, 4294901760
        %v4647 = vsub.f32 %v3002, %v4646
        %4648 = vmatpush1.xpose.msra.mxu0 %v4647
        %4649 = vmatprep.subr.mxu0 0.0
        %v4650 = vand.u32 %v3000, 4294901760
        %v4651 = vsub.f32 %v3000, %v4650
        %4652 = vmatpush1.xpose.msra.mxu0 %v4651
        %4653 = vmatprep.subr.mxu0 0.0
        %v4654 = vand.u32 %v2998, 4294901760
        %v4655 = vsub.f32 %v2998, %v4654
        %4656 = vmatpush1.xpose.msra.mxu0 %v4655
        %4657 = vmatprep.subr.mxu0 0.0
        %v4658 = vand.u32 %v2996, 4294901760
        %v4659 = vsub.f32 %v2996, %v4658
        %4660 = vmatpush1.xpose.msra.mxu0 %v4659
        %4661 = vmatprep.subr.mxu0 0.0
        %v4662 = vand.u32 %v2994, 4294901760
        %v4663 = vsub.f32 %v2994, %v4662
        %4664 = vmatpush1.xpose.msra.mxu0 %v4663
        %4665 = vmatprep.subr.mxu0 0.0
        %v4666 = vand.u32 %v2992, 4294901760
        %v4667 = vsub.f32 %v2992, %v4666
        %4668 = vmatpush1.xpose.msra.mxu0 %v4667
        %4669 = vmatprep.subr.mxu0 0.0
        %v4670 = vand.u32 %v2990, 4294901760
        %v4671 = vsub.f32 %v2990, %v4670
        %4672 = vmatpush1.xpose.msra.mxu0 %v4671
        %4673 = vmatprep.subr.mxu0 0.0
        %v4674 = vand.u32 %v2988, 4294901760
        %v4675 = vsub.f32 %v2988, %v4674
        %4676 = vmatpush1.xpose.msra.mxu0 %v4675
        %4677 = vmatprep.subr.mxu0 0.0
        %v4678 = vand.u32 %v2986, 4294901760
        %v4679 = vsub.f32 %v2986, %v4678
        %4680 = vmatpush1.xpose.msra.mxu0 %v4679
        %4681 = vmatprep.subr.mxu0 0.0
        %v4682 = vand.u32 %v2984, 4294901760
        %v4683 = vsub.f32 %v2984, %v4682
        %4684 = vmatpush1.xpose.msra.mxu0 %v4683
        %4685 = vmatprep.subr.mxu0 0.0
        %v4686 = vand.u32 %v2982, 4294901760
        %v4687 = vsub.f32 %v2982, %v4686
        %4688 = vmatpush1.xpose.msra.mxu0 %v4687
        %4689 = vmatprep.subr.mxu0 0.0
        %v4690 = vand.u32 %v2980, 4294901760
        %v4691 = vsub.f32 %v2980, %v4690
        %4692 = vmatpush1.xpose.msra.mxu0 %v4691
        %4693 = vmatprep.subr.mxu0 0.0
        %4694 = vmatpush2.xpose.msra.mxu0 0.0
        %4695 = vmatprep.subr.mxu0 0.0
        %4696 = vmatpush2.xpose.msra.mxu0 0.0
        %4697 = vmatprep.subr.mxu0 0.0
        %4698 = vmatpush2.xpose.msra.mxu0 0.0
        %4699 = vmatprep.subr.mxu0 0.0
        %4700 = vmatpush2.xpose.msra.mxu0 0.0
        %4701 = vmatprep.subr.mxu0 0.0
        %4702 = vmatpush2.xpose.msra.mxu0 0.0
        %4703 = vmatprep.subr.mxu0 0.0
        %4704 = vmatpush2.xpose.msra.mxu0 0.0
        %4705 = vmatprep.subr.mxu0 0.0
        %4706 = vmatpush2.xpose.msra.mxu0 0.0
        %4707 = vmatprep.subr.mxu0 0.0
        %4708 = vmatpush2.xpose.msra.mxu0 0.0
        %4709 = vmatprep.subr.mxu0 0.0
        %4710 = vmatpush2.xpose.msra.mxu0 0.0
        %4711 = vmatprep.subr.mxu0 0.0
        %4712 = vmatpush2.xpose.msra.mxu0 0.0
        %4713 = vmatprep.subr.mxu0 0.0
        %4714 = vmatpush2.xpose.msra.mxu0 0.0
        %4715 = vmatprep.subr.mxu0 0.0
        %4716 = vmatpush2.xpose.msra.mxu0 0.0
        %4717 = vmatprep.subr.mxu0 0.0
        %4718 = vmatpush2.xpose.msra.mxu0 0.0
        %4719 = vmatprep.subr.mxu0 0.0
        %4720 = vmatpush2.xpose.msra.mxu0 0.0
        %4721 = vmatprep.subr.mxu0 0.0
        %4722 = vmatpush2.xpose.msra.mxu0 0.0
        %4723 = vmatprep.subr.mxu0 0.0
        %4724 = vmatpush2.xpose.msra.mxu0 0.0
        %4725 = vmatprep.mubr.f32.mxu0 0.0
        %v4726 = vand.u32 %v2890, 4294901760
        %v4727 = vsub.f32 %v2890, %v4726
        %4728 = vmatmul.mubr.f32.gmra.mxu0 %v4727
        %v4729 = vpop.f32.mrf.mxu0
        %v4730 = vadd.f32 %v4578, %v4729
        %v4731 = vpop.f32.mrf.mxu0
        %4732 = vmatprep.mubr.f32.mxu0 0.0
        %v4733 = vand.u32 %v2893, 4294901760
        %v4734 = vsub.f32 %v2893, %v4733
        %4735 = vmatmul.mubr.f32.gmra.mxu0 %v4734
        %v4736 = vpop.f32.mrf.mxu0
        %v4737 = vadd.f32 %v4584, %v4736
        %v4738 = vpop.f32.mrf.mxu0
        %4739 = vmatprep.mubr.f32.mxu0 0.0
        %v4740 = vand.u32 %v2896, 4294901760
        %v4741 = vsub.f32 %v2896, %v4740
        %4742 = vmatmul.mubr.f32.gmra.mxu0 %v4741
        %v4743 = vpop.f32.mrf.mxu0
        %v4744 = vadd.f32 %v4590, %v4743
        %v4745 = vpop.f32.mrf.mxu0
        %4746 = vmatprep.mubr.f32.mxu0 0.0
        %v4747 = vand.u32 %v2899, 4294901760
        %v4748 = vsub.f32 %v2899, %v4747
        %4749 = vmatmul.mubr.f32.gmra.mxu0 %v4748
        %v4750 = vpop.f32.mrf.mxu0
        %v4751 = vadd.f32 %v4596, %v4750
        %v4752 = vpop.f32.mrf.mxu0
        %4753 = vmatprep.mubr.f32.mxu0 0.0
        %v4754 = vand.u32 %v2902, 4294901760
        %v4755 = vsub.f32 %v2902, %v4754
        %4756 = vmatmul.mubr.f32.gmra.mxu0 %v4755
        %v4757 = vpop.f32.mrf.mxu0
        %v4758 = vadd.f32 %v4602, %v4757
        %v4759 = vpop.f32.mrf.mxu0
        %4760 = vmatprep.mubr.f32.mxu0 0.0
        %v4761 = vand.u32 %v2905, 4294901760
        %v4762 = vsub.f32 %v2905, %v4761
        %4763 = vmatmul.mubr.f32.gmra.mxu0 %v4762
        %v4764 = vpop.f32.mrf.mxu0
        %v4765 = vadd.f32 %v4608, %v4764
        %v4766 = vpop.f32.mrf.mxu0
        %4767 = vmatprep.mubr.f32.mxu0 0.0
        %v4768 = vand.u32 %v2908, 4294901760
        %v4769 = vsub.f32 %v2908, %v4768
        %4770 = vmatmul.mubr.f32.gmra.mxu0 %v4769
        %v4771 = vpop.f32.mrf.mxu0
        %v4772 = vadd.f32 %v4614, %v4771
        %v4773 = vpop.f32.mrf.mxu0
        %4774 = vmatprep.mubr.f32.mxu0 0.0
        %v4775 = vand.u32 %v2911, 4294901760
        %v4776 = vsub.f32 %v2911, %v4775
        %4777 = vmatmul.mubr.f32.gmra.mxu0 %v4776
        %v4778 = vpop.f32.mrf.mxu0
        %v4779 = vadd.f32 %v4620, %v4778
        %v4780 = vpop.f32.mrf.mxu0
        %4781 = vmatprep.mubr.f32.mxu0 0.0
        %v4782 = vand.u32 %v2914, 4294901760
        %v4783 = vsub.f32 %v2914, %v4782
        %4784 = vmatmul.mubr.f32.gmra.mxu0 %v4783
        %v4785 = vpop.f32.mrf.mxu0
        %v4786 = vadd.f32 %v4626, %v4785
        %v4787 = vpop.f32.mrf.mxu0
        %4788 = vdwg.mxu0
        %4789 = vmatprep.subr.mxu0 0.0
        %v4790 = vand.u32 %v3010, 4294901760
        %4791 = vmatpush1.xpose.msra.mxu0 %v4790
        %4792 = vmatprep.subr.mxu0 0.0
        %v4793 = vand.u32 %v3008, 4294901760
        %4794 = vmatpush1.xpose.msra.mxu0 %v4793
        %4795 = vmatprep.subr.mxu0 0.0
        %v4796 = vand.u32 %v3006, 4294901760
        %4797 = vmatpush1.xpose.msra.mxu0 %v4796
        %4798 = vmatprep.subr.mxu0 0.0
        %v4799 = vand.u32 %v3004, 4294901760
        %4800 = vmatpush1.xpose.msra.mxu0 %v4799
        %4801 = vmatprep.subr.mxu0 0.0
        %v4802 = vand.u32 %v3002, 4294901760
        %4803 = vmatpush1.xpose.msra.mxu0 %v4802
        %4804 = vmatprep.subr.mxu0 0.0
        %v4805 = vand.u32 %v3000, 4294901760
        %4806 = vmatpush1.xpose.msra.mxu0 %v4805
        %4807 = vmatprep.subr.mxu0 0.0
        %v4808 = vand.u32 %v2998, 4294901760
        %4809 = vmatpush1.xpose.msra.mxu0 %v4808
        %4810 = vmatprep.subr.mxu0 0.0
        %v4811 = vand.u32 %v2996, 4294901760
        %4812 = vmatpush1.xpose.msra.mxu0 %v4811
        %4813 = vmatprep.subr.mxu0 0.0
        %v4814 = vand.u32 %v2994, 4294901760
        %4815 = vmatpush1.xpose.msra.mxu0 %v4814
        %4816 = vmatprep.subr.mxu0 0.0
        %v4817 = vand.u32 %v2992, 4294901760
        %4818 = vmatpush1.xpose.msra.mxu0 %v4817
        %4819 = vmatprep.subr.mxu0 0.0
        %v4820 = vand.u32 %v2990, 4294901760
        %4821 = vmatpush1.xpose.msra.mxu0 %v4820
        %4822 = vmatprep.subr.mxu0 0.0
        %v4823 = vand.u32 %v2988, 4294901760
        %4824 = vmatpush1.xpose.msra.mxu0 %v4823
        %4825 = vmatprep.subr.mxu0 0.0
        %v4826 = vand.u32 %v2986, 4294901760
        %4827 = vmatpush1.xpose.msra.mxu0 %v4826
        %4828 = vmatprep.subr.mxu0 0.0
        %v4829 = vand.u32 %v2984, 4294901760
        %4830 = vmatpush1.xpose.msra.mxu0 %v4829
        %4831 = vmatprep.subr.mxu0 0.0
        %v4832 = vand.u32 %v2982, 4294901760
        %4833 = vmatpush1.xpose.msra.mxu0 %v4832
        %4834 = vmatprep.subr.mxu0 0.0
        %v4835 = vand.u32 %v2980, 4294901760
        %4836 = vmatpush1.xpose.msra.mxu0 %v4835
        %4837 = vmatprep.subr.mxu0 0.0
        %4838 = vmatpush2.xpose.msra.mxu0 0.0
        %4839 = vmatprep.subr.mxu0 0.0
        %4840 = vmatpush2.xpose.msra.mxu0 0.0
        %4841 = vmatprep.subr.mxu0 0.0
        %4842 = vmatpush2.xpose.msra.mxu0 0.0
        %4843 = vmatprep.subr.mxu0 0.0
        %4844 = vmatpush2.xpose.msra.mxu0 0.0
        %4845 = vmatprep.subr.mxu0 0.0
        %4846 = vmatpush2.xpose.msra.mxu0 0.0
        %4847 = vmatprep.subr.mxu0 0.0
        %4848 = vmatpush2.xpose.msra.mxu0 0.0
        %4849 = vmatprep.subr.mxu0 0.0
        %4850 = vmatpush2.xpose.msra.mxu0 0.0
        %4851 = vmatprep.subr.mxu0 0.0
        %4852 = vmatpush2.xpose.msra.mxu0 0.0
        %4853 = vmatprep.subr.mxu0 0.0
        %4854 = vmatpush2.xpose.msra.mxu0 0.0
        %4855 = vmatprep.subr.mxu0 0.0
        %4856 = vmatpush2.xpose.msra.mxu0 0.0
        %4857 = vmatprep.subr.mxu0 0.0
        %4858 = vmatpush2.xpose.msra.mxu0 0.0
        %4859 = vmatprep.subr.mxu0 0.0
        %4860 = vmatpush2.xpose.msra.mxu0 0.0
        %4861 = vmatprep.subr.mxu0 0.0
        %4862 = vmatpush2.xpose.msra.mxu0 0.0
        %4863 = vmatprep.subr.mxu0 0.0
        %4864 = vmatpush2.xpose.msra.mxu0 0.0
        %4865 = vmatprep.subr.mxu0 0.0
        %4866 = vmatpush2.xpose.msra.mxu0 0.0
        %4867 = vmatprep.subr.mxu0 0.0
        %4868 = vmatpush2.xpose.msra.mxu0 0.0
        %4869 = vmatprep.mubr.f32.mxu0 0.0
        %v4870 = vand.u32 %v2890, 4294901760
        %v4871 = vsub.f32 %v2890, %v4870
        %v4872 = vand.u32 %v4871, 4294901760
        %4873 = vmatmul.mubr.f32.gmra.mxu0 %v4872
        %v4874 = vpop.f32.mrf.mxu0
        %v4875 = vadd.f32 %v4730, %v4874
        %v4876 = vpop.f32.mrf.mxu0
        %4877 = vmatprep.mubr.f32.mxu0 0.0
        %v4878 = vand.u32 %v2893, 4294901760
        %v4879 = vsub.f32 %v2893, %v4878
        %v4880 = vand.u32 %v4879, 4294901760
        %4881 = vmatmul.mubr.f32.gmra.mxu0 %v4880
        %v4882 = vpop.f32.mrf.mxu0
        %v4883 = vadd.f32 %v4737, %v4882
        %v4884 = vpop.f32.mrf.mxu0
        %4885 = vmatprep.mubr.f32.mxu0 0.0
        %v4886 = vand.u32 %v2896, 4294901760
        %v4887 = vsub.f32 %v2896, %v4886
        %v4888 = vand.u32 %v4887, 4294901760
        %4889 = vmatmul.mubr.f32.gmra.mxu0 %v4888
        %v4890 = vpop.f32.mrf.mxu0
        %v4891 = vadd.f32 %v4744, %v4890
        %v4892 = vpop.f32.mrf.mxu0
        %4893 = vmatprep.mubr.f32.mxu0 0.0
        %v4894 = vand.u32 %v2899, 4294901760
        %v4895 = vsub.f32 %v2899, %v4894
        %v4896 = vand.u32 %v4895, 4294901760
        %4897 = vmatmul.mubr.f32.gmra.mxu0 %v4896
        %v4898 = vpop.f32.mrf.mxu0
        %v4899 = vadd.f32 %v4751, %v4898
        %v4900 = vpop.f32.mrf.mxu0
        %4901 = vmatprep.mubr.f32.mxu0 0.0
        %v4902 = vand.u32 %v2902, 4294901760
        %v4903 = vsub.f32 %v2902, %v4902
        %v4904 = vand.u32 %v4903, 4294901760
        %4905 = vmatmul.mubr.f32.gmra.mxu0 %v4904
        %v4906 = vpop.f32.mrf.mxu0
        %v4907 = vadd.f32 %v4758, %v4906
        %v4908 = vpop.f32.mrf.mxu0
        %4909 = vmatprep.mubr.f32.mxu0 0.0
        %v4910 = vand.u32 %v2905, 4294901760
        %v4911 = vsub.f32 %v2905, %v4910
        %v4912 = vand.u32 %v4911, 4294901760
        %4913 = vmatmul.mubr.f32.gmra.mxu0 %v4912
        %v4914 = vpop.f32.mrf.mxu0
        %v4915 = vadd.f32 %v4765, %v4914
        %v4916 = vpop.f32.mrf.mxu0
        %4917 = vmatprep.mubr.f32.mxu0 0.0
        %v4918 = vand.u32 %v2908, 4294901760
        %v4919 = vsub.f32 %v2908, %v4918
        %v4920 = vand.u32 %v4919, 4294901760
        %4921 = vmatmul.mubr.f32.gmra.mxu0 %v4920
        %v4922 = vpop.f32.mrf.mxu0
        %v4923 = vadd.f32 %v4772, %v4922
        %v4924 = vpop.f32.mrf.mxu0
        %4925 = vmatprep.mubr.f32.mxu0 0.0
        %v4926 = vand.u32 %v2911, 4294901760
        %v4927 = vsub.f32 %v2911, %v4926
        %v4928 = vand.u32 %v4927, 4294901760
        %4929 = vmatmul.mubr.f32.gmra.mxu0 %v4928
        %v4930 = vpop.f32.mrf.mxu0
        %v4931 = vadd.f32 %v4779, %v4930
        %v4932 = vpop.f32.mrf.mxu0
        %4933 = vmatprep.mubr.f32.mxu0 0.0
        %v4934 = vand.u32 %v2914, 4294901760
        %v4935 = vsub.f32 %v2914, %v4934
        %v4936 = vand.u32 %v4935, 4294901760
        %4937 = vmatmul.mubr.f32.gmra.mxu0 %v4936
        %v4938 = vpop.f32.mrf.mxu0
        %v4939 = vadd.f32 %v4786, %v4938
        %v4940 = vpop.f32.mrf.mxu0
        %4941 = vdwg.mxu0
        %4942 = vmatprep.subr.mxu0 0.0
        %v4943 = vand.u32 %v3010, 4294901760
        %v4944 = vsub.f32 %v3010, %v4943
        %v4945 = vand.u32 %v4944, 4294901760
        %4946 = vmatpush1.xpose.msra.mxu0 %v4945
        %4947 = vmatprep.subr.mxu0 0.0
        %v4948 = vand.u32 %v3008, 4294901760
        %v4949 = vsub.f32 %v3008, %v4948
        %v4950 = vand.u32 %v4949, 4294901760
        %4951 = vmatpush1.xpose.msra.mxu0 %v4950
        %4952 = vmatprep.subr.mxu0 0.0
        %v4953 = vand.u32 %v3006, 4294901760
        %v4954 = vsub.f32 %v3006, %v4953
        %v4955 = vand.u32 %v4954, 4294901760
        %4956 = vmatpush1.xpose.msra.mxu0 %v4955
        %4957 = vmatprep.subr.mxu0 0.0
        %v4958 = vand.u32 %v3004, 4294901760
        %v4959 = vsub.f32 %v3004, %v4958
        %v4960 = vand.u32 %v4959, 4294901760
        %4961 = vmatpush1.xpose.msra.mxu0 %v4960
        %4962 = vmatprep.subr.mxu0 0.0
        %v4963 = vand.u32 %v3002, 4294901760
        %v4964 = vsub.f32 %v3002, %v4963
        %v4965 = vand.u32 %v4964, 4294901760
        %4966 = vmatpush1.xpose.msra.mxu0 %v4965
        %4967 = vmatprep.subr.mxu0 0.0
        %v4968 = vand.u32 %v3000, 4294901760
        %v4969 = vsub.f32 %v3000, %v4968
        %v4970 = vand.u32 %v4969, 4294901760
        %4971 = vmatpush1.xpose.msra.mxu0 %v4970
        %4972 = vmatprep.subr.mxu0 0.0
        %v4973 = vand.u32 %v2998, 4294901760
        %v4974 = vsub.f32 %v2998, %v4973
        %v4975 = vand.u32 %v4974, 4294901760
        %4976 = vmatpush1.xpose.msra.mxu0 %v4975
        %4977 = vmatprep.subr.mxu0 0.0
        %v4978 = vand.u32 %v2996, 4294901760
        %v4979 = vsub.f32 %v2996, %v4978
        %v4980 = vand.u32 %v4979, 4294901760
        %4981 = vmatpush1.xpose.msra.mxu0 %v4980
        %4982 = vmatprep.subr.mxu0 0.0
        %v4983 = vand.u32 %v2994, 4294901760
        %v4984 = vsub.f32 %v2994, %v4983
        %v4985 = vand.u32 %v4984, 4294901760
        %4986 = vmatpush1.xpose.msra.mxu0 %v4985
        %4987 = vmatprep.subr.mxu0 0.0
        %v4988 = vand.u32 %v2992, 4294901760
        %v4989 = vsub.f32 %v2992, %v4988
        %v4990 = vand.u32 %v4989, 4294901760
        %4991 = vmatpush1.xpose.msra.mxu0 %v4990
        %4992 = vmatprep.subr.mxu0 0.0
        %v4993 = vand.u32 %v2990, 4294901760
        %v4994 = vsub.f32 %v2990, %v4993
        %v4995 = vand.u32 %v4994, 4294901760
        %4996 = vmatpush1.xpose.msra.mxu0 %v4995
        %4997 = vmatprep.subr.mxu0 0.0
        %v4998 = vand.u32 %v2988, 4294901760
        %v4999 = vsub.f32 %v2988, %v4998
        %v5000 = vand.u32 %v4999, 4294901760
        %5001 = vmatpush1.xpose.msra.mxu0 %v5000
        %5002 = vmatprep.subr.mxu0 0.0
        %v5003 = vand.u32 %v2986, 4294901760
        %v5004 = vsub.f32 %v2986, %v5003
        %v5005 = vand.u32 %v5004, 4294901760
        %5006 = vmatpush1.xpose.msra.mxu0 %v5005
        %5007 = vmatprep.subr.mxu0 0.0
        %v5008 = vand.u32 %v2984, 4294901760
        %v5009 = vsub.f32 %v2984, %v5008
        %v5010 = vand.u32 %v5009, 4294901760
        %5011 = vmatpush1.xpose.msra.mxu0 %v5010
        %5012 = vmatprep.subr.mxu0 0.0
        %v5013 = vand.u32 %v2982, 4294901760
        %v5014 = vsub.f32 %v2982, %v5013
        %v5015 = vand.u32 %v5014, 4294901760
        %5016 = vmatpush1.xpose.msra.mxu0 %v5015
        %5017 = vmatprep.subr.mxu0 0.0
        %v5018 = vand.u32 %v2980, 4294901760
        %v5019 = vsub.f32 %v2980, %v5018
        %v5020 = vand.u32 %v5019, 4294901760
        %5021 = vmatpush1.xpose.msra.mxu0 %v5020
        %5022 = vmatprep.subr.mxu0 0.0
        %5023 = vmatpush2.xpose.msra.mxu0 0.0
        %5024 = vmatprep.subr.mxu0 0.0
        %5025 = vmatpush2.xpose.msra.mxu0 0.0
        %5026 = vmatprep.subr.mxu0 0.0
        %5027 = vmatpush2.xpose.msra.mxu0 0.0
        %5028 = vmatprep.subr.mxu0 0.0
        %5029 = vmatpush2.xpose.msra.mxu0 0.0
        %5030 = vmatprep.subr.mxu0 0.0
        %5031 = vmatpush2.xpose.msra.mxu0 0.0
        %5032 = vmatprep.subr.mxu0 0.0
        %5033 = vmatpush2.xpose.msra.mxu0 0.0
        %5034 = vmatprep.subr.mxu0 0.0
        %5035 = vmatpush2.xpose.msra.mxu0 0.0
        %5036 = vmatprep.subr.mxu0 0.0
        %5037 = vmatpush2.xpose.msra.mxu0 0.0
        %5038 = vmatprep.subr.mxu0 0.0
        %5039 = vmatpush2.xpose.msra.mxu0 0.0
        %5040 = vmatprep.subr.mxu0 0.0
        %5041 = vmatpush2.xpose.msra.mxu0 0.0
        %5042 = vmatprep.subr.mxu0 0.0
        %5043 = vmatpush2.xpose.msra.mxu0 0.0
        %5044 = vmatprep.subr.mxu0 0.0
        %5045 = vmatpush2.xpose.msra.mxu0 0.0
        %5046 = vmatprep.subr.mxu0 0.0
        %5047 = vmatpush2.xpose.msra.mxu0 0.0
        %5048 = vmatprep.subr.mxu0 0.0
        %5049 = vmatpush2.xpose.msra.mxu0 0.0
        %5050 = vmatprep.subr.mxu0 0.0
        %5051 = vmatpush2.xpose.msra.mxu0 0.0
        %5052 = vmatprep.subr.mxu0 0.0
        %5053 = vmatpush2.xpose.msra.mxu0 0.0
        %5054 = vmatprep.mubr.f32.mxu0 0.0
        %v5055 = vand.u32 %v2890, 4294901760
        %5056 = vmatmul.mubr.f32.gmra.mxu0 %v5055
        %v5057 = vpop.f32.mrf.mxu0
        %v5058 = vadd.f32 %v4875, %v5057
        %v5059 = vpop.f32.mrf.mxu0
        %5060 = vmatprep.mubr.f32.mxu0 0.0
        %v5061 = vand.u32 %v2893, 4294901760
        %5062 = vmatmul.mubr.f32.gmra.mxu0 %v5061
        %v5063 = vpop.f32.mrf.mxu0
        %v5064 = vadd.f32 %v4883, %v5063
        %v5065 = vpop.f32.mrf.mxu0
        %5066 = vmatprep.mubr.f32.mxu0 0.0
        %v5067 = vand.u32 %v2896, 4294901760
        %5068 = vmatmul.mubr.f32.gmra.mxu0 %v5067
        %v5069 = vpop.f32.mrf.mxu0
        %v5070 = vadd.f32 %v4891, %v5069
        %v5071 = vpop.f32.mrf.mxu0
        %5072 = vmatprep.mubr.f32.mxu0 0.0
        %v5073 = vand.u32 %v2899, 4294901760
        %5074 = vmatmul.mubr.f32.gmra.mxu0 %v5073
        %v5075 = vpop.f32.mrf.mxu0
        %v5076 = vadd.f32 %v4899, %v5075
        %v5077 = vpop.f32.mrf.mxu0
        %5078 = vmatprep.mubr.f32.mxu0 0.0
        %v5079 = vand.u32 %v2902, 4294901760
        %5080 = vmatmul.mubr.f32.gmra.mxu0 %v5079
        %v5081 = vpop.f32.mrf.mxu0
        %v5082 = vadd.f32 %v4907, %v5081
        %v5083 = vpop.f32.mrf.mxu0
        %5084 = vmatprep.mubr.f32.mxu0 0.0
        %v5085 = vand.u32 %v2905, 4294901760
        %5086 = vmatmul.mubr.f32.gmra.mxu0 %v5085
        %v5087 = vpop.f32.mrf.mxu0
        %v5088 = vadd.f32 %v4915, %v5087
        %v5089 = vpop.f32.mrf.mxu0
        %5090 = vmatprep.mubr.f32.mxu0 0.0
        %v5091 = vand.u32 %v2908, 4294901760
        %5092 = vmatmul.mubr.f32.gmra.mxu0 %v5091
        %v5093 = vpop.f32.mrf.mxu0
        %v5094 = vadd.f32 %v4923, %v5093
        %v5095 = vpop.f32.mrf.mxu0
        %5096 = vmatprep.mubr.f32.mxu0 0.0
        %v5097 = vand.u32 %v2911, 4294901760
        %5098 = vmatmul.mubr.f32.gmra.mxu0 %v5097
        %v5099 = vpop.f32.mrf.mxu0
        %v5100 = vadd.f32 %v4931, %v5099
        %v5101 = vpop.f32.mrf.mxu0
        %5102 = vmatprep.mubr.f32.mxu0 0.0
        %v5103 = vand.u32 %v2914, 4294901760
        %5104 = vmatmul.mubr.f32.gmra.mxu0 %v5103
        %v5105 = vpop.f32.mrf.mxu0
        %v5106 = vadd.f32 %v4939, %v5105
        %v5107 = vpop.f32.mrf.mxu0
        %5108 = vdwg.mxu0
        %5109 = vmatprep.subr.mxu0 0.0
        %v5110 = vand.u32 %v3010, 4294901760
        %5111 = vmatpush1.xpose.msra.mxu0 %v5110
        %5112 = vmatprep.subr.mxu0 0.0
        %v5113 = vand.u32 %v3008, 4294901760
        %5114 = vmatpush1.xpose.msra.mxu0 %v5113
        %5115 = vmatprep.subr.mxu0 0.0
        %v5116 = vand.u32 %v3006, 4294901760
        %5117 = vmatpush1.xpose.msra.mxu0 %v5116
        %5118 = vmatprep.subr.mxu0 0.0
        %v5119 = vand.u32 %v3004, 4294901760
        %5120 = vmatpush1.xpose.msra.mxu0 %v5119
        %5121 = vmatprep.subr.mxu0 0.0
        %v5122 = vand.u32 %v3002, 4294901760
        %5123 = vmatpush1.xpose.msra.mxu0 %v5122
        %5124 = vmatprep.subr.mxu0 0.0
        %v5125 = vand.u32 %v3000, 4294901760
        %5126 = vmatpush1.xpose.msra.mxu0 %v5125
        %5127 = vmatprep.subr.mxu0 0.0
        %v5128 = vand.u32 %v2998, 4294901760
        %5129 = vmatpush1.xpose.msra.mxu0 %v5128
        %5130 = vmatprep.subr.mxu0 0.0
        %v5131 = vand.u32 %v2996, 4294901760
        %5132 = vmatpush1.xpose.msra.mxu0 %v5131
        %5133 = vmatprep.subr.mxu0 0.0
        %v5134 = vand.u32 %v2994, 4294901760
        %5135 = vmatpush1.xpose.msra.mxu0 %v5134
        %5136 = vmatprep.subr.mxu0 0.0
        %v5137 = vand.u32 %v2992, 4294901760
        %5138 = vmatpush1.xpose.msra.mxu0 %v5137
        %5139 = vmatprep.subr.mxu0 0.0
        %v5140 = vand.u32 %v2990, 4294901760
        %5141 = vmatpush1.xpose.msra.mxu0 %v5140
        %5142 = vmatprep.subr.mxu0 0.0
        %v5143 = vand.u32 %v2988, 4294901760
        %5144 = vmatpush1.xpose.msra.mxu0 %v5143
        %5145 = vmatprep.subr.mxu0 0.0
        %v5146 = vand.u32 %v2986, 4294901760
        %5147 = vmatpush1.xpose.msra.mxu0 %v5146
        %5148 = vmatprep.subr.mxu0 0.0
        %v5149 = vand.u32 %v2984, 4294901760
        %5150 = vmatpush1.xpose.msra.mxu0 %v5149
        %5151 = vmatprep.subr.mxu0 0.0
        %v5152 = vand.u32 %v2982, 4294901760
        %5153 = vmatpush1.xpose.msra.mxu0 %v5152
        %5154 = vmatprep.subr.mxu0 0.0
        %v5155 = vand.u32 %v2980, 4294901760
        %5156 = vmatpush1.xpose.msra.mxu0 %v5155
        %5157 = vmatprep.subr.mxu0 0.0
        %5158 = vmatpush2.xpose.msra.mxu0 0.0
        %5159 = vmatprep.subr.mxu0 0.0
        %5160 = vmatpush2.xpose.msra.mxu0 0.0
        %5161 = vmatprep.subr.mxu0 0.0
        %5162 = vmatpush2.xpose.msra.mxu0 0.0
        %5163 = vmatprep.subr.mxu0 0.0
        %5164 = vmatpush2.xpose.msra.mxu0 0.0
        %5165 = vmatprep.subr.mxu0 0.0
        %5166 = vmatpush2.xpose.msra.mxu0 0.0
        %5167 = vmatprep.subr.mxu0 0.0
        %5168 = vmatpush2.xpose.msra.mxu0 0.0
        %5169 = vmatprep.subr.mxu0 0.0
        %5170 = vmatpush2.xpose.msra.mxu0 0.0
        %5171 = vmatprep.subr.mxu0 0.0
        %5172 = vmatpush2.xpose.msra.mxu0 0.0
        %5173 = vmatprep.subr.mxu0 0.0
        %5174 = vmatpush2.xpose.msra.mxu0 0.0
        %5175 = vmatprep.subr.mxu0 0.0
        %5176 = vmatpush2.xpose.msra.mxu0 0.0
        %5177 = vmatprep.subr.mxu0 0.0
        %5178 = vmatpush2.xpose.msra.mxu0 0.0
        %5179 = vmatprep.subr.mxu0 0.0
        %5180 = vmatpush2.xpose.msra.mxu0 0.0
        %5181 = vmatprep.subr.mxu0 0.0
        %5182 = vmatpush2.xpose.msra.mxu0 0.0
        %5183 = vmatprep.subr.mxu0 0.0
        %5184 = vmatpush2.xpose.msra.mxu0 0.0
        %5185 = vmatprep.subr.mxu0 0.0
        %5186 = vmatpush2.xpose.msra.mxu0 0.0
        %5187 = vmatprep.subr.mxu0 0.0
        %5188 = vmatpush2.xpose.msra.mxu0 0.0
        %5189 = vmatprep.mubr.f32.mxu0 0.0
        %v5190 = vand.u32 %v2890, 4294901760
        %5191 = vmatmul.mubr.f32.gmra.mxu0 %v5190
        %v5192 = vpop.f32.mrf.mxu0
        %v5193 = vadd.f32 %v5058, %v5192
        %v5194 = vpop.f32.mrf.mxu0
        %5195 = vmatprep.mubr.f32.mxu0 0.0
        %v5196 = vand.u32 %v2893, 4294901760
        %5197 = vmatmul.mubr.f32.gmra.mxu0 %v5196
        %v5198 = vpop.f32.mrf.mxu0
        %v5199 = vadd.f32 %v5064, %v5198
        %v5200 = vpop.f32.mrf.mxu0
        %5201 = vmatprep.mubr.f32.mxu0 0.0
        %v5202 = vand.u32 %v2896, 4294901760
        %5203 = vmatmul.mubr.f32.gmra.mxu0 %v5202
        %v5204 = vpop.f32.mrf.mxu0
        %v5205 = vadd.f32 %v5070, %v5204
        %v5206 = vpop.f32.mrf.mxu0
        %5207 = vmatprep.mubr.f32.mxu0 0.0
        %v5208 = vand.u32 %v2899, 4294901760
        %5209 = vmatmul.mubr.f32.gmra.mxu0 %v5208
        %v5210 = vpop.f32.mrf.mxu0
        %v5211 = vadd.f32 %v5076, %v5210
        %v5212 = vpop.f32.mrf.mxu0
        %5213 = vmatprep.mubr.f32.mxu0 0.0
        %v5214 = vand.u32 %v2902, 4294901760
        %5215 = vmatmul.mubr.f32.gmra.mxu0 %v5214
        %v5216 = vpop.f32.mrf.mxu0
        %v5217 = vadd.f32 %v5082, %v5216
        %v5218 = vpop.f32.mrf.mxu0
        %5219 = vmatprep.mubr.f32.mxu0 0.0
        %v5220 = vand.u32 %v2905, 4294901760
        %5221 = vmatmul.mubr.f32.gmra.mxu0 %v5220
        %v5222 = vpop.f32.mrf.mxu0
        %v5223 = vadd.f32 %v5088, %v5222
        %v5224 = vpop.f32.mrf.mxu0
        %5225 = vmatprep.mubr.f32.mxu0 0.0
        %v5226 = vand.u32 %v2908, 4294901760
        %5227 = vmatmul.mubr.f32.gmra.mxu0 %v5226
        %v5228 = vpop.f32.mrf.mxu0
        %v5229 = vadd.f32 %v5094, %v5228
        %v5230 = vpop.f32.mrf.mxu0
        %5231 = vmatprep.mubr.f32.mxu0 0.0
        %v5232 = vand.u32 %v2911, 4294901760
        %5233 = vmatmul.mubr.f32.gmra.mxu0 %v5232
        %v5234 = vpop.f32.mrf.mxu0
        %v5235 = vadd.f32 %v5100, %v5234
        %v5236 = vpop.f32.mrf.mxu0
        %5237 = vmatprep.mubr.f32.mxu0 0.0
        %v5238 = vand.u32 %v2914, 4294901760
        %5239 = vmatmul.mubr.f32.gmra.mxu0 %v5238
        %v5240 = vpop.f32.mrf.mxu0
        %v5241 = vadd.f32 %v5106, %v5240
        %v5242 = vpop.f32.mrf.mxu0
        %5243 = vdwg.mxu0
        %v5244 = vld [vmem:[%s4] sm:$0xff]
        %v5245 = vld [vmem:[%s4 + $0x8] sm:$0xff]
        %v5246 = vmul.f32 %v4199, %v4199
        %v5247 = vmul.f32 %v4201, %v4201
        %v5248 = vmul.f32 %v5193, %v5193
        %v5249 = vmul.f32 %v4206, %v4206
        %v5250 = vmul.f32 %v4208, %v4208
        %v5251 = vmul.f32 %v5199, %v5199
        %v5252 = vmul.f32 %v4213, %v4213
        %v5253 = vmul.f32 %v4215, %v4215
        %v5254 = vmul.f32 %v5205, %v5205
        %v5255 = vmul.f32 %v4220, %v4220
        %v5256 = vmul.f32 %v4222, %v4222
        %v5257 = vmul.f32 %v5211, %v5211
        %v5258 = vmul.f32 %v4227, %v4227
        %v5259 = vmul.f32 %v4229, %v4229
        %v5260 = vmul.f32 %v5217, %v5217
        %v5261 = vmul.f32 %v4234, %v4234
        %v5262 = vmul.f32 %v4236, %v4236
        %v5263 = vmul.f32 %v5223, %v5223
        %v5264 = vmul.f32 %v4241, %v4241
        %v5265 = vmul.f32 %v4243, %v4243
        %v5266 = vmul.f32 %v5229, %v5229
        %v5267 = vmul.f32 %v4248, %v4248
        %v5268 = vmul.f32 %v4250, %v4250
        %v5269 = vmul.f32 %v5235, %v5235
        %v5270 = vmul.f32 %v4255, %v4255
        %v5271 = vmul.f32 %v4257, %v4257
        %v5272 = vmul.f32 %v5241, %v5241
        %vm5273 = vcmask 588800
        %v5275 = vsel %vm5273, %v5244, 0
        %v5278 = vsel %vm5273, %v5245, 0
        %5280 = vmatprep.subr.mxu0 0.0
        %5281 = vmatpush1.msra.mxu0 0.0
        %5282 = vmatprep.subr.mxu0 0.0
        %5283 = vmatpush1.msra.mxu0 0.0
        %5284 = vmatprep.subr.mxu0 0.0
        %5285 = vmatpush1.msra.mxu0 0.0
        %5286 = vmatprep.subr.mxu0 0.0
        %5287 = vmatpush1.msra.mxu0 0.0
        %5288 = vmatprep.subr.mxu0 0.0
        %5289 = vmatpush1.msra.mxu0 0.0
        %5290 = vmatprep.subr.mxu0 0.0
        %5291 = vmatpush1.msra.mxu0 0.0
        %5292 = vmatprep.subr.mxu0 0.0
        %5293 = vmatpush1.msra.mxu0 0.0
        %v5294 = vand.u32 %v5271, 4294901760
        %5295 = vmatprep.subr.mxu0 %v5294
        %v5296 = vand.u32 %v5270, 4294901760
        %5297 = vmatpush1.msra.mxu0 %v5296
        %v5298 = vand.u32 %v5268, 4294901760
        %5299 = vmatprep.subr.mxu0 %v5298
        %v5300 = vand.u32 %v5267, 4294901760
        %5301 = vmatpush1.msra.mxu0 %v5300
        %v5302 = vand.u32 %v5265, 4294901760
        %5303 = vmatprep.subr.mxu0 %v5302
        %v5304 = vand.u32 %v5264, 4294901760
        %5305 = vmatpush1.msra.mxu0 %v5304
        %v5306 = vand.u32 %v5262, 4294901760
        %5307 = vmatprep.subr.mxu0 %v5306
        %v5308 = vand.u32 %v5261, 4294901760
        %5309 = vmatpush1.msra.mxu0 %v5308
        %v5310 = vand.u32 %v5259, 4294901760
        %5311 = vmatprep.subr.mxu0 %v5310
        %v5312 = vand.u32 %v5258, 4294901760
        %5313 = vmatpush1.msra.mxu0 %v5312
        %v5314 = vand.u32 %v5256, 4294901760
        %5315 = vmatprep.subr.mxu0 %v5314
        %v5316 = vand.u32 %v5255, 4294901760
        %5317 = vmatpush1.msra.mxu0 %v5316
        %v5318 = vand.u32 %v5253, 4294901760
        %5319 = vmatprep.subr.mxu0 %v5318
        %v5320 = vand.u32 %v5252, 4294901760
        %5321 = vmatpush1.msra.mxu0 %v5320
        %v5322 = vand.u32 %v5250, 4294901760
        %5323 = vmatprep.subr.mxu0 %v5322
        %v5324 = vand.u32 %v5249, 4294901760
        %5325 = vmatpush1.msra.mxu0 %v5324
        %v5326 = vand.u32 %v5247, 4294901760
        %5327 = vmatprep.subr.mxu0 %v5326
        %v5328 = vand.u32 %v5246, 4294901760
        %5329 = vmatpush1.msra.mxu0 %v5328
        %5330 = vmatprep.subr.mxu0 0.0
        %5331 = vmatpush2.msra.mxu0 0.0
        %5332 = vmatprep.subr.mxu0 0.0
        %5333 = vmatpush2.msra.mxu0 0.0
        %5334 = vmatprep.subr.mxu0 0.0
        %5335 = vmatpush2.msra.mxu0 0.0
        %5336 = vmatprep.subr.mxu0 0.0
        %5337 = vmatpush2.msra.mxu0 0.0
        %5338 = vmatprep.subr.mxu0 0.0
        %5339 = vmatpush2.msra.mxu0 0.0
        %5340 = vmatprep.subr.mxu0 0.0
        %5341 = vmatpush2.msra.mxu0 0.0
        %5342 = vmatprep.subr.mxu0 0.0
        %5343 = vmatpush2.msra.mxu0 0.0
        %5344 = vmatprep.subr.mxu0 0.0
        %5345 = vmatpush2.msra.mxu0 0.0
        %5346 = vmatprep.subr.mxu0 0.0
        %5347 = vmatpush2.msra.mxu0 0.0
        %5348 = vmatprep.subr.mxu0 0.0
        %5349 = vmatpush2.msra.mxu0 0.0
        %5350 = vmatprep.subr.mxu0 0.0
        %5351 = vmatpush2.msra.mxu0 0.0
        %5352 = vmatprep.subr.mxu0 0.0
        %5353 = vmatpush2.msra.mxu0 0.0
        %5354 = vmatprep.subr.mxu0 0.0
        %5355 = vmatpush2.msra.mxu0 0.0
        %5356 = vmatprep.subr.mxu0 0.0
        %5357 = vmatpush2.msra.mxu0 0.0
        %5358 = vmatprep.subr.mxu0 0.0
        %5359 = vmatpush2.msra.mxu0 0.0
        %5360 = vmatprep.subr.mxu0 0.0
        %5361 = vmatpush2.msra.mxu0 0.0
        %5362 = vmatprep.mubr.f32.mxu0 0.0
        %v5363 = vand.u32 %v5275, 4294901760
        %v5364 = vsub.f32 %v5275, %v5363
        %v5365 = vand.u32 %v5364, 4294901760
        %v5366 = vsub.f32 %v5364, %v5365
        %v5367 = vand.u32 %v5366, 4294901760
        %5368 = vmatmul.mubr.f32.gmra.mxu0 %v5367
        %v5369 = vpop.f32.mrf.mxu0
        %v5370 = vadd.f32 0.0, %v5369
        %v5371 = vpop.f32.mrf.mxu0
        %v5372 = vadd.f32 0.0, %v5371
        %5373 = vmatprep.mubr.f32.mxu0 0.0
        %v5374 = vand.u32 %v5278, 4294901760
        %v5375 = vsub.f32 %v5278, %v5374
        %v5376 = vand.u32 %v5375, 4294901760
        %v5377 = vsub.f32 %v5375, %v5376
        %v5378 = vand.u32 %v5377, 4294901760
        %5379 = vmatmul.mubr.f32.gmra.mxu0 %v5378
        %v5380 = vpop.f32.mrf.mxu0
        %v5381 = vadd.f32 0.0, %v5380
        %v5382 = vpop.f32.mrf.mxu0
        %v5383 = vadd.f32 0.0, %v5382
        %5384 = vdwg.mxu0
        %5385 = vmatprep.subr.mxu0 0.0
        %5386 = vmatpush1.msra.mxu0 0.0
        %5387 = vmatprep.subr.mxu0 0.0
        %5388 = vmatpush1.msra.mxu0 0.0
        %5389 = vmatprep.subr.mxu0 0.0
        %5390 = vmatpush1.msra.mxu0 0.0
        %5391 = vmatprep.subr.mxu0 0.0
        %5392 = vmatpush1.msra.mxu0 0.0
        %5393 = vmatprep.subr.mxu0 0.0
        %5394 = vmatpush1.msra.mxu0 0.0
        %5395 = vmatprep.subr.mxu0 0.0
        %5396 = vmatpush1.msra.mxu0 0.0
        %5397 = vmatprep.subr.mxu0 0.0
        %5398 = vmatpush1.msra.mxu0 0.0
        %v5399 = vand.u32 %v5271, 4294901760
        %v5400 = vsub.f32 %v5271, %v5399
        %v5401 = vand.u32 %v5400, 4294901760
        %v5402 = vsub.f32 %v5400, %v5401
        %v5403 = vand.u32 %v5402, 4294901760
        %5404 = vmatprep.subr.mxu0 %v5403
        %v5405 = vand.u32 %v5270, 4294901760
        %v5406 = vsub.f32 %v5270, %v5405
        %v5407 = vand.u32 %v5406, 4294901760
        %v5408 = vsub.f32 %v5406, %v5407
        %v5409 = vand.u32 %v5408, 4294901760
        %5410 = vmatpush1.msra.mxu0 %v5409
        %v5411 = vand.u32 %v5268, 4294901760
        %v5412 = vsub.f32 %v5268, %v5411
        %v5413 = vand.u32 %v5412, 4294901760
        %v5414 = vsub.f32 %v5412, %v5413
        %v5415 = vand.u32 %v5414, 4294901760
        %5416 = vmatprep.subr.mxu0 %v5415
        %v5417 = vand.u32 %v5267, 4294901760
        %v5418 = vsub.f32 %v5267, %v5417
        %v5419 = vand.u32 %v5418, 4294901760
        %v5420 = vsub.f32 %v5418, %v5419
        %v5421 = vand.u32 %v5420, 4294901760
        %5422 = vmatpush1.msra.mxu0 %v5421
        %v5423 = vand.u32 %v5265, 4294901760
        %v5424 = vsub.f32 %v5265, %v5423
        %v5425 = vand.u32 %v5424, 4294901760
        %v5426 = vsub.f32 %v5424, %v5425
        %v5427 = vand.u32 %v5426, 4294901760
        %5428 = vmatprep.subr.mxu0 %v5427
        %v5429 = vand.u32 %v5264, 4294901760
        %v5430 = vsub.f32 %v5264, %v5429
        %v5431 = vand.u32 %v5430, 4294901760
        %v5432 = vsub.f32 %v5430, %v5431
        %v5433 = vand.u32 %v5432, 4294901760
        %5434 = vmatpush1.msra.mxu0 %v5433
        %v5435 = vand.u32 %v5262, 4294901760
        %v5436 = vsub.f32 %v5262, %v5435
        %v5437 = vand.u32 %v5436, 4294901760
        %v5438 = vsub.f32 %v5436, %v5437
        %v5439 = vand.u32 %v5438, 4294901760
        %5440 = vmatprep.subr.mxu0 %v5439
        %v5441 = vand.u32 %v5261, 4294901760
        %v5442 = vsub.f32 %v5261, %v5441
        %v5443 = vand.u32 %v5442, 4294901760
        %v5444 = vsub.f32 %v5442, %v5443
        %v5445 = vand.u32 %v5444, 4294901760
        %5446 = vmatpush1.msra.mxu0 %v5445
        %v5447 = vand.u32 %v5259, 4294901760
        %v5448 = vsub.f32 %v5259, %v5447
        %v5449 = vand.u32 %v5448, 4294901760
        %v5450 = vsub.f32 %v5448, %v5449
        %v5451 = vand.u32 %v5450, 4294901760
        %5452 = vmatprep.subr.mxu0 %v5451
        %v5453 = vand.u32 %v5258, 4294901760
        %v5454 = vsub.f32 %v5258, %v5453
        %v5455 = vand.u32 %v5454, 4294901760
        %v5456 = vsub.f32 %v5454, %v5455
        %v5457 = vand.u32 %v5456, 4294901760
        %5458 = vmatpush1.msra.mxu0 %v5457
        %v5459 = vand.u32 %v5256, 4294901760
        %v5460 = vsub.f32 %v5256, %v5459
        %v5461 = vand.u32 %v5460, 4294901760
        %v5462 = vsub.f32 %v5460, %v5461
        %v5463 = vand.u32 %v5462, 4294901760
        %5464 = vmatprep.subr.mxu0 %v5463
        %v5465 = vand.u32 %v5255, 4294901760
        %v5466 = vsub.f32 %v5255, %v5465
        %v5467 = vand.u32 %v5466, 4294901760
        %v5468 = vsub.f32 %v5466, %v5467
        %v5469 = vand.u32 %v5468, 4294901760
        %5470 = vmatpush1.msra.mxu0 %v5469
        %v5471 = vand.u32 %v5253, 4294901760
        %v5472 = vsub.f32 %v5253, %v5471
        %v5473 = vand.u32 %v5472, 4294901760
        %v5474 = vsub.f32 %v5472, %v5473
        %v5475 = vand.u32 %v5474, 4294901760
        %5476 = vmatprep.subr.mxu0 %v5475
        %v5477 = vand.u32 %v5252, 4294901760
        %v5478 = vsub.f32 %v5252, %v5477
        %v5479 = vand.u32 %v5478, 4294901760
        %v5480 = vsub.f32 %v5478, %v5479
        %v5481 = vand.u32 %v5480, 4294901760
        %5482 = vmatpush1.msra.mxu0 %v5481
        %v5483 = vand.u32 %v5250, 4294901760
        %v5484 = vsub.f32 %v5250, %v5483
        %v5485 = vand.u32 %v5484, 4294901760
        %v5486 = vsub.f32 %v5484, %v5485
        %v5487 = vand.u32 %v5486, 4294901760
        %5488 = vmatprep.subr.mxu0 %v5487
        %v5489 = vand.u32 %v5249, 4294901760
        %v5490 = vsub.f32 %v5249, %v5489
        %v5491 = vand.u32 %v5490, 4294901760
        %v5492 = vsub.f32 %v5490, %v5491
        %v5493 = vand.u32 %v5492, 4294901760
        %5494 = vmatpush1.msra.mxu0 %v5493
        %v5495 = vand.u32 %v5247, 4294901760
        %v5496 = vsub.f32 %v5247, %v5495
        %v5497 = vand.u32 %v5496, 4294901760
        %v5498 = vsub.f32 %v5496, %v5497
        %v5499 = vand.u32 %v5498, 4294901760
        %5500 = vmatprep.subr.mxu0 %v5499
        %v5501 = vand.u32 %v5246, 4294901760
        %v5502 = vsub.f32 %v5246, %v5501
        %v5503 = vand.u32 %v5502, 4294901760
        %v5504 = vsub.f32 %v5502, %v5503
        %v5505 = vand.u32 %v5504, 4294901760
        %5506 = vmatpush1.msra.mxu0 %v5505
        %5507 = vmatprep.subr.mxu0 0.0
        %5508 = vmatpush2.msra.mxu0 0.0
        %5509 = vmatprep.subr.mxu0 0.0
        %5510 = vmatpush2.msra.mxu0 0.0
        %5511 = vmatprep.subr.mxu0 0.0
        %5512 = vmatpush2.msra.mxu0 0.0
        %5513 = vmatprep.subr.mxu0 0.0
        %5514 = vmatpush2.msra.mxu0 0.0
        %5515 = vmatprep.subr.mxu0 0.0
        %5516 = vmatpush2.msra.mxu0 0.0
        %5517 = vmatprep.subr.mxu0 0.0
        %5518 = vmatpush2.msra.mxu0 0.0
        %5519 = vmatprep.subr.mxu0 0.0
        %5520 = vmatpush2.msra.mxu0 0.0
        %5521 = vmatprep.subr.mxu0 0.0
        %5522 = vmatpush2.msra.mxu0 0.0
        %5523 = vmatprep.subr.mxu0 0.0
        %5524 = vmatpush2.msra.mxu0 0.0
        %5525 = vmatprep.subr.mxu0 0.0
        %5526 = vmatpush2.msra.mxu0 0.0
        %5527 = vmatprep.subr.mxu0 0.0
        %5528 = vmatpush2.msra.mxu0 0.0
        %5529 = vmatprep.subr.mxu0 0.0
        %5530 = vmatpush2.msra.mxu0 0.0
        %5531 = vmatprep.subr.mxu0 0.0
        %5532 = vmatpush2.msra.mxu0 0.0
        %5533 = vmatprep.subr.mxu0 0.0
        %5534 = vmatpush2.msra.mxu0 0.0
        %5535 = vmatprep.subr.mxu0 0.0
        %5536 = vmatpush2.msra.mxu0 0.0
        %5537 = vmatprep.subr.mxu0 0.0
        %5538 = vmatpush2.msra.mxu0 0.0
        %5539 = vmatprep.mubr.f32.mxu0 0.0
        %v5540 = vand.u32 %v5275, 4294901760
        %5541 = vmatmul.mubr.f32.gmra.mxu0 %v5540
        %v5542 = vpop.f32.mrf.mxu0
        %v5543 = vadd.f32 %v5370, %v5542
        %v5544 = vpop.f32.mrf.mxu0
        %v5545 = vadd.f32 %v5372, %v5544
        %5546 = vmatprep.mubr.f32.mxu0 0.0
        %v5547 = vand.u32 %v5278, 4294901760
        %5548 = vmatmul.mubr.f32.gmra.mxu0 %v5547
        %v5549 = vpop.f32.mrf.mxu0
        %v5550 = vadd.f32 %v5381, %v5549
        %v5551 = vpop.f32.mrf.mxu0
        %v5552 = vadd.f32 %v5383, %v5551
        %5553 = vdwg.mxu0
        %5554 = vmatprep.subr.mxu0 0.0
        %5555 = vmatpush1.msra.mxu0 0.0
        %5556 = vmatprep.subr.mxu0 0.0
        %5557 = vmatpush1.msra.mxu0 0.0
        %5558 = vmatprep.subr.mxu0 0.0
        %5559 = vmatpush1.msra.mxu0 0.0
        %5560 = vmatprep.subr.mxu0 0.0
        %5561 = vmatpush1.msra.mxu0 0.0
        %5562 = vmatprep.subr.mxu0 0.0
        %5563 = vmatpush1.msra.mxu0 0.0
        %5564 = vmatprep.subr.mxu0 0.0
        %5565 = vmatpush1.msra.mxu0 0.0
        %5566 = vmatprep.subr.mxu0 0.0
        %5567 = vmatpush1.msra.mxu0 0.0
        %v5568 = vand.u32 %v5271, 4294901760
        %v5569 = vsub.f32 %v5271, %v5568
        %5570 = vmatprep.subr.mxu0 %v5569
        %v5571 = vand.u32 %v5270, 4294901760
        %v5572 = vsub.f32 %v5270, %v5571
        %5573 = vmatpush1.msra.mxu0 %v5572
        %v5574 = vand.u32 %v5268, 4294901760
        %v5575 = vsub.f32 %v5268, %v5574
        %5576 = vmatprep.subr.mxu0 %v5575
        %v5577 = vand.u32 %v5267, 4294901760
        %v5578 = vsub.f32 %v5267, %v5577
        %5579 = vmatpush1.msra.mxu0 %v5578
        %v5580 = vand.u32 %v5265, 4294901760
        %v5581 = vsub.f32 %v5265, %v5580
        %5582 = vmatprep.subr.mxu0 %v5581
        %v5583 = vand.u32 %v5264, 4294901760
        %v5584 = vsub.f32 %v5264, %v5583
        %5585 = vmatpush1.msra.mxu0 %v5584
        %v5586 = vand.u32 %v5262, 4294901760
        %v5587 = vsub.f32 %v5262, %v5586
        %5588 = vmatprep.subr.mxu0 %v5587
        %v5589 = vand.u32 %v5261, 4294901760
        %v5590 = vsub.f32 %v5261, %v5589
        %5591 = vmatpush1.msra.mxu0 %v5590
        %v5592 = vand.u32 %v5259, 4294901760
        %v5593 = vsub.f32 %v5259, %v5592
        %5594 = vmatprep.subr.mxu0 %v5593
        %v5595 = vand.u32 %v5258, 4294901760
        %v5596 = vsub.f32 %v5258, %v5595
        %5597 = vmatpush1.msra.mxu0 %v5596
        %v5598 = vand.u32 %v5256, 4294901760
        %v5599 = vsub.f32 %v5256, %v5598
        %5600 = vmatprep.subr.mxu0 %v5599
        %v5601 = vand.u32 %v5255, 4294901760
        %v5602 = vsub.f32 %v5255, %v5601
        %5603 = vmatpush1.msra.mxu0 %v5602
        %v5604 = vand.u32 %v5253, 4294901760
        %v5605 = vsub.f32 %v5253, %v5604
        %5606 = vmatprep.subr.mxu0 %v5605
        %v5607 = vand.u32 %v5252, 4294901760
        %v5608 = vsub.f32 %v5252, %v5607
        %5609 = vmatpush1.msra.mxu0 %v5608
        %v5610 = vand.u32 %v5250, 4294901760
        %v5611 = vsub.f32 %v5250, %v5610
        %5612 = vmatprep.subr.mxu0 %v5611
        %v5613 = vand.u32 %v5249, 4294901760
        %v5614 = vsub.f32 %v5249, %v5613
        %5615 = vmatpush1.msra.mxu0 %v5614
        %v5616 = vand.u32 %v5247, 4294901760
        %v5617 = vsub.f32 %v5247, %v5616
        %5618 = vmatprep.subr.mxu0 %v5617
        %v5619 = vand.u32 %v5246, 4294901760
        %v5620 = vsub.f32 %v5246, %v5619
        %5621 = vmatpush1.msra.mxu0 %v5620
        %5622 = vmatprep.subr.mxu0 0.0
        %5623 = vmatpush2.msra.mxu0 0.0
        %5624 = vmatprep.subr.mxu0 0.0
        %5625 = vmatpush2.msra.mxu0 0.0
        %5626 = vmatprep.subr.mxu0 0.0
        %5627 = vmatpush2.msra.mxu0 0.0
        %5628 = vmatprep.subr.mxu0 0.0
        %5629 = vmatpush2.msra.mxu0 0.0
        %5630 = vmatprep.subr.mxu0 0.0
        %5631 = vmatpush2.msra.mxu0 0.0
        %5632 = vmatprep.subr.mxu0 0.0
        %5633 = vmatpush2.msra.mxu0 0.0
        %5634 = vmatprep.subr.mxu0 0.0
        %5635 = vmatpush2.msra.mxu0 0.0
        %5636 = vmatprep.subr.mxu0 0.0
        %5637 = vmatpush2.msra.mxu0 0.0
        %5638 = vmatprep.subr.mxu0 0.0
        %5639 = vmatpush2.msra.mxu0 0.0
        %5640 = vmatprep.subr.mxu0 0.0
        %5641 = vmatpush2.msra.mxu0 0.0
        %5642 = vmatprep.subr.mxu0 0.0
        %5643 = vmatpush2.msra.mxu0 0.0
        %5644 = vmatprep.subr.mxu0 0.0
        %5645 = vmatpush2.msra.mxu0 0.0
        %5646 = vmatprep.subr.mxu0 0.0
        %5647 = vmatpush2.msra.mxu0 0.0
        %5648 = vmatprep.subr.mxu0 0.0
        %5649 = vmatpush2.msra.mxu0 0.0
        %5650 = vmatprep.subr.mxu0 0.0
        %5651 = vmatpush2.msra.mxu0 0.0
        %5652 = vmatprep.subr.mxu0 0.0
        %5653 = vmatpush2.msra.mxu0 0.0
        %5654 = vmatprep.mubr.f32.mxu0 0.0
        %v5655 = vand.u32 %v5275, 4294901760
        %v5656 = vsub.f32 %v5275, %v5655
        %5657 = vmatmul.mubr.f32.gmra.mxu0 %v5656
        %v5658 = vpop.f32.mrf.mxu0
        %v5659 = vadd.f32 %v5543, %v5658
        %v5660 = vpop.f32.mrf.mxu0
        %v5661 = vadd.f32 %v5545, %v5660
        %5662 = vmatprep.mubr.f32.mxu0 0.0
        %v5663 = vand.u32 %v5278, 4294901760
        %v5664 = vsub.f32 %v5278, %v5663
        %5665 = vmatmul.mubr.f32.gmra.mxu0 %v5664
        %v5666 = vpop.f32.mrf.mxu0
        %v5667 = vadd.f32 %v5550, %v5666
        %v5668 = vpop.f32.mrf.mxu0
        %v5669 = vadd.f32 %v5552, %v5668
        %5670 = vdwg.mxu0
        %5671 = vmatprep.subr.mxu0 0.0
        %5672 = vmatpush1.msra.mxu0 0.0
        %5673 = vmatprep.subr.mxu0 0.0
        %5674 = vmatpush1.msra.mxu0 0.0
        %5675 = vmatprep.subr.mxu0 0.0
        %5676 = vmatpush1.msra.mxu0 0.0
        %5677 = vmatprep.subr.mxu0 0.0
        %5678 = vmatpush1.msra.mxu0 0.0
        %5679 = vmatprep.subr.mxu0 0.0
        %5680 = vmatpush1.msra.mxu0 0.0
        %5681 = vmatprep.subr.mxu0 0.0
        %5682 = vmatpush1.msra.mxu0 0.0
        %5683 = vmatprep.subr.mxu0 0.0
        %5684 = vmatpush1.msra.mxu0 0.0
        %v5685 = vand.u32 %v5271, 4294901760
        %5686 = vmatprep.subr.mxu0 %v5685
        %v5687 = vand.u32 %v5270, 4294901760
        %5688 = vmatpush1.msra.mxu0 %v5687
        %v5689 = vand.u32 %v5268, 4294901760
        %5690 = vmatprep.subr.mxu0 %v5689
        %v5691 = vand.u32 %v5267, 4294901760
        %5692 = vmatpush1.msra.mxu0 %v5691
        %v5693 = vand.u32 %v5265, 4294901760
        %5694 = vmatprep.subr.mxu0 %v5693
        %v5695 = vand.u32 %v5264, 4294901760
        %5696 = vmatpush1.msra.mxu0 %v5695
        %v5697 = vand.u32 %v5262, 4294901760
        %5698 = vmatprep.subr.mxu0 %v5697
        %v5699 = vand.u32 %v5261, 4294901760
        %5700 = vmatpush1.msra.mxu0 %v5699
        %v5701 = vand.u32 %v5259, 4294901760
        %5702 = vmatprep.subr.mxu0 %v5701
        %v5703 = vand.u32 %v5258, 4294901760
        %5704 = vmatpush1.msra.mxu0 %v5703
        %v5705 = vand.u32 %v5256, 4294901760
        %5706 = vmatprep.subr.mxu0 %v5705
        %v5707 = vand.u32 %v5255, 4294901760
        %5708 = vmatpush1.msra.mxu0 %v5707
        %v5709 = vand.u32 %v5253, 4294901760
        %5710 = vmatprep.subr.mxu0 %v5709
        %v5711 = vand.u32 %v5252, 4294901760
        %5712 = vmatpush1.msra.mxu0 %v5711
        %v5713 = vand.u32 %v5250, 4294901760
        %5714 = vmatprep.subr.mxu0 %v5713
        %v5715 = vand.u32 %v5249, 4294901760
        %5716 = vmatpush1.msra.mxu0 %v5715
        %v5717 = vand.u32 %v5247, 4294901760
        %5718 = vmatprep.subr.mxu0 %v5717
        %v5719 = vand.u32 %v5246, 4294901760
        %5720 = vmatpush1.msra.mxu0 %v5719
        %5721 = vmatprep.subr.mxu0 0.0
        %5722 = vmatpush2.msra.mxu0 0.0
        %5723 = vmatprep.subr.mxu0 0.0
        %5724 = vmatpush2.msra.mxu0 0.0
        %5725 = vmatprep.subr.mxu0 0.0
        %5726 = vmatpush2.msra.mxu0 0.0
        %5727 = vmatprep.subr.mxu0 0.0
        %5728 = vmatpush2.msra.mxu0 0.0
        %5729 = vmatprep.subr.mxu0 0.0
        %5730 = vmatpush2.msra.mxu0 0.0
        %5731 = vmatprep.subr.mxu0 0.0
        %5732 = vmatpush2.msra.mxu0 0.0
        %5733 = vmatprep.subr.mxu0 0.0
        %5734 = vmatpush2.msra.mxu0 0.0
        %5735 = vmatprep.subr.mxu0 0.0
        %5736 = vmatpush2.msra.mxu0 0.0
        %5737 = vmatprep.subr.mxu0 0.0
        %5738 = vmatpush2.msra.mxu0 0.0
        %5739 = vmatprep.subr.mxu0 0.0
        %5740 = vmatpush2.msra.mxu0 0.0
        %5741 = vmatprep.subr.mxu0 0.0
        %5742 = vmatpush2.msra.mxu0 0.0
        %5743 = vmatprep.subr.mxu0 0.0
        %5744 = vmatpush2.msra.mxu0 0.0
        %5745 = vmatprep.subr.mxu0 0.0
        %5746 = vmatpush2.msra.mxu0 0.0
        %5747 = vmatprep.subr.mxu0 0.0
        %5748 = vmatpush2.msra.mxu0 0.0
        %5749 = vmatprep.subr.mxu0 0.0
        %5750 = vmatpush2.msra.mxu0 0.0
        %5751 = vmatprep.subr.mxu0 0.0
        %5752 = vmatpush2.msra.mxu0 0.0
        %5753 = vmatprep.mubr.f32.mxu0 0.0
        %v5754 = vand.u32 %v5275, 4294901760
        %v5755 = vsub.f32 %v5275, %v5754
        %v5756 = vand.u32 %v5755, 4294901760
        %5757 = vmatmul.mubr.f32.gmra.mxu0 %v5756
        %v5758 = vpop.f32.mrf.mxu0
        %v5759 = vadd.f32 %v5659, %v5758
        %v5760 = vpop.f32.mrf.mxu0
        %v5761 = vadd.f32 %v5661, %v5760
        %5762 = vmatprep.mubr.f32.mxu0 0.0
        %v5763 = vand.u32 %v5278, 4294901760
        %v5764 = vsub.f32 %v5278, %v5763
        %v5765 = vand.u32 %v5764, 4294901760
        %5766 = vmatmul.mubr.f32.gmra.mxu0 %v5765
        %v5767 = vpop.f32.mrf.mxu0
        %v5768 = vadd.f32 %v5667, %v5767
        %v5769 = vpop.f32.mrf.mxu0
        %v5770 = vadd.f32 %v5669, %v5769
        %5771 = vdwg.mxu0
        %5772 = vmatprep.subr.mxu0 0.0
        %5773 = vmatpush1.msra.mxu0 0.0
        %5774 = vmatprep.subr.mxu0 0.0
        %5775 = vmatpush1.msra.mxu0 0.0
        %5776 = vmatprep.subr.mxu0 0.0
        %5777 = vmatpush1.msra.mxu0 0.0
        %5778 = vmatprep.subr.mxu0 0.0
        %5779 = vmatpush1.msra.mxu0 0.0
        %5780 = vmatprep.subr.mxu0 0.0
        %5781 = vmatpush1.msra.mxu0 0.0
        %5782 = vmatprep.subr.mxu0 0.0
        %5783 = vmatpush1.msra.mxu0 0.0
        %5784 = vmatprep.subr.mxu0 0.0
        %5785 = vmatpush1.msra.mxu0 0.0
        %v5786 = vand.u32 %v5271, 4294901760
        %v5787 = vsub.f32 %v5271, %v5786
        %v5788 = vand.u32 %v5787, 4294901760
        %5789 = vmatprep.subr.mxu0 %v5788
        %v5790 = vand.u32 %v5270, 4294901760
        %v5791 = vsub.f32 %v5270, %v5790
        %v5792 = vand.u32 %v5791, 4294901760
        %5793 = vmatpush1.msra.mxu0 %v5792
        %v5794 = vand.u32 %v5268, 4294901760
        %v5795 = vsub.f32 %v5268, %v5794
        %v5796 = vand.u32 %v5795, 4294901760
        %5797 = vmatprep.subr.mxu0 %v5796
        %v5798 = vand.u32 %v5267, 4294901760
        %v5799 = vsub.f32 %v5267, %v5798
        %v5800 = vand.u32 %v5799, 4294901760
        %5801 = vmatpush1.msra.mxu0 %v5800
        %v5802 = vand.u32 %v5265, 4294901760
        %v5803 = vsub.f32 %v5265, %v5802
        %v5804 = vand.u32 %v5803, 4294901760
        %5805 = vmatprep.subr.mxu0 %v5804
        %v5806 = vand.u32 %v5264, 4294901760
        %v5807 = vsub.f32 %v5264, %v5806
        %v5808 = vand.u32 %v5807, 4294901760
        %5809 = vmatpush1.msra.mxu0 %v5808
        %v5810 = vand.u32 %v5262, 4294901760
        %v5811 = vsub.f32 %v5262, %v5810
        %v5812 = vand.u32 %v5811, 4294901760
        %5813 = vmatprep.subr.mxu0 %v5812
        %v5814 = vand.u32 %v5261, 4294901760
        %v5815 = vsub.f32 %v5261, %v5814
        %v5816 = vand.u32 %v5815, 4294901760
        %5817 = vmatpush1.msra.mxu0 %v5816
        %v5818 = vand.u32 %v5259, 4294901760
        %v5819 = vsub.f32 %v5259, %v5818
        %v5820 = vand.u32 %v5819, 4294901760
        %5821 = vmatprep.subr.mxu0 %v5820
        %v5822 = vand.u32 %v5258, 4294901760
        %v5823 = vsub.f32 %v5258, %v5822
        %v5824 = vand.u32 %v5823, 4294901760
        %5825 = vmatpush1.msra.mxu0 %v5824
        %v5826 = vand.u32 %v5256, 4294901760
        %v5827 = vsub.f32 %v5256, %v5826
        %v5828 = vand.u32 %v5827, 4294901760
        %5829 = vmatprep.subr.mxu0 %v5828
        %v5830 = vand.u32 %v5255, 4294901760
        %v5831 = vsub.f32 %v5255, %v5830
        %v5832 = vand.u32 %v5831, 4294901760
        %5833 = vmatpush1.msra.mxu0 %v5832
        %v5834 = vand.u32 %v5253, 4294901760
        %v5835 = vsub.f32 %v5253, %v5834
        %v5836 = vand.u32 %v5835, 4294901760
        %5837 = vmatprep.subr.mxu0 %v5836
        %v5838 = vand.u32 %v5252, 4294901760
        %v5839 = vsub.f32 %v5252, %v5838
        %v5840 = vand.u32 %v5839, 4294901760
        %5841 = vmatpush1.msra.mxu0 %v5840
        %v5842 = vand.u32 %v5250, 4294901760
        %v5843 = vsub.f32 %v5250, %v5842
        %v5844 = vand.u32 %v5843, 4294901760
        %5845 = vmatprep.subr.mxu0 %v5844
        %v5846 = vand.u32 %v5249, 4294901760
        %v5847 = vsub.f32 %v5249, %v5846
        %v5848 = vand.u32 %v5847, 4294901760
        %5849 = vmatpush1.msra.mxu0 %v5848
        %v5850 = vand.u32 %v5247, 4294901760
        %v5851 = vsub.f32 %v5247, %v5850
        %v5852 = vand.u32 %v5851, 4294901760
        %5853 = vmatprep.subr.mxu0 %v5852
        %v5854 = vand.u32 %v5246, 4294901760
        %v5855 = vsub.f32 %v5246, %v5854
        %v5856 = vand.u32 %v5855, 4294901760
        %5857 = vmatpush1.msra.mxu0 %v5856
        %5858 = vmatprep.subr.mxu0 0.0
        %5859 = vmatpush2.msra.mxu0 0.0
        %5860 = vmatprep.subr.mxu0 0.0
        %5861 = vmatpush2.msra.mxu0 0.0
        %5862 = vmatprep.subr.mxu0 0.0
        %5863 = vmatpush2.msra.mxu0 0.0
        %5864 = vmatprep.subr.mxu0 0.0
        %5865 = vmatpush2.msra.mxu0 0.0
        %5866 = vmatprep.subr.mxu0 0.0
        %5867 = vmatpush2.msra.mxu0 0.0
        %5868 = vmatprep.subr.mxu0 0.0
        %5869 = vmatpush2.msra.mxu0 0.0
        %5870 = vmatprep.subr.mxu0 0.0
        %5871 = vmatpush2.msra.mxu0 0.0
        %5872 = vmatprep.subr.mxu0 0.0
        %5873 = vmatpush2.msra.mxu0 0.0
        %5874 = vmatprep.subr.mxu0 0.0
        %5875 = vmatpush2.msra.mxu0 0.0
        %5876 = vmatprep.subr.mxu0 0.0
        %5877 = vmatpush2.msra.mxu0 0.0
        %5878 = vmatprep.subr.mxu0 0.0
        %5879 = vmatpush2.msra.mxu0 0.0
        %5880 = vmatprep.subr.mxu0 0.0
        %5881 = vmatpush2.msra.mxu0 0.0
        %5882 = vmatprep.subr.mxu0 0.0
        %5883 = vmatpush2.msra.mxu0 0.0
        %5884 = vmatprep.subr.mxu0 0.0
        %5885 = vmatpush2.msra.mxu0 0.0
        %5886 = vmatprep.subr.mxu0 0.0
        %5887 = vmatpush2.msra.mxu0 0.0
        %5888 = vmatprep.subr.mxu0 0.0
        %5889 = vmatpush2.msra.mxu0 0.0
        %5890 = vmatprep.mubr.f32.mxu0 0.0
        %v5891 = vand.u32 %v5275, 4294901760
        %5892 = vmatmul.mubr.f32.gmra.mxu0 %v5891
        %v5893 = vpop.f32.mrf.mxu0
        %v5894 = vadd.f32 %v5759, %v5893
        %v5895 = vpop.f32.mrf.mxu0
        %v5896 = vadd.f32 %v5761, %v5895
        %5897 = vmatprep.mubr.f32.mxu0 0.0
        %v5898 = vand.u32 %v5278, 4294901760
        %5899 = vmatmul.mubr.f32.gmra.mxu0 %v5898
        %v5900 = vpop.f32.mrf.mxu0
        %v5901 = vadd.f32 %v5768, %v5900
        %v5902 = vpop.f32.mrf.mxu0
        %v5903 = vadd.f32 %v5770, %v5902
        %5904 = vdwg.mxu0
        %5905 = vmatprep.subr.mxu0 0.0
        %5906 = vmatpush1.msra.mxu0 0.0
        %5907 = vmatprep.subr.mxu0 0.0
        %5908 = vmatpush1.msra.mxu0 0.0
        %5909 = vmatprep.subr.mxu0 0.0
        %5910 = vmatpush1.msra.mxu0 0.0
        %5911 = vmatprep.subr.mxu0 0.0
        %5912 = vmatpush1.msra.mxu0 0.0
        %5913 = vmatprep.subr.mxu0 0.0
        %5914 = vmatpush1.msra.mxu0 0.0
        %5915 = vmatprep.subr.mxu0 0.0
        %5916 = vmatpush1.msra.mxu0 0.0
        %5917 = vmatprep.subr.mxu0 0.0
        %5918 = vmatpush1.msra.mxu0 0.0
        %v5919 = vand.u32 %v5271, 4294901760
        %5920 = vmatprep.subr.mxu0 %v5919
        %v5921 = vand.u32 %v5270, 4294901760
        %5922 = vmatpush1.msra.mxu0 %v5921
        %v5923 = vand.u32 %v5268, 4294901760
        %5924 = vmatprep.subr.mxu0 %v5923
        %v5925 = vand.u32 %v5267, 4294901760
        %5926 = vmatpush1.msra.mxu0 %v5925
        %v5927 = vand.u32 %v5265, 4294901760
        %5928 = vmatprep.subr.mxu0 %v5927
        %v5929 = vand.u32 %v5264, 4294901760
        %5930 = vmatpush1.msra.mxu0 %v5929
        %v5931 = vand.u32 %v5262, 4294901760
        %5932 = vmatprep.subr.mxu0 %v5931
        %v5933 = vand.u32 %v5261, 4294901760
        %5934 = vmatpush1.msra.mxu0 %v5933
        %v5935 = vand.u32 %v5259, 4294901760
        %5936 = vmatprep.subr.mxu0 %v5935
        %v5937 = vand.u32 %v5258, 4294901760
        %5938 = vmatpush1.msra.mxu0 %v5937
        %v5939 = vand.u32 %v5256, 4294901760
        %5940 = vmatprep.subr.mxu0 %v5939
        %v5941 = vand.u32 %v5255, 4294901760
        %5942 = vmatpush1.msra.mxu0 %v5941
        %v5943 = vand.u32 %v5253, 4294901760
        %5944 = vmatprep.subr.mxu0 %v5943
        %v5945 = vand.u32 %v5252, 4294901760
        %5946 = vmatpush1.msra.mxu0 %v5945
        %v5947 = vand.u32 %v5250, 4294901760
        %5948 = vmatprep.subr.mxu0 %v5947
        %v5949 = vand.u32 %v5249, 4294901760
        %5950 = vmatpush1.msra.mxu0 %v5949
        %v5951 = vand.u32 %v5247, 4294901760
        %5952 = vmatprep.subr.mxu0 %v5951
        %v5953 = vand.u32 %v5246, 4294901760
        %5954 = vmatpush1.msra.mxu0 %v5953
        %5955 = vmatprep.subr.mxu0 0.0
        %5956 = vmatpush2.msra.mxu0 0.0
        %5957 = vmatprep.subr.mxu0 0.0
        %5958 = vmatpush2.msra.mxu0 0.0
        %5959 = vmatprep.subr.mxu0 0.0
        %5960 = vmatpush2.msra.mxu0 0.0
        %5961 = vmatprep.subr.mxu0 0.0
        %5962 = vmatpush2.msra.mxu0 0.0
        %5963 = vmatprep.subr.mxu0 0.0
        %5964 = vmatpush2.msra.mxu0 0.0
        %5965 = vmatprep.subr.mxu0 0.0
        %5966 = vmatpush2.msra.mxu0 0.0
        %5967 = vmatprep.subr.mxu0 0.0
        %5968 = vmatpush2.msra.mxu0 0.0
        %5969 = vmatprep.subr.mxu0 0.0
        %5970 = vmatpush2.msra.mxu0 0.0
        %5971 = vmatprep.subr.mxu0 0.0
        %5972 = vmatpush2.msra.mxu0 0.0
        %5973 = vmatprep.subr.mxu0 0.0
        %5974 = vmatpush2.msra.mxu0 0.0
        %5975 = vmatprep.subr.mxu0 0.0
        %5976 = vmatpush2.msra.mxu0 0.0
        %5977 = vmatprep.subr.mxu0 0.0
        %5978 = vmatpush2.msra.mxu0 0.0
        %5979 = vmatprep.subr.mxu0 0.0
        %5980 = vmatpush2.msra.mxu0 0.0
        %5981 = vmatprep.subr.mxu0 0.0
        %5982 = vmatpush2.msra.mxu0 0.0
        %5983 = vmatprep.subr.mxu0 0.0
        %5984 = vmatpush2.msra.mxu0 0.0
        %5985 = vmatprep.subr.mxu0 0.0
        %5986 = vmatpush2.msra.mxu0 0.0
        %5987 = vmatprep.mubr.f32.mxu0 0.0
        %v5988 = vand.u32 %v5275, 4294901760
        %5989 = vmatmul.mubr.f32.gmra.mxu0 %v5988
        %v5990 = vpop.f32.mrf.mxu0
        %v5991 = vadd.f32 %v5894, %v5990
        %v5992 = vpop.f32.mrf.mxu0
        %v5993 = vadd.f32 %v5896, %v5992
        %5994 = vmatprep.mubr.f32.mxu0 0.0
        %v5995 = vand.u32 %v5278, 4294901760
        %5996 = vmatmul.mubr.f32.gmra.mxu0 %v5995
        %v5997 = vpop.f32.mrf.mxu0
        %v5998 = vadd.f32 %v5901, %v5997
        %v5999 = vpop.f32.mrf.mxu0
        %v6000 = vadd.f32 %v5903, %v5999
        %6001 = vdwg.mxu0
        %6002 = vmatprep.subr.mxu0 0.0
        %6003 = vmatpush1.msra.mxu0 0.0
        %6004 = vmatprep.subr.mxu0 0.0
        %6005 = vmatpush1.msra.mxu0 0.0
        %6006 = vmatprep.subr.mxu0 0.0
        %6007 = vmatpush1.msra.mxu0 0.0
        %6008 = vmatprep.subr.mxu0 0.0
        %6009 = vmatpush1.msra.mxu0 0.0
        %6010 = vmatprep.subr.mxu0 0.0
        %6011 = vmatpush1.msra.mxu0 0.0
        %6012 = vmatprep.subr.mxu0 0.0
        %6013 = vmatpush1.msra.mxu0 0.0
        %6014 = vmatprep.subr.mxu0 0.0
        %6015 = vmatpush1.msra.mxu0 0.0
        %6016 = vmatprep.subr.mxu0 0.0
        %v6017 = vand.u32 %v5272, 4294901760
        %6018 = vmatpush1.msra.mxu0 %v6017
        %6019 = vmatprep.subr.mxu0 0.0
        %v6020 = vand.u32 %v5269, 4294901760
        %6021 = vmatpush1.msra.mxu0 %v6020
        %6022 = vmatprep.subr.mxu0 0.0
        %v6023 = vand.u32 %v5266, 4294901760
        %6024 = vmatpush1.msra.mxu0 %v6023
        %6025 = vmatprep.subr.mxu0 0.0
        %v6026 = vand.u32 %v5263, 4294901760
        %6027 = vmatpush1.msra.mxu0 %v6026
        %6028 = vmatprep.subr.mxu0 0.0
        %v6029 = vand.u32 %v5260, 4294901760
        %6030 = vmatpush1.msra.mxu0 %v6029
        %6031 = vmatprep.subr.mxu0 0.0
        %v6032 = vand.u32 %v5257, 4294901760
        %6033 = vmatpush1.msra.mxu0 %v6032
        %6034 = vmatprep.subr.mxu0 0.0
        %v6035 = vand.u32 %v5254, 4294901760
        %6036 = vmatpush1.msra.mxu0 %v6035
        %6037 = vmatprep.subr.mxu0 0.0
        %v6038 = vand.u32 %v5251, 4294901760
        %6039 = vmatpush1.msra.mxu0 %v6038
        %6040 = vmatprep.subr.mxu0 0.0
        %v6041 = vand.u32 %v5248, 4294901760
        %6042 = vmatpush1.msra.mxu0 %v6041
        %6043 = vmatprep.subr.mxu0 0.0
        %6044 = vmatpush2.msra.mxu0 0.0
        %6045 = vmatprep.subr.mxu0 0.0
        %6046 = vmatpush2.msra.mxu0 0.0
        %6047 = vmatprep.subr.mxu0 0.0
        %6048 = vmatpush2.msra.mxu0 0.0
        %6049 = vmatprep.subr.mxu0 0.0
        %6050 = vmatpush2.msra.mxu0 0.0
        %6051 = vmatprep.subr.mxu0 0.0
        %6052 = vmatpush2.msra.mxu0 0.0
        %6053 = vmatprep.subr.mxu0 0.0
        %6054 = vmatpush2.msra.mxu0 0.0
        %6055 = vmatprep.subr.mxu0 0.0
        %6056 = vmatpush2.msra.mxu0 0.0
        %6057 = vmatprep.subr.mxu0 0.0
        %6058 = vmatpush2.msra.mxu0 0.0
        %6059 = vmatprep.subr.mxu0 0.0
        %6060 = vmatpush2.msra.mxu0 0.0
        %6061 = vmatprep.subr.mxu0 0.0
        %6062 = vmatpush2.msra.mxu0 0.0
        %6063 = vmatprep.subr.mxu0 0.0
        %6064 = vmatpush2.msra.mxu0 0.0
        %6065 = vmatprep.subr.mxu0 0.0
        %6066 = vmatpush2.msra.mxu0 0.0
        %6067 = vmatprep.subr.mxu0 0.0
        %6068 = vmatpush2.msra.mxu0 0.0
        %6069 = vmatprep.subr.mxu0 0.0
        %6070 = vmatpush2.msra.mxu0 0.0
        %6071 = vmatprep.subr.mxu0 0.0
        %6072 = vmatpush2.msra.mxu0 0.0
        %6073 = vmatprep.subr.mxu0 0.0
        %6074 = vmatpush2.msra.mxu0 0.0
        %6075 = vmatprep.mubr.f32.mxu0 0.0
        %v6076 = vand.u32 %v5275, 4294901760
        %v6077 = vsub.f32 %v5275, %v6076
        %v6078 = vand.u32 %v6077, 4294901760
        %v6079 = vsub.f32 %v6077, %v6078
        %v6080 = vand.u32 %v6079, 4294901760
        %6081 = vmatmul.mubr.f32.gmra.mxu0 %v6080
        %v6082 = vpop.f32.mrf.mxu0
        %v6083 = vadd.f32 0.0, %v6082
        %v6084 = vpop.f32.mrf.mxu0
        %6085 = vmatprep.mubr.f32.mxu0 0.0
        %v6086 = vand.u32 %v5278, 4294901760
        %v6087 = vsub.f32 %v5278, %v6086
        %v6088 = vand.u32 %v6087, 4294901760
        %v6089 = vsub.f32 %v6087, %v6088
        %v6090 = vand.u32 %v6089, 4294901760
        %6091 = vmatmul.mubr.f32.gmra.mxu0 %v6090
        %v6092 = vpop.f32.mrf.mxu0
        %v6093 = vadd.f32 0.0, %v6092
        %v6094 = vpop.f32.mrf.mxu0
        %6095 = vdwg.mxu0
        %6096 = vmatprep.subr.mxu0 0.0
        %6097 = vmatpush1.msra.mxu0 0.0
        %6098 = vmatprep.subr.mxu0 0.0
        %6099 = vmatpush1.msra.mxu0 0.0
        %6100 = vmatprep.subr.mxu0 0.0
        %6101 = vmatpush1.msra.mxu0 0.0
        %6102 = vmatprep.subr.mxu0 0.0
        %6103 = vmatpush1.msra.mxu0 0.0
        %6104 = vmatprep.subr.mxu0 0.0
        %6105 = vmatpush1.msra.mxu0 0.0
        %6106 = vmatprep.subr.mxu0 0.0
        %6107 = vmatpush1.msra.mxu0 0.0
        %6108 = vmatprep.subr.mxu0 0.0
        %6109 = vmatpush1.msra.mxu0 0.0
        %6110 = vmatprep.subr.mxu0 0.0
        %v6111 = vand.u32 %v5272, 4294901760
        %v6112 = vsub.f32 %v5272, %v6111
        %v6113 = vand.u32 %v6112, 4294901760
        %v6114 = vsub.f32 %v6112, %v6113
        %v6115 = vand.u32 %v6114, 4294901760
        %6116 = vmatpush1.msra.mxu0 %v6115
        %6117 = vmatprep.subr.mxu0 0.0
        %v6118 = vand.u32 %v5269, 4294901760
        %v6119 = vsub.f32 %v5269, %v6118
        %v6120 = vand.u32 %v6119, 4294901760
        %v6121 = vsub.f32 %v6119, %v6120
        %v6122 = vand.u32 %v6121, 4294901760
        %6123 = vmatpush1.msra.mxu0 %v6122
        %6124 = vmatprep.subr.mxu0 0.0
        %v6125 = vand.u32 %v5266, 4294901760
        %v6126 = vsub.f32 %v5266, %v6125
        %v6127 = vand.u32 %v6126, 4294901760
        %v6128 = vsub.f32 %v6126, %v6127
        %v6129 = vand.u32 %v6128, 4294901760
        %6130 = vmatpush1.msra.mxu0 %v6129
        %6131 = vmatprep.subr.mxu0 0.0
        %v6132 = vand.u32 %v5263, 4294901760
        %v6133 = vsub.f32 %v5263, %v6132
        %v6134 = vand.u32 %v6133, 4294901760
        %v6135 = vsub.f32 %v6133, %v6134
        %v6136 = vand.u32 %v6135, 4294901760
        %6137 = vmatpush1.msra.mxu0 %v6136
        %6138 = vmatprep.subr.mxu0 0.0
        %v6139 = vand.u32 %v5260, 4294901760
        %v6140 = vsub.f32 %v5260, %v6139
        %v6141 = vand.u32 %v6140, 4294901760
        %v6142 = vsub.f32 %v6140, %v6141
        %v6143 = vand.u32 %v6142, 4294901760
        %6144 = vmatpush1.msra.mxu0 %v6143
        %6145 = vmatprep.subr.mxu0 0.0
        %v6146 = vand.u32 %v5257, 4294901760
        %v6147 = vsub.f32 %v5257, %v6146
        %v6148 = vand.u32 %v6147, 4294901760
        %v6149 = vsub.f32 %v6147, %v6148
        %v6150 = vand.u32 %v6149, 4294901760
        %6151 = vmatpush1.msra.mxu0 %v6150
        %6152 = vmatprep.subr.mxu0 0.0
        %v6153 = vand.u32 %v5254, 4294901760
        %v6154 = vsub.f32 %v5254, %v6153
        %v6155 = vand.u32 %v6154, 4294901760
        %v6156 = vsub.f32 %v6154, %v6155
        %v6157 = vand.u32 %v6156, 4294901760
        %6158 = vmatpush1.msra.mxu0 %v6157
        %6159 = vmatprep.subr.mxu0 0.0
        %v6160 = vand.u32 %v5251, 4294901760
        %v6161 = vsub.f32 %v5251, %v6160
        %v6162 = vand.u32 %v6161, 4294901760
        %v6163 = vsub.f32 %v6161, %v6162
        %v6164 = vand.u32 %v6163, 4294901760
        %6165 = vmatpush1.msra.mxu0 %v6164
        %6166 = vmatprep.subr.mxu0 0.0
        %v6167 = vand.u32 %v5248, 4294901760
        %v6168 = vsub.f32 %v5248, %v6167
        %v6169 = vand.u32 %v6168, 4294901760
        %v6170 = vsub.f32 %v6168, %v6169
        %v6171 = vand.u32 %v6170, 4294901760
        %6172 = vmatpush1.msra.mxu0 %v6171
        %6173 = vmatprep.subr.mxu0 0.0
        %6174 = vmatpush2.msra.mxu0 0.0
        %6175 = vmatprep.subr.mxu0 0.0
        %6176 = vmatpush2.msra.mxu0 0.0
        %6177 = vmatprep.subr.mxu0 0.0
        %6178 = vmatpush2.msra.mxu0 0.0
        %6179 = vmatprep.subr.mxu0 0.0
        %6180 = vmatpush2.msra.mxu0 0.0
        %6181 = vmatprep.subr.mxu0 0.0
        %6182 = vmatpush2.msra.mxu0 0.0
        %6183 = vmatprep.subr.mxu0 0.0
        %6184 = vmatpush2.msra.mxu0 0.0
        %6185 = vmatprep.subr.mxu0 0.0
        %6186 = vmatpush2.msra.mxu0 0.0
        %6187 = vmatprep.subr.mxu0 0.0
        %6188 = vmatpush2.msra.mxu0 0.0
        %6189 = vmatprep.subr.mxu0 0.0
        %6190 = vmatpush2.msra.mxu0 0.0
        %6191 = vmatprep.subr.mxu0 0.0
        %6192 = vmatpush2.msra.mxu0 0.0
        %6193 = vmatprep.subr.mxu0 0.0
        %6194 = vmatpush2.msra.mxu0 0.0
        %6195 = vmatprep.subr.mxu0 0.0
        %6196 = vmatpush2.msra.mxu0 0.0
        %6197 = vmatprep.subr.mxu0 0.0
        %6198 = vmatpush2.msra.mxu0 0.0
        %6199 = vmatprep.subr.mxu0 0.0
        %6200 = vmatpush2.msra.mxu0 0.0
        %6201 = vmatprep.subr.mxu0 0.0
        %6202 = vmatpush2.msra.mxu0 0.0
        %6203 = vmatprep.subr.mxu0 0.0
        %6204 = vmatpush2.msra.mxu0 0.0
        %6205 = vmatprep.mubr.f32.mxu0 0.0
        %v6206 = vand.u32 %v5275, 4294901760
        %6207 = vmatmul.mubr.f32.gmra.mxu0 %v6206
        %v6208 = vpop.f32.mrf.mxu0
        %v6209 = vadd.f32 %v6083, %v6208
        %v6210 = vpop.f32.mrf.mxu0
        %6211 = vmatprep.mubr.f32.mxu0 0.0
        %v6212 = vand.u32 %v5278, 4294901760
        %6213 = vmatmul.mubr.f32.gmra.mxu0 %v6212
        %v6214 = vpop.f32.mrf.mxu0
        %v6215 = vadd.f32 %v6093, %v6214
        %v6216 = vpop.f32.mrf.mxu0
        %6217 = vdwg.mxu0
        %6218 = vmatprep.subr.mxu0 0.0
        %6219 = vmatpush1.msra.mxu0 0.0
        %6220 = vmatprep.subr.mxu0 0.0
        %6221 = vmatpush1.msra.mxu0 0.0
        %6222 = vmatprep.subr.mxu0 0.0
        %6223 = vmatpush1.msra.mxu0 0.0
        %6224 = vmatprep.subr.mxu0 0.0
        %6225 = vmatpush1.msra.mxu0 0.0
        %6226 = vmatprep.subr.mxu0 0.0
        %6227 = vmatpush1.msra.mxu0 0.0
        %6228 = vmatprep.subr.mxu0 0.0
        %6229 = vmatpush1.msra.mxu0 0.0
        %6230 = vmatprep.subr.mxu0 0.0
        %6231 = vmatpush1.msra.mxu0 0.0
        %6232 = vmatprep.subr.mxu0 0.0
        %v6233 = vand.u32 %v5272, 4294901760
        %v6234 = vsub.f32 %v5272, %v6233
        %6235 = vmatpush1.msra.mxu0 %v6234
        %6236 = vmatprep.subr.mxu0 0.0
        %v6237 = vand.u32 %v5269, 4294901760
        %v6238 = vsub.f32 %v5269, %v6237
        %6239 = vmatpush1.msra.mxu0 %v6238
        %6240 = vmatprep.subr.mxu0 0.0
        %v6241 = vand.u32 %v5266, 4294901760
        %v6242 = vsub.f32 %v5266, %v6241
        %6243 = vmatpush1.msra.mxu0 %v6242
        %6244 = vmatprep.subr.mxu0 0.0
        %v6245 = vand.u32 %v5263, 4294901760
        %v6246 = vsub.f32 %v5263, %v6245
        %6247 = vmatpush1.msra.mxu0 %v6246
        %6248 = vmatprep.subr.mxu0 0.0
        %v6249 = vand.u32 %v5260, 4294901760
        %v6250 = vsub.f32 %v5260, %v6249
        %6251 = vmatpush1.msra.mxu0 %v6250
        %6252 = vmatprep.subr.mxu0 0.0
        %v6253 = vand.u32 %v5257, 4294901760
        %v6254 = vsub.f32 %v5257, %v6253
        %6255 = vmatpush1.msra.mxu0 %v6254
        %6256 = vmatprep.subr.mxu0 0.0
        %v6257 = vand.u32 %v5254, 4294901760
        %v6258 = vsub.f32 %v5254, %v6257
        %6259 = vmatpush1.msra.mxu0 %v6258
        %6260 = vmatprep.subr.mxu0 0.0
        %v6261 = vand.u32 %v5251, 4294901760
        %v6262 = vsub.f32 %v5251, %v6261
        %6263 = vmatpush1.msra.mxu0 %v6262
        %6264 = vmatprep.subr.mxu0 0.0
        %v6265 = vand.u32 %v5248, 4294901760
        %v6266 = vsub.f32 %v5248, %v6265
        %6267 = vmatpush1.msra.mxu0 %v6266
        %6268 = vmatprep.subr.mxu0 0.0
        %6269 = vmatpush2.msra.mxu0 0.0
        %6270 = vmatprep.subr.mxu0 0.0
        %6271 = vmatpush2.msra.mxu0 0.0
        %6272 = vmatprep.subr.mxu0 0.0
        %6273 = vmatpush2.msra.mxu0 0.0
        %6274 = vmatprep.subr.mxu0 0.0
        %6275 = vmatpush2.msra.mxu0 0.0
        %6276 = vmatprep.subr.mxu0 0.0
        %6277 = vmatpush2.msra.mxu0 0.0
        %6278 = vmatprep.subr.mxu0 0.0
        %6279 = vmatpush2.msra.mxu0 0.0
        %6280 = vmatprep.subr.mxu0 0.0
        %6281 = vmatpush2.msra.mxu0 0.0
        %6282 = vmatprep.subr.mxu0 0.0
        %6283 = vmatpush2.msra.mxu0 0.0
        %6284 = vmatprep.subr.mxu0 0.0
        %6285 = vmatpush2.msra.mxu0 0.0
        %6286 = vmatprep.subr.mxu0 0.0
        %6287 = vmatpush2.msra.mxu0 0.0
        %6288 = vmatprep.subr.mxu0 0.0
        %6289 = vmatpush2.msra.mxu0 0.0
        %6290 = vmatprep.subr.mxu0 0.0
        %6291 = vmatpush2.msra.mxu0 0.0
        %6292 = vmatprep.subr.mxu0 0.0
        %6293 = vmatpush2.msra.mxu0 0.0
        %6294 = vmatprep.subr.mxu0 0.0
        %6295 = vmatpush2.msra.mxu0 0.0
        %6296 = vmatprep.subr.mxu0 0.0
        %6297 = vmatpush2.msra.mxu0 0.0
        %6298 = vmatprep.subr.mxu0 0.0
        %6299 = vmatpush2.msra.mxu0 0.0
        %6300 = vmatprep.mubr.f32.mxu0 0.0
        %v6301 = vand.u32 %v5275, 4294901760
        %v6302 = vsub.f32 %v5275, %v6301
        %6303 = vmatmul.mubr.f32.gmra.mxu0 %v6302
        %v6304 = vpop.f32.mrf.mxu0
        %v6305 = vadd.f32 %v6209, %v6304
        %v6306 = vpop.f32.mrf.mxu0
        %6307 = vmatprep.mubr.f32.mxu0 0.0
        %v6308 = vand.u32 %v5278, 4294901760
        %v6309 = vsub.f32 %v5278, %v6308
        %6310 = vmatmul.mubr.f32.gmra.mxu0 %v6309
        %v6311 = vpop.f32.mrf.mxu0
        %v6312 = vadd.f32 %v6215, %v6311
        %v6313 = vpop.f32.mrf.mxu0
        %6314 = vdwg.mxu0
        %6315 = vmatprep.subr.mxu0 0.0
        %6316 = vmatpush1.msra.mxu0 0.0
        %6317 = vmatprep.subr.mxu0 0.0
        %6318 = vmatpush1.msra.mxu0 0.0
        %6319 = vmatprep.subr.mxu0 0.0
        %6320 = vmatpush1.msra.mxu0 0.0
        %6321 = vmatprep.subr.mxu0 0.0
        %6322 = vmatpush1.msra.mxu0 0.0
        %6323 = vmatprep.subr.mxu0 0.0
        %6324 = vmatpush1.msra.mxu0 0.0
        %6325 = vmatprep.subr.mxu0 0.0
        %6326 = vmatpush1.msra.mxu0 0.0
        %6327 = vmatprep.subr.mxu0 0.0
        %6328 = vmatpush1.msra.mxu0 0.0
        %6329 = vmatprep.subr.mxu0 0.0
        %v6330 = vand.u32 %v5272, 4294901760
        %6331 = vmatpush1.msra.mxu0 %v6330
        %6332 = vmatprep.subr.mxu0 0.0
        %v6333 = vand.u32 %v5269, 4294901760
        %6334 = vmatpush1.msra.mxu0 %v6333
        %6335 = vmatprep.subr.mxu0 0.0
        %v6336 = vand.u32 %v5266, 4294901760
        %6337 = vmatpush1.msra.mxu0 %v6336
        %6338 = vmatprep.subr.mxu0 0.0
        %v6339 = vand.u32 %v5263, 4294901760
        %6340 = vmatpush1.msra.mxu0 %v6339
        %6341 = vmatprep.subr.mxu0 0.0
        %v6342 = vand.u32 %v5260, 4294901760
        %6343 = vmatpush1.msra.mxu0 %v6342
        %6344 = vmatprep.subr.mxu0 0.0
        %v6345 = vand.u32 %v5257, 4294901760
        %6346 = vmatpush1.msra.mxu0 %v6345
        %6347 = vmatprep.subr.mxu0 0.0
        %v6348 = vand.u32 %v5254, 4294901760
        %6349 = vmatpush1.msra.mxu0 %v6348
        %6350 = vmatprep.subr.mxu0 0.0
        %v6351 = vand.u32 %v5251, 4294901760
        %6352 = vmatpush1.msra.mxu0 %v6351
        %6353 = vmatprep.subr.mxu0 0.0
        %v6354 = vand.u32 %v5248, 4294901760
        %6355 = vmatpush1.msra.mxu0 %v6354
        %6356 = vmatprep.subr.mxu0 0.0
        %6357 = vmatpush2.msra.mxu0 0.0
        %6358 = vmatprep.subr.mxu0 0.0
        %6359 = vmatpush2.msra.mxu0 0.0
        %6360 = vmatprep.subr.mxu0 0.0
        %6361 = vmatpush2.msra.mxu0 0.0
        %6362 = vmatprep.subr.mxu0 0.0
        %6363 = vmatpush2.msra.mxu0 0.0
        %6364 = vmatprep.subr.mxu0 0.0
        %6365 = vmatpush2.msra.mxu0 0.0
        %6366 = vmatprep.subr.mxu0 0.0
        %6367 = vmatpush2.msra.mxu0 0.0
        %6368 = vmatprep.subr.mxu0 0.0
        %6369 = vmatpush2.msra.mxu0 0.0
        %6370 = vmatprep.subr.mxu0 0.0
        %6371 = vmatpush2.msra.mxu0 0.0
        %6372 = vmatprep.subr.mxu0 0.0
        %6373 = vmatpush2.msra.mxu0 0.0
        %6374 = vmatprep.subr.mxu0 0.0
        %6375 = vmatpush2.msra.mxu0 0.0
        %6376 = vmatprep.subr.mxu0 0.0
        %6377 = vmatpush2.msra.mxu0 0.0
        %6378 = vmatprep.subr.mxu0 0.0
        %6379 = vmatpush2.msra.mxu0 0.0
        %6380 = vmatprep.subr.mxu0 0.0
        %6381 = vmatpush2.msra.mxu0 0.0
        %6382 = vmatprep.subr.mxu0 0.0
        %6383 = vmatpush2.msra.mxu0 0.0
        %6384 = vmatprep.subr.mxu0 0.0
        %6385 = vmatpush2.msra.mxu0 0.0
        %6386 = vmatprep.subr.mxu0 0.0
        %6387 = vmatpush2.msra.mxu0 0.0
        %6388 = vmatprep.mubr.f32.mxu0 0.0
        %v6389 = vand.u32 %v5275, 4294901760
        %v6390 = vsub.f32 %v5275, %v6389
        %v6391 = vand.u32 %v6390, 4294901760
        %6392 = vmatmul.mubr.f32.gmra.mxu0 %v6391
        %v6393 = vpop.f32.mrf.mxu0
        %v6394 = vadd.f32 %v6305, %v6393
        %v6395 = vpop.f32.mrf.mxu0
        %6396 = vmatprep.mubr.f32.mxu0 0.0
        %v6397 = vand.u32 %v5278, 4294901760
        %v6398 = vsub.f32 %v5278, %v6397
        %v6399 = vand.u32 %v6398, 4294901760
        %6400 = vmatmul.mubr.f32.gmra.mxu0 %v6399
        %v6401 = vpop.f32.mrf.mxu0
        %v6402 = vadd.f32 %v6312, %v6401
        %v6403 = vpop.f32.mrf.mxu0
        %6404 = vdwg.mxu0
        %6405 = vmatprep.subr.mxu0 0.0
        %6406 = vmatpush1.msra.mxu0 0.0
        %6407 = vmatprep.subr.mxu0 0.0
        %6408 = vmatpush1.msra.mxu0 0.0
        %6409 = vmatprep.subr.mxu0 0.0
        %6410 = vmatpush1.msra.mxu0 0.0
        %6411 = vmatprep.subr.mxu0 0.0
        %6412 = vmatpush1.msra.mxu0 0.0
        %6413 = vmatprep.subr.mxu0 0.0
        %6414 = vmatpush1.msra.mxu0 0.0
        %6415 = vmatprep.subr.mxu0 0.0
        %6416 = vmatpush1.msra.mxu0 0.0
        %6417 = vmatprep.subr.mxu0 0.0
        %6418 = vmatpush1.msra.mxu0 0.0
        %6419 = vmatprep.subr.mxu0 0.0
        %v6420 = vand.u32 %v5272, 4294901760
        %v6421 = vsub.f32 %v5272, %v6420
        %v6422 = vand.u32 %v6421, 4294901760
        %6423 = vmatpush1.msra.mxu0 %v6422
        %6424 = vmatprep.subr.mxu0 0.0
        %v6425 = vand.u32 %v5269, 4294901760
        %v6426 = vsub.f32 %v5269, %v6425
        %v6427 = vand.u32 %v6426, 4294901760
        %6428 = vmatpush1.msra.mxu0 %v6427
        %6429 = vmatprep.subr.mxu0 0.0
        %v6430 = vand.u32 %v5266, 4294901760
        %v6431 = vsub.f32 %v5266, %v6430
        %v6432 = vand.u32 %v6431, 4294901760
        %6433 = vmatpush1.msra.mxu0 %v6432
        %6434 = vmatprep.subr.mxu0 0.0
        %v6435 = vand.u32 %v5263, 4294901760
        %v6436 = vsub.f32 %v5263, %v6435
        %v6437 = vand.u32 %v6436, 4294901760
        %6438 = vmatpush1.msra.mxu0 %v6437
        %6439 = vmatprep.subr.mxu0 0.0
        %v6440 = vand.u32 %v5260, 4294901760
        %v6441 = vsub.f32 %v5260, %v6440
        %v6442 = vand.u32 %v6441, 4294901760
        %6443 = vmatpush1.msra.mxu0 %v6442
        %6444 = vmatprep.subr.mxu0 0.0
        %v6445 = vand.u32 %v5257, 4294901760
        %v6446 = vsub.f32 %v5257, %v6445
        %v6447 = vand.u32 %v6446, 4294901760
        %6448 = vmatpush1.msra.mxu0 %v6447
        %6449 = vmatprep.subr.mxu0 0.0
        %v6450 = vand.u32 %v5254, 4294901760
        %v6451 = vsub.f32 %v5254, %v6450
        %v6452 = vand.u32 %v6451, 4294901760
        %6453 = vmatpush1.msra.mxu0 %v6452
        %6454 = vmatprep.subr.mxu0 0.0
        %v6455 = vand.u32 %v5251, 4294901760
        %v6456 = vsub.f32 %v5251, %v6455
        %v6457 = vand.u32 %v6456, 4294901760
        %6458 = vmatpush1.msra.mxu0 %v6457
        %6459 = vmatprep.subr.mxu0 0.0
        %v6460 = vand.u32 %v5248, 4294901760
        %v6461 = vsub.f32 %v5248, %v6460
        %v6462 = vand.u32 %v6461, 4294901760
        %6463 = vmatpush1.msra.mxu0 %v6462
        %6464 = vmatprep.subr.mxu0 0.0
        %6465 = vmatpush2.msra.mxu0 0.0
        %6466 = vmatprep.subr.mxu0 0.0
        %6467 = vmatpush2.msra.mxu0 0.0
        %6468 = vmatprep.subr.mxu0 0.0
        %6469 = vmatpush2.msra.mxu0 0.0
        %6470 = vmatprep.subr.mxu0 0.0
        %6471 = vmatpush2.msra.mxu0 0.0
        %6472 = vmatprep.subr.mxu0 0.0
        %6473 = vmatpush2.msra.mxu0 0.0
        %6474 = vmatprep.subr.mxu0 0.0
        %6475 = vmatpush2.msra.mxu0 0.0
        %6476 = vmatprep.subr.mxu0 0.0
        %6477 = vmatpush2.msra.mxu0 0.0
        %6478 = vmatprep.subr.mxu0 0.0
        %6479 = vmatpush2.msra.mxu0 0.0
        %6480 = vmatprep.subr.mxu0 0.0
        %6481 = vmatpush2.msra.mxu0 0.0
        %6482 = vmatprep.subr.mxu0 0.0
        %6483 = vmatpush2.msra.mxu0 0.0
        %6484 = vmatprep.subr.mxu0 0.0
        %6485 = vmatpush2.msra.mxu0 0.0
        %6486 = vmatprep.subr.mxu0 0.0
        %6487 = vmatpush2.msra.mxu0 0.0
        %6488 = vmatprep.subr.mxu0 0.0
        %6489 = vmatpush2.msra.mxu0 0.0
        %6490 = vmatprep.subr.mxu0 0.0
        %6491 = vmatpush2.msra.mxu0 0.0
        %6492 = vmatprep.subr.mxu0 0.0
        %6493 = vmatpush2.msra.mxu0 0.0
        %6494 = vmatprep.subr.mxu0 0.0
        %6495 = vmatpush2.msra.mxu0 0.0
        %6496 = vmatprep.mubr.f32.mxu0 0.0
        %v6497 = vand.u32 %v5275, 4294901760
        %6498 = vmatmul.mubr.f32.gmra.mxu0 %v6497
        %v6499 = vpop.f32.mrf.mxu0
        %v6500 = vadd.f32 %v6394, %v6499
        %v6501 = vpop.f32.mrf.mxu0
        %6502 = vmatprep.mubr.f32.mxu0 0.0
        %v6503 = vand.u32 %v5278, 4294901760
        %6504 = vmatmul.mubr.f32.gmra.mxu0 %v6503
        %v6505 = vpop.f32.mrf.mxu0
        %v6506 = vadd.f32 %v6402, %v6505
        %v6507 = vpop.f32.mrf.mxu0
        %6508 = vdwg.mxu0
        %6509 = vmatprep.subr.mxu0 0.0
        %6510 = vmatpush1.msra.mxu0 0.0
        %6511 = vmatprep.subr.mxu0 0.0
        %6512 = vmatpush1.msra.mxu0 0.0
        %6513 = vmatprep.subr.mxu0 0.0
        %6514 = vmatpush1.msra.mxu0 0.0
        %6515 = vmatprep.subr.mxu0 0.0
        %6516 = vmatpush1.msra.mxu0 0.0
        %6517 = vmatprep.subr.mxu0 0.0
        %6518 = vmatpush1.msra.mxu0 0.0
        %6519 = vmatprep.subr.mxu0 0.0
        %6520 = vmatpush1.msra.mxu0 0.0
        %6521 = vmatprep.subr.mxu0 0.0
        %6522 = vmatpush1.msra.mxu0 0.0
        %6523 = vmatprep.subr.mxu0 0.0
        %v6524 = vand.u32 %v5272, 4294901760
        %6525 = vmatpush1.msra.mxu0 %v6524
        %6526 = vmatprep.subr.mxu0 0.0
        %v6527 = vand.u32 %v5269, 4294901760
        %6528 = vmatpush1.msra.mxu0 %v6527
        %6529 = vmatprep.subr.mxu0 0.0
        %v6530 = vand.u32 %v5266, 4294901760
        %6531 = vmatpush1.msra.mxu0 %v6530
        %6532 = vmatprep.subr.mxu0 0.0
        %v6533 = vand.u32 %v5263, 4294901760
        %6534 = vmatpush1.msra.mxu0 %v6533
        %6535 = vmatprep.subr.mxu0 0.0
        %v6536 = vand.u32 %v5260, 4294901760
        %6537 = vmatpush1.msra.mxu0 %v6536
        %6538 = vmatprep.subr.mxu0 0.0
        %v6539 = vand.u32 %v5257, 4294901760
        %6540 = vmatpush1.msra.mxu0 %v6539
        %6541 = vmatprep.subr.mxu0 0.0
        %v6542 = vand.u32 %v5254, 4294901760
        %6543 = vmatpush1.msra.mxu0 %v6542
        %6544 = vmatprep.subr.mxu0 0.0
        %v6545 = vand.u32 %v5251, 4294901760
        %6546 = vmatpush1.msra.mxu0 %v6545
        %6547 = vmatprep.subr.mxu0 0.0
        %v6548 = vand.u32 %v5248, 4294901760
        %6549 = vmatpush1.msra.mxu0 %v6548
        %6550 = vmatprep.subr.mxu0 0.0
        %6551 = vmatpush2.msra.mxu0 0.0
        %6552 = vmatprep.subr.mxu0 0.0
        %6553 = vmatpush2.msra.mxu0 0.0
        %6554 = vmatprep.subr.mxu0 0.0
        %6555 = vmatpush2.msra.mxu0 0.0
        %6556 = vmatprep.subr.mxu0 0.0
        %6557 = vmatpush2.msra.mxu0 0.0
        %6558 = vmatprep.subr.mxu0 0.0
        %6559 = vmatpush2.msra.mxu0 0.0
        %6560 = vmatprep.subr.mxu0 0.0
        %6561 = vmatpush2.msra.mxu0 0.0
        %6562 = vmatprep.subr.mxu0 0.0
        %6563 = vmatpush2.msra.mxu0 0.0
        %6564 = vmatprep.subr.mxu0 0.0
        %6565 = vmatpush2.msra.mxu0 0.0
        %6566 = vmatprep.subr.mxu0 0.0
        %6567 = vmatpush2.msra.mxu0 0.0
        %6568 = vmatprep.subr.mxu0 0.0
        %6569 = vmatpush2.msra.mxu0 0.0
        %6570 = vmatprep.subr.mxu0 0.0
        %6571 = vmatpush2.msra.mxu0 0.0
        %6572 = vmatprep.subr.mxu0 0.0
        %6573 = vmatpush2.msra.mxu0 0.0
        %6574 = vmatprep.subr.mxu0 0.0
        %6575 = vmatpush2.msra.mxu0 0.0
        %6576 = vmatprep.subr.mxu0 0.0
        %6577 = vmatpush2.msra.mxu0 0.0
        %6578 = vmatprep.subr.mxu0 0.0
        %6579 = vmatpush2.msra.mxu0 0.0
        %6580 = vmatprep.subr.mxu0 0.0
        %6581 = vmatpush2.msra.mxu0 0.0
        %6582 = vmatprep.mubr.f32.mxu0 0.0
        %v6583 = vand.u32 %v5275, 4294901760
        %6584 = vmatmul.mubr.f32.gmra.mxu0 %v6583
        %v6585 = vpop.f32.mrf.mxu0
        %v6586 = vadd.f32 %v6500, %v6585
        %v6587 = vpop.f32.mrf.mxu0
        %6588 = vmatprep.mubr.f32.mxu0 0.0
        %v6589 = vand.u32 %v5278, 4294901760
        %6590 = vmatmul.mubr.f32.gmra.mxu0 %v6589
        %v6591 = vpop.f32.mrf.mxu0
        %v6592 = vadd.f32 %v6506, %v6591
        %v6593 = vpop.f32.mrf.mxu0
        %6594 = vdwg.mxu0
        %6595 = vst [vmem:[%s287] sm:$0xff] %v5991
        %6596 = vst [vmem:[%s287 + $0x8] sm:$0xff] %v5993
        %6597 = vst [vmem:[%s287 + $0x10] sm:$0xff] %v6586
        %6598 = vst [vmem:[%s287 + $0x18] sm:$0xff] %v5998
        %6599 = vst [vmem:[%s287 + $0x20] sm:$0xff] %v6000
        %6600 = vst [vmem:[%s287 + $0x28] sm:$0xff] %v6592
        %s6601 = sand.u32 %s164, 1
        %s6602 = scalar_lea.sflag [#allocation3], %s6601
        %s6603 = sand.u32 %s164, 1
        %s6604 = smul.addr %s6603, 48
        %s6605 = scalar_lea.vmem [#allocation2], %s6604
        // Predicated region
        $region41: #{mel_spectrogram.1} parent=39 // pred_check
          %p6606 = pneg %p174
        $region42: #{mel_spectrogram.1} parent=39 // pred_check_branch
          %6608 = sbr.rel (%p6606) target = $region44
        $region43: #{mel_spectrogram.1} parent=39 // pred_region
          %s6609 = smul.u32 3, %s24
          %s6611 = ssub.s32 768, 768
          %6612 = vsyncadd %s6602, %s6611
          %s6613 = smul.addr %s23, 6
          %s6614 = sadd.s32 %s6609, %s6613
          %s6615 = smul.addr %s6614, 128
          %s6616 = scalar_lea.hbm %s5, %s6615
          %s6617 = sshll.u32 %s6605, 4
          %s6618 = int_to_ptr.vmem [resolvable:$true] %s6617
          %6623 = dma.vmem_to_hbm [thread:$0]  %s6618, 768, %s6616, %s6602, 384, 384, 24
        $region44: #{mel_spectrogram.1} parent=39 // pred_fallthru
          _
      $region40: #{mel_spectrogram.1} parent=5 // pred_fallthru
        _
      %p6624 = scmp.le.s32.totalorder 2, %s14
      // Predicated region
      $region45: #{mel_spectrogram.1} parent=5 // pred_check
        %p6625 = pneg %p6624
      $region46: #{mel_spectrogram.1} parent=5 // pred_check_branch
        %6627 = sbr.rel (%p6625) target = $region48
      $region47: #{mel_spectrogram.1} parent=5 // pred_region
        %s6628 = ssub.s32 %s14, 2
        // Predicated region
        $region49: #{mel_spectrogram.1} parent=47 // pred_check
          %p6629 = pneg %p180
        $region50: #{mel_spectrogram.1} parent=47 // pred_check_branch
          %6631 = sbr.rel (%p6629) target = $region52
        $region51: #{mel_spectrogram.1} parent=47 // pred_region
          %s6632 = sand.u32 %s165, 1
          %s6633 = scalar_lea.sflag [#allocation3], %s6632
          %s6634 = sand.u32 %s165, 1
          %s6635 = smul.addr %s6634, 48
          %s6636 = scalar_lea.vmem [#allocation2], %s6635
          %6637 = dma.done %s6633, 768
        $region52: #{mel_spectrogram.1} parent=47 // pred_fallthru
          _
      $region48: #{mel_spectrogram.1} parent=5 // pred_fallthru
        _
    $region6: #{mel_spectrogram.1} parent=1 // loop_footer
      %s18 = sadd.s32 1, %s14
    $region7: #{mel_spectrogram.1} parent=1 // loop_footer_branch
      %13 = sbr.rel target = $region3
    $region8: #{mel_spectrogram.1} parent=1 // loop_exit
      _
    %6638 = vsyncpa [#allocation3], 1
    %s6639 = scalar_lea.sflag [#allocation3], 1
    %6640 = vsyncpa %s6639, 1

</llo_original>
